<compile_context>
chip_gen: v5e
topology: v5e:2x2
jax: 0.10.0
libtpu: 0.0.40
codegen_flags: <defaults>
</compile_context>

<pallas_src>
import jax
import jax.numpy as jnp
from jax import lax
from jax.experimental import pallas as pl
from jax.experimental.pallas import tpu as pltpu

NUM_CLASSES_EX = 8
NUM_CLASSES_AU = 12
OUT_PAD = 128          # lane-dense output slab width
HIDDEN = 512
FEAT = 2048
BN_EPS = 1e-5


# ---------------- Pallas kernel: fused multitask heads ----------------
def multitask_heads_kernel(feat_ref, w1_ref, b1_ref, w2_ref, b2_ref, out_ref):
    # feat: (B, 2048) f32 -> bf16 for native MXU bf16 path (f32 accumulation).
    feat = feat_ref[...].astype(jnp.bfloat16)
    # Fused first layer: one (2048, 1024) bf16 GEMM.
    #   lanes [0, 512)   = EX hidden (fc1_1)
    #   lanes [512, 1024)= AU hidden (fc2_1)
    h = jnp.dot(feat, w1_ref[...], preferred_element_type=jnp.float32) + b1_ref[...]
    h = jnp.maximum(h, 0.0)                      # ReLU; Dropout(p=0.5) is identity @ eval
    # Fused second layer: block-diagonal (1024, 128) bf16 GEMM.
    #   out lanes [0, 8)  = EX logits (fc1_2), lanes [8, 20) = AU logits (fc2_2)
    out_ref[...] = jnp.dot(h.astype(jnp.bfloat16), w2_ref[...],
                           preferred_element_type=jnp.float32) + b2_ref[...]


def multitask_heads(feat, head_params):
    """feat: (B, 2048) f32. Returns (out_ex (B, NUM_CLASSES_EX), out_au (B, NUM_CLASSES_AU))."""
    B = feat.shape[0]
    w1, b1, w2, b2 = head_params
    vmem_spec = pl.BlockSpec(memory_space=pltpu.MemorySpace.VMEM)
    out = pl.pallas_call(
        multitask_heads_kernel,
        out_shape=jax.ShapeDtypeStruct((B, OUT_PAD), jnp.float32),
        in_specs=[vmem_spec] * 5,
        out_specs=vmem_spec,
        compiler_params=pltpu.CompilerParams(vmem_limit_bytes=16 << 20),
    )(feat, w1, b1, w2, b2)
    out_ex = out[:, :NUM_CLASSES_EX]
    out_au = out[:, NUM_CLASSES_EX:NUM_CLASSES_EX + NUM_CLASSES_AU]
    return out_ex, out_au


# ---------------- ResNet50 backbone (plain JAX glue, NHWC) ----------------
def conv2d(x, w_hwio, stride=1, padding=0):
    return lax.conv_general_dilated(
        x, w_hwio, window_strides=(stride, stride),
        padding=((padding, padding), (padding, padding)),
        dimension_numbers=('NHWC', 'HWIO', 'NHWC'))


def batchnorm(x, bn):
    gamma, beta, mean, var = bn
    inv = gamma / jnp.sqrt(var + BN_EPS)
    return x * inv + (beta - mean * inv)      # channels-last broadcast


def maxpool3x3s2(x):
    return lax.reduce_window(
        x, -jnp.inf, lax.max,
        window_dimensions=(1, 3, 3, 1), window_strides=(1, 2, 2, 1),
        padding=((0, 0), (1, 1), (1, 1), (0, 0)))


def init_conv(key, out_c, in_c, kh, kw):
    # Kaiming-ish init in OIHW (PyTorch convention), stored as HWIO for NHWC convs.
    fan_in = in_c * kh * kw
    w = jax.random.normal(key, (out_c, in_c, kh, kw), jnp.float32) * (2.0 / fan_in) ** 0.5
    return jnp.transpose(w, (2, 3, 1, 0))     # OIHW -> HWIO


def init_bn(key, c):
    k1, k2 = jax.random.split(key)
    gamma = 1.0 + 0.1 * jax.random.normal(k1, (c,), jnp.float32)
    beta = 0.1 * jax.random.normal(k2, (c,), jnp.float32)
    return (gamma, beta, jnp.zeros((c,), jnp.float32), jnp.ones((c,), jnp.float32))


def init_bottleneck(key, in_c, planes, stride):
    keys = jax.random.split(key, 8)
    out_c = planes * 4
    p = dict(
        conv1=init_conv(keys[0], planes, in_c, 1, 1), bn1=init_bn(keys[1], planes),
        conv2=init_conv(keys[2], planes, planes, 3, 3), bn2=init_bn(keys[3], planes),
        conv3=init_conv(keys[4], out_c, planes, 1, 1), bn3=init_bn(keys[5], out_c),
        stride=stride)
    if stride != 1 or in_c != out_c:
        p['down_conv'] = init_conv(keys[6], out_c, in_c, 1, 1)
        p['down_bn'] = init_bn(keys[7], out_c)
    return p


def bottleneck_fwd(x, p):
    identity = x
    out = jax.nn.relu(batchnorm(conv2d(x, p['conv1']), p['bn1']))
    out = jax.nn.relu(batchnorm(conv2d(out, p['conv2'], stride=p['stride'], padding=1), p['bn2']))
    out = batchnorm(conv2d(out, p['conv3']), p['bn3'])
    if 'down_conv' in p:
        identity = batchnorm(conv2d(x, p['down_conv'], stride=p['stride']), p['down_bn'])
    return jax.nn.relu(out + identity)


def init_resnet50(key):
    layers_cfg = [(64, 3, 1), (128, 4, 2), (256, 6, 2), (512, 3, 2)]
    keys = jax.random.split(key, 2 + sum(n for _, n, _ in layers_cfg))
    params = dict(conv1=init_conv(keys[0], 64, 3, 7, 7), bn1=init_bn(keys[1], 64))
    in_c, ki, stages = 64, 2, []
    for planes, n_blocks, stride in layers_cfg:
        stage = []
        for b in range(n_blocks):
            s = stride if b == 0 else 1
            stage.append(init_bottleneck(keys[ki], in_c, planes, s))
            ki += 1
            in_c = planes * 4
        stages.append(stage)
    params['layers'] = stages
    return params


def resnet50_fwd(x_nchw, params):
    x = jnp.transpose(x_nchw, (0, 2, 3, 1))   # NCHW (PyTorch interface) -> NHWC
    out = jax.nn.relu(batchnorm(conv2d(x, params['conv1'], stride=2, padding=3), params['bn1']))
    out = maxpool3x3s2(out)
    for stage in params['layers']:
        for blk in stage:
            out = bottleneck_fwd(out, blk)
    return jnp.mean(out, axis=(1, 2))         # adaptive avg-pool -> (B, 2048); fc = Identity


# ---------------- Head params (PyTorch nn.Linear init convention) ----------------
def init_linear(key, in_f, out_f):
    k1, k2 = jax.random.split(key)
    bound = float(in_f) ** -0.5
    w = jax.random.uniform(k1, (out_f, in_f), jnp.float32, -bound, bound)  # (out, in) like torch
    b = jax.random.uniform(k2, (out_f,), jnp.float32, -bound, bound)
    return w, b


def pack_head_params(w11, b11, w12, b12, w21, b21, w22, b22):
    """Fuse and pack the 4 Linear layers into the 2-GEMM kernel layout."""
    # Fused first layer: (2048, 1024) bf16, EX hidden in cols [0,512), AU in [512,1024).
    w1 = jnp.concatenate([w11.T, w21.T], axis=1).astype(jnp.bfloat16)
    b1 = jnp.concatenate([b11, b21]).reshape(1, -1).astype(jnp.float32)
    # Block-diagonal second layer padded to a 128-lane output slab.
    w2 = jnp.zeros((2 * HIDDEN, OUT_PAD), jnp.float32)
    w2 = w2.at[:HIDDEN, :NUM_CLASSES_EX].set(w12.T)
    w2 = w2.at[HIDDEN:, NUM_CLASSES_EX:NUM_CLASSES_EX + NUM_CLASSES_AU].set(w22.T)
    w2 = w2.astype(jnp.bfloat16)
    b2 = jnp.zeros((1, OUT_PAD), jnp.float32)
    b2 = b2.at[0, :NUM_CLASSES_EX].set(b12)
    b2 = b2.at[0, NUM_CLASSES_EX:NUM_CLASSES_EX + NUM_CLASSES_AU].set(b22)
    return (w1, b1, w2, b2)


if __name__ == "__main__":
    key = jax.random.PRNGKey(0)
    k_back, k11, k12, k21, k22, k_x = jax.random.split(key, 6)

    backbone_params = init_resnet50(k_back)
    w11, b11 = init_linear(k11, FEAT, HIDDEN)
    w12, b12 = init_linear(k12, HIDDEN, NUM_CLASSES_EX)
    w21, b21 = init_linear(k21, FEAT, HIDDEN)
    w22, b22 = init_linear(k22, HIDDEN, NUM_CLASSES_AU)
    head_params = pack_head_params(w11, b11, w12, b12, w21, b21, w22, b22)

    x = jax.random.normal(k_x, (2, 3, 32, 32), jnp.float32)  # NCHW input, small spatial

    @jax.jit
    def forward(x):
        feat = resnet50_fwd(x, backbone_params)        # (B, 2048)  plain-JAX backbone
        return multitask_heads(feat, head_params)      # fused Pallas heads

    out_ex, out_au = forward(x)
    jax.block_until_ready((out_ex, out_au))
    assert out_ex.shape == (2, NUM_CLASSES_EX)
    assert out_au.shape == (2, NUM_CLASSES_AU)
    assert out_ex.dtype == jnp.float32 and out_au.dtype == jnp.float32
    print("KERNEL_OK")
</pallas_src>

<mosaic_0001>
module attributes {stable_mosaic.version = 11 : i64} {
  func.func @multitask_heads_kernel(%arg0: memref<2x2048xf32, #tpu.memory_space<vmem>>, %arg1: memref<2048x1024xbf16, #tpu.memory_space<vmem>>, %arg2: memref<1x1024xf32, #tpu.memory_space<vmem>>, %arg3: memref<1024x128xbf16, #tpu.memory_space<vmem>>, %arg4: memref<1x128xf32, #tpu.memory_space<vmem>>, %arg5: memref<2x128xf32, #tpu.memory_space<vmem>>) attributes {dimension_semantics = [], scalar_prefetch = 0 : i64, scratch_operands = 0 : i64, tpu.core_type = #tpu.core_type<tc>} {
    %c0 = arith.constant 0 : index
    %c0_0 = arith.constant 0 : index
    %0 = vector.load %arg0[%c0, %c0_0] : memref<2x2048xf32, #tpu.memory_space<vmem>>, vector<2x2048xf32>
    %1 = arith.truncf %0 : vector<2x2048xf32> to vector<2x2048xbf16>
    %c0_1 = arith.constant 0 : index
    %c0_2 = arith.constant 0 : index
    %2 = vector.load %arg1[%c0_1, %c0_2] : memref<2048x1024xbf16, #tpu.memory_space<vmem>>, vector<2048x1024xbf16>
    %cst = arith.constant dense<0.000000e+00> : vector<2x1024xf32>
    %3 = tpu.matmul %1, %2, %cst {dimension_numbers = #tpu.dot_dimension_numbers<[1], [0], [0], [1], [0, 0, 1, 1], [], []>} : vector<2x2048xbf16>, vector<2048x1024xbf16>, vector<2x1024xf32> -> vector<2x1024xf32>
    %c0_3 = arith.constant 0 : index
    %c0_4 = arith.constant 0 : index
    %4 = vector.load %arg2[%c0_3, %c0_4] : memref<1x1024xf32, #tpu.memory_space<vmem>>, vector<1x1024xf32>
    %5 = vector.broadcast %4 : vector<1x1024xf32> to vector<2x1024xf32>
    %6 = arith.addf %3, %5 : vector<2x1024xf32>
    %cst_5 = arith.constant 0.000000e+00 : f32
    %7 = vector.broadcast %cst_5 : f32 to vector<2x1024xf32>
    %8 = arith.maximumf %6, %7 : vector<2x1024xf32>
    %9 = arith.truncf %8 : vector<2x1024xf32> to vector<2x1024xbf16>
    %c0_6 = arith.constant 0 : index
    %c0_7 = arith.constant 0 : index
    %10 = vector.load %arg3[%c0_6, %c0_7] : memref<1024x128xbf16, #tpu.memory_space<vmem>>, vector<1024x128xbf16>
    %cst_8 = arith.constant dense<0.000000e+00> : vector<2x128xf32>
    %11 = tpu.matmul %9, %10, %cst_8 {dimension_numbers = #tpu.dot_dimension_numbers<[1], [0], [0], [1], [0, 0, 1, 1], [], []>} : vector<2x1024xbf16>, vector<1024x128xbf16>, vector<2x128xf32> -> vector<2x128xf32>
    %c0_9 = arith.constant 0 : index
    %c0_10 = arith.constant 0 : index
    %12 = vector.load %arg4[%c0_9, %c0_10] : memref<1x128xf32, #tpu.memory_space<vmem>>, vector<1x128xf32>
    %13 = vector.broadcast %12 : vector<1x128xf32> to vector<2x128xf32>
    %14 = arith.addf %11, %13 : vector<2x128xf32>
    %c0_11 = arith.constant 0 : index
    %c0_12 = arith.constant 0 : index
    %15 = vector.load %arg5[%c0_11, %c0_12] : memref<2x128xf32, #tpu.memory_space<vmem>>, vector<2x128xf32>
    tpu.vector_store %arg5[%c0_11, %c0_12], %14 {strides = array<i32>} : memref<2x128xf32, #tpu.memory_space<vmem>>, vector<2x128xf32>,
    return
  }
}

</mosaic_0001>

<llo_original>
// kernel: forward.1
$region0: #{forward.1}
  #allocation0 [shape = 'u32[]', space=smem, size = 0x4, offset = 0x4, fixed_abs, tag = 'smem constant byte address 0x4 - core index']
  #allocation1 [shape = 'u32[72,128]{1,0:T(1,128)}', space=vmem, size = 0x9000, scoped, tag = 'internal scratch']
  %s0 = inlined_call_operand.vmem [shape: f32[2,2048], index: 0, kind: input, shape index: {}]
  %s1 = inlined_call_operand.vmem [shape: bf16[2048,1024], index: 1, kind: input, shape index: {}]
  %s2 = inlined_call_operand.vmem [shape: f32[1,1024], index: 2, kind: input, shape index: {}]
  %s3 = inlined_call_operand.vmem [shape: bf16[1024,128], index: 3, kind: input, shape index: {}]
  %s4 = inlined_call_operand.vmem [shape: f32[1,128], index: 4, kind: input, shape index: {}]
  %s5 = inlined_call_operand.vmem [shape: f32[2,128], index: 5, kind: output, shape index: {}]
  %s6 = sld [smem:[#allocation0]]
  $region30: #{forward.1} parent=0
    _
  %s8 = ssub.s32 1, %s6
  %s9 = scalar_select 0, %s8, %s6
  // Predicated region
  $region2: #{forward.1} parent=0 // pred_check
    _
  $region3: #{forward.1} parent=0 // pred_check_branch
    %11 = sbr.rel (0) target = $region5
  $region4: #{forward.1} parent=0 // pred_region
    _
  $region5: #{forward.1} parent=0 // pred_fallthru
    _
  // Predicated region
  $region6: #{forward.1} parent=0 // pred_check
    _
  $region7: #{forward.1} parent=0 // pred_check_branch
    %13 = sbr.rel (0) target = $region9
  $region8: #{forward.1} parent=0 // pred_region
    _
  $region9: #{forward.1} parent=0 // pred_fallthru
    _
  // Predicated region
  $region10: #{forward.1} parent=0 // pred_check
    _
  $region11: #{forward.1} parent=0 // pred_check_branch
    %15 = sbr.rel (0) target = $region13
  $region12: #{forward.1} parent=0 // pred_region
    _
  $region13: #{forward.1} parent=0 // pred_fallthru
    _
  // Predicated region
  $region14: #{forward.1} parent=0 // pred_check
    _
  $region15: #{forward.1} parent=0 // pred_check_branch
    %17 = sbr.rel (0) target = $region17
  $region16: #{forward.1} parent=0 // pred_region
    _
  $region17: #{forward.1} parent=0 // pred_fallthru
    _
  // Predicated region
  $region18: #{forward.1} parent=0 // pred_check
    _
  $region19: #{forward.1} parent=0 // pred_check_branch
    %19 = sbr.rel (0) target = $region21
  $region20: #{forward.1} parent=0 // pred_region
    _
  $region21: #{forward.1} parent=0 // pred_fallthru
    _
  %v20 = vld [vmem:[%s0] sm:$0xff]
  %v21 = vld [vmem:[%s0 + $0x8] sm:$0xff]
  %v22 = vld [vmem:[%s0 + $0x10] sm:$0xff]
  %v23 = vld [vmem:[%s0 + $0x18] sm:$0xff]
  %28 = vst [vmem:[#allocation1] ss:$4 sm:$0xff] %v20
  %s29 = scalar_lea.vmem [#allocation1], 32
  %30 = vst [vmem:[%s29] ss:$4 sm:$0xff] %v21
  %v31 = vld.sshfl [vmem:[#allocation1] sm:$0xff pattern:$0x73625140]
  %v32 = vld.sshfl [vmem:[#allocation1 + $0x8] sm:$0xff pattern:$0x73625140]
  %v33 = vld.sshfl [vmem:[#allocation1 + $0x10] sm:$0xff pattern:$0x73625140]
  %v34 = vld.sshfl [vmem:[#allocation1 + $0x18] sm:$0xff pattern:$0x73625140]
  %v35 = vld.sshfl [vmem:[#allocation1 + $0x20] sm:$0xff pattern:$0x73625140]
  %v36 = vld.sshfl [vmem:[#allocation1 + $0x28] sm:$0xff pattern:$0x73625140]
  %v37 = vld.sshfl [vmem:[#allocation1 + $0x30] sm:$0xff pattern:$0x73625140]
  %v38 = vld.sshfl [vmem:[#allocation1 + $0x38] sm:$0xff pattern:$0x73625140]
  %39 = vst [vmem:[#allocation1] ss:$4 sm:$0xff] %v22
  %40 = vst [vmem:[%s29] ss:$4 sm:$0xff] %v23
  %v41 = vld.sshfl [vmem:[#allocation1] sm:$0xff pattern:$0x73625140]
  %v42 = vld.sshfl [vmem:[#allocation1 + $0x8] sm:$0xff pattern:$0x73625140]
  %v43 = vld.sshfl [vmem:[#allocation1 + $0x10] sm:$0xff pattern:$0x73625140]
  %v44 = vld.sshfl [vmem:[#allocation1 + $0x18] sm:$0xff pattern:$0x73625140]
  %v45 = vld.sshfl [vmem:[#allocation1 + $0x20] sm:$0xff pattern:$0x73625140]
  %v46 = vld.sshfl [vmem:[#allocation1 + $0x28] sm:$0xff pattern:$0x73625140]
  %v47 = vld.sshfl [vmem:[#allocation1 + $0x30] sm:$0xff pattern:$0x73625140]
  %v48 = vld.sshfl [vmem:[#allocation1 + $0x38] sm:$0xff pattern:$0x73625140]
  %v65 = vpack.c.bf16 %v31, %v31
  %v66 = vpack.c.bf16 %v32, %v32
  %v67 = vpack.c.bf16 %v33, %v33
  %v68 = vpack.c.bf16 %v34, %v34
  %v69 = vpack.c.bf16 %v35, %v35
  %v70 = vpack.c.bf16 %v36, %v36
  %v71 = vpack.c.bf16 %v37, %v37
  %v72 = vpack.c.bf16 %v38, %v38
  %v73 = vpack.c.bf16 %v41, %v41
  %v74 = vpack.c.bf16 %v42, %v42
  %v75 = vpack.c.bf16 %v43, %v43
  %v76 = vpack.c.bf16 %v44, %v44
  %v77 = vpack.c.bf16 %v45, %v45
  %v78 = vpack.c.bf16 %v46, %v46
  %v79 = vpack.c.bf16 %v47, %v47
  %v80 = vpack.c.bf16 %v48, %v48
  %v81 = vld [vmem:[%s1] sm:$0xff]
  %v82 = vld [vmem:[%s1 + $0x8] sm:$0xff]
  %v83 = vld [vmem:[%s1 + $0x10] sm:$0xff]
  %v84 = vld [vmem:[%s1 + $0x18] sm:$0xff]
  %v85 = vld [vmem:[%s1 + $0x20] sm:$0xff]
  %v86 = vld [vmem:[%s1 + $0x28] sm:$0xff]
  %v87 = vld [vmem:[%s1 + $0x30] sm:$0xff]
  %v88 = vld [vmem:[%s1 + $0x38] sm:$0xff]
  %v89 = vld [vmem:[%s1 + $0x40] sm:$0xff]
  %v90 = vld [vmem:[%s1 + $0x48] sm:$0xff]
  %v91 = vld [vmem:[%s1 + $0x50] sm:$0xff]
  %v92 = vld [vmem:[%s1 + $0x58] sm:$0xff]
  %v93 = vld [vmem:[%s1 + $0x60] sm:$0xff]
  %v94 = vld [vmem:[%s1 + $0x68] sm:$0xff]
  %v95 = vld [vmem:[%s1 + $0x70] sm:$0xff]
  %v96 = vld [vmem:[%s1 + $0x78] sm:$0xff]
  %v97 = vld [vmem:[%s1 + $0x80] sm:$0xff]
  %v98 = vld [vmem:[%s1 + $0x88] sm:$0xff]
  %v99 = vld [vmem:[%s1 + $0x90] sm:$0xff]
  %v100 = vld [vmem:[%s1 + $0x98] sm:$0xff]
  %v101 = vld [vmem:[%s1 + $0xa0] sm:$0xff]
  %v102 = vld [vmem:[%s1 + $0xa8] sm:$0xff]
  %v103 = vld [vmem:[%s1 + $0xb0] sm:$0xff]
  %v104 = vld [vmem:[%s1 + $0xb8] sm:$0xff]
  %v105 = vld [vmem:[%s1 + $0xc0] sm:$0xff]
  %v106 = vld [vmem:[%s1 + $0xc8] sm:$0xff]
  %v107 = vld [vmem:[%s1 + $0xd0] sm:$0xff]
  %v108 = vld [vmem:[%s1 + $0xd8] sm:$0xff]
  %v109 = vld [vmem:[%s1 + $0xe0] sm:$0xff]
  %v110 = vld [vmem:[%s1 + $0xe8] sm:$0xff]
  %v111 = vld [vmem:[%s1 + $0xf0] sm:$0xff]
  %v112 = vld [vmem:[%s1 + $0xf8] sm:$0xff]
  %v113 = vld [vmem:[%s1 + $0x100] sm:$0xff]
  %v114 = vld [vmem:[%s1 + $0x108] sm:$0xff]
  %v115 = vld [vmem:[%s1 + $0x110] sm:$0xff]
  %v116 = vld [vmem:[%s1 + $0x118] sm:$0xff]
  %v117 = vld [vmem:[%s1 + $0x120] sm:$0xff]
  %v118 = vld [vmem:[%s1 + $0x128] sm:$0xff]
  %v119 = vld [vmem:[%s1 + $0x130] sm:$0xff]
  %v120 = vld [vmem:[%s1 + $0x138] sm:$0xff]
  %v121 = vld [vmem:[%s1 + $0x140] sm:$0xff]
  %v122 = vld [vmem:[%s1 + $0x148] sm:$0xff]
  %v123 = vld [vmem:[%s1 + $0x150] sm:$0xff]
  %v124 = vld [vmem:[%s1 + $0x158] sm:$0xff]
  %v125 = vld [vmem:[%s1 + $0x160] sm:$0xff]
  %v126 = vld [vmem:[%s1 + $0x168] sm:$0xff]
  %v127 = vld [vmem:[%s1 + $0x170] sm:$0xff]
  %v128 = vld [vmem:[%s1 + $0x178] sm:$0xff]
  %v129 = vld [vmem:[%s1 + $0x180] sm:$0xff]
  %v130 = vld [vmem:[%s1 + $0x188] sm:$0xff]
  %v131 = vld [vmem:[%s1 + $0x190] sm:$0xff]
  %v132 = vld [vmem:[%s1 + $0x198] sm:$0xff]
  %v133 = vld [vmem:[%s1 + $0x1a0] sm:$0xff]
  %v134 = vld [vmem:[%s1 + $0x1a8] sm:$0xff]
  %v135 = vld [vmem:[%s1 + $0x1b0] sm:$0xff]
  %v136 = vld [vmem:[%s1 + $0x1b8] sm:$0xff]
  %v137 = vld [vmem:[%s1 + $0x1c0] sm:$0xff]
  %v138 = vld [vmem:[%s1 + $0x1c8] sm:$0xff]
  %v139 = vld [vmem:[%s1 + $0x1d0] sm:$0xff]
  %v140 = vld [vmem:[%s1 + $0x1d8] sm:$0xff]
  %v141 = vld [vmem:[%s1 + $0x1e0] sm:$0xff]
  %v142 = vld [vmem:[%s1 + $0x1e8] sm:$0xff]
  %v143 = vld [vmem:[%s1 + $0x1f0] sm:$0xff]
  %v144 = vld [vmem:[%s1 + $0x1f8] sm:$0xff]
  %v145 = vld [vmem:[%s1 + $0x200] sm:$0xff]
  %v146 = vld [vmem:[%s1 + $0x208] sm:$0xff]
  %v147 = vld [vmem:[%s1 + $0x210] sm:$0xff]
  %v148 = vld [vmem:[%s1 + $0x218] sm:$0xff]
  %v149 = vld [vmem:[%s1 + $0x220] sm:$0xff]
  %v150 = vld [vmem:[%s1 + $0x228] sm:$0xff]
  %v151 = vld [vmem:[%s1 + $0x230] sm:$0xff]
  %v152 = vld [vmem:[%s1 + $0x238] sm:$0xff]
  %v153 = vld [vmem:[%s1 + $0x240] sm:$0xff]
  %v154 = vld [vmem:[%s1 + $0x248] sm:$0xff]
  %v155 = vld [vmem:[%s1 + $0x250] sm:$0xff]
  %v156 = vld [vmem:[%s1 + $0x258] sm:$0xff]
  %v157 = vld [vmem:[%s1 + $0x260] sm:$0xff]
  %v158 = vld [vmem:[%s1 + $0x268] sm:$0xff]
  %v159 = vld [vmem:[%s1 + $0x270] sm:$0xff]
  %v160 = vld [vmem:[%s1 + $0x278] sm:$0xff]
  %v161 = vld [vmem:[%s1 + $0x280] sm:$0xff]
  %v162 = vld [vmem:[%s1 + $0x288] sm:$0xff]
  %v163 = vld [vmem:[%s1 + $0x290] sm:$0xff]
  %v164 = vld [vmem:[%s1 + $0x298] sm:$0xff]
  %v165 = vld [vmem:[%s1 + $0x2a0] sm:$0xff]
  %v166 = vld [vmem:[%s1 + $0x2a8] sm:$0xff]
  %v167 = vld [vmem:[%s1 + $0x2b0] sm:$0xff]
  %v168 = vld [vmem:[%s1 + $0x2b8] sm:$0xff]
  %v169 = vld [vmem:[%s1 + $0x2c0] sm:$0xff]
  %v170 = vld [vmem:[%s1 + $0x2c8] sm:$0xff]
  %v171 = vld [vmem:[%s1 + $0x2d0] sm:$0xff]
  %v172 = vld [vmem:[%s1 + $0x2d8] sm:$0xff]
  %v173 = vld [vmem:[%s1 + $0x2e0] sm:$0xff]
  %v174 = vld [vmem:[%s1 + $0x2e8] sm:$0xff]
  %v175 = vld [vmem:[%s1 + $0x2f0] sm:$0xff]
  %v176 = vld [vmem:[%s1 + $0x2f8] sm:$0xff]
  %v177 = vld [vmem:[%s1 + $0x300] sm:$0xff]
  %v178 = vld [vmem:[%s1 + $0x308] sm:$0xff]
  %v179 = vld [vmem:[%s1 + $0x310] sm:$0xff]
  %v180 = vld [vmem:[%s1 + $0x318] sm:$0xff]
  %v181 = vld [vmem:[%s1 + $0x320] sm:$0xff]
  %v182 = vld [vmem:[%s1 + $0x328] sm:$0xff]
  %v183 = vld [vmem:[%s1 + $0x330] sm:$0xff]
  %v184 = vld [vmem:[%s1 + $0x338] sm:$0xff]
  %v185 = vld [vmem:[%s1 + $0x340] sm:$0xff]
  %v186 = vld [vmem:[%s1 + $0x348] sm:$0xff]
  %v187 = vld [vmem:[%s1 + $0x350] sm:$0xff]
  %v188 = vld [vmem:[%s1 + $0x358] sm:$0xff]
  %v189 = vld [vmem:[%s1 + $0x360] sm:$0xff]
  %v190 = vld [vmem:[%s1 + $0x368] sm:$0xff]
  %v191 = vld [vmem:[%s1 + $0x370] sm:$0xff]
  %v192 = vld [vmem:[%s1 + $0x378] sm:$0xff]
  %v193 = vld [vmem:[%s1 + $0x380] sm:$0xff]
  %v194 = vld [vmem:[%s1 + $0x388] sm:$0xff]
  %v195 = vld [vmem:[%s1 + $0x390] sm:$0xff]
  %v196 = vld [vmem:[%s1 + $0x398] sm:$0xff]
  %v197 = vld [vmem:[%s1 + $0x3a0] sm:$0xff]
  %v198 = vld [vmem:[%s1 + $0x3a8] sm:$0xff]
  %v199 = vld [vmem:[%s1 + $0x3b0] sm:$0xff]
  %v200 = vld [vmem:[%s1 + $0x3b8] sm:$0xff]
  %v201 = vld [vmem:[%s1 + $0x3c0] sm:$0xff]
  %v202 = vld [vmem:[%s1 + $0x3c8] sm:$0xff]
  %v203 = vld [vmem:[%s1 + $0x3d0] sm:$0xff]
  %v204 = vld [vmem:[%s1 + $0x3d8] sm:$0xff]
  %v205 = vld [vmem:[%s1 + $0x3e0] sm:$0xff]
  %v206 = vld [vmem:[%s1 + $0x3e8] sm:$0xff]
  %v207 = vld [vmem:[%s1 + $0x3f0] sm:$0xff]
  %v208 = vld [vmem:[%s1 + $0x3f8] sm:$0xff]
  %v209 = vld [vmem:[%s1 + $0x400] sm:$0xff]
  %v210 = vld [vmem:[%s1 + $0x408] sm:$0xff]
  %v211 = vld [vmem:[%s1 + $0x410] sm:$0xff]
  %v212 = vld [vmem:[%s1 + $0x418] sm:$0xff]
  %v213 = vld [vmem:[%s1 + $0x420] sm:$0xff]
  %v214 = vld [vmem:[%s1 + $0x428] sm:$0xff]
  %v215 = vld [vmem:[%s1 + $0x430] sm:$0xff]
  %v216 = vld [vmem:[%s1 + $0x438] sm:$0xff]
  %v217 = vld [vmem:[%s1 + $0x440] sm:$0xff]
  %v218 = vld [vmem:[%s1 + $0x448] sm:$0xff]
  %v219 = vld [vmem:[%s1 + $0x450] sm:$0xff]
  %v220 = vld [vmem:[%s1 + $0x458] sm:$0xff]
  %v221 = vld [vmem:[%s1 + $0x460] sm:$0xff]
  %v222 = vld [vmem:[%s1 + $0x468] sm:$0xff]
  %v223 = vld [vmem:[%s1 + $0x470] sm:$0xff]
  %v224 = vld [vmem:[%s1 + $0x478] sm:$0xff]
  %v225 = vld [vmem:[%s1 + $0x480] sm:$0xff]
  %v226 = vld [vmem:[%s1 + $0x488] sm:$0xff]
  %v227 = vld [vmem:[%s1 + $0x490] sm:$0xff]
  %v228 = vld [vmem:[%s1 + $0x498] sm:$0xff]
  %v229 = vld [vmem:[%s1 + $0x4a0] sm:$0xff]
  %v230 = vld [vmem:[%s1 + $0x4a8] sm:$0xff]
  %v231 = vld [vmem:[%s1 + $0x4b0] sm:$0xff]
  %v232 = vld [vmem:[%s1 + $0x4b8] sm:$0xff]
  %v233 = vld [vmem:[%s1 + $0x4c0] sm:$0xff]
  %v234 = vld [vmem:[%s1 + $0x4c8] sm:$0xff]
  %v235 = vld [vmem:[%s1 + $0x4d0] sm:$0xff]
  %v236 = vld [vmem:[%s1 + $0x4d8] sm:$0xff]
  %v237 = vld [vmem:[%s1 + $0x4e0] sm:$0xff]
  %v238 = vld [vmem:[%s1 + $0x4e8] sm:$0xff]
  %v239 = vld [vmem:[%s1 + $0x4f0] sm:$0xff]
  %v240 = vld [vmem:[%s1 + $0x4f8] sm:$0xff]
  %v241 = vld [vmem:[%s1 + $0x500] sm:$0xff]
  %v242 = vld [vmem:[%s1 + $0x508] sm:$0xff]
  %v243 = vld [vmem:[%s1 + $0x510] sm:$0xff]
  %v244 = vld [vmem:[%s1 + $0x518] sm:$0xff]
  %v245 = vld [vmem:[%s1 + $0x520] sm:$0xff]
  %v246 = vld [vmem:[%s1 + $0x528] sm:$0xff]
  %v247 = vld [vmem:[%s1 + $0x530] sm:$0xff]
  %v248 = vld [vmem:[%s1 + $0x538] sm:$0xff]
  %v249 = vld [vmem:[%s1 + $0x540] sm:$0xff]
  %v250 = vld [vmem:[%s1 + $0x548] sm:$0xff]
  %v251 = vld [vmem:[%s1 + $0x550] sm:$0xff]
  %v252 = vld [vmem:[%s1 + $0x558] sm:$0xff]
  %v253 = vld [vmem:[%s1 + $0x560] sm:$0xff]
  %v254 = vld [vmem:[%s1 + $0x568] sm:$0xff]
  %v255 = vld [vmem:[%s1 + $0x570] sm:$0xff]
  %v256 = vld [vmem:[%s1 + $0x578] sm:$0xff]
  %v257 = vld [vmem:[%s1 + $0x580] sm:$0xff]
  %v258 = vld [vmem:[%s1 + $0x588] sm:$0xff]
  %v259 = vld [vmem:[%s1 + $0x590] sm:$0xff]
  %v260 = vld [vmem:[%s1 + $0x598] sm:$0xff]
  %v261 = vld [vmem:[%s1 + $0x5a0] sm:$0xff]
  %v262 = vld [vmem:[%s1 + $0x5a8] sm:$0xff]
  %v263 = vld [vmem:[%s1 + $0x5b0] sm:$0xff]
  %v264 = vld [vmem:[%s1 + $0x5b8] sm:$0xff]
  %v265 = vld [vmem:[%s1 + $0x5c0] sm:$0xff]
  %v266 = vld [vmem:[%s1 + $0x5c8] sm:$0xff]
  %v267 = vld [vmem:[%s1 + $0x5d0] sm:$0xff]
  %v268 = vld [vmem:[%s1 + $0x5d8] sm:$0xff]
  %v269 = vld [vmem:[%s1 + $0x5e0] sm:$0xff]
  %v270 = vld [vmem:[%s1 + $0x5e8] sm:$0xff]
  %v271 = vld [vmem:[%s1 + $0x5f0] sm:$0xff]
  %v272 = vld [vmem:[%s1 + $0x5f8] sm:$0xff]
  %v273 = vld [vmem:[%s1 + $0x600] sm:$0xff]
  %v274 = vld [vmem:[%s1 + $0x608] sm:$0xff]
  %v275 = vld [vmem:[%s1 + $0x610] sm:$0xff]
  %v276 = vld [vmem:[%s1 + $0x618] sm:$0xff]
  %v277 = vld [vmem:[%s1 + $0x620] sm:$0xff]
  %v278 = vld [vmem:[%s1 + $0x628] sm:$0xff]
  %v279 = vld [vmem:[%s1 + $0x630] sm:$0xff]
  %v280 = vld [vmem:[%s1 + $0x638] sm:$0xff]
  %v281 = vld [vmem:[%s1 + $0x640] sm:$0xff]
  %v282 = vld [vmem:[%s1 + $0x648] sm:$0xff]
  %v283 = vld [vmem:[%s1 + $0x650] sm:$0xff]
  %v284 = vld [vmem:[%s1 + $0x658] sm:$0xff]
  %v285 = vld [vmem:[%s1 + $0x660] sm:$0xff]
  %v286 = vld [vmem:[%s1 + $0x668] sm:$0xff]
  %v287 = vld [vmem:[%s1 + $0x670] sm:$0xff]
  %v288 = vld [vmem:[%s1 + $0x678] sm:$0xff]
  %v289 = vld [vmem:[%s1 + $0x680] sm:$0xff]
  %v290 = vld [vmem:[%s1 + $0x688] sm:$0xff]
  %v291 = vld [vmem:[%s1 + $0x690] sm:$0xff]
  %v292 = vld [vmem:[%s1 + $0x698] sm:$0xff]
  %v293 = vld [vmem:[%s1 + $0x6a0] sm:$0xff]
  %v294 = vld [vmem:[%s1 + $0x6a8] sm:$0xff]
  %v295 = vld [vmem:[%s1 + $0x6b0] sm:$0xff]
  %v296 = vld [vmem:[%s1 + $0x6b8] sm:$0xff]
  %v297 = vld [vmem:[%s1 + $0x6c0] sm:$0xff]
  %v298 = vld [vmem:[%s1 + $0x6c8] sm:$0xff]
  %v299 = vld [vmem:[%s1 + $0x6d0] sm:$0xff]
  %v300 = vld [vmem:[%s1 + $0x6d8] sm:$0xff]
  %v301 = vld [vmem:[%s1 + $0x6e0] sm:$0xff]
  %v302 = vld [vmem:[%s1 + $0x6e8] sm:$0xff]
  %v303 = vld [vmem:[%s1 + $0x6f0] sm:$0xff]
  %v304 = vld [vmem:[%s1 + $0x6f8] sm:$0xff]
  %v305 = vld [vmem:[%s1 + $0x700] sm:$0xff]
  %v306 = vld [vmem:[%s1 + $0x708] sm:$0xff]
  %v307 = vld [vmem:[%s1 + $0x710] sm:$0xff]
  %v308 = vld [vmem:[%s1 + $0x718] sm:$0xff]
  %v309 = vld [vmem:[%s1 + $0x720] sm:$0xff]
  %v310 = vld [vmem:[%s1 + $0x728] sm:$0xff]
  %v311 = vld [vmem:[%s1 + $0x730] sm:$0xff]
  %v312 = vld [vmem:[%s1 + $0x738] sm:$0xff]
  %v313 = vld [vmem:[%s1 + $0x740] sm:$0xff]
  %v314 = vld [vmem:[%s1 + $0x748] sm:$0xff]
  %v315 = vld [vmem:[%s1 + $0x750] sm:$0xff]
  %v316 = vld [vmem:[%s1 + $0x758] sm:$0xff]
  %v317 = vld [vmem:[%s1 + $0x760] sm:$0xff]
  %v318 = vld [vmem:[%s1 + $0x768] sm:$0xff]
  %v319 = vld [vmem:[%s1 + $0x770] sm:$0xff]
  %v320 = vld [vmem:[%s1 + $0x778] sm:$0xff]
  %v321 = vld [vmem:[%s1 + $0x780] sm:$0xff]
  %v322 = vld [vmem:[%s1 + $0x788] sm:$0xff]
  %v323 = vld [vmem:[%s1 + $0x790] sm:$0xff]
  %v324 = vld [vmem:[%s1 + $0x798] sm:$0xff]
  %v325 = vld [vmem:[%s1 + $0x7a0] sm:$0xff]
  %v326 = vld [vmem:[%s1 + $0x7a8] sm:$0xff]
  %v327 = vld [vmem:[%s1 + $0x7b0] sm:$0xff]
  %v328 = vld [vmem:[%s1 + $0x7b8] sm:$0xff]
  %v329 = vld [vmem:[%s1 + $0x7c0] sm:$0xff]
  %v330 = vld [vmem:[%s1 + $0x7c8] sm:$0xff]
  %v331 = vld [vmem:[%s1 + $0x7d0] sm:$0xff]
  %v332 = vld [vmem:[%s1 + $0x7d8] sm:$0xff]
  %v333 = vld [vmem:[%s1 + $0x7e0] sm:$0xff]
  %v334 = vld [vmem:[%s1 + $0x7e8] sm:$0xff]
  %v335 = vld [vmem:[%s1 + $0x7f0] sm:$0xff]
  %v336 = vld [vmem:[%s1 + $0x7f8] sm:$0xff]
  %v337 = vld [vmem:[%s1 + $0x800] sm:$0xff]
  %v338 = vld [vmem:[%s1 + $0x808] sm:$0xff]
  %v339 = vld [vmem:[%s1 + $0x810] sm:$0xff]
  %v340 = vld [vmem:[%s1 + $0x818] sm:$0xff]
  %v341 = vld [vmem:[%s1 + $0x820] sm:$0xff]
  %v342 = vld [vmem:[%s1 + $0x828] sm:$0xff]
  %v343 = vld [vmem:[%s1 + $0x830] sm:$0xff]
  %v344 = vld [vmem:[%s1 + $0x838] sm:$0xff]
  %v345 = vld [vmem:[%s1 + $0x840] sm:$0xff]
  %v346 = vld [vmem:[%s1 + $0x848] sm:$0xff]
  %v347 = vld [vmem:[%s1 + $0x850] sm:$0xff]
  %v348 = vld [vmem:[%s1 + $0x858] sm:$0xff]
  %v349 = vld [vmem:[%s1 + $0x860] sm:$0xff]
  %v350 = vld [vmem:[%s1 + $0x868] sm:$0xff]
  %v351 = vld [vmem:[%s1 + $0x870] sm:$0xff]
  %v352 = vld [vmem:[%s1 + $0x878] sm:$0xff]
  %v353 = vld [vmem:[%s1 + $0x880] sm:$0xff]
  %v354 = vld [vmem:[%s1 + $0x888] sm:$0xff]
  %v355 = vld [vmem:[%s1 + $0x890] sm:$0xff]
  %v356 = vld [vmem:[%s1 + $0x898] sm:$0xff]
  %v357 = vld [vmem:[%s1 + $0x8a0] sm:$0xff]
  %v358 = vld [vmem:[%s1 + $0x8a8] sm:$0xff]
  %v359 = vld [vmem:[%s1 + $0x8b0] sm:$0xff]
  %v360 = vld [vmem:[%s1 + $0x8b8] sm:$0xff]
  %v361 = vld [vmem:[%s1 + $0x8c0] sm:$0xff]
  %v362 = vld [vmem:[%s1 + $0x8c8] sm:$0xff]
  %v363 = vld [vmem:[%s1 + $0x8d0] sm:$0xff]
  %v364 = vld [vmem:[%s1 + $0x8d8] sm:$0xff]
  %v365 = vld [vmem:[%s1 + $0x8e0] sm:$0xff]
  %v366 = vld [vmem:[%s1 + $0x8e8] sm:$0xff]
  %v367 = vld [vmem:[%s1 + $0x8f0] sm:$0xff]
  %v368 = vld [vmem:[%s1 + $0x8f8] sm:$0xff]
  %v369 = vld [vmem:[%s1 + $0x900] sm:$0xff]
  %v370 = vld [vmem:[%s1 + $0x908] sm:$0xff]
  %v371 = vld [vmem:[%s1 + $0x910] sm:$0xff]
  %v372 = vld [vmem:[%s1 + $0x918] sm:$0xff]
  %v373 = vld [vmem:[%s1 + $0x920] sm:$0xff]
  %v374 = vld [vmem:[%s1 + $0x928] sm:$0xff]
  %v375 = vld [vmem:[%s1 + $0x930] sm:$0xff]
  %v376 = vld [vmem:[%s1 + $0x938] sm:$0xff]
  %v377 = vld [vmem:[%s1 + $0x940] sm:$0xff]
  %v378 = vld [vmem:[%s1 + $0x948] sm:$0xff]
  %v379 = vld [vmem:[%s1 + $0x950] sm:$0xff]
  %v380 = vld [vmem:[%s1 + $0x958] sm:$0xff]
  %v381 = vld [vmem:[%s1 + $0x960] sm:$0xff]
  %v382 = vld [vmem:[%s1 + $0x968] sm:$0xff]
  %v383 = vld [vmem:[%s1 + $0x970] sm:$0xff]
  %v384 = vld [vmem:[%s1 + $0x978] sm:$0xff]
  %v385 = vld [vmem:[%s1 + $0x980] sm:$0xff]
  %v386 = vld [vmem:[%s1 + $0x988] sm:$0xff]
  %v387 = vld [vmem:[%s1 + $0x990] sm:$0xff]
  %v388 = vld [vmem:[%s1 + $0x998] sm:$0xff]
  %v389 = vld [vmem:[%s1 + $0x9a0] sm:$0xff]
  %v390 = vld [vmem:[%s1 + $0x9a8] sm:$0xff]
  %v391 = vld [vmem:[%s1 + $0x9b0] sm:$0xff]
  %v392 = vld [vmem:[%s1 + $0x9b8] sm:$0xff]
  %v393 = vld [vmem:[%s1 + $0x9c0] sm:$0xff]
  %v394 = vld [vmem:[%s1 + $0x9c8] sm:$0xff]
  %v395 = vld [vmem:[%s1 + $0x9d0] sm:$0xff]
  %v396 = vld [vmem:[%s1 + $0x9d8] sm:$0xff]
  %v397 = vld [vmem:[%s1 + $0x9e0] sm:$0xff]
  %v398 = vld [vmem:[%s1 + $0x9e8] sm:$0xff]
  %v399 = vld [vmem:[%s1 + $0x9f0] sm:$0xff]
  %v400 = vld [vmem:[%s1 + $0x9f8] sm:$0xff]
  %v401 = vld [vmem:[%s1 + $0xa00] sm:$0xff]
  %v402 = vld [vmem:[%s1 + $0xa08] sm:$0xff]
  %v403 = vld [vmem:[%s1 + $0xa10] sm:$0xff]
  %v404 = vld [vmem:[%s1 + $0xa18] sm:$0xff]
  %v405 = vld [vmem:[%s1 + $0xa20] sm:$0xff]
  %v406 = vld [vmem:[%s1 + $0xa28] sm:$0xff]
  %v407 = vld [vmem:[%s1 + $0xa30] sm:$0xff]
  %v408 = vld [vmem:[%s1 + $0xa38] sm:$0xff]
  %v409 = vld [vmem:[%s1 + $0xa40] sm:$0xff]
  %v410 = vld [vmem:[%s1 + $0xa48] sm:$0xff]
  %v411 = vld [vmem:[%s1 + $0xa50] sm:$0xff]
  %v412 = vld [vmem:[%s1 + $0xa58] sm:$0xff]
  %v413 = vld [vmem:[%s1 + $0xa60] sm:$0xff]
  %v414 = vld [vmem:[%s1 + $0xa68] sm:$0xff]
  %v415 = vld [vmem:[%s1 + $0xa70] sm:$0xff]
  %v416 = vld [vmem:[%s1 + $0xa78] sm:$0xff]
  %v417 = vld [vmem:[%s1 + $0xa80] sm:$0xff]
  %v418 = vld [vmem:[%s1 + $0xa88] sm:$0xff]
  %v419 = vld [vmem:[%s1 + $0xa90] sm:$0xff]
  %v420 = vld [vmem:[%s1 + $0xa98] sm:$0xff]
  %v421 = vld [vmem:[%s1 + $0xaa0] sm:$0xff]
  %v422 = vld [vmem:[%s1 + $0xaa8] sm:$0xff]
  %v423 = vld [vmem:[%s1 + $0xab0] sm:$0xff]
  %v424 = vld [vmem:[%s1 + $0xab8] sm:$0xff]
  %v425 = vld [vmem:[%s1 + $0xac0] sm:$0xff]
  %v426 = vld [vmem:[%s1 + $0xac8] sm:$0xff]
  %v427 = vld [vmem:[%s1 + $0xad0] sm:$0xff]
  %v428 = vld [vmem:[%s1 + $0xad8] sm:$0xff]
  %v429 = vld [vmem:[%s1 + $0xae0] sm:$0xff]
  %v430 = vld [vmem:[%s1 + $0xae8] sm:$0xff]
  %v431 = vld [vmem:[%s1 + $0xaf0] sm:$0xff]
  %v432 = vld [vmem:[%s1 + $0xaf8] sm:$0xff]
  %v433 = vld [vmem:[%s1 + $0xb00] sm:$0xff]
  %v434 = vld [vmem:[%s1 + $0xb08] sm:$0xff]
  %v435 = vld [vmem:[%s1 + $0xb10] sm:$0xff]
  %v436 = vld [vmem:[%s1 + $0xb18] sm:$0xff]
  %v437 = vld [vmem:[%s1 + $0xb20] sm:$0xff]
  %v438 = vld [vmem:[%s1 + $0xb28] sm:$0xff]
  %v439 = vld [vmem:[%s1 + $0xb30] sm:$0xff]
  %v440 = vld [vmem:[%s1 + $0xb38] sm:$0xff]
  %v441 = vld [vmem:[%s1 + $0xb40] sm:$0xff]
  %v442 = vld [vmem:[%s1 + $0xb48] sm:$0xff]
  %v443 = vld [vmem:[%s1 + $0xb50] sm:$0xff]
  %v444 = vld [vmem:[%s1 + $0xb58] sm:$0xff]
  %v445 = vld [vmem:[%s1 + $0xb60] sm:$0xff]
  %v446 = vld [vmem:[%s1 + $0xb68] sm:$0xff]
  %v447 = vld [vmem:[%s1 + $0xb70] sm:$0xff]
  %v448 = vld [vmem:[%s1 + $0xb78] sm:$0xff]
  %v449 = vld [vmem:[%s1 + $0xb80] sm:$0xff]
  %v450 = vld [vmem:[%s1 + $0xb88] sm:$0xff]
  %v451 = vld [vmem:[%s1 + $0xb90] sm:$0xff]
  %v452 = vld [vmem:[%s1 + $0xb98] sm:$0xff]
  %v453 = vld [vmem:[%s1 + $0xba0] sm:$0xff]
  %v454 = vld [vmem:[%s1 + $0xba8] sm:$0xff]
  %v455 = vld [vmem:[%s1 + $0xbb0] sm:$0xff]
  %v456 = vld [vmem:[%s1 + $0xbb8] sm:$0xff]
  %v457 = vld [vmem:[%s1 + $0xbc0] sm:$0xff]
  %v458 = vld [vmem:[%s1 + $0xbc8] sm:$0xff]
  %v459 = vld [vmem:[%s1 + $0xbd0] sm:$0xff]
  %v460 = vld [vmem:[%s1 + $0xbd8] sm:$0xff]
  %v461 = vld [vmem:[%s1 + $0xbe0] sm:$0xff]
  %v462 = vld [vmem:[%s1 + $0xbe8] sm:$0xff]
  %v463 = vld [vmem:[%s1 + $0xbf0] sm:$0xff]
  %v464 = vld [vmem:[%s1 + $0xbf8] sm:$0xff]
  %v465 = vld [vmem:[%s1 + $0xc00] sm:$0xff]
  %v466 = vld [vmem:[%s1 + $0xc08] sm:$0xff]
  %v467 = vld [vmem:[%s1 + $0xc10] sm:$0xff]
  %v468 = vld [vmem:[%s1 + $0xc18] sm:$0xff]
  %v469 = vld [vmem:[%s1 + $0xc20] sm:$0xff]
  %v470 = vld [vmem:[%s1 + $0xc28] sm:$0xff]
  %v471 = vld [vmem:[%s1 + $0xc30] sm:$0xff]
  %v472 = vld [vmem:[%s1 + $0xc38] sm:$0xff]
  %v473 = vld [vmem:[%s1 + $0xc40] sm:$0xff]
  %v474 = vld [vmem:[%s1 + $0xc48] sm:$0xff]
  %v475 = vld [vmem:[%s1 + $0xc50] sm:$0xff]
  %v476 = vld [vmem:[%s1 + $0xc58] sm:$0xff]
  %v477 = vld [vmem:[%s1 + $0xc60] sm:$0xff]
  %v478 = vld [vmem:[%s1 + $0xc68] sm:$0xff]
  %v479 = vld [vmem:[%s1 + $0xc70] sm:$0xff]
  %v480 = vld [vmem:[%s1 + $0xc78] sm:$0xff]
  %v481 = vld [vmem:[%s1 + $0xc80] sm:$0xff]
  %v482 = vld [vmem:[%s1 + $0xc88] sm:$0xff]
  %v483 = vld [vmem:[%s1 + $0xc90] sm:$0xff]
  %v484 = vld [vmem:[%s1 + $0xc98] sm:$0xff]
  %v485 = vld [vmem:[%s1 + $0xca0] sm:$0xff]
  %v486 = vld [vmem:[%s1 + $0xca8] sm:$0xff]
  %v487 = vld [vmem:[%s1 + $0xcb0] sm:$0xff]
  %v488 = vld [vmem:[%s1 + $0xcb8] sm:$0xff]
  %v489 = vld [vmem:[%s1 + $0xcc0] sm:$0xff]
  %v490 = vld [vmem:[%s1 + $0xcc8] sm:$0xff]
  %v491 = vld [vmem:[%s1 + $0xcd0] sm:$0xff]
  %v492 = vld [vmem:[%s1 + $0xcd8] sm:$0xff]
  %v493 = vld [vmem:[%s1 + $0xce0] sm:$0xff]
  %v494 = vld [vmem:[%s1 + $0xce8] sm:$0xff]
  %v495 = vld [vmem:[%s1 + $0xcf0] sm:$0xff]
  %v496 = vld [vmem:[%s1 + $0xcf8] sm:$0xff]
  %v497 = vld [vmem:[%s1 + $0xd00] sm:$0xff]
  %v498 = vld [vmem:[%s1 + $0xd08] sm:$0xff]
  %v499 = vld [vmem:[%s1 + $0xd10] sm:$0xff]
  %v500 = vld [vmem:[%s1 + $0xd18] sm:$0xff]
  %v501 = vld [vmem:[%s1 + $0xd20] sm:$0xff]
  %v502 = vld [vmem:[%s1 + $0xd28] sm:$0xff]
  %v503 = vld [vmem:[%s1 + $0xd30] sm:$0xff]
  %v504 = vld [vmem:[%s1 + $0xd38] sm:$0xff]
  %v505 = vld [vmem:[%s1 + $0xd40] sm:$0xff]
  %v506 = vld [vmem:[%s1 + $0xd48] sm:$0xff]
  %v507 = vld [vmem:[%s1 + $0xd50] sm:$0xff]
  %v508 = vld [vmem:[%s1 + $0xd58] sm:$0xff]
  %v509 = vld [vmem:[%s1 + $0xd60] sm:$0xff]
  %v510 = vld [vmem:[%s1 + $0xd68] sm:$0xff]
  %v511 = vld [vmem:[%s1 + $0xd70] sm:$0xff]
  %v512 = vld [vmem:[%s1 + $0xd78] sm:$0xff]
  %v513 = vld [vmem:[%s1 + $0xd80] sm:$0xff]
  %v514 = vld [vmem:[%s1 + $0xd88] sm:$0xff]
  %v515 = vld [vmem:[%s1 + $0xd90] sm:$0xff]
  %v516 = vld [vmem:[%s1 + $0xd98] sm:$0xff]
  %v517 = vld [vmem:[%s1 + $0xda0] sm:$0xff]
  %v518 = vld [vmem:[%s1 + $0xda8] sm:$0xff]
  %v519 = vld [vmem:[%s1 + $0xdb0] sm:$0xff]
  %v520 = vld [vmem:[%s1 + $0xdb8] sm:$0xff]
  %v521 = vld [vmem:[%s1 + $0xdc0] sm:$0xff]
  %v522 = vld [vmem:[%s1 + $0xdc8] sm:$0xff]
  %v523 = vld [vmem:[%s1 + $0xdd0] sm:$0xff]
  %v524 = vld [vmem:[%s1 + $0xdd8] sm:$0xff]
  %v525 = vld [vmem:[%s1 + $0xde0] sm:$0xff]
  %v526 = vld [vmem:[%s1 + $0xde8] sm:$0xff]
  %v527 = vld [vmem:[%s1 + $0xdf0] sm:$0xff]
  %v528 = vld [vmem:[%s1 + $0xdf8] sm:$0xff]
  %v529 = vld [vmem:[%s1 + $0xe00] sm:$0xff]
  %v530 = vld [vmem:[%s1 + $0xe08] sm:$0xff]
  %v531 = vld [vmem:[%s1 + $0xe10] sm:$0xff]
  %v532 = vld [vmem:[%s1 + $0xe18] sm:$0xff]
  %v533 = vld [vmem:[%s1 + $0xe20] sm:$0xff]
  %v534 = vld [vmem:[%s1 + $0xe28] sm:$0xff]
  %v535 = vld [vmem:[%s1 + $0xe30] sm:$0xff]
  %v536 = vld [vmem:[%s1 + $0xe38] sm:$0xff]
  %v537 = vld [vmem:[%s1 + $0xe40] sm:$0xff]
  %v538 = vld [vmem:[%s1 + $0xe48] sm:$0xff]
  %v539 = vld [vmem:[%s1 + $0xe50] sm:$0xff]
  %v540 = vld [vmem:[%s1 + $0xe58] sm:$0xff]
  %v541 = vld [vmem:[%s1 + $0xe60] sm:$0xff]
  %v542 = vld [vmem:[%s1 + $0xe68] sm:$0xff]
  %v543 = vld [vmem:[%s1 + $0xe70] sm:$0xff]
  %v544 = vld [vmem:[%s1 + $0xe78] sm:$0xff]
  %v545 = vld [vmem:[%s1 + $0xe80] sm:$0xff]
  %v546 = vld [vmem:[%s1 + $0xe88] sm:$0xff]
  %v547 = vld [vmem:[%s1 + $0xe90] sm:$0xff]
  %v548 = vld [vmem:[%s1 + $0xe98] sm:$0xff]
  %v549 = vld [vmem:[%s1 + $0xea0] sm:$0xff]
  %v550 = vld [vmem:[%s1 + $0xea8] sm:$0xff]
  %v551 = vld [vmem:[%s1 + $0xeb0] sm:$0xff]
  %v552 = vld [vmem:[%s1 + $0xeb8] sm:$0xff]
  %v553 = vld [vmem:[%s1 + $0xec0] sm:$0xff]
  %v554 = vld [vmem:[%s1 + $0xec8] sm:$0xff]
  %v555 = vld [vmem:[%s1 + $0xed0] sm:$0xff]
  %v556 = vld [vmem:[%s1 + $0xed8] sm:$0xff]
  %v557 = vld [vmem:[%s1 + $0xee0] sm:$0xff]
  %v558 = vld [vmem:[%s1 + $0xee8] sm:$0xff]
  %v559 = vld [vmem:[%s1 + $0xef0] sm:$0xff]
  %v560 = vld [vmem:[%s1 + $0xef8] sm:$0xff]
  %v561 = vld [vmem:[%s1 + $0xf00] sm:$0xff]
  %v562 = vld [vmem:[%s1 + $0xf08] sm:$0xff]
  %v563 = vld [vmem:[%s1 + $0xf10] sm:$0xff]
  %v564 = vld [vmem:[%s1 + $0xf18] sm:$0xff]
  %v565 = vld [vmem:[%s1 + $0xf20] sm:$0xff]
  %v566 = vld [vmem:[%s1 + $0xf28] sm:$0xff]
  %v567 = vld [vmem:[%s1 + $0xf30] sm:$0xff]
  %v568 = vld [vmem:[%s1 + $0xf38] sm:$0xff]
  %v569 = vld [vmem:[%s1 + $0xf40] sm:$0xff]
  %v570 = vld [vmem:[%s1 + $0xf48] sm:$0xff]
  %v571 = vld [vmem:[%s1 + $0xf50] sm:$0xff]
  %v572 = vld [vmem:[%s1 + $0xf58] sm:$0xff]
  %v573 = vld [vmem:[%s1 + $0xf60] sm:$0xff]
  %v574 = vld [vmem:[%s1 + $0xf68] sm:$0xff]
  %v575 = vld [vmem:[%s1 + $0xf70] sm:$0xff]
  %v576 = vld [vmem:[%s1 + $0xf78] sm:$0xff]
  %v577 = vld [vmem:[%s1 + $0xf80] sm:$0xff]
  %v578 = vld [vmem:[%s1 + $0xf88] sm:$0xff]
  %v579 = vld [vmem:[%s1 + $0xf90] sm:$0xff]
  %v580 = vld [vmem:[%s1 + $0xf98] sm:$0xff]
  %v581 = vld [vmem:[%s1 + $0xfa0] sm:$0xff]
  %v582 = vld [vmem:[%s1 + $0xfa8] sm:$0xff]
  %v583 = vld [vmem:[%s1 + $0xfb0] sm:$0xff]
  %v584 = vld [vmem:[%s1 + $0xfb8] sm:$0xff]
  %v585 = vld [vmem:[%s1 + $0xfc0] sm:$0xff]
  %v586 = vld [vmem:[%s1 + $0xfc8] sm:$0xff]
  %v587 = vld [vmem:[%s1 + $0xfd0] sm:$0xff]
  %v588 = vld [vmem:[%s1 + $0xfd8] sm:$0xff]
  %v589 = vld [vmem:[%s1 + $0xfe0] sm:$0xff]
  %v590 = vld [vmem:[%s1 + $0xfe8] sm:$0xff]
  %v591 = vld [vmem:[%s1 + $0xff0] sm:$0xff]
  %v592 = vld [vmem:[%s1 + $0xff8] sm:$0xff]
  %v593 = vld [vmem:[%s1 + $0x1000] sm:$0xff]
  %v594 = vld [vmem:[%s1 + $0x1008] sm:$0xff]
  %v595 = vld [vmem:[%s1 + $0x1010] sm:$0xff]
  %v596 = vld [vmem:[%s1 + $0x1018] sm:$0xff]
  %v597 = vld [vmem:[%s1 + $0x1020] sm:$0xff]
  %v598 = vld [vmem:[%s1 + $0x1028] sm:$0xff]
  %v599 = vld [vmem:[%s1 + $0x1030] sm:$0xff]
  %v600 = vld [vmem:[%s1 + $0x1038] sm:$0xff]
  %v601 = vld [vmem:[%s1 + $0x1040] sm:$0xff]
  %v602 = vld [vmem:[%s1 + $0x1048] sm:$0xff]
  %v603 = vld [vmem:[%s1 + $0x1050] sm:$0xff]
  %v604 = vld [vmem:[%s1 + $0x1058] sm:$0xff]
  %v605 = vld [vmem:[%s1 + $0x1060] sm:$0xff]
  %v606 = vld [vmem:[%s1 + $0x1068] sm:$0xff]
  %v607 = vld [vmem:[%s1 + $0x1070] sm:$0xff]
  %v608 = vld [vmem:[%s1 + $0x1078] sm:$0xff]
  %v609 = vld [vmem:[%s1 + $0x1080] sm:$0xff]
  %v610 = vld [vmem:[%s1 + $0x1088] sm:$0xff]
  %v611 = vld [vmem:[%s1 + $0x1090] sm:$0xff]
  %v612 = vld [vmem:[%s1 + $0x1098] sm:$0xff]
  %v613 = vld [vmem:[%s1 + $0x10a0] sm:$0xff]
  %v614 = vld [vmem:[%s1 + $0x10a8] sm:$0xff]
  %v615 = vld [vmem:[%s1 + $0x10b0] sm:$0xff]
  %v616 = vld [vmem:[%s1 + $0x10b8] sm:$0xff]
  %v617 = vld [vmem:[%s1 + $0x10c0] sm:$0xff]
  %v618 = vld [vmem:[%s1 + $0x10c8] sm:$0xff]
  %v619 = vld [vmem:[%s1 + $0x10d0] sm:$0xff]
  %v620 = vld [vmem:[%s1 + $0x10d8] sm:$0xff]
  %v621 = vld [vmem:[%s1 + $0x10e0] sm:$0xff]
  %v622 = vld [vmem:[%s1 + $0x10e8] sm:$0xff]
  %v623 = vld [vmem:[%s1 + $0x10f0] sm:$0xff]
  %v624 = vld [vmem:[%s1 + $0x10f8] sm:$0xff]
  %v625 = vld [vmem:[%s1 + $0x1100] sm:$0xff]
  %v626 = vld [vmem:[%s1 + $0x1108] sm:$0xff]
  %v627 = vld [vmem:[%s1 + $0x1110] sm:$0xff]
  %v628 = vld [vmem:[%s1 + $0x1118] sm:$0xff]
  %v629 = vld [vmem:[%s1 + $0x1120] sm:$0xff]
  %v630 = vld [vmem:[%s1 + $0x1128] sm:$0xff]
  %v631 = vld [vmem:[%s1 + $0x1130] sm:$0xff]
  %v632 = vld [vmem:[%s1 + $0x1138] sm:$0xff]
  %v633 = vld [vmem:[%s1 + $0x1140] sm:$0xff]
  %v634 = vld [vmem:[%s1 + $0x1148] sm:$0xff]
  %v635 = vld [vmem:[%s1 + $0x1150] sm:$0xff]
  %v636 = vld [vmem:[%s1 + $0x1158] sm:$0xff]
  %v637 = vld [vmem:[%s1 + $0x1160] sm:$0xff]
  %v638 = vld [vmem:[%s1 + $0x1168] sm:$0xff]
  %v639 = vld [vmem:[%s1 + $0x1170] sm:$0xff]
  %v640 = vld [vmem:[%s1 + $0x1178] sm:$0xff]
  %v641 = vld [vmem:[%s1 + $0x1180] sm:$0xff]
  %v642 = vld [vmem:[%s1 + $0x1188] sm:$0xff]
  %v643 = vld [vmem:[%s1 + $0x1190] sm:$0xff]
  %v644 = vld [vmem:[%s1 + $0x1198] sm:$0xff]
  %v645 = vld [vmem:[%s1 + $0x11a0] sm:$0xff]
  %v646 = vld [vmem:[%s1 + $0x11a8] sm:$0xff]
  %v647 = vld [vmem:[%s1 + $0x11b0] sm:$0xff]
  %v648 = vld [vmem:[%s1 + $0x11b8] sm:$0xff]
  %v649 = vld [vmem:[%s1 + $0x11c0] sm:$0xff]
  %v650 = vld [vmem:[%s1 + $0x11c8] sm:$0xff]
  %v651 = vld [vmem:[%s1 + $0x11d0] sm:$0xff]
  %v652 = vld [vmem:[%s1 + $0x11d8] sm:$0xff]
  %v653 = vld [vmem:[%s1 + $0x11e0] sm:$0xff]
  %v654 = vld [vmem:[%s1 + $0x11e8] sm:$0xff]
  %v655 = vld [vmem:[%s1 + $0x11f0] sm:$0xff]
  %v656 = vld [vmem:[%s1 + $0x11f8] sm:$0xff]
  %v657 = vld [vmem:[%s1 + $0x1200] sm:$0xff]
  %v658 = vld [vmem:[%s1 + $0x1208] sm:$0xff]
  %v659 = vld [vmem:[%s1 + $0x1210] sm:$0xff]
  %v660 = vld [vmem:[%s1 + $0x1218] sm:$0xff]
  %v661 = vld [vmem:[%s1 + $0x1220] sm:$0xff]
  %v662 = vld [vmem:[%s1 + $0x1228] sm:$0xff]
  %v663 = vld [vmem:[%s1 + $0x1230] sm:$0xff]
  %v664 = vld [vmem:[%s1 + $0x1238] sm:$0xff]
  %v665 = vld [vmem:[%s1 + $0x1240] sm:$0xff]
  %v666 = vld [vmem:[%s1 + $0x1248] sm:$0xff]
  %v667 = vld [vmem:[%s1 + $0x1250] sm:$0xff]
  %v668 = vld [vmem:[%s1 + $0x1258] sm:$0xff]
  %v669 = vld [vmem:[%s1 + $0x1260] sm:$0xff]
  %v670 = vld [vmem:[%s1 + $0x1268] sm:$0xff]
  %v671 = vld [vmem:[%s1 + $0x1270] sm:$0xff]
  %v672 = vld [vmem:[%s1 + $0x1278] sm:$0xff]
  %v673 = vld [vmem:[%s1 + $0x1280] sm:$0xff]
  %v674 = vld [vmem:[%s1 + $0x1288] sm:$0xff]
  %v675 = vld [vmem:[%s1 + $0x1290] sm:$0xff]
  %v676 = vld [vmem:[%s1 + $0x1298] sm:$0xff]
  %v677 = vld [vmem:[%s1 + $0x12a0] sm:$0xff]
  %v678 = vld [vmem:[%s1 + $0x12a8] sm:$0xff]
  %v679 = vld [vmem:[%s1 + $0x12b0] sm:$0xff]
  %v680 = vld [vmem:[%s1 + $0x12b8] sm:$0xff]
  %v681 = vld [vmem:[%s1 + $0x12c0] sm:$0xff]
  %v682 = vld [vmem:[%s1 + $0x12c8] sm:$0xff]
  %v683 = vld [vmem:[%s1 + $0x12d0] sm:$0xff]
  %v684 = vld [vmem:[%s1 + $0x12d8] sm:$0xff]
  %v685 = vld [vmem:[%s1 + $0x12e0] sm:$0xff]
  %v686 = vld [vmem:[%s1 + $0x12e8] sm:$0xff]
  %v687 = vld [vmem:[%s1 + $0x12f0] sm:$0xff]
  %v688 = vld [vmem:[%s1 + $0x12f8] sm:$0xff]
  %v689 = vld [vmem:[%s1 + $0x1300] sm:$0xff]
  %v690 = vld [vmem:[%s1 + $0x1308] sm:$0xff]
  %v691 = vld [vmem:[%s1 + $0x1310] sm:$0xff]
  %v692 = vld [vmem:[%s1 + $0x1318] sm:$0xff]
  %v693 = vld [vmem:[%s1 + $0x1320] sm:$0xff]
  %v694 = vld [vmem:[%s1 + $0x1328] sm:$0xff]
  %v695 = vld [vmem:[%s1 + $0x1330] sm:$0xff]
  %v696 = vld [vmem:[%s1 + $0x1338] sm:$0xff]
  %v697 = vld [vmem:[%s1 + $0x1340] sm:$0xff]
  %v698 = vld [vmem:[%s1 + $0x1348] sm:$0xff]
  %v699 = vld [vmem:[%s1 + $0x1350] sm:$0xff]
  %v700 = vld [vmem:[%s1 + $0x1358] sm:$0xff]
  %v701 = vld [vmem:[%s1 + $0x1360] sm:$0xff]
  %v702 = vld [vmem:[%s1 + $0x1368] sm:$0xff]
  %v703 = vld [vmem:[%s1 + $0x1370] sm:$0xff]
  %v704 = vld [vmem:[%s1 + $0x1378] sm:$0xff]
  %v705 = vld [vmem:[%s1 + $0x1380] sm:$0xff]
  %v706 = vld [vmem:[%s1 + $0x1388] sm:$0xff]
  %v707 = vld [vmem:[%s1 + $0x1390] sm:$0xff]
  %v708 = vld [vmem:[%s1 + $0x1398] sm:$0xff]
  %v709 = vld [vmem:[%s1 + $0x13a0] sm:$0xff]
  %v710 = vld [vmem:[%s1 + $0x13a8] sm:$0xff]
  %v711 = vld [vmem:[%s1 + $0x13b0] sm:$0xff]
  %v712 = vld [vmem:[%s1 + $0x13b8] sm:$0xff]
  %v713 = vld [vmem:[%s1 + $0x13c0] sm:$0xff]
  %v714 = vld [vmem:[%s1 + $0x13c8] sm:$0xff]
  %v715 = vld [vmem:[%s1 + $0x13d0] sm:$0xff]
  %v716 = vld [vmem:[%s1 + $0x13d8] sm:$0xff]
  %v717 = vld [vmem:[%s1 + $0x13e0] sm:$0xff]
  %v718 = vld [vmem:[%s1 + $0x13e8] sm:$0xff]
  %v719 = vld [vmem:[%s1 + $0x13f0] sm:$0xff]
  %v720 = vld [vmem:[%s1 + $0x13f8] sm:$0xff]
  %v721 = vld [vmem:[%s1 + $0x1400] sm:$0xff]
  %v722 = vld [vmem:[%s1 + $0x1408] sm:$0xff]
  %v723 = vld [vmem:[%s1 + $0x1410] sm:$0xff]
  %v724 = vld [vmem:[%s1 + $0x1418] sm:$0xff]
  %v725 = vld [vmem:[%s1 + $0x1420] sm:$0xff]
  %v726 = vld [vmem:[%s1 + $0x1428] sm:$0xff]
  %v727 = vld [vmem:[%s1 + $0x1430] sm:$0xff]
  %v728 = vld [vmem:[%s1 + $0x1438] sm:$0xff]
  %v729 = vld [vmem:[%s1 + $0x1440] sm:$0xff]
  %v730 = vld [vmem:[%s1 + $0x1448] sm:$0xff]
  %v731 = vld [vmem:[%s1 + $0x1450] sm:$0xff]
  %v732 = vld [vmem:[%s1 + $0x1458] sm:$0xff]
  %v733 = vld [vmem:[%s1 + $0x1460] sm:$0xff]
  %v734 = vld [vmem:[%s1 + $0x1468] sm:$0xff]
  %v735 = vld [vmem:[%s1 + $0x1470] sm:$0xff]
  %v736 = vld [vmem:[%s1 + $0x1478] sm:$0xff]
  %v737 = vld [vmem:[%s1 + $0x1480] sm:$0xff]
  %v738 = vld [vmem:[%s1 + $0x1488] sm:$0xff]
  %v739 = vld [vmem:[%s1 + $0x1490] sm:$0xff]
  %v740 = vld [vmem:[%s1 + $0x1498] sm:$0xff]
  %v741 = vld [vmem:[%s1 + $0x14a0] sm:$0xff]
  %v742 = vld [vmem:[%s1 + $0x14a8] sm:$0xff]
  %v743 = vld [vmem:[%s1 + $0x14b0] sm:$0xff]
  %v744 = vld [vmem:[%s1 + $0x14b8] sm:$0xff]
  %v745 = vld [vmem:[%s1 + $0x14c0] sm:$0xff]
  %v746 = vld [vmem:[%s1 + $0x14c8] sm:$0xff]
  %v747 = vld [vmem:[%s1 + $0x14d0] sm:$0xff]
  %v748 = vld [vmem:[%s1 + $0x14d8] sm:$0xff]
  %v749 = vld [vmem:[%s1 + $0x14e0] sm:$0xff]
  %v750 = vld [vmem:[%s1 + $0x14e8] sm:$0xff]
  %v751 = vld [vmem:[%s1 + $0x14f0] sm:$0xff]
  %v752 = vld [vmem:[%s1 + $0x14f8] sm:$0xff]
  %v753 = vld [vmem:[%s1 + $0x1500] sm:$0xff]
  %v754 = vld [vmem:[%s1 + $0x1508] sm:$0xff]
  %v755 = vld [vmem:[%s1 + $0x1510] sm:$0xff]
  %v756 = vld [vmem:[%s1 + $0x1518] sm:$0xff]
  %v757 = vld [vmem:[%s1 + $0x1520] sm:$0xff]
  %v758 = vld [vmem:[%s1 + $0x1528] sm:$0xff]
  %v759 = vld [vmem:[%s1 + $0x1530] sm:$0xff]
  %v760 = vld [vmem:[%s1 + $0x1538] sm:$0xff]
  %v761 = vld [vmem:[%s1 + $0x1540] sm:$0xff]
  %v762 = vld [vmem:[%s1 + $0x1548] sm:$0xff]
  %v763 = vld [vmem:[%s1 + $0x1550] sm:$0xff]
  %v764 = vld [vmem:[%s1 + $0x1558] sm:$0xff]
  %v765 = vld [vmem:[%s1 + $0x1560] sm:$0xff]
  %v766 = vld [vmem:[%s1 + $0x1568] sm:$0xff]
  %v767 = vld [vmem:[%s1 + $0x1570] sm:$0xff]
  %v768 = vld [vmem:[%s1 + $0x1578] sm:$0xff]
  %v769 = vld [vmem:[%s1 + $0x1580] sm:$0xff]
  %v770 = vld [vmem:[%s1 + $0x1588] sm:$0xff]
  %v771 = vld [vmem:[%s1 + $0x1590] sm:$0xff]
  %v772 = vld [vmem:[%s1 + $0x1598] sm:$0xff]
  %v773 = vld [vmem:[%s1 + $0x15a0] sm:$0xff]
  %v774 = vld [vmem:[%s1 + $0x15a8] sm:$0xff]
  %v775 = vld [vmem:[%s1 + $0x15b0] sm:$0xff]
  %v776 = vld [vmem:[%s1 + $0x15b8] sm:$0xff]
  %v777 = vld [vmem:[%s1 + $0x15c0] sm:$0xff]
  %v778 = vld [vmem:[%s1 + $0x15c8] sm:$0xff]
  %v779 = vld [vmem:[%s1 + $0x15d0] sm:$0xff]
  %v780 = vld [vmem:[%s1 + $0x15d8] sm:$0xff]
  %v781 = vld [vmem:[%s1 + $0x15e0] sm:$0xff]
  %v782 = vld [vmem:[%s1 + $0x15e8] sm:$0xff]
  %v783 = vld [vmem:[%s1 + $0x15f0] sm:$0xff]
  %v784 = vld [vmem:[%s1 + $0x15f8] sm:$0xff]
  %v785 = vld [vmem:[%s1 + $0x1600] sm:$0xff]
  %v786 = vld [vmem:[%s1 + $0x1608] sm:$0xff]
  %v787 = vld [vmem:[%s1 + $0x1610] sm:$0xff]
  %v788 = vld [vmem:[%s1 + $0x1618] sm:$0xff]
  %v789 = vld [vmem:[%s1 + $0x1620] sm:$0xff]
  %v790 = vld [vmem:[%s1 + $0x1628] sm:$0xff]
  %v791 = vld [vmem:[%s1 + $0x1630] sm:$0xff]
  %v792 = vld [vmem:[%s1 + $0x1638] sm:$0xff]
  %v793 = vld [vmem:[%s1 + $0x1640] sm:$0xff]
  %v794 = vld [vmem:[%s1 + $0x1648] sm:$0xff]
  %v795 = vld [vmem:[%s1 + $0x1650] sm:$0xff]
  %v796 = vld [vmem:[%s1 + $0x1658] sm:$0xff]
  %v797 = vld [vmem:[%s1 + $0x1660] sm:$0xff]
  %v798 = vld [vmem:[%s1 + $0x1668] sm:$0xff]
  %v799 = vld [vmem:[%s1 + $0x1670] sm:$0xff]
  %v800 = vld [vmem:[%s1 + $0x1678] sm:$0xff]
  %v801 = vld [vmem:[%s1 + $0x1680] sm:$0xff]
  %v802 = vld [vmem:[%s1 + $0x1688] sm:$0xff]
  %v803 = vld [vmem:[%s1 + $0x1690] sm:$0xff]
  %v804 = vld [vmem:[%s1 + $0x1698] sm:$0xff]
  %v805 = vld [vmem:[%s1 + $0x16a0] sm:$0xff]
  %v806 = vld [vmem:[%s1 + $0x16a8] sm:$0xff]
  %v807 = vld [vmem:[%s1 + $0x16b0] sm:$0xff]
  %v808 = vld [vmem:[%s1 + $0x16b8] sm:$0xff]
  %v809 = vld [vmem:[%s1 + $0x16c0] sm:$0xff]
  %v810 = vld [vmem:[%s1 + $0x16c8] sm:$0xff]
  %v811 = vld [vmem:[%s1 + $0x16d0] sm:$0xff]
  %v812 = vld [vmem:[%s1 + $0x16d8] sm:$0xff]
  %v813 = vld [vmem:[%s1 + $0x16e0] sm:$0xff]
  %v814 = vld [vmem:[%s1 + $0x16e8] sm:$0xff]
  %v815 = vld [vmem:[%s1 + $0x16f0] sm:$0xff]
  %v816 = vld [vmem:[%s1 + $0x16f8] sm:$0xff]
  %v817 = vld [vmem:[%s1 + $0x1700] sm:$0xff]
  %v818 = vld [vmem:[%s1 + $0x1708] sm:$0xff]
  %v819 = vld [vmem:[%s1 + $0x1710] sm:$0xff]
  %v820 = vld [vmem:[%s1 + $0x1718] sm:$0xff]
  %v821 = vld [vmem:[%s1 + $0x1720] sm:$0xff]
  %v822 = vld [vmem:[%s1 + $0x1728] sm:$0xff]
  %v823 = vld [vmem:[%s1 + $0x1730] sm:$0xff]
  %v824 = vld [vmem:[%s1 + $0x1738] sm:$0xff]
  %v825 = vld [vmem:[%s1 + $0x1740] sm:$0xff]
  %v826 = vld [vmem:[%s1 + $0x1748] sm:$0xff]
  %v827 = vld [vmem:[%s1 + $0x1750] sm:$0xff]
  %v828 = vld [vmem:[%s1 + $0x1758] sm:$0xff]
  %v829 = vld [vmem:[%s1 + $0x1760] sm:$0xff]
  %v830 = vld [vmem:[%s1 + $0x1768] sm:$0xff]
  %v831 = vld [vmem:[%s1 + $0x1770] sm:$0xff]
  %v832 = vld [vmem:[%s1 + $0x1778] sm:$0xff]
  %v833 = vld [vmem:[%s1 + $0x1780] sm:$0xff]
  %v834 = vld [vmem:[%s1 + $0x1788] sm:$0xff]
  %v835 = vld [vmem:[%s1 + $0x1790] sm:$0xff]
  %v836 = vld [vmem:[%s1 + $0x1798] sm:$0xff]
  %v837 = vld [vmem:[%s1 + $0x17a0] sm:$0xff]
  %v838 = vld [vmem:[%s1 + $0x17a8] sm:$0xff]
  %v839 = vld [vmem:[%s1 + $0x17b0] sm:$0xff]
  %v840 = vld [vmem:[%s1 + $0x17b8] sm:$0xff]
  %v841 = vld [vmem:[%s1 + $0x17c0] sm:$0xff]
  %v842 = vld [vmem:[%s1 + $0x17c8] sm:$0xff]
  %v843 = vld [vmem:[%s1 + $0x17d0] sm:$0xff]
  %v844 = vld [vmem:[%s1 + $0x17d8] sm:$0xff]
  %v845 = vld [vmem:[%s1 + $0x17e0] sm:$0xff]
  %v846 = vld [vmem:[%s1 + $0x17e8] sm:$0xff]
  %v847 = vld [vmem:[%s1 + $0x17f0] sm:$0xff]
  %v848 = vld [vmem:[%s1 + $0x17f8] sm:$0xff]
  %v849 = vld [vmem:[%s1 + $0x1800] sm:$0xff]
  %v850 = vld [vmem:[%s1 + $0x1808] sm:$0xff]
  %v851 = vld [vmem:[%s1 + $0x1810] sm:$0xff]
  %v852 = vld [vmem:[%s1 + $0x1818] sm:$0xff]
  %v853 = vld [vmem:[%s1 + $0x1820] sm:$0xff]
  %v854 = vld [vmem:[%s1 + $0x1828] sm:$0xff]
  %v855 = vld [vmem:[%s1 + $0x1830] sm:$0xff]
  %v856 = vld [vmem:[%s1 + $0x1838] sm:$0xff]
  %v857 = vld [vmem:[%s1 + $0x1840] sm:$0xff]
  %v858 = vld [vmem:[%s1 + $0x1848] sm:$0xff]
  %v859 = vld [vmem:[%s1 + $0x1850] sm:$0xff]
  %v860 = vld [vmem:[%s1 + $0x1858] sm:$0xff]
  %v861 = vld [vmem:[%s1 + $0x1860] sm:$0xff]
  %v862 = vld [vmem:[%s1 + $0x1868] sm:$0xff]
  %v863 = vld [vmem:[%s1 + $0x1870] sm:$0xff]
  %v864 = vld [vmem:[%s1 + $0x1878] sm:$0xff]
  %v865 = vld [vmem:[%s1 + $0x1880] sm:$0xff]
  %v866 = vld [vmem:[%s1 + $0x1888] sm:$0xff]
  %v867 = vld [vmem:[%s1 + $0x1890] sm:$0xff]
  %v868 = vld [vmem:[%s1 + $0x1898] sm:$0xff]
  %v869 = vld [vmem:[%s1 + $0x18a0] sm:$0xff]
  %v870 = vld [vmem:[%s1 + $0x18a8] sm:$0xff]
  %v871 = vld [vmem:[%s1 + $0x18b0] sm:$0xff]
  %v872 = vld [vmem:[%s1 + $0x18b8] sm:$0xff]
  %v873 = vld [vmem:[%s1 + $0x18c0] sm:$0xff]
  %v874 = vld [vmem:[%s1 + $0x18c8] sm:$0xff]
  %v875 = vld [vmem:[%s1 + $0x18d0] sm:$0xff]
  %v876 = vld [vmem:[%s1 + $0x18d8] sm:$0xff]
  %v877 = vld [vmem:[%s1 + $0x18e0] sm:$0xff]
  %v878 = vld [vmem:[%s1 + $0x18e8] sm:$0xff]
  %v879 = vld [vmem:[%s1 + $0x18f0] sm:$0xff]
  %v880 = vld [vmem:[%s1 + $0x18f8] sm:$0xff]
  %v881 = vld [vmem:[%s1 + $0x1900] sm:$0xff]
  %v882 = vld [vmem:[%s1 + $0x1908] sm:$0xff]
  %v883 = vld [vmem:[%s1 + $0x1910] sm:$0xff]
  %v884 = vld [vmem:[%s1 + $0x1918] sm:$0xff]
  %v885 = vld [vmem:[%s1 + $0x1920] sm:$0xff]
  %v886 = vld [vmem:[%s1 + $0x1928] sm:$0xff]
  %v887 = vld [vmem:[%s1 + $0x1930] sm:$0xff]
  %v888 = vld [vmem:[%s1 + $0x1938] sm:$0xff]
  %v889 = vld [vmem:[%s1 + $0x1940] sm:$0xff]
  %v890 = vld [vmem:[%s1 + $0x1948] sm:$0xff]
  %v891 = vld [vmem:[%s1 + $0x1950] sm:$0xff]
  %v892 = vld [vmem:[%s1 + $0x1958] sm:$0xff]
  %v893 = vld [vmem:[%s1 + $0x1960] sm:$0xff]
  %v894 = vld [vmem:[%s1 + $0x1968] sm:$0xff]
  %v895 = vld [vmem:[%s1 + $0x1970] sm:$0xff]
  %v896 = vld [vmem:[%s1 + $0x1978] sm:$0xff]
  %v897 = vld [vmem:[%s1 + $0x1980] sm:$0xff]
  %v898 = vld [vmem:[%s1 + $0x1988] sm:$0xff]
  %v899 = vld [vmem:[%s1 + $0x1990] sm:$0xff]
  %v900 = vld [vmem:[%s1 + $0x1998] sm:$0xff]
  %v901 = vld [vmem:[%s1 + $0x19a0] sm:$0xff]
  %v902 = vld [vmem:[%s1 + $0x19a8] sm:$0xff]
  %v903 = vld [vmem:[%s1 + $0x19b0] sm:$0xff]
  %v904 = vld [vmem:[%s1 + $0x19b8] sm:$0xff]
  %v905 = vld [vmem:[%s1 + $0x19c0] sm:$0xff]
  %v906 = vld [vmem:[%s1 + $0x19c8] sm:$0xff]
  %v907 = vld [vmem:[%s1 + $0x19d0] sm:$0xff]
  %v908 = vld [vmem:[%s1 + $0x19d8] sm:$0xff]
  %v909 = vld [vmem:[%s1 + $0x19e0] sm:$0xff]
  %v910 = vld [vmem:[%s1 + $0x19e8] sm:$0xff]
  %v911 = vld [vmem:[%s1 + $0x19f0] sm:$0xff]
  %v912 = vld [vmem:[%s1 + $0x19f8] sm:$0xff]
  %v913 = vld [vmem:[%s1 + $0x1a00] sm:$0xff]
  %v914 = vld [vmem:[%s1 + $0x1a08] sm:$0xff]
  %v915 = vld [vmem:[%s1 + $0x1a10] sm:$0xff]
  %v916 = vld [vmem:[%s1 + $0x1a18] sm:$0xff]
  %v917 = vld [vmem:[%s1 + $0x1a20] sm:$0xff]
  %v918 = vld [vmem:[%s1 + $0x1a28] sm:$0xff]
  %v919 = vld [vmem:[%s1 + $0x1a30] sm:$0xff]
  %v920 = vld [vmem:[%s1 + $0x1a38] sm:$0xff]
  %v921 = vld [vmem:[%s1 + $0x1a40] sm:$0xff]
  %v922 = vld [vmem:[%s1 + $0x1a48] sm:$0xff]
  %v923 = vld [vmem:[%s1 + $0x1a50] sm:$0xff]
  %v924 = vld [vmem:[%s1 + $0x1a58] sm:$0xff]
  %v925 = vld [vmem:[%s1 + $0x1a60] sm:$0xff]
  %v926 = vld [vmem:[%s1 + $0x1a68] sm:$0xff]
  %v927 = vld [vmem:[%s1 + $0x1a70] sm:$0xff]
  %v928 = vld [vmem:[%s1 + $0x1a78] sm:$0xff]
  %v929 = vld [vmem:[%s1 + $0x1a80] sm:$0xff]
  %v930 = vld [vmem:[%s1 + $0x1a88] sm:$0xff]
  %v931 = vld [vmem:[%s1 + $0x1a90] sm:$0xff]
  %v932 = vld [vmem:[%s1 + $0x1a98] sm:$0xff]
  %v933 = vld [vmem:[%s1 + $0x1aa0] sm:$0xff]
  %v934 = vld [vmem:[%s1 + $0x1aa8] sm:$0xff]
  %v935 = vld [vmem:[%s1 + $0x1ab0] sm:$0xff]
  %v936 = vld [vmem:[%s1 + $0x1ab8] sm:$0xff]
  %v937 = vld [vmem:[%s1 + $0x1ac0] sm:$0xff]
  %v938 = vld [vmem:[%s1 + $0x1ac8] sm:$0xff]
  %v939 = vld [vmem:[%s1 + $0x1ad0] sm:$0xff]
  %v940 = vld [vmem:[%s1 + $0x1ad8] sm:$0xff]
  %v941 = vld [vmem:[%s1 + $0x1ae0] sm:$0xff]
  %v942 = vld [vmem:[%s1 + $0x1ae8] sm:$0xff]
  %v943 = vld [vmem:[%s1 + $0x1af0] sm:$0xff]
  %v944 = vld [vmem:[%s1 + $0x1af8] sm:$0xff]
  %v945 = vld [vmem:[%s1 + $0x1b00] sm:$0xff]
  %v946 = vld [vmem:[%s1 + $0x1b08] sm:$0xff]
  %v947 = vld [vmem:[%s1 + $0x1b10] sm:$0xff]
  %v948 = vld [vmem:[%s1 + $0x1b18] sm:$0xff]
  %v949 = vld [vmem:[%s1 + $0x1b20] sm:$0xff]
  %v950 = vld [vmem:[%s1 + $0x1b28] sm:$0xff]
  %v951 = vld [vmem:[%s1 + $0x1b30] sm:$0xff]
  %v952 = vld [vmem:[%s1 + $0x1b38] sm:$0xff]
  %v953 = vld [vmem:[%s1 + $0x1b40] sm:$0xff]
  %v954 = vld [vmem:[%s1 + $0x1b48] sm:$0xff]
  %v955 = vld [vmem:[%s1 + $0x1b50] sm:$0xff]
  %v956 = vld [vmem:[%s1 + $0x1b58] sm:$0xff]
  %v957 = vld [vmem:[%s1 + $0x1b60] sm:$0xff]
  %v958 = vld [vmem:[%s1 + $0x1b68] sm:$0xff]
  %v959 = vld [vmem:[%s1 + $0x1b70] sm:$0xff]
  %v960 = vld [vmem:[%s1 + $0x1b78] sm:$0xff]
  %v961 = vld [vmem:[%s1 + $0x1b80] sm:$0xff]
  %v962 = vld [vmem:[%s1 + $0x1b88] sm:$0xff]
  %v963 = vld [vmem:[%s1 + $0x1b90] sm:$0xff]
  %v964 = vld [vmem:[%s1 + $0x1b98] sm:$0xff]
  %v965 = vld [vmem:[%s1 + $0x1ba0] sm:$0xff]
  %v966 = vld [vmem:[%s1 + $0x1ba8] sm:$0xff]
  %v967 = vld [vmem:[%s1 + $0x1bb0] sm:$0xff]
  %v968 = vld [vmem:[%s1 + $0x1bb8] sm:$0xff]
  %v969 = vld [vmem:[%s1 + $0x1bc0] sm:$0xff]
  %v970 = vld [vmem:[%s1 + $0x1bc8] sm:$0xff]
  %v971 = vld [vmem:[%s1 + $0x1bd0] sm:$0xff]
  %v972 = vld [vmem:[%s1 + $0x1bd8] sm:$0xff]
  %v973 = vld [vmem:[%s1 + $0x1be0] sm:$0xff]
  %v974 = vld [vmem:[%s1 + $0x1be8] sm:$0xff]
  %v975 = vld [vmem:[%s1 + $0x1bf0] sm:$0xff]
  %v976 = vld [vmem:[%s1 + $0x1bf8] sm:$0xff]
  %v977 = vld [vmem:[%s1 + $0x1c00] sm:$0xff]
  %v978 = vld [vmem:[%s1 + $0x1c08] sm:$0xff]
  %v979 = vld [vmem:[%s1 + $0x1c10] sm:$0xff]
  %v980 = vld [vmem:[%s1 + $0x1c18] sm:$0xff]
  %v981 = vld [vmem:[%s1 + $0x1c20] sm:$0xff]
  %v982 = vld [vmem:[%s1 + $0x1c28] sm:$0xff]
  %v983 = vld [vmem:[%s1 + $0x1c30] sm:$0xff]
  %v984 = vld [vmem:[%s1 + $0x1c38] sm:$0xff]
  %v985 = vld [vmem:[%s1 + $0x1c40] sm:$0xff]
  %v986 = vld [vmem:[%s1 + $0x1c48] sm:$0xff]
  %v987 = vld [vmem:[%s1 + $0x1c50] sm:$0xff]
  %v988 = vld [vmem:[%s1 + $0x1c58] sm:$0xff]
  %v989 = vld [vmem:[%s1 + $0x1c60] sm:$0xff]
  %v990 = vld [vmem:[%s1 + $0x1c68] sm:$0xff]
  %v991 = vld [vmem:[%s1 + $0x1c70] sm:$0xff]
  %v992 = vld [vmem:[%s1 + $0x1c78] sm:$0xff]
  %v993 = vld [vmem:[%s1 + $0x1c80] sm:$0xff]
  %v994 = vld [vmem:[%s1 + $0x1c88] sm:$0xff]
  %v995 = vld [vmem:[%s1 + $0x1c90] sm:$0xff]
  %v996 = vld [vmem:[%s1 + $0x1c98] sm:$0xff]
  %v997 = vld [vmem:[%s1 + $0x1ca0] sm:$0xff]
  %v998 = vld [vmem:[%s1 + $0x1ca8] sm:$0xff]
  %v999 = vld [vmem:[%s1 + $0x1cb0] sm:$0xff]
  %v1000 = vld [vmem:[%s1 + $0x1cb8] sm:$0xff]
  %v1001 = vld [vmem:[%s1 + $0x1cc0] sm:$0xff]
  %v1002 = vld [vmem:[%s1 + $0x1cc8] sm:$0xff]
  %v1003 = vld [vmem:[%s1 + $0x1cd0] sm:$0xff]
  %v1004 = vld [vmem:[%s1 + $0x1cd8] sm:$0xff]
  %v1005 = vld [vmem:[%s1 + $0x1ce0] sm:$0xff]
  %v1006 = vld [vmem:[%s1 + $0x1ce8] sm:$0xff]
  %v1007 = vld [vmem:[%s1 + $0x1cf0] sm:$0xff]
  %v1008 = vld [vmem:[%s1 + $0x1cf8] sm:$0xff]
  %v1009 = vld [vmem:[%s1 + $0x1d00] sm:$0xff]
  %v1010 = vld [vmem:[%s1 + $0x1d08] sm:$0xff]
  %v1011 = vld [vmem:[%s1 + $0x1d10] sm:$0xff]
  %v1012 = vld [vmem:[%s1 + $0x1d18] sm:$0xff]
  %v1013 = vld [vmem:[%s1 + $0x1d20] sm:$0xff]
  %v1014 = vld [vmem:[%s1 + $0x1d28] sm:$0xff]
  %v1015 = vld [vmem:[%s1 + $0x1d30] sm:$0xff]
  %v1016 = vld [vmem:[%s1 + $0x1d38] sm:$0xff]
  %v1017 = vld [vmem:[%s1 + $0x1d40] sm:$0xff]
  %v1018 = vld [vmem:[%s1 + $0x1d48] sm:$0xff]
  %v1019 = vld [vmem:[%s1 + $0x1d50] sm:$0xff]
  %v1020 = vld [vmem:[%s1 + $0x1d58] sm:$0xff]
  %v1021 = vld [vmem:[%s1 + $0x1d60] sm:$0xff]
  %v1022 = vld [vmem:[%s1 + $0x1d68] sm:$0xff]
  %v1023 = vld [vmem:[%s1 + $0x1d70] sm:$0xff]
  %v1024 = vld [vmem:[%s1 + $0x1d78] sm:$0xff]
  %v1025 = vld [vmem:[%s1 + $0x1d80] sm:$0xff]
  %v1026 = vld [vmem:[%s1 + $0x1d88] sm:$0xff]
  %v1027 = vld [vmem:[%s1 + $0x1d90] sm:$0xff]
  %v1028 = vld [vmem:[%s1 + $0x1d98] sm:$0xff]
  %v1029 = vld [vmem:[%s1 + $0x1da0] sm:$0xff]
  %v1030 = vld [vmem:[%s1 + $0x1da8] sm:$0xff]
  %v1031 = vld [vmem:[%s1 + $0x1db0] sm:$0xff]
  %v1032 = vld [vmem:[%s1 + $0x1db8] sm:$0xff]
  %v1033 = vld [vmem:[%s1 + $0x1dc0] sm:$0xff]
  %v1034 = vld [vmem:[%s1 + $0x1dc8] sm:$0xff]
  %v1035 = vld [vmem:[%s1 + $0x1dd0] sm:$0xff]
  %v1036 = vld [vmem:[%s1 + $0x1dd8] sm:$0xff]
  %v1037 = vld [vmem:[%s1 + $0x1de0] sm:$0xff]
  %v1038 = vld [vmem:[%s1 + $0x1de8] sm:$0xff]
  %v1039 = vld [vmem:[%s1 + $0x1df0] sm:$0xff]
  %v1040 = vld [vmem:[%s1 + $0x1df8] sm:$0xff]
  %v1041 = vld [vmem:[%s1 + $0x1e00] sm:$0xff]
  %v1042 = vld [vmem:[%s1 + $0x1e08] sm:$0xff]
  %v1043 = vld [vmem:[%s1 + $0x1e10] sm:$0xff]
  %v1044 = vld [vmem:[%s1 + $0x1e18] sm:$0xff]
  %v1045 = vld [vmem:[%s1 + $0x1e20] sm:$0xff]
  %v1046 = vld [vmem:[%s1 + $0x1e28] sm:$0xff]
  %v1047 = vld [vmem:[%s1 + $0x1e30] sm:$0xff]
  %v1048 = vld [vmem:[%s1 + $0x1e38] sm:$0xff]
  %v1049 = vld [vmem:[%s1 + $0x1e40] sm:$0xff]
  %v1050 = vld [vmem:[%s1 + $0x1e48] sm:$0xff]
  %v1051 = vld [vmem:[%s1 + $0x1e50] sm:$0xff]
  %v1052 = vld [vmem:[%s1 + $0x1e58] sm:$0xff]
  %v1053 = vld [vmem:[%s1 + $0x1e60] sm:$0xff]
  %v1054 = vld [vmem:[%s1 + $0x1e68] sm:$0xff]
  %v1055 = vld [vmem:[%s1 + $0x1e70] sm:$0xff]
  %v1056 = vld [vmem:[%s1 + $0x1e78] sm:$0xff]
  %v1057 = vld [vmem:[%s1 + $0x1e80] sm:$0xff]
  %v1058 = vld [vmem:[%s1 + $0x1e88] sm:$0xff]
  %v1059 = vld [vmem:[%s1 + $0x1e90] sm:$0xff]
  %v1060 = vld [vmem:[%s1 + $0x1e98] sm:$0xff]
  %v1061 = vld [vmem:[%s1 + $0x1ea0] sm:$0xff]
  %v1062 = vld [vmem:[%s1 + $0x1ea8] sm:$0xff]
  %v1063 = vld [vmem:[%s1 + $0x1eb0] sm:$0xff]
  %v1064 = vld [vmem:[%s1 + $0x1eb8] sm:$0xff]
  %v1065 = vld [vmem:[%s1 + $0x1ec0] sm:$0xff]
  %v1066 = vld [vmem:[%s1 + $0x1ec8] sm:$0xff]
  %v1067 = vld [vmem:[%s1 + $0x1ed0] sm:$0xff]
  %v1068 = vld [vmem:[%s1 + $0x1ed8] sm:$0xff]
  %v1069 = vld [vmem:[%s1 + $0x1ee0] sm:$0xff]
  %v1070 = vld [vmem:[%s1 + $0x1ee8] sm:$0xff]
  %v1071 = vld [vmem:[%s1 + $0x1ef0] sm:$0xff]
  %v1072 = vld [vmem:[%s1 + $0x1ef8] sm:$0xff]
  %v1073 = vld [vmem:[%s1 + $0x1f00] sm:$0xff]
  %v1074 = vld [vmem:[%s1 + $0x1f08] sm:$0xff]
  %v1075 = vld [vmem:[%s1 + $0x1f10] sm:$0xff]
  %v1076 = vld [vmem:[%s1 + $0x1f18] sm:$0xff]
  %v1077 = vld [vmem:[%s1 + $0x1f20] sm:$0xff]
  %v1078 = vld [vmem:[%s1 + $0x1f28] sm:$0xff]
  %v1079 = vld [vmem:[%s1 + $0x1f30] sm:$0xff]
  %v1080 = vld [vmem:[%s1 + $0x1f38] sm:$0xff]
  %v1081 = vld [vmem:[%s1 + $0x1f40] sm:$0xff]
  %v1082 = vld [vmem:[%s1 + $0x1f48] sm:$0xff]
  %v1083 = vld [vmem:[%s1 + $0x1f50] sm:$0xff]
  %v1084 = vld [vmem:[%s1 + $0x1f58] sm:$0xff]
  %v1085 = vld [vmem:[%s1 + $0x1f60] sm:$0xff]
  %v1086 = vld [vmem:[%s1 + $0x1f68] sm:$0xff]
  %v1087 = vld [vmem:[%s1 + $0x1f70] sm:$0xff]
  %v1088 = vld [vmem:[%s1 + $0x1f78] sm:$0xff]
  %v1089 = vld [vmem:[%s1 + $0x1f80] sm:$0xff]
  %v1090 = vld [vmem:[%s1 + $0x1f88] sm:$0xff]
  %v1091 = vld [vmem:[%s1 + $0x1f90] sm:$0xff]
  %v1092 = vld [vmem:[%s1 + $0x1f98] sm:$0xff]
  %v1093 = vld [vmem:[%s1 + $0x1fa0] sm:$0xff]
  %v1094 = vld [vmem:[%s1 + $0x1fa8] sm:$0xff]
  %v1095 = vld [vmem:[%s1 + $0x1fb0] sm:$0xff]
  %v1096 = vld [vmem:[%s1 + $0x1fb8] sm:$0xff]
  %v1097 = vld [vmem:[%s1 + $0x1fc0] sm:$0xff]
  %v1098 = vld [vmem:[%s1 + $0x1fc8] sm:$0xff]
  %v1099 = vld [vmem:[%s1 + $0x1fd0] sm:$0xff]
  %v1100 = vld [vmem:[%s1 + $0x1fd8] sm:$0xff]
  %v1101 = vld [vmem:[%s1 + $0x1fe0] sm:$0xff]
  %v1102 = vld [vmem:[%s1 + $0x1fe8] sm:$0xff]
  %v1103 = vld [vmem:[%s1 + $0x1ff0] sm:$0xff]
  %v1104 = vld [vmem:[%s1 + $0x1ff8] sm:$0xff]
  %v1105 = vld [vmem:[%s2] sm:$0xff]
  %v1107 = vperm.slane %v1105, 0
  %v1108 = vperm.slane %v1105, 1
  %v1109 = vperm.slane %v1105, 2
  %v1110 = vperm.slane %v1105, 3
  %v1111 = vperm.slane %v1105, 4
  %v1112 = vperm.slane %v1105, 5
  %v1113 = vperm.slane %v1105, 6
  %v1114 = vperm.slane %v1105, 7
  %v2147 = vunpack.c.l.b16 %v81
  %v2148 = vunpack.c.h.b16 %v81
  %v2149 = vunpack.c.l.b16 %v82
  %v2150 = vunpack.c.h.b16 %v82
  %v2151 = vunpack.c.l.b16 %v83
  %v2152 = vunpack.c.h.b16 %v83
  %v2153 = vunpack.c.l.b16 %v84
  %v2154 = vunpack.c.h.b16 %v84
  %v2155 = vunpack.c.l.b16 %v85
  %v2156 = vunpack.c.h.b16 %v85
  %v2157 = vunpack.c.l.b16 %v86
  %v2158 = vunpack.c.h.b16 %v86
  %v2159 = vunpack.c.l.b16 %v87
  %v2160 = vunpack.c.h.b16 %v87
  %v2161 = vunpack.c.l.b16 %v88
  %v2162 = vunpack.c.h.b16 %v88
  %v2163 = vunpack.c.l.b16 %v89
  %v2164 = vunpack.c.h.b16 %v89
  %v2165 = vunpack.c.l.b16 %v90
  %v2166 = vunpack.c.h.b16 %v90
  %v2167 = vunpack.c.l.b16 %v91
  %v2168 = vunpack.c.h.b16 %v91
  %v2169 = vunpack.c.l.b16 %v92
  %v2170 = vunpack.c.h.b16 %v92
  %v2171 = vunpack.c.l.b16 %v93
  %v2172 = vunpack.c.h.b16 %v93
  %v2173 = vunpack.c.l.b16 %v94
  %v2174 = vunpack.c.h.b16 %v94
  %v2175 = vunpack.c.l.b16 %v95
  %v2176 = vunpack.c.h.b16 %v95
  %v2177 = vunpack.c.l.b16 %v96
  %v2178 = vunpack.c.h.b16 %v96
  %v2179 = vunpack.c.l.b16 %v97
  %v2180 = vunpack.c.h.b16 %v97
  %v2181 = vunpack.c.l.b16 %v98
  %v2182 = vunpack.c.h.b16 %v98
  %v2183 = vunpack.c.l.b16 %v99
  %v2184 = vunpack.c.h.b16 %v99
  %v2185 = vunpack.c.l.b16 %v100
  %v2186 = vunpack.c.h.b16 %v100
  %v2187 = vunpack.c.l.b16 %v101
  %v2188 = vunpack.c.h.b16 %v101
  %v2189 = vunpack.c.l.b16 %v102
  %v2190 = vunpack.c.h.b16 %v102
  %v2191 = vunpack.c.l.b16 %v103
  %v2192 = vunpack.c.h.b16 %v103
  %v2193 = vunpack.c.l.b16 %v104
  %v2194 = vunpack.c.h.b16 %v104
  %v2195 = vunpack.c.l.b16 %v105
  %v2196 = vunpack.c.h.b16 %v105
  %v2197 = vunpack.c.l.b16 %v106
  %v2198 = vunpack.c.h.b16 %v106
  %v2199 = vunpack.c.l.b16 %v107
  %v2200 = vunpack.c.h.b16 %v107
  %v2201 = vunpack.c.l.b16 %v108
  %v2202 = vunpack.c.h.b16 %v108
  %v2203 = vunpack.c.l.b16 %v109
  %v2204 = vunpack.c.h.b16 %v109
  %v2205 = vunpack.c.l.b16 %v110
  %v2206 = vunpack.c.h.b16 %v110
  %v2207 = vunpack.c.l.b16 %v111
  %v2208 = vunpack.c.h.b16 %v111
  %v2209 = vunpack.c.l.b16 %v112
  %v2210 = vunpack.c.h.b16 %v112
  %v2211 = vunpack.c.l.b16 %v113
  %v2212 = vunpack.c.h.b16 %v113
  %v2213 = vunpack.c.l.b16 %v114
  %v2214 = vunpack.c.h.b16 %v114
  %v2215 = vunpack.c.l.b16 %v115
  %v2216 = vunpack.c.h.b16 %v115
  %v2217 = vunpack.c.l.b16 %v116
  %v2218 = vunpack.c.h.b16 %v116
  %v2219 = vunpack.c.l.b16 %v117
  %v2220 = vunpack.c.h.b16 %v117
  %v2221 = vunpack.c.l.b16 %v118
  %v2222 = vunpack.c.h.b16 %v118
  %v2223 = vunpack.c.l.b16 %v119
  %v2224 = vunpack.c.h.b16 %v119
  %v2225 = vunpack.c.l.b16 %v120
  %v2226 = vunpack.c.h.b16 %v120
  %v2227 = vunpack.c.l.b16 %v121
  %v2228 = vunpack.c.h.b16 %v121
  %v2229 = vunpack.c.l.b16 %v122
  %v2230 = vunpack.c.h.b16 %v122
  %v2231 = vunpack.c.l.b16 %v123
  %v2232 = vunpack.c.h.b16 %v123
  %v2233 = vunpack.c.l.b16 %v124
  %v2234 = vunpack.c.h.b16 %v124
  %v2235 = vunpack.c.l.b16 %v125
  %v2236 = vunpack.c.h.b16 %v125
  %v2237 = vunpack.c.l.b16 %v126
  %v2238 = vunpack.c.h.b16 %v126
  %v2239 = vunpack.c.l.b16 %v127
  %v2240 = vunpack.c.h.b16 %v127
  %v2241 = vunpack.c.l.b16 %v128
  %v2242 = vunpack.c.h.b16 %v128
  %v2243 = vunpack.c.l.b16 %v129
  %v2244 = vunpack.c.h.b16 %v129
  %v2245 = vunpack.c.l.b16 %v130
  %v2246 = vunpack.c.h.b16 %v130
  %v2247 = vunpack.c.l.b16 %v131
  %v2248 = vunpack.c.h.b16 %v131
  %v2249 = vunpack.c.l.b16 %v132
  %v2250 = vunpack.c.h.b16 %v132
  %v2251 = vunpack.c.l.b16 %v133
  %v2252 = vunpack.c.h.b16 %v133
  %v2253 = vunpack.c.l.b16 %v134
  %v2254 = vunpack.c.h.b16 %v134
  %v2255 = vunpack.c.l.b16 %v135
  %v2256 = vunpack.c.h.b16 %v135
  %v2257 = vunpack.c.l.b16 %v136
  %v2258 = vunpack.c.h.b16 %v136
  %v2259 = vunpack.c.l.b16 %v137
  %v2260 = vunpack.c.h.b16 %v137
  %v2261 = vunpack.c.l.b16 %v138
  %v2262 = vunpack.c.h.b16 %v138
  %v2263 = vunpack.c.l.b16 %v139
  %v2264 = vunpack.c.h.b16 %v139
  %v2265 = vunpack.c.l.b16 %v140
  %v2266 = vunpack.c.h.b16 %v140
  %v2267 = vunpack.c.l.b16 %v141
  %v2268 = vunpack.c.h.b16 %v141
  %v2269 = vunpack.c.l.b16 %v142
  %v2270 = vunpack.c.h.b16 %v142
  %v2271 = vunpack.c.l.b16 %v143
  %v2272 = vunpack.c.h.b16 %v143
  %v2273 = vunpack.c.l.b16 %v144
  %v2274 = vunpack.c.h.b16 %v144
  %v2275 = vunpack.c.l.b16 %v145
  %v2276 = vunpack.c.h.b16 %v145
  %v2277 = vunpack.c.l.b16 %v146
  %v2278 = vunpack.c.h.b16 %v146
  %v2279 = vunpack.c.l.b16 %v147
  %v2280 = vunpack.c.h.b16 %v147
  %v2281 = vunpack.c.l.b16 %v148
  %v2282 = vunpack.c.h.b16 %v148
  %v2283 = vunpack.c.l.b16 %v149
  %v2284 = vunpack.c.h.b16 %v149
  %v2285 = vunpack.c.l.b16 %v150
  %v2286 = vunpack.c.h.b16 %v150
  %v2287 = vunpack.c.l.b16 %v151
  %v2288 = vunpack.c.h.b16 %v151
  %v2289 = vunpack.c.l.b16 %v152
  %v2290 = vunpack.c.h.b16 %v152
  %v2291 = vunpack.c.l.b16 %v153
  %v2292 = vunpack.c.h.b16 %v153
  %v2293 = vunpack.c.l.b16 %v154
  %v2294 = vunpack.c.h.b16 %v154
  %v2295 = vunpack.c.l.b16 %v155
  %v2296 = vunpack.c.h.b16 %v155
  %v2297 = vunpack.c.l.b16 %v156
  %v2298 = vunpack.c.h.b16 %v156
  %v2299 = vunpack.c.l.b16 %v157
  %v2300 = vunpack.c.h.b16 %v157
  %v2301 = vunpack.c.l.b16 %v158
  %v2302 = vunpack.c.h.b16 %v158
  %v2303 = vunpack.c.l.b16 %v159
  %v2304 = vunpack.c.h.b16 %v159
  %v2305 = vunpack.c.l.b16 %v160
  %v2306 = vunpack.c.h.b16 %v160
  %v2307 = vunpack.c.l.b16 %v161
  %v2308 = vunpack.c.h.b16 %v161
  %v2309 = vunpack.c.l.b16 %v162
  %v2310 = vunpack.c.h.b16 %v162
  %v2311 = vunpack.c.l.b16 %v163
  %v2312 = vunpack.c.h.b16 %v163
  %v2313 = vunpack.c.l.b16 %v164
  %v2314 = vunpack.c.h.b16 %v164
  %v2315 = vunpack.c.l.b16 %v165
  %v2316 = vunpack.c.h.b16 %v165
  %v2317 = vunpack.c.l.b16 %v166
  %v2318 = vunpack.c.h.b16 %v166
  %v2319 = vunpack.c.l.b16 %v167
  %v2320 = vunpack.c.h.b16 %v167
  %v2321 = vunpack.c.l.b16 %v168
  %v2322 = vunpack.c.h.b16 %v168
  %v2323 = vunpack.c.l.b16 %v169
  %v2324 = vunpack.c.h.b16 %v169
  %v2325 = vunpack.c.l.b16 %v170
  %v2326 = vunpack.c.h.b16 %v170
  %v2327 = vunpack.c.l.b16 %v171
  %v2328 = vunpack.c.h.b16 %v171
  %v2329 = vunpack.c.l.b16 %v172
  %v2330 = vunpack.c.h.b16 %v172
  %v2331 = vunpack.c.l.b16 %v173
  %v2332 = vunpack.c.h.b16 %v173
  %v2333 = vunpack.c.l.b16 %v174
  %v2334 = vunpack.c.h.b16 %v174
  %v2335 = vunpack.c.l.b16 %v175
  %v2336 = vunpack.c.h.b16 %v175
  %v2337 = vunpack.c.l.b16 %v176
  %v2338 = vunpack.c.h.b16 %v176
  %v2339 = vunpack.c.l.b16 %v177
  %v2340 = vunpack.c.h.b16 %v177
  %v2341 = vunpack.c.l.b16 %v178
  %v2342 = vunpack.c.h.b16 %v178
  %v2343 = vunpack.c.l.b16 %v179
  %v2344 = vunpack.c.h.b16 %v179
  %v2345 = vunpack.c.l.b16 %v180
  %v2346 = vunpack.c.h.b16 %v180
  %v2347 = vunpack.c.l.b16 %v181
  %v2348 = vunpack.c.h.b16 %v181
  %v2349 = vunpack.c.l.b16 %v182
  %v2350 = vunpack.c.h.b16 %v182
  %v2351 = vunpack.c.l.b16 %v183
  %v2352 = vunpack.c.h.b16 %v183
  %v2353 = vunpack.c.l.b16 %v184
  %v2354 = vunpack.c.h.b16 %v184
  %v2355 = vunpack.c.l.b16 %v185
  %v2356 = vunpack.c.h.b16 %v185
  %v2357 = vunpack.c.l.b16 %v186
  %v2358 = vunpack.c.h.b16 %v186
  %v2359 = vunpack.c.l.b16 %v187
  %v2360 = vunpack.c.h.b16 %v187
  %v2361 = vunpack.c.l.b16 %v188
  %v2362 = vunpack.c.h.b16 %v188
  %v2363 = vunpack.c.l.b16 %v189
  %v2364 = vunpack.c.h.b16 %v189
  %v2365 = vunpack.c.l.b16 %v190
  %v2366 = vunpack.c.h.b16 %v190
  %v2367 = vunpack.c.l.b16 %v191
  %v2368 = vunpack.c.h.b16 %v191
  %v2369 = vunpack.c.l.b16 %v192
  %v2370 = vunpack.c.h.b16 %v192
  %v2371 = vunpack.c.l.b16 %v193
  %v2372 = vunpack.c.h.b16 %v193
  %v2373 = vunpack.c.l.b16 %v194
  %v2374 = vunpack.c.h.b16 %v194
  %v2375 = vunpack.c.l.b16 %v195
  %v2376 = vunpack.c.h.b16 %v195
  %v2377 = vunpack.c.l.b16 %v196
  %v2378 = vunpack.c.h.b16 %v196
  %v2379 = vunpack.c.l.b16 %v197
  %v2380 = vunpack.c.h.b16 %v197
  %v2381 = vunpack.c.l.b16 %v198
  %v2382 = vunpack.c.h.b16 %v198
  %v2383 = vunpack.c.l.b16 %v199
  %v2384 = vunpack.c.h.b16 %v199
  %v2385 = vunpack.c.l.b16 %v200
  %v2386 = vunpack.c.h.b16 %v200
  %v2387 = vunpack.c.l.b16 %v201
  %v2388 = vunpack.c.h.b16 %v201
  %v2389 = vunpack.c.l.b16 %v202
  %v2390 = vunpack.c.h.b16 %v202
  %v2391 = vunpack.c.l.b16 %v203
  %v2392 = vunpack.c.h.b16 %v203
  %v2393 = vunpack.c.l.b16 %v204
  %v2394 = vunpack.c.h.b16 %v204
  %v2395 = vunpack.c.l.b16 %v205
  %v2396 = vunpack.c.h.b16 %v205
  %v2397 = vunpack.c.l.b16 %v206
  %v2398 = vunpack.c.h.b16 %v206
  %v2399 = vunpack.c.l.b16 %v207
  %v2400 = vunpack.c.h.b16 %v207
  %v2401 = vunpack.c.l.b16 %v208
  %v2402 = vunpack.c.h.b16 %v208
  %v2403 = vunpack.c.l.b16 %v209
  %v2404 = vunpack.c.h.b16 %v209
  %v2405 = vunpack.c.l.b16 %v210
  %v2406 = vunpack.c.h.b16 %v210
  %v2407 = vunpack.c.l.b16 %v211
  %v2408 = vunpack.c.h.b16 %v211
  %v2409 = vunpack.c.l.b16 %v212
  %v2410 = vunpack.c.h.b16 %v212
  %v2411 = vunpack.c.l.b16 %v213
  %v2412 = vunpack.c.h.b16 %v213
  %v2413 = vunpack.c.l.b16 %v214
  %v2414 = vunpack.c.h.b16 %v214
  %v2415 = vunpack.c.l.b16 %v215
  %v2416 = vunpack.c.h.b16 %v215
  %v2417 = vunpack.c.l.b16 %v216
  %v2418 = vunpack.c.h.b16 %v216
  %v2419 = vunpack.c.l.b16 %v217
  %v2420 = vunpack.c.h.b16 %v217
  %v2421 = vunpack.c.l.b16 %v218
  %v2422 = vunpack.c.h.b16 %v218
  %v2423 = vunpack.c.l.b16 %v219
  %v2424 = vunpack.c.h.b16 %v219
  %v2425 = vunpack.c.l.b16 %v220
  %v2426 = vunpack.c.h.b16 %v220
  %v2427 = vunpack.c.l.b16 %v221
  %v2428 = vunpack.c.h.b16 %v221
  %v2429 = vunpack.c.l.b16 %v222
  %v2430 = vunpack.c.h.b16 %v222
  %v2431 = vunpack.c.l.b16 %v223
  %v2432 = vunpack.c.h.b16 %v223
  %v2433 = vunpack.c.l.b16 %v224
  %v2434 = vunpack.c.h.b16 %v224
  %v2435 = vunpack.c.l.b16 %v225
  %v2436 = vunpack.c.h.b16 %v225
  %v2437 = vunpack.c.l.b16 %v226
  %v2438 = vunpack.c.h.b16 %v226
  %v2439 = vunpack.c.l.b16 %v227
  %v2440 = vunpack.c.h.b16 %v227
  %v2441 = vunpack.c.l.b16 %v228
  %v2442 = vunpack.c.h.b16 %v228
  %v2443 = vunpack.c.l.b16 %v229
  %v2444 = vunpack.c.h.b16 %v229
  %v2445 = vunpack.c.l.b16 %v230
  %v2446 = vunpack.c.h.b16 %v230
  %v2447 = vunpack.c.l.b16 %v231
  %v2448 = vunpack.c.h.b16 %v231
  %v2449 = vunpack.c.l.b16 %v232
  %v2450 = vunpack.c.h.b16 %v232
  %v2451 = vunpack.c.l.b16 %v233
  %v2452 = vunpack.c.h.b16 %v233
  %v2453 = vunpack.c.l.b16 %v234
  %v2454 = vunpack.c.h.b16 %v234
  %v2455 = vunpack.c.l.b16 %v235
  %v2456 = vunpack.c.h.b16 %v235
  %v2457 = vunpack.c.l.b16 %v236
  %v2458 = vunpack.c.h.b16 %v236
  %v2459 = vunpack.c.l.b16 %v237
  %v2460 = vunpack.c.h.b16 %v237
  %v2461 = vunpack.c.l.b16 %v238
  %v2462 = vunpack.c.h.b16 %v238
  %v2463 = vunpack.c.l.b16 %v239
  %v2464 = vunpack.c.h.b16 %v239
  %v2465 = vunpack.c.l.b16 %v240
  %v2466 = vunpack.c.h.b16 %v240
  %v2467 = vunpack.c.l.b16 %v241
  %v2468 = vunpack.c.h.b16 %v241
  %v2469 = vunpack.c.l.b16 %v242
  %v2470 = vunpack.c.h.b16 %v242
  %v2471 = vunpack.c.l.b16 %v243
  %v2472 = vunpack.c.h.b16 %v243
  %v2473 = vunpack.c.l.b16 %v244
  %v2474 = vunpack.c.h.b16 %v244
  %v2475 = vunpack.c.l.b16 %v245
  %v2476 = vunpack.c.h.b16 %v245
  %v2477 = vunpack.c.l.b16 %v246
  %v2478 = vunpack.c.h.b16 %v246
  %v2479 = vunpack.c.l.b16 %v247
  %v2480 = vunpack.c.h.b16 %v247
  %v2481 = vunpack.c.l.b16 %v248
  %v2482 = vunpack.c.h.b16 %v248
  %v2483 = vunpack.c.l.b16 %v249
  %v2484 = vunpack.c.h.b16 %v249
  %v2485 = vunpack.c.l.b16 %v250
  %v2486 = vunpack.c.h.b16 %v250
  %v2487 = vunpack.c.l.b16 %v251
  %v2488 = vunpack.c.h.b16 %v251
  %v2489 = vunpack.c.l.b16 %v252
  %v2490 = vunpack.c.h.b16 %v252
  %v2491 = vunpack.c.l.b16 %v253
  %v2492 = vunpack.c.h.b16 %v253
  %v2493 = vunpack.c.l.b16 %v254
  %v2494 = vunpack.c.h.b16 %v254
  %v2495 = vunpack.c.l.b16 %v255
  %v2496 = vunpack.c.h.b16 %v255
  %v2497 = vunpack.c.l.b16 %v256
  %v2498 = vunpack.c.h.b16 %v256
  %v2499 = vunpack.c.l.b16 %v257
  %v2500 = vunpack.c.h.b16 %v257
  %v2501 = vunpack.c.l.b16 %v258
  %v2502 = vunpack.c.h.b16 %v258
  %v2503 = vunpack.c.l.b16 %v259
  %v2504 = vunpack.c.h.b16 %v259
  %v2505 = vunpack.c.l.b16 %v260
  %v2506 = vunpack.c.h.b16 %v260
  %v2507 = vunpack.c.l.b16 %v261
  %v2508 = vunpack.c.h.b16 %v261
  %v2509 = vunpack.c.l.b16 %v262
  %v2510 = vunpack.c.h.b16 %v262
  %v2511 = vunpack.c.l.b16 %v263
  %v2512 = vunpack.c.h.b16 %v263
  %v2513 = vunpack.c.l.b16 %v264
  %v2514 = vunpack.c.h.b16 %v264
  %v2515 = vunpack.c.l.b16 %v265
  %v2516 = vunpack.c.h.b16 %v265
  %v2517 = vunpack.c.l.b16 %v266
  %v2518 = vunpack.c.h.b16 %v266
  %v2519 = vunpack.c.l.b16 %v267
  %v2520 = vunpack.c.h.b16 %v267
  %v2521 = vunpack.c.l.b16 %v268
  %v2522 = vunpack.c.h.b16 %v268
  %v2523 = vunpack.c.l.b16 %v269
  %v2524 = vunpack.c.h.b16 %v269
  %v2525 = vunpack.c.l.b16 %v270
  %v2526 = vunpack.c.h.b16 %v270
  %v2527 = vunpack.c.l.b16 %v271
  %v2528 = vunpack.c.h.b16 %v271
  %v2529 = vunpack.c.l.b16 %v272
  %v2530 = vunpack.c.h.b16 %v272
  %v2531 = vunpack.c.l.b16 %v273
  %v2532 = vunpack.c.h.b16 %v273
  %v2533 = vunpack.c.l.b16 %v274
  %v2534 = vunpack.c.h.b16 %v274
  %v2535 = vunpack.c.l.b16 %v275
  %v2536 = vunpack.c.h.b16 %v275
  %v2537 = vunpack.c.l.b16 %v276
  %v2538 = vunpack.c.h.b16 %v276
  %v2539 = vunpack.c.l.b16 %v277
  %v2540 = vunpack.c.h.b16 %v277
  %v2541 = vunpack.c.l.b16 %v278
  %v2542 = vunpack.c.h.b16 %v278
  %v2543 = vunpack.c.l.b16 %v279
  %v2544 = vunpack.c.h.b16 %v279
  %v2545 = vunpack.c.l.b16 %v280
  %v2546 = vunpack.c.h.b16 %v280
  %v2547 = vunpack.c.l.b16 %v281
  %v2548 = vunpack.c.h.b16 %v281
  %v2549 = vunpack.c.l.b16 %v282
  %v2550 = vunpack.c.h.b16 %v282
  %v2551 = vunpack.c.l.b16 %v283
  %v2552 = vunpack.c.h.b16 %v283
  %v2553 = vunpack.c.l.b16 %v284
  %v2554 = vunpack.c.h.b16 %v284
  %v2555 = vunpack.c.l.b16 %v285
  %v2556 = vunpack.c.h.b16 %v285
  %v2557 = vunpack.c.l.b16 %v286
  %v2558 = vunpack.c.h.b16 %v286
  %v2559 = vunpack.c.l.b16 %v287
  %v2560 = vunpack.c.h.b16 %v287
  %v2561 = vunpack.c.l.b16 %v288
  %v2562 = vunpack.c.h.b16 %v288
  %v2563 = vunpack.c.l.b16 %v289
  %v2564 = vunpack.c.h.b16 %v289
  %v2565 = vunpack.c.l.b16 %v290
  %v2566 = vunpack.c.h.b16 %v290
  %v2567 = vunpack.c.l.b16 %v291
  %v2568 = vunpack.c.h.b16 %v291
  %v2569 = vunpack.c.l.b16 %v292
  %v2570 = vunpack.c.h.b16 %v292
  %v2571 = vunpack.c.l.b16 %v293
  %v2572 = vunpack.c.h.b16 %v293
  %v2573 = vunpack.c.l.b16 %v294
  %v2574 = vunpack.c.h.b16 %v294
  %v2575 = vunpack.c.l.b16 %v295
  %v2576 = vunpack.c.h.b16 %v295
  %v2577 = vunpack.c.l.b16 %v296
  %v2578 = vunpack.c.h.b16 %v296
  %v2579 = vunpack.c.l.b16 %v297
  %v2580 = vunpack.c.h.b16 %v297
  %v2581 = vunpack.c.l.b16 %v298
  %v2582 = vunpack.c.h.b16 %v298
  %v2583 = vunpack.c.l.b16 %v299
  %v2584 = vunpack.c.h.b16 %v299
  %v2585 = vunpack.c.l.b16 %v300
  %v2586 = vunpack.c.h.b16 %v300
  %v2587 = vunpack.c.l.b16 %v301
  %v2588 = vunpack.c.h.b16 %v301
  %v2589 = vunpack.c.l.b16 %v302
  %v2590 = vunpack.c.h.b16 %v302
  %v2591 = vunpack.c.l.b16 %v303
  %v2592 = vunpack.c.h.b16 %v303
  %v2593 = vunpack.c.l.b16 %v304
  %v2594 = vunpack.c.h.b16 %v304
  %v2595 = vunpack.c.l.b16 %v305
  %v2596 = vunpack.c.h.b16 %v305
  %v2597 = vunpack.c.l.b16 %v306
  %v2598 = vunpack.c.h.b16 %v306
  %v2599 = vunpack.c.l.b16 %v307
  %v2600 = vunpack.c.h.b16 %v307
  %v2601 = vunpack.c.l.b16 %v308
  %v2602 = vunpack.c.h.b16 %v308
  %v2603 = vunpack.c.l.b16 %v309
  %v2604 = vunpack.c.h.b16 %v309
  %v2605 = vunpack.c.l.b16 %v310
  %v2606 = vunpack.c.h.b16 %v310
  %v2607 = vunpack.c.l.b16 %v311
  %v2608 = vunpack.c.h.b16 %v311
  %v2609 = vunpack.c.l.b16 %v312
  %v2610 = vunpack.c.h.b16 %v312
  %v2611 = vunpack.c.l.b16 %v313
  %v2612 = vunpack.c.h.b16 %v313
  %v2613 = vunpack.c.l.b16 %v314
  %v2614 = vunpack.c.h.b16 %v314
  %v2615 = vunpack.c.l.b16 %v315
  %v2616 = vunpack.c.h.b16 %v315
  %v2617 = vunpack.c.l.b16 %v316
  %v2618 = vunpack.c.h.b16 %v316
  %v2619 = vunpack.c.l.b16 %v317
  %v2620 = vunpack.c.h.b16 %v317
  %v2621 = vunpack.c.l.b16 %v318
  %v2622 = vunpack.c.h.b16 %v318
  %v2623 = vunpack.c.l.b16 %v319
  %v2624 = vunpack.c.h.b16 %v319
  %v2625 = vunpack.c.l.b16 %v320
  %v2626 = vunpack.c.h.b16 %v320
  %v2627 = vunpack.c.l.b16 %v321
  %v2628 = vunpack.c.h.b16 %v321
  %v2629 = vunpack.c.l.b16 %v322
  %v2630 = vunpack.c.h.b16 %v322
  %v2631 = vunpack.c.l.b16 %v323
  %v2632 = vunpack.c.h.b16 %v323
  %v2633 = vunpack.c.l.b16 %v324
  %v2634 = vunpack.c.h.b16 %v324
  %v2635 = vunpack.c.l.b16 %v325
  %v2636 = vunpack.c.h.b16 %v325
  %v2637 = vunpack.c.l.b16 %v326
  %v2638 = vunpack.c.h.b16 %v326
  %v2639 = vunpack.c.l.b16 %v327
  %v2640 = vunpack.c.h.b16 %v327
  %v2641 = vunpack.c.l.b16 %v328
  %v2642 = vunpack.c.h.b16 %v328
  %v2643 = vunpack.c.l.b16 %v329
  %v2644 = vunpack.c.h.b16 %v329
  %v2645 = vunpack.c.l.b16 %v330
  %v2646 = vunpack.c.h.b16 %v330
  %v2647 = vunpack.c.l.b16 %v331
  %v2648 = vunpack.c.h.b16 %v331
  %v2649 = vunpack.c.l.b16 %v332
  %v2650 = vunpack.c.h.b16 %v332
  %v2651 = vunpack.c.l.b16 %v333
  %v2652 = vunpack.c.h.b16 %v333
  %v2653 = vunpack.c.l.b16 %v334
  %v2654 = vunpack.c.h.b16 %v334
  %v2655 = vunpack.c.l.b16 %v335
  %v2656 = vunpack.c.h.b16 %v335
  %v2657 = vunpack.c.l.b16 %v336
  %v2658 = vunpack.c.h.b16 %v336
  %v2659 = vunpack.c.l.b16 %v337
  %v2660 = vunpack.c.h.b16 %v337
  %v2661 = vunpack.c.l.b16 %v338
  %v2662 = vunpack.c.h.b16 %v338
  %v2663 = vunpack.c.l.b16 %v339
  %v2664 = vunpack.c.h.b16 %v339
  %v2665 = vunpack.c.l.b16 %v340
  %v2666 = vunpack.c.h.b16 %v340
  %v2667 = vunpack.c.l.b16 %v341
  %v2668 = vunpack.c.h.b16 %v341
  %v2669 = vunpack.c.l.b16 %v342
  %v2670 = vunpack.c.h.b16 %v342
  %v2671 = vunpack.c.l.b16 %v343
  %v2672 = vunpack.c.h.b16 %v343
  %v2673 = vunpack.c.l.b16 %v344
  %v2674 = vunpack.c.h.b16 %v344
  %v2675 = vunpack.c.l.b16 %v345
  %v2676 = vunpack.c.h.b16 %v345
  %v2677 = vunpack.c.l.b16 %v346
  %v2678 = vunpack.c.h.b16 %v346
  %v2679 = vunpack.c.l.b16 %v347
  %v2680 = vunpack.c.h.b16 %v347
  %v2681 = vunpack.c.l.b16 %v348
  %v2682 = vunpack.c.h.b16 %v348
  %v2683 = vunpack.c.l.b16 %v349
  %v2684 = vunpack.c.h.b16 %v349
  %v2685 = vunpack.c.l.b16 %v350
  %v2686 = vunpack.c.h.b16 %v350
  %v2687 = vunpack.c.l.b16 %v351
  %v2688 = vunpack.c.h.b16 %v351
  %v2689 = vunpack.c.l.b16 %v352
  %v2690 = vunpack.c.h.b16 %v352
  %v2691 = vunpack.c.l.b16 %v353
  %v2692 = vunpack.c.h.b16 %v353
  %v2693 = vunpack.c.l.b16 %v354
  %v2694 = vunpack.c.h.b16 %v354
  %v2695 = vunpack.c.l.b16 %v355
  %v2696 = vunpack.c.h.b16 %v355
  %v2697 = vunpack.c.l.b16 %v356
  %v2698 = vunpack.c.h.b16 %v356
  %v2699 = vunpack.c.l.b16 %v357
  %v2700 = vunpack.c.h.b16 %v357
  %v2701 = vunpack.c.l.b16 %v358
  %v2702 = vunpack.c.h.b16 %v358
  %v2703 = vunpack.c.l.b16 %v359
  %v2704 = vunpack.c.h.b16 %v359
  %v2705 = vunpack.c.l.b16 %v360
  %v2706 = vunpack.c.h.b16 %v360
  %v2707 = vunpack.c.l.b16 %v361
  %v2708 = vunpack.c.h.b16 %v361
  %v2709 = vunpack.c.l.b16 %v362
  %v2710 = vunpack.c.h.b16 %v362
  %v2711 = vunpack.c.l.b16 %v363
  %v2712 = vunpack.c.h.b16 %v363
  %v2713 = vunpack.c.l.b16 %v364
  %v2714 = vunpack.c.h.b16 %v364
  %v2715 = vunpack.c.l.b16 %v365
  %v2716 = vunpack.c.h.b16 %v365
  %v2717 = vunpack.c.l.b16 %v366
  %v2718 = vunpack.c.h.b16 %v366
  %v2719 = vunpack.c.l.b16 %v367
  %v2720 = vunpack.c.h.b16 %v367
  %v2721 = vunpack.c.l.b16 %v368
  %v2722 = vunpack.c.h.b16 %v368
  %v2723 = vunpack.c.l.b16 %v369
  %v2724 = vunpack.c.h.b16 %v369
  %v2725 = vunpack.c.l.b16 %v370
  %v2726 = vunpack.c.h.b16 %v370
  %v2727 = vunpack.c.l.b16 %v371
  %v2728 = vunpack.c.h.b16 %v371
  %v2729 = vunpack.c.l.b16 %v372
  %v2730 = vunpack.c.h.b16 %v372
  %v2731 = vunpack.c.l.b16 %v373
  %v2732 = vunpack.c.h.b16 %v373
  %v2733 = vunpack.c.l.b16 %v374
  %v2734 = vunpack.c.h.b16 %v374
  %v2735 = vunpack.c.l.b16 %v375
  %v2736 = vunpack.c.h.b16 %v375
  %v2737 = vunpack.c.l.b16 %v376
  %v2738 = vunpack.c.h.b16 %v376
  %v2739 = vunpack.c.l.b16 %v377
  %v2740 = vunpack.c.h.b16 %v377
  %v2741 = vunpack.c.l.b16 %v378
  %v2742 = vunpack.c.h.b16 %v378
  %v2743 = vunpack.c.l.b16 %v379
  %v2744 = vunpack.c.h.b16 %v379
  %v2745 = vunpack.c.l.b16 %v380
  %v2746 = vunpack.c.h.b16 %v380
  %v2747 = vunpack.c.l.b16 %v381
  %v2748 = vunpack.c.h.b16 %v381
  %v2749 = vunpack.c.l.b16 %v382
  %v2750 = vunpack.c.h.b16 %v382
  %v2751 = vunpack.c.l.b16 %v383
  %v2752 = vunpack.c.h.b16 %v383
  %v2753 = vunpack.c.l.b16 %v384
  %v2754 = vunpack.c.h.b16 %v384
  %v2755 = vunpack.c.l.b16 %v385
  %v2756 = vunpack.c.h.b16 %v385
  %v2757 = vunpack.c.l.b16 %v386
  %v2758 = vunpack.c.h.b16 %v386
  %v2759 = vunpack.c.l.b16 %v387
  %v2760 = vunpack.c.h.b16 %v387
  %v2761 = vunpack.c.l.b16 %v388
  %v2762 = vunpack.c.h.b16 %v388
  %v2763 = vunpack.c.l.b16 %v389
  %v2764 = vunpack.c.h.b16 %v389
  %v2765 = vunpack.c.l.b16 %v390
  %v2766 = vunpack.c.h.b16 %v390
  %v2767 = vunpack.c.l.b16 %v391
  %v2768 = vunpack.c.h.b16 %v391
  %v2769 = vunpack.c.l.b16 %v392
  %v2770 = vunpack.c.h.b16 %v392
  %v2771 = vunpack.c.l.b16 %v393
  %v2772 = vunpack.c.h.b16 %v393
  %v2773 = vunpack.c.l.b16 %v394
  %v2774 = vunpack.c.h.b16 %v394
  %v2775 = vunpack.c.l.b16 %v395
  %v2776 = vunpack.c.h.b16 %v395
  %v2777 = vunpack.c.l.b16 %v396
  %v2778 = vunpack.c.h.b16 %v396
  %v2779 = vunpack.c.l.b16 %v397
  %v2780 = vunpack.c.h.b16 %v397
  %v2781 = vunpack.c.l.b16 %v398
  %v2782 = vunpack.c.h.b16 %v398
  %v2783 = vunpack.c.l.b16 %v399
  %v2784 = vunpack.c.h.b16 %v399
  %v2785 = vunpack.c.l.b16 %v400
  %v2786 = vunpack.c.h.b16 %v400
  %v2787 = vunpack.c.l.b16 %v401
  %v2788 = vunpack.c.h.b16 %v401
  %v2789 = vunpack.c.l.b16 %v402
  %v2790 = vunpack.c.h.b16 %v402
  %v2791 = vunpack.c.l.b16 %v403
  %v2792 = vunpack.c.h.b16 %v403
  %v2793 = vunpack.c.l.b16 %v404
  %v2794 = vunpack.c.h.b16 %v404
  %v2795 = vunpack.c.l.b16 %v405
  %v2796 = vunpack.c.h.b16 %v405
  %v2797 = vunpack.c.l.b16 %v406
  %v2798 = vunpack.c.h.b16 %v406
  %v2799 = vunpack.c.l.b16 %v407
  %v2800 = vunpack.c.h.b16 %v407
  %v2801 = vunpack.c.l.b16 %v408
  %v2802 = vunpack.c.h.b16 %v408
  %v2803 = vunpack.c.l.b16 %v409
  %v2804 = vunpack.c.h.b16 %v409
  %v2805 = vunpack.c.l.b16 %v410
  %v2806 = vunpack.c.h.b16 %v410
  %v2807 = vunpack.c.l.b16 %v411
  %v2808 = vunpack.c.h.b16 %v411
  %v2809 = vunpack.c.l.b16 %v412
  %v2810 = vunpack.c.h.b16 %v412
  %v2811 = vunpack.c.l.b16 %v413
  %v2812 = vunpack.c.h.b16 %v413
  %v2813 = vunpack.c.l.b16 %v414
  %v2814 = vunpack.c.h.b16 %v414
  %v2815 = vunpack.c.l.b16 %v415
  %v2816 = vunpack.c.h.b16 %v415
  %v2817 = vunpack.c.l.b16 %v416
  %v2818 = vunpack.c.h.b16 %v416
  %v2819 = vunpack.c.l.b16 %v417
  %v2820 = vunpack.c.h.b16 %v417
  %v2821 = vunpack.c.l.b16 %v418
  %v2822 = vunpack.c.h.b16 %v418
  %v2823 = vunpack.c.l.b16 %v419
  %v2824 = vunpack.c.h.b16 %v419
  %v2825 = vunpack.c.l.b16 %v420
  %v2826 = vunpack.c.h.b16 %v420
  %v2827 = vunpack.c.l.b16 %v421
  %v2828 = vunpack.c.h.b16 %v421
  %v2829 = vunpack.c.l.b16 %v422
  %v2830 = vunpack.c.h.b16 %v422
  %v2831 = vunpack.c.l.b16 %v423
  %v2832 = vunpack.c.h.b16 %v423
  %v2833 = vunpack.c.l.b16 %v424
  %v2834 = vunpack.c.h.b16 %v424
  %v2835 = vunpack.c.l.b16 %v425
  %v2836 = vunpack.c.h.b16 %v425
  %v2837 = vunpack.c.l.b16 %v426
  %v2838 = vunpack.c.h.b16 %v426
  %v2839 = vunpack.c.l.b16 %v427
  %v2840 = vunpack.c.h.b16 %v427
  %v2841 = vunpack.c.l.b16 %v428
  %v2842 = vunpack.c.h.b16 %v428
  %v2843 = vunpack.c.l.b16 %v429
  %v2844 = vunpack.c.h.b16 %v429
  %v2845 = vunpack.c.l.b16 %v430
  %v2846 = vunpack.c.h.b16 %v430
  %v2847 = vunpack.c.l.b16 %v431
  %v2848 = vunpack.c.h.b16 %v431
  %v2849 = vunpack.c.l.b16 %v432
  %v2850 = vunpack.c.h.b16 %v432
  %v2851 = vunpack.c.l.b16 %v433
  %v2852 = vunpack.c.h.b16 %v433
  %v2853 = vunpack.c.l.b16 %v434
  %v2854 = vunpack.c.h.b16 %v434
  %v2855 = vunpack.c.l.b16 %v435
  %v2856 = vunpack.c.h.b16 %v435
  %v2857 = vunpack.c.l.b16 %v436
  %v2858 = vunpack.c.h.b16 %v436
  %v2859 = vunpack.c.l.b16 %v437
  %v2860 = vunpack.c.h.b16 %v437
  %v2861 = vunpack.c.l.b16 %v438
  %v2862 = vunpack.c.h.b16 %v438
  %v2863 = vunpack.c.l.b16 %v439
  %v2864 = vunpack.c.h.b16 %v439
  %v2865 = vunpack.c.l.b16 %v440
  %v2866 = vunpack.c.h.b16 %v440
  %v2867 = vunpack.c.l.b16 %v441
  %v2868 = vunpack.c.h.b16 %v441
  %v2869 = vunpack.c.l.b16 %v442
  %v2870 = vunpack.c.h.b16 %v442
  %v2871 = vunpack.c.l.b16 %v443
  %v2872 = vunpack.c.h.b16 %v443
  %v2873 = vunpack.c.l.b16 %v444
  %v2874 = vunpack.c.h.b16 %v444
  %v2875 = vunpack.c.l.b16 %v445
  %v2876 = vunpack.c.h.b16 %v445
  %v2877 = vunpack.c.l.b16 %v446
  %v2878 = vunpack.c.h.b16 %v446
  %v2879 = vunpack.c.l.b16 %v447
  %v2880 = vunpack.c.h.b16 %v447
  %v2881 = vunpack.c.l.b16 %v448
  %v2882 = vunpack.c.h.b16 %v448
  %v2883 = vunpack.c.l.b16 %v449
  %v2884 = vunpack.c.h.b16 %v449
  %v2885 = vunpack.c.l.b16 %v450
  %v2886 = vunpack.c.h.b16 %v450
  %v2887 = vunpack.c.l.b16 %v451
  %v2888 = vunpack.c.h.b16 %v451
  %v2889 = vunpack.c.l.b16 %v452
  %v2890 = vunpack.c.h.b16 %v452
  %v2891 = vunpack.c.l.b16 %v453
  %v2892 = vunpack.c.h.b16 %v453
  %v2893 = vunpack.c.l.b16 %v454
  %v2894 = vunpack.c.h.b16 %v454
  %v2895 = vunpack.c.l.b16 %v455
  %v2896 = vunpack.c.h.b16 %v455
  %v2897 = vunpack.c.l.b16 %v456
  %v2898 = vunpack.c.h.b16 %v456
  %v2899 = vunpack.c.l.b16 %v457
  %v2900 = vunpack.c.h.b16 %v457
  %v2901 = vunpack.c.l.b16 %v458
  %v2902 = vunpack.c.h.b16 %v458
  %v2903 = vunpack.c.l.b16 %v459
  %v2904 = vunpack.c.h.b16 %v459
  %v2905 = vunpack.c.l.b16 %v460
  %v2906 = vunpack.c.h.b16 %v460
  %v2907 = vunpack.c.l.b16 %v461
  %v2908 = vunpack.c.h.b16 %v461
  %v2909 = vunpack.c.l.b16 %v462
  %v2910 = vunpack.c.h.b16 %v462
  %v2911 = vunpack.c.l.b16 %v463
  %v2912 = vunpack.c.h.b16 %v463
  %v2913 = vunpack.c.l.b16 %v464
  %v2914 = vunpack.c.h.b16 %v464
  %v2915 = vunpack.c.l.b16 %v465
  %v2916 = vunpack.c.h.b16 %v465
  %v2917 = vunpack.c.l.b16 %v466
  %v2918 = vunpack.c.h.b16 %v466
  %v2919 = vunpack.c.l.b16 %v467
  %v2920 = vunpack.c.h.b16 %v467
  %v2921 = vunpack.c.l.b16 %v468
  %v2922 = vunpack.c.h.b16 %v468
  %v2923 = vunpack.c.l.b16 %v469
  %v2924 = vunpack.c.h.b16 %v469
  %v2925 = vunpack.c.l.b16 %v470
  %v2926 = vunpack.c.h.b16 %v470
  %v2927 = vunpack.c.l.b16 %v471
  %v2928 = vunpack.c.h.b16 %v471
  %v2929 = vunpack.c.l.b16 %v472
  %v2930 = vunpack.c.h.b16 %v472
  %v2931 = vunpack.c.l.b16 %v473
  %v2932 = vunpack.c.h.b16 %v473
  %v2933 = vunpack.c.l.b16 %v474
  %v2934 = vunpack.c.h.b16 %v474
  %v2935 = vunpack.c.l.b16 %v475
  %v2936 = vunpack.c.h.b16 %v475
  %v2937 = vunpack.c.l.b16 %v476
  %v2938 = vunpack.c.h.b16 %v476
  %v2939 = vunpack.c.l.b16 %v477
  %v2940 = vunpack.c.h.b16 %v477
  %v2941 = vunpack.c.l.b16 %v478
  %v2942 = vunpack.c.h.b16 %v478
  %v2943 = vunpack.c.l.b16 %v479
  %v2944 = vunpack.c.h.b16 %v479
  %v2945 = vunpack.c.l.b16 %v480
  %v2946 = vunpack.c.h.b16 %v480
  %v2947 = vunpack.c.l.b16 %v481
  %v2948 = vunpack.c.h.b16 %v481
  %v2949 = vunpack.c.l.b16 %v482
  %v2950 = vunpack.c.h.b16 %v482
  %v2951 = vunpack.c.l.b16 %v483
  %v2952 = vunpack.c.h.b16 %v483
  %v2953 = vunpack.c.l.b16 %v484
  %v2954 = vunpack.c.h.b16 %v484
  %v2955 = vunpack.c.l.b16 %v485
  %v2956 = vunpack.c.h.b16 %v485
  %v2957 = vunpack.c.l.b16 %v486
  %v2958 = vunpack.c.h.b16 %v486
  %v2959 = vunpack.c.l.b16 %v487
  %v2960 = vunpack.c.h.b16 %v487
  %v2961 = vunpack.c.l.b16 %v488
  %v2962 = vunpack.c.h.b16 %v488
  %v2963 = vunpack.c.l.b16 %v489
  %v2964 = vunpack.c.h.b16 %v489
  %v2965 = vunpack.c.l.b16 %v490
  %v2966 = vunpack.c.h.b16 %v490
  %v2967 = vunpack.c.l.b16 %v491
  %v2968 = vunpack.c.h.b16 %v491
  %v2969 = vunpack.c.l.b16 %v492
  %v2970 = vunpack.c.h.b16 %v492
  %v2971 = vunpack.c.l.b16 %v493
  %v2972 = vunpack.c.h.b16 %v493
  %v2973 = vunpack.c.l.b16 %v494
  %v2974 = vunpack.c.h.b16 %v494
  %v2975 = vunpack.c.l.b16 %v495
  %v2976 = vunpack.c.h.b16 %v495
  %v2977 = vunpack.c.l.b16 %v496
  %v2978 = vunpack.c.h.b16 %v496
  %v2979 = vunpack.c.l.b16 %v497
  %v2980 = vunpack.c.h.b16 %v497
  %v2981 = vunpack.c.l.b16 %v498
  %v2982 = vunpack.c.h.b16 %v498
  %v2983 = vunpack.c.l.b16 %v499
  %v2984 = vunpack.c.h.b16 %v499
  %v2985 = vunpack.c.l.b16 %v500
  %v2986 = vunpack.c.h.b16 %v500
  %v2987 = vunpack.c.l.b16 %v501
  %v2988 = vunpack.c.h.b16 %v501
  %v2989 = vunpack.c.l.b16 %v502
  %v2990 = vunpack.c.h.b16 %v502
  %v2991 = vunpack.c.l.b16 %v503
  %v2992 = vunpack.c.h.b16 %v503
  %v2993 = vunpack.c.l.b16 %v504
  %v2994 = vunpack.c.h.b16 %v504
  %v2995 = vunpack.c.l.b16 %v505
  %v2996 = vunpack.c.h.b16 %v505
  %v2997 = vunpack.c.l.b16 %v506
  %v2998 = vunpack.c.h.b16 %v506
  %v2999 = vunpack.c.l.b16 %v507
  %v3000 = vunpack.c.h.b16 %v507
  %v3001 = vunpack.c.l.b16 %v508
  %v3002 = vunpack.c.h.b16 %v508
  %v3003 = vunpack.c.l.b16 %v509
  %v3004 = vunpack.c.h.b16 %v509
  %v3005 = vunpack.c.l.b16 %v510
  %v3006 = vunpack.c.h.b16 %v510
  %v3007 = vunpack.c.l.b16 %v511
  %v3008 = vunpack.c.h.b16 %v511
  %v3009 = vunpack.c.l.b16 %v512
  %v3010 = vunpack.c.h.b16 %v512
  %v3011 = vunpack.c.l.b16 %v513
  %v3012 = vunpack.c.h.b16 %v513
  %v3013 = vunpack.c.l.b16 %v514
  %v3014 = vunpack.c.h.b16 %v514
  %v3015 = vunpack.c.l.b16 %v515
  %v3016 = vunpack.c.h.b16 %v515
  %v3017 = vunpack.c.l.b16 %v516
  %v3018 = vunpack.c.h.b16 %v516
  %v3019 = vunpack.c.l.b16 %v517
  %v3020 = vunpack.c.h.b16 %v517
  %v3021 = vunpack.c.l.b16 %v518
  %v3022 = vunpack.c.h.b16 %v518
  %v3023 = vunpack.c.l.b16 %v519
  %v3024 = vunpack.c.h.b16 %v519
  %v3025 = vunpack.c.l.b16 %v520
  %v3026 = vunpack.c.h.b16 %v520
  %v3027 = vunpack.c.l.b16 %v521
  %v3028 = vunpack.c.h.b16 %v521
  %v3029 = vunpack.c.l.b16 %v522
  %v3030 = vunpack.c.h.b16 %v522
  %v3031 = vunpack.c.l.b16 %v523
  %v3032 = vunpack.c.h.b16 %v523
  %v3033 = vunpack.c.l.b16 %v524
  %v3034 = vunpack.c.h.b16 %v524
  %v3035 = vunpack.c.l.b16 %v525
  %v3036 = vunpack.c.h.b16 %v525
  %v3037 = vunpack.c.l.b16 %v526
  %v3038 = vunpack.c.h.b16 %v526
  %v3039 = vunpack.c.l.b16 %v527
  %v3040 = vunpack.c.h.b16 %v527
  %v3041 = vunpack.c.l.b16 %v528
  %v3042 = vunpack.c.h.b16 %v528
  %v3043 = vunpack.c.l.b16 %v529
  %v3044 = vunpack.c.h.b16 %v529
  %v3045 = vunpack.c.l.b16 %v530
  %v3046 = vunpack.c.h.b16 %v530
  %v3047 = vunpack.c.l.b16 %v531
  %v3048 = vunpack.c.h.b16 %v531
  %v3049 = vunpack.c.l.b16 %v532
  %v3050 = vunpack.c.h.b16 %v532
  %v3051 = vunpack.c.l.b16 %v533
  %v3052 = vunpack.c.h.b16 %v533
  %v3053 = vunpack.c.l.b16 %v534
  %v3054 = vunpack.c.h.b16 %v534
  %v3055 = vunpack.c.l.b16 %v535
  %v3056 = vunpack.c.h.b16 %v535
  %v3057 = vunpack.c.l.b16 %v536
  %v3058 = vunpack.c.h.b16 %v536
  %v3059 = vunpack.c.l.b16 %v537
  %v3060 = vunpack.c.h.b16 %v537
  %v3061 = vunpack.c.l.b16 %v538
  %v3062 = vunpack.c.h.b16 %v538
  %v3063 = vunpack.c.l.b16 %v539
  %v3064 = vunpack.c.h.b16 %v539
  %v3065 = vunpack.c.l.b16 %v540
  %v3066 = vunpack.c.h.b16 %v540
  %v3067 = vunpack.c.l.b16 %v541
  %v3068 = vunpack.c.h.b16 %v541
  %v3069 = vunpack.c.l.b16 %v542
  %v3070 = vunpack.c.h.b16 %v542
  %v3071 = vunpack.c.l.b16 %v543
  %v3072 = vunpack.c.h.b16 %v543
  %v3073 = vunpack.c.l.b16 %v544
  %v3074 = vunpack.c.h.b16 %v544
  %v3075 = vunpack.c.l.b16 %v545
  %v3076 = vunpack.c.h.b16 %v545
  %v3077 = vunpack.c.l.b16 %v546
  %v3078 = vunpack.c.h.b16 %v546
  %v3079 = vunpack.c.l.b16 %v547
  %v3080 = vunpack.c.h.b16 %v547
  %v3081 = vunpack.c.l.b16 %v548
  %v3082 = vunpack.c.h.b16 %v548
  %v3083 = vunpack.c.l.b16 %v549
  %v3084 = vunpack.c.h.b16 %v549
  %v3085 = vunpack.c.l.b16 %v550
  %v3086 = vunpack.c.h.b16 %v550
  %v3087 = vunpack.c.l.b16 %v551
  %v3088 = vunpack.c.h.b16 %v551
  %v3089 = vunpack.c.l.b16 %v552
  %v3090 = vunpack.c.h.b16 %v552
  %v3091 = vunpack.c.l.b16 %v553
  %v3092 = vunpack.c.h.b16 %v553
  %v3093 = vunpack.c.l.b16 %v554
  %v3094 = vunpack.c.h.b16 %v554
  %v3095 = vunpack.c.l.b16 %v555
  %v3096 = vunpack.c.h.b16 %v555
  %v3097 = vunpack.c.l.b16 %v556
  %v3098 = vunpack.c.h.b16 %v556
  %v3099 = vunpack.c.l.b16 %v557
  %v3100 = vunpack.c.h.b16 %v557
  %v3101 = vunpack.c.l.b16 %v558
  %v3102 = vunpack.c.h.b16 %v558
  %v3103 = vunpack.c.l.b16 %v559
  %v3104 = vunpack.c.h.b16 %v559
  %v3105 = vunpack.c.l.b16 %v560
  %v3106 = vunpack.c.h.b16 %v560
  %v3107 = vunpack.c.l.b16 %v561
  %v3108 = vunpack.c.h.b16 %v561
  %v3109 = vunpack.c.l.b16 %v562
  %v3110 = vunpack.c.h.b16 %v562
  %v3111 = vunpack.c.l.b16 %v563
  %v3112 = vunpack.c.h.b16 %v563
  %v3113 = vunpack.c.l.b16 %v564
  %v3114 = vunpack.c.h.b16 %v564
  %v3115 = vunpack.c.l.b16 %v565
  %v3116 = vunpack.c.h.b16 %v565
  %v3117 = vunpack.c.l.b16 %v566
  %v3118 = vunpack.c.h.b16 %v566
  %v3119 = vunpack.c.l.b16 %v567
  %v3120 = vunpack.c.h.b16 %v567
  %v3121 = vunpack.c.l.b16 %v568
  %v3122 = vunpack.c.h.b16 %v568
  %v3123 = vunpack.c.l.b16 %v569
  %v3124 = vunpack.c.h.b16 %v569
  %v3125 = vunpack.c.l.b16 %v570
  %v3126 = vunpack.c.h.b16 %v570
  %v3127 = vunpack.c.l.b16 %v571
  %v3128 = vunpack.c.h.b16 %v571
  %v3129 = vunpack.c.l.b16 %v572
  %v3130 = vunpack.c.h.b16 %v572
  %v3131 = vunpack.c.l.b16 %v573
  %v3132 = vunpack.c.h.b16 %v573
  %v3133 = vunpack.c.l.b16 %v574
  %v3134 = vunpack.c.h.b16 %v574
  %v3135 = vunpack.c.l.b16 %v575
  %v3136 = vunpack.c.h.b16 %v575
  %v3137 = vunpack.c.l.b16 %v576
  %v3138 = vunpack.c.h.b16 %v576
  %v3139 = vunpack.c.l.b16 %v577
  %v3140 = vunpack.c.h.b16 %v577
  %v3141 = vunpack.c.l.b16 %v578
  %v3142 = vunpack.c.h.b16 %v578
  %v3143 = vunpack.c.l.b16 %v579
  %v3144 = vunpack.c.h.b16 %v579
  %v3145 = vunpack.c.l.b16 %v580
  %v3146 = vunpack.c.h.b16 %v580
  %v3147 = vunpack.c.l.b16 %v581
  %v3148 = vunpack.c.h.b16 %v581
  %v3149 = vunpack.c.l.b16 %v582
  %v3150 = vunpack.c.h.b16 %v582
  %v3151 = vunpack.c.l.b16 %v583
  %v3152 = vunpack.c.h.b16 %v583
  %v3153 = vunpack.c.l.b16 %v584
  %v3154 = vunpack.c.h.b16 %v584
  %v3155 = vunpack.c.l.b16 %v585
  %v3156 = vunpack.c.h.b16 %v585
  %v3157 = vunpack.c.l.b16 %v586
  %v3158 = vunpack.c.h.b16 %v586
  %v3159 = vunpack.c.l.b16 %v587
  %v3160 = vunpack.c.h.b16 %v587
  %v3161 = vunpack.c.l.b16 %v588
  %v3162 = vunpack.c.h.b16 %v588
  %v3163 = vunpack.c.l.b16 %v589
  %v3164 = vunpack.c.h.b16 %v589
  %v3165 = vunpack.c.l.b16 %v590
  %v3166 = vunpack.c.h.b16 %v590
  %v3167 = vunpack.c.l.b16 %v591
  %v3168 = vunpack.c.h.b16 %v591
  %v3169 = vunpack.c.l.b16 %v592
  %v3170 = vunpack.c.h.b16 %v592
  %v3171 = vunpack.c.l.b16 %v593
  %v3172 = vunpack.c.h.b16 %v593
  %v3173 = vunpack.c.l.b16 %v594
  %v3174 = vunpack.c.h.b16 %v594
  %v3175 = vunpack.c.l.b16 %v595
  %v3176 = vunpack.c.h.b16 %v595
  %v3177 = vunpack.c.l.b16 %v596
  %v3178 = vunpack.c.h.b16 %v596
  %v3179 = vunpack.c.l.b16 %v597
  %v3180 = vunpack.c.h.b16 %v597
  %v3181 = vunpack.c.l.b16 %v598
  %v3182 = vunpack.c.h.b16 %v598
  %v3183 = vunpack.c.l.b16 %v599
  %v3184 = vunpack.c.h.b16 %v599
  %v3185 = vunpack.c.l.b16 %v600
  %v3186 = vunpack.c.h.b16 %v600
  %v3187 = vunpack.c.l.b16 %v601
  %v3188 = vunpack.c.h.b16 %v601
  %v3189 = vunpack.c.l.b16 %v602
  %v3190 = vunpack.c.h.b16 %v602
  %v3191 = vunpack.c.l.b16 %v603
  %v3192 = vunpack.c.h.b16 %v603
  %v3193 = vunpack.c.l.b16 %v604
  %v3194 = vunpack.c.h.b16 %v604
  %v3195 = vunpack.c.l.b16 %v605
  %v3196 = vunpack.c.h.b16 %v605
  %v3197 = vunpack.c.l.b16 %v606
  %v3198 = vunpack.c.h.b16 %v606
  %v3199 = vunpack.c.l.b16 %v607
  %v3200 = vunpack.c.h.b16 %v607
  %v3201 = vunpack.c.l.b16 %v608
  %v3202 = vunpack.c.h.b16 %v608
  %v3203 = vunpack.c.l.b16 %v609
  %v3204 = vunpack.c.h.b16 %v609
  %v3205 = vunpack.c.l.b16 %v610
  %v3206 = vunpack.c.h.b16 %v610
  %v3207 = vunpack.c.l.b16 %v611
  %v3208 = vunpack.c.h.b16 %v611
  %v3209 = vunpack.c.l.b16 %v612
  %v3210 = vunpack.c.h.b16 %v612
  %v3211 = vunpack.c.l.b16 %v613
  %v3212 = vunpack.c.h.b16 %v613
  %v3213 = vunpack.c.l.b16 %v614
  %v3214 = vunpack.c.h.b16 %v614
  %v3215 = vunpack.c.l.b16 %v615
  %v3216 = vunpack.c.h.b16 %v615
  %v3217 = vunpack.c.l.b16 %v616
  %v3218 = vunpack.c.h.b16 %v616
  %v3219 = vunpack.c.l.b16 %v617
  %v3220 = vunpack.c.h.b16 %v617
  %v3221 = vunpack.c.l.b16 %v618
  %v3222 = vunpack.c.h.b16 %v618
  %v3223 = vunpack.c.l.b16 %v619
  %v3224 = vunpack.c.h.b16 %v619
  %v3225 = vunpack.c.l.b16 %v620
  %v3226 = vunpack.c.h.b16 %v620
  %v3227 = vunpack.c.l.b16 %v621
  %v3228 = vunpack.c.h.b16 %v621
  %v3229 = vunpack.c.l.b16 %v622
  %v3230 = vunpack.c.h.b16 %v622
  %v3231 = vunpack.c.l.b16 %v623
  %v3232 = vunpack.c.h.b16 %v623
  %v3233 = vunpack.c.l.b16 %v624
  %v3234 = vunpack.c.h.b16 %v624
  %v3235 = vunpack.c.l.b16 %v625
  %v3236 = vunpack.c.h.b16 %v625
  %v3237 = vunpack.c.l.b16 %v626
  %v3238 = vunpack.c.h.b16 %v626
  %v3239 = vunpack.c.l.b16 %v627
  %v3240 = vunpack.c.h.b16 %v627
  %v3241 = vunpack.c.l.b16 %v628
  %v3242 = vunpack.c.h.b16 %v628
  %v3243 = vunpack.c.l.b16 %v629
  %v3244 = vunpack.c.h.b16 %v629
  %v3245 = vunpack.c.l.b16 %v630
  %v3246 = vunpack.c.h.b16 %v630
  %v3247 = vunpack.c.l.b16 %v631
  %v3248 = vunpack.c.h.b16 %v631
  %v3249 = vunpack.c.l.b16 %v632
  %v3250 = vunpack.c.h.b16 %v632
  %v3251 = vunpack.c.l.b16 %v633
  %v3252 = vunpack.c.h.b16 %v633
  %v3253 = vunpack.c.l.b16 %v634
  %v3254 = vunpack.c.h.b16 %v634
  %v3255 = vunpack.c.l.b16 %v635
  %v3256 = vunpack.c.h.b16 %v635
  %v3257 = vunpack.c.l.b16 %v636
  %v3258 = vunpack.c.h.b16 %v636
  %v3259 = vunpack.c.l.b16 %v637
  %v3260 = vunpack.c.h.b16 %v637
  %v3261 = vunpack.c.l.b16 %v638
  %v3262 = vunpack.c.h.b16 %v638
  %v3263 = vunpack.c.l.b16 %v639
  %v3264 = vunpack.c.h.b16 %v639
  %v3265 = vunpack.c.l.b16 %v640
  %v3266 = vunpack.c.h.b16 %v640
  %v3267 = vunpack.c.l.b16 %v641
  %v3268 = vunpack.c.h.b16 %v641
  %v3269 = vunpack.c.l.b16 %v642
  %v3270 = vunpack.c.h.b16 %v642
  %v3271 = vunpack.c.l.b16 %v643
  %v3272 = vunpack.c.h.b16 %v643
  %v3273 = vunpack.c.l.b16 %v644
  %v3274 = vunpack.c.h.b16 %v644
  %v3275 = vunpack.c.l.b16 %v645
  %v3276 = vunpack.c.h.b16 %v645
  %v3277 = vunpack.c.l.b16 %v646
  %v3278 = vunpack.c.h.b16 %v646
  %v3279 = vunpack.c.l.b16 %v647
  %v3280 = vunpack.c.h.b16 %v647
  %v3281 = vunpack.c.l.b16 %v648
  %v3282 = vunpack.c.h.b16 %v648
  %v3283 = vunpack.c.l.b16 %v649
  %v3284 = vunpack.c.h.b16 %v649
  %v3285 = vunpack.c.l.b16 %v650
  %v3286 = vunpack.c.h.b16 %v650
  %v3287 = vunpack.c.l.b16 %v651
  %v3288 = vunpack.c.h.b16 %v651
  %v3289 = vunpack.c.l.b16 %v652
  %v3290 = vunpack.c.h.b16 %v652
  %v3291 = vunpack.c.l.b16 %v653
  %v3292 = vunpack.c.h.b16 %v653
  %v3293 = vunpack.c.l.b16 %v654
  %v3294 = vunpack.c.h.b16 %v654
  %v3295 = vunpack.c.l.b16 %v655
  %v3296 = vunpack.c.h.b16 %v655
  %v3297 = vunpack.c.l.b16 %v656
  %v3298 = vunpack.c.h.b16 %v656
  %v3299 = vunpack.c.l.b16 %v657
  %v3300 = vunpack.c.h.b16 %v657
  %v3301 = vunpack.c.l.b16 %v658
  %v3302 = vunpack.c.h.b16 %v658
  %v3303 = vunpack.c.l.b16 %v659
  %v3304 = vunpack.c.h.b16 %v659
  %v3305 = vunpack.c.l.b16 %v660
  %v3306 = vunpack.c.h.b16 %v660
  %v3307 = vunpack.c.l.b16 %v661
  %v3308 = vunpack.c.h.b16 %v661
  %v3309 = vunpack.c.l.b16 %v662
  %v3310 = vunpack.c.h.b16 %v662
  %v3311 = vunpack.c.l.b16 %v663
  %v3312 = vunpack.c.h.b16 %v663
  %v3313 = vunpack.c.l.b16 %v664
  %v3314 = vunpack.c.h.b16 %v664
  %v3315 = vunpack.c.l.b16 %v665
  %v3316 = vunpack.c.h.b16 %v665
  %v3317 = vunpack.c.l.b16 %v666
  %v3318 = vunpack.c.h.b16 %v666
  %v3319 = vunpack.c.l.b16 %v667
  %v3320 = vunpack.c.h.b16 %v667
  %v3321 = vunpack.c.l.b16 %v668
  %v3322 = vunpack.c.h.b16 %v668
  %v3323 = vunpack.c.l.b16 %v669
  %v3324 = vunpack.c.h.b16 %v669
  %v3325 = vunpack.c.l.b16 %v670
  %v3326 = vunpack.c.h.b16 %v670
  %v3327 = vunpack.c.l.b16 %v671
  %v3328 = vunpack.c.h.b16 %v671
  %v3329 = vunpack.c.l.b16 %v672
  %v3330 = vunpack.c.h.b16 %v672
  %v3331 = vunpack.c.l.b16 %v673
  %v3332 = vunpack.c.h.b16 %v673
  %v3333 = vunpack.c.l.b16 %v674
  %v3334 = vunpack.c.h.b16 %v674
  %v3335 = vunpack.c.l.b16 %v675
  %v3336 = vunpack.c.h.b16 %v675
  %v3337 = vunpack.c.l.b16 %v676
  %v3338 = vunpack.c.h.b16 %v676
  %v3339 = vunpack.c.l.b16 %v677
  %v3340 = vunpack.c.h.b16 %v677
  %v3341 = vunpack.c.l.b16 %v678
  %v3342 = vunpack.c.h.b16 %v678
  %v3343 = vunpack.c.l.b16 %v679
  %v3344 = vunpack.c.h.b16 %v679
  %v3345 = vunpack.c.l.b16 %v680
  %v3346 = vunpack.c.h.b16 %v680
  %v3347 = vunpack.c.l.b16 %v681
  %v3348 = vunpack.c.h.b16 %v681
  %v3349 = vunpack.c.l.b16 %v682
  %v3350 = vunpack.c.h.b16 %v682
  %v3351 = vunpack.c.l.b16 %v683
  %v3352 = vunpack.c.h.b16 %v683
  %v3353 = vunpack.c.l.b16 %v684
  %v3354 = vunpack.c.h.b16 %v684
  %v3355 = vunpack.c.l.b16 %v685
  %v3356 = vunpack.c.h.b16 %v685
  %v3357 = vunpack.c.l.b16 %v686
  %v3358 = vunpack.c.h.b16 %v686
  %v3359 = vunpack.c.l.b16 %v687
  %v3360 = vunpack.c.h.b16 %v687
  %v3361 = vunpack.c.l.b16 %v688
  %v3362 = vunpack.c.h.b16 %v688
  %v3363 = vunpack.c.l.b16 %v689
  %v3364 = vunpack.c.h.b16 %v689
  %v3365 = vunpack.c.l.b16 %v690
  %v3366 = vunpack.c.h.b16 %v690
  %v3367 = vunpack.c.l.b16 %v691
  %v3368 = vunpack.c.h.b16 %v691
  %v3369 = vunpack.c.l.b16 %v692
  %v3370 = vunpack.c.h.b16 %v692
  %v3371 = vunpack.c.l.b16 %v693
  %v3372 = vunpack.c.h.b16 %v693
  %v3373 = vunpack.c.l.b16 %v694
  %v3374 = vunpack.c.h.b16 %v694
  %v3375 = vunpack.c.l.b16 %v695
  %v3376 = vunpack.c.h.b16 %v695
  %v3377 = vunpack.c.l.b16 %v696
  %v3378 = vunpack.c.h.b16 %v696
  %v3379 = vunpack.c.l.b16 %v697
  %v3380 = vunpack.c.h.b16 %v697
  %v3381 = vunpack.c.l.b16 %v698
  %v3382 = vunpack.c.h.b16 %v698
  %v3383 = vunpack.c.l.b16 %v699
  %v3384 = vunpack.c.h.b16 %v699
  %v3385 = vunpack.c.l.b16 %v700
  %v3386 = vunpack.c.h.b16 %v700
  %v3387 = vunpack.c.l.b16 %v701
  %v3388 = vunpack.c.h.b16 %v701
  %v3389 = vunpack.c.l.b16 %v702
  %v3390 = vunpack.c.h.b16 %v702
  %v3391 = vunpack.c.l.b16 %v703
  %v3392 = vunpack.c.h.b16 %v703
  %v3393 = vunpack.c.l.b16 %v704
  %v3394 = vunpack.c.h.b16 %v704
  %v3395 = vunpack.c.l.b16 %v705
  %v3396 = vunpack.c.h.b16 %v705
  %v3397 = vunpack.c.l.b16 %v706
  %v3398 = vunpack.c.h.b16 %v706
  %v3399 = vunpack.c.l.b16 %v707
  %v3400 = vunpack.c.h.b16 %v707
  %v3401 = vunpack.c.l.b16 %v708
  %v3402 = vunpack.c.h.b16 %v708
  %v3403 = vunpack.c.l.b16 %v709
  %v3404 = vunpack.c.h.b16 %v709
  %v3405 = vunpack.c.l.b16 %v710
  %v3406 = vunpack.c.h.b16 %v710
  %v3407 = vunpack.c.l.b16 %v711
  %v3408 = vunpack.c.h.b16 %v711
  %v3409 = vunpack.c.l.b16 %v712
  %v3410 = vunpack.c.h.b16 %v712
  %v3411 = vunpack.c.l.b16 %v713
  %v3412 = vunpack.c.h.b16 %v713
  %v3413 = vunpack.c.l.b16 %v714
  %v3414 = vunpack.c.h.b16 %v714
  %v3415 = vunpack.c.l.b16 %v715
  %v3416 = vunpack.c.h.b16 %v715
  %v3417 = vunpack.c.l.b16 %v716
  %v3418 = vunpack.c.h.b16 %v716
  %v3419 = vunpack.c.l.b16 %v717
  %v3420 = vunpack.c.h.b16 %v717
  %v3421 = vunpack.c.l.b16 %v718
  %v3422 = vunpack.c.h.b16 %v718
  %v3423 = vunpack.c.l.b16 %v719
  %v3424 = vunpack.c.h.b16 %v719
  %v3425 = vunpack.c.l.b16 %v720
  %v3426 = vunpack.c.h.b16 %v720
  %v3427 = vunpack.c.l.b16 %v721
  %v3428 = vunpack.c.h.b16 %v721
  %v3429 = vunpack.c.l.b16 %v722
  %v3430 = vunpack.c.h.b16 %v722
  %v3431 = vunpack.c.l.b16 %v723
  %v3432 = vunpack.c.h.b16 %v723
  %v3433 = vunpack.c.l.b16 %v724
  %v3434 = vunpack.c.h.b16 %v724
  %v3435 = vunpack.c.l.b16 %v725
  %v3436 = vunpack.c.h.b16 %v725
  %v3437 = vunpack.c.l.b16 %v726
  %v3438 = vunpack.c.h.b16 %v726
  %v3439 = vunpack.c.l.b16 %v727
  %v3440 = vunpack.c.h.b16 %v727
  %v3441 = vunpack.c.l.b16 %v728
  %v3442 = vunpack.c.h.b16 %v728
  %v3443 = vunpack.c.l.b16 %v729
  %v3444 = vunpack.c.h.b16 %v729
  %v3445 = vunpack.c.l.b16 %v730
  %v3446 = vunpack.c.h.b16 %v730
  %v3447 = vunpack.c.l.b16 %v731
  %v3448 = vunpack.c.h.b16 %v731
  %v3449 = vunpack.c.l.b16 %v732
  %v3450 = vunpack.c.h.b16 %v732
  %v3451 = vunpack.c.l.b16 %v733
  %v3452 = vunpack.c.h.b16 %v733
  %v3453 = vunpack.c.l.b16 %v734
  %v3454 = vunpack.c.h.b16 %v734
  %v3455 = vunpack.c.l.b16 %v735
  %v3456 = vunpack.c.h.b16 %v735
  %v3457 = vunpack.c.l.b16 %v736
  %v3458 = vunpack.c.h.b16 %v736
  %v3459 = vunpack.c.l.b16 %v737
  %v3460 = vunpack.c.h.b16 %v737
  %v3461 = vunpack.c.l.b16 %v738
  %v3462 = vunpack.c.h.b16 %v738
  %v3463 = vunpack.c.l.b16 %v739
  %v3464 = vunpack.c.h.b16 %v739
  %v3465 = vunpack.c.l.b16 %v740
  %v3466 = vunpack.c.h.b16 %v740
  %v3467 = vunpack.c.l.b16 %v741
  %v3468 = vunpack.c.h.b16 %v741
  %v3469 = vunpack.c.l.b16 %v742
  %v3470 = vunpack.c.h.b16 %v742
  %v3471 = vunpack.c.l.b16 %v743
  %v3472 = vunpack.c.h.b16 %v743
  %v3473 = vunpack.c.l.b16 %v744
  %v3474 = vunpack.c.h.b16 %v744
  %v3475 = vunpack.c.l.b16 %v745
  %v3476 = vunpack.c.h.b16 %v745
  %v3477 = vunpack.c.l.b16 %v746
  %v3478 = vunpack.c.h.b16 %v746
  %v3479 = vunpack.c.l.b16 %v747
  %v3480 = vunpack.c.h.b16 %v747
  %v3481 = vunpack.c.l.b16 %v748
  %v3482 = vunpack.c.h.b16 %v748
  %v3483 = vunpack.c.l.b16 %v749
  %v3484 = vunpack.c.h.b16 %v749
  %v3485 = vunpack.c.l.b16 %v750
  %v3486 = vunpack.c.h.b16 %v750
  %v3487 = vunpack.c.l.b16 %v751
  %v3488 = vunpack.c.h.b16 %v751
  %v3489 = vunpack.c.l.b16 %v752
  %v3490 = vunpack.c.h.b16 %v752
  %v3491 = vunpack.c.l.b16 %v753
  %v3492 = vunpack.c.h.b16 %v753
  %v3493 = vunpack.c.l.b16 %v754
  %v3494 = vunpack.c.h.b16 %v754
  %v3495 = vunpack.c.l.b16 %v755
  %v3496 = vunpack.c.h.b16 %v755
  %v3497 = vunpack.c.l.b16 %v756
  %v3498 = vunpack.c.h.b16 %v756
  %v3499 = vunpack.c.l.b16 %v757
  %v3500 = vunpack.c.h.b16 %v757
  %v3501 = vunpack.c.l.b16 %v758
  %v3502 = vunpack.c.h.b16 %v758
  %v3503 = vunpack.c.l.b16 %v759
  %v3504 = vunpack.c.h.b16 %v759
  %v3505 = vunpack.c.l.b16 %v760
  %v3506 = vunpack.c.h.b16 %v760
  %v3507 = vunpack.c.l.b16 %v761
  %v3508 = vunpack.c.h.b16 %v761
  %v3509 = vunpack.c.l.b16 %v762
  %v3510 = vunpack.c.h.b16 %v762
  %v3511 = vunpack.c.l.b16 %v763
  %v3512 = vunpack.c.h.b16 %v763
  %v3513 = vunpack.c.l.b16 %v764
  %v3514 = vunpack.c.h.b16 %v764
  %v3515 = vunpack.c.l.b16 %v765
  %v3516 = vunpack.c.h.b16 %v765
  %v3517 = vunpack.c.l.b16 %v766
  %v3518 = vunpack.c.h.b16 %v766
  %v3519 = vunpack.c.l.b16 %v767
  %v3520 = vunpack.c.h.b16 %v767
  %v3521 = vunpack.c.l.b16 %v768
  %v3522 = vunpack.c.h.b16 %v768
  %v3523 = vunpack.c.l.b16 %v769
  %v3524 = vunpack.c.h.b16 %v769
  %v3525 = vunpack.c.l.b16 %v770
  %v3526 = vunpack.c.h.b16 %v770
  %v3527 = vunpack.c.l.b16 %v771
  %v3528 = vunpack.c.h.b16 %v771
  %v3529 = vunpack.c.l.b16 %v772
  %v3530 = vunpack.c.h.b16 %v772
  %v3531 = vunpack.c.l.b16 %v773
  %v3532 = vunpack.c.h.b16 %v773
  %v3533 = vunpack.c.l.b16 %v774
  %v3534 = vunpack.c.h.b16 %v774
  %v3535 = vunpack.c.l.b16 %v775
  %v3536 = vunpack.c.h.b16 %v775
  %v3537 = vunpack.c.l.b16 %v776
  %v3538 = vunpack.c.h.b16 %v776
  %v3539 = vunpack.c.l.b16 %v777
  %v3540 = vunpack.c.h.b16 %v777
  %v3541 = vunpack.c.l.b16 %v778
  %v3542 = vunpack.c.h.b16 %v778
  %v3543 = vunpack.c.l.b16 %v779
  %v3544 = vunpack.c.h.b16 %v779
  %v3545 = vunpack.c.l.b16 %v780
  %v3546 = vunpack.c.h.b16 %v780
  %v3547 = vunpack.c.l.b16 %v781
  %v3548 = vunpack.c.h.b16 %v781
  %v3549 = vunpack.c.l.b16 %v782
  %v3550 = vunpack.c.h.b16 %v782
  %v3551 = vunpack.c.l.b16 %v783
  %v3552 = vunpack.c.h.b16 %v783
  %v3553 = vunpack.c.l.b16 %v784
  %v3554 = vunpack.c.h.b16 %v784
  %v3555 = vunpack.c.l.b16 %v785
  %v3556 = vunpack.c.h.b16 %v785
  %v3557 = vunpack.c.l.b16 %v786
  %v3558 = vunpack.c.h.b16 %v786
  %v3559 = vunpack.c.l.b16 %v787
  %v3560 = vunpack.c.h.b16 %v787
  %v3561 = vunpack.c.l.b16 %v788
  %v3562 = vunpack.c.h.b16 %v788
  %v3563 = vunpack.c.l.b16 %v789
  %v3564 = vunpack.c.h.b16 %v789
  %v3565 = vunpack.c.l.b16 %v790
  %v3566 = vunpack.c.h.b16 %v790
  %v3567 = vunpack.c.l.b16 %v791
  %v3568 = vunpack.c.h.b16 %v791
  %v3569 = vunpack.c.l.b16 %v792
  %v3570 = vunpack.c.h.b16 %v792
  %v3571 = vunpack.c.l.b16 %v793
  %v3572 = vunpack.c.h.b16 %v793
  %v3573 = vunpack.c.l.b16 %v794
  %v3574 = vunpack.c.h.b16 %v794
  %v3575 = vunpack.c.l.b16 %v795
  %v3576 = vunpack.c.h.b16 %v795
  %v3577 = vunpack.c.l.b16 %v796
  %v3578 = vunpack.c.h.b16 %v796
  %v3579 = vunpack.c.l.b16 %v797
  %v3580 = vunpack.c.h.b16 %v797
  %v3581 = vunpack.c.l.b16 %v798
  %v3582 = vunpack.c.h.b16 %v798
  %v3583 = vunpack.c.l.b16 %v799
  %v3584 = vunpack.c.h.b16 %v799
  %v3585 = vunpack.c.l.b16 %v800
  %v3586 = vunpack.c.h.b16 %v800
  %v3587 = vunpack.c.l.b16 %v801
  %v3588 = vunpack.c.h.b16 %v801
  %v3589 = vunpack.c.l.b16 %v802
  %v3590 = vunpack.c.h.b16 %v802
  %v3591 = vunpack.c.l.b16 %v803
  %v3592 = vunpack.c.h.b16 %v803
  %v3593 = vunpack.c.l.b16 %v804
  %v3594 = vunpack.c.h.b16 %v804
  %v3595 = vunpack.c.l.b16 %v805
  %v3596 = vunpack.c.h.b16 %v805
  %v3597 = vunpack.c.l.b16 %v806
  %v3598 = vunpack.c.h.b16 %v806
  %v3599 = vunpack.c.l.b16 %v807
  %v3600 = vunpack.c.h.b16 %v807
  %v3601 = vunpack.c.l.b16 %v808
  %v3602 = vunpack.c.h.b16 %v808
  %v3603 = vunpack.c.l.b16 %v809
  %v3604 = vunpack.c.h.b16 %v809
  %v3605 = vunpack.c.l.b16 %v810
  %v3606 = vunpack.c.h.b16 %v810
  %v3607 = vunpack.c.l.b16 %v811
  %v3608 = vunpack.c.h.b16 %v811
  %v3609 = vunpack.c.l.b16 %v812
  %v3610 = vunpack.c.h.b16 %v812
  %v3611 = vunpack.c.l.b16 %v813
  %v3612 = vunpack.c.h.b16 %v813
  %v3613 = vunpack.c.l.b16 %v814
  %v3614 = vunpack.c.h.b16 %v814
  %v3615 = vunpack.c.l.b16 %v815
  %v3616 = vunpack.c.h.b16 %v815
  %v3617 = vunpack.c.l.b16 %v816
  %v3618 = vunpack.c.h.b16 %v816
  %v3619 = vunpack.c.l.b16 %v817
  %v3620 = vunpack.c.h.b16 %v817
  %v3621 = vunpack.c.l.b16 %v818
  %v3622 = vunpack.c.h.b16 %v818
  %v3623 = vunpack.c.l.b16 %v819
  %v3624 = vunpack.c.h.b16 %v819
  %v3625 = vunpack.c.l.b16 %v820
  %v3626 = vunpack.c.h.b16 %v820
  %v3627 = vunpack.c.l.b16 %v821
  %v3628 = vunpack.c.h.b16 %v821
  %v3629 = vunpack.c.l.b16 %v822
  %v3630 = vunpack.c.h.b16 %v822
  %v3631 = vunpack.c.l.b16 %v823
  %v3632 = vunpack.c.h.b16 %v823
  %v3633 = vunpack.c.l.b16 %v824
  %v3634 = vunpack.c.h.b16 %v824
  %v3635 = vunpack.c.l.b16 %v825
  %v3636 = vunpack.c.h.b16 %v825
  %v3637 = vunpack.c.l.b16 %v826
  %v3638 = vunpack.c.h.b16 %v826
  %v3639 = vunpack.c.l.b16 %v827
  %v3640 = vunpack.c.h.b16 %v827
  %v3641 = vunpack.c.l.b16 %v828
  %v3642 = vunpack.c.h.b16 %v828
  %v3643 = vunpack.c.l.b16 %v829
  %v3644 = vunpack.c.h.b16 %v829
  %v3645 = vunpack.c.l.b16 %v830
  %v3646 = vunpack.c.h.b16 %v830
  %v3647 = vunpack.c.l.b16 %v831
  %v3648 = vunpack.c.h.b16 %v831
  %v3649 = vunpack.c.l.b16 %v832
  %v3650 = vunpack.c.h.b16 %v832
  %v3651 = vunpack.c.l.b16 %v833
  %v3652 = vunpack.c.h.b16 %v833
  %v3653 = vunpack.c.l.b16 %v834
  %v3654 = vunpack.c.h.b16 %v834
  %v3655 = vunpack.c.l.b16 %v835
  %v3656 = vunpack.c.h.b16 %v835
  %v3657 = vunpack.c.l.b16 %v836
  %v3658 = vunpack.c.h.b16 %v836
  %v3659 = vunpack.c.l.b16 %v837
  %v3660 = vunpack.c.h.b16 %v837
  %v3661 = vunpack.c.l.b16 %v838
  %v3662 = vunpack.c.h.b16 %v838
  %v3663 = vunpack.c.l.b16 %v839
  %v3664 = vunpack.c.h.b16 %v839
  %v3665 = vunpack.c.l.b16 %v840
  %v3666 = vunpack.c.h.b16 %v840
  %v3667 = vunpack.c.l.b16 %v841
  %v3668 = vunpack.c.h.b16 %v841
  %v3669 = vunpack.c.l.b16 %v842
  %v3670 = vunpack.c.h.b16 %v842
  %v3671 = vunpack.c.l.b16 %v843
  %v3672 = vunpack.c.h.b16 %v843
  %v3673 = vunpack.c.l.b16 %v844
  %v3674 = vunpack.c.h.b16 %v844
  %v3675 = vunpack.c.l.b16 %v845
  %v3676 = vunpack.c.h.b16 %v845
  %v3677 = vunpack.c.l.b16 %v846
  %v3678 = vunpack.c.h.b16 %v846
  %v3679 = vunpack.c.l.b16 %v847
  %v3680 = vunpack.c.h.b16 %v847
  %v3681 = vunpack.c.l.b16 %v848
  %v3682 = vunpack.c.h.b16 %v848
  %v3683 = vunpack.c.l.b16 %v849
  %v3684 = vunpack.c.h.b16 %v849
  %v3685 = vunpack.c.l.b16 %v850
  %v3686 = vunpack.c.h.b16 %v850
  %v3687 = vunpack.c.l.b16 %v851
  %v3688 = vunpack.c.h.b16 %v851
  %v3689 = vunpack.c.l.b16 %v852
  %v3690 = vunpack.c.h.b16 %v852
  %v3691 = vunpack.c.l.b16 %v853
  %v3692 = vunpack.c.h.b16 %v853
  %v3693 = vunpack.c.l.b16 %v854
  %v3694 = vunpack.c.h.b16 %v854
  %v3695 = vunpack.c.l.b16 %v855
  %v3696 = vunpack.c.h.b16 %v855
  %v3697 = vunpack.c.l.b16 %v856
  %v3698 = vunpack.c.h.b16 %v856
  %v3699 = vunpack.c.l.b16 %v857
  %v3700 = vunpack.c.h.b16 %v857
  %v3701 = vunpack.c.l.b16 %v858
  %v3702 = vunpack.c.h.b16 %v858
  %v3703 = vunpack.c.l.b16 %v859
  %v3704 = vunpack.c.h.b16 %v859
  %v3705 = vunpack.c.l.b16 %v860
  %v3706 = vunpack.c.h.b16 %v860
  %v3707 = vunpack.c.l.b16 %v861
  %v3708 = vunpack.c.h.b16 %v861
  %v3709 = vunpack.c.l.b16 %v862
  %v3710 = vunpack.c.h.b16 %v862
  %v3711 = vunpack.c.l.b16 %v863
  %v3712 = vunpack.c.h.b16 %v863
  %v3713 = vunpack.c.l.b16 %v864
  %v3714 = vunpack.c.h.b16 %v864
  %v3715 = vunpack.c.l.b16 %v865
  %v3716 = vunpack.c.h.b16 %v865
  %v3717 = vunpack.c.l.b16 %v866
  %v3718 = vunpack.c.h.b16 %v866
  %v3719 = vunpack.c.l.b16 %v867
  %v3720 = vunpack.c.h.b16 %v867
  %v3721 = vunpack.c.l.b16 %v868
  %v3722 = vunpack.c.h.b16 %v868
  %v3723 = vunpack.c.l.b16 %v869
  %v3724 = vunpack.c.h.b16 %v869
  %v3725 = vunpack.c.l.b16 %v870
  %v3726 = vunpack.c.h.b16 %v870
  %v3727 = vunpack.c.l.b16 %v871
  %v3728 = vunpack.c.h.b16 %v871
  %v3729 = vunpack.c.l.b16 %v872
  %v3730 = vunpack.c.h.b16 %v872
  %v3731 = vunpack.c.l.b16 %v873
  %v3732 = vunpack.c.h.b16 %v873
  %v3733 = vunpack.c.l.b16 %v874
  %v3734 = vunpack.c.h.b16 %v874
  %v3735 = vunpack.c.l.b16 %v875
  %v3736 = vunpack.c.h.b16 %v875
  %v3737 = vunpack.c.l.b16 %v876
  %v3738 = vunpack.c.h.b16 %v876
  %v3739 = vunpack.c.l.b16 %v877
  %v3740 = vunpack.c.h.b16 %v877
  %v3741 = vunpack.c.l.b16 %v878
  %v3742 = vunpack.c.h.b16 %v878
  %v3743 = vunpack.c.l.b16 %v879
  %v3744 = vunpack.c.h.b16 %v879
  %v3745 = vunpack.c.l.b16 %v880
  %v3746 = vunpack.c.h.b16 %v880
  %v3747 = vunpack.c.l.b16 %v881
  %v3748 = vunpack.c.h.b16 %v881
  %v3749 = vunpack.c.l.b16 %v882
  %v3750 = vunpack.c.h.b16 %v882
  %v3751 = vunpack.c.l.b16 %v883
  %v3752 = vunpack.c.h.b16 %v883
  %v3753 = vunpack.c.l.b16 %v884
  %v3754 = vunpack.c.h.b16 %v884
  %v3755 = vunpack.c.l.b16 %v885
  %v3756 = vunpack.c.h.b16 %v885
  %v3757 = vunpack.c.l.b16 %v886
  %v3758 = vunpack.c.h.b16 %v886
  %v3759 = vunpack.c.l.b16 %v887
  %v3760 = vunpack.c.h.b16 %v887
  %v3761 = vunpack.c.l.b16 %v888
  %v3762 = vunpack.c.h.b16 %v888
  %v3763 = vunpack.c.l.b16 %v889
  %v3764 = vunpack.c.h.b16 %v889
  %v3765 = vunpack.c.l.b16 %v890
  %v3766 = vunpack.c.h.b16 %v890
  %v3767 = vunpack.c.l.b16 %v891
  %v3768 = vunpack.c.h.b16 %v891
  %v3769 = vunpack.c.l.b16 %v892
  %v3770 = vunpack.c.h.b16 %v892
  %v3771 = vunpack.c.l.b16 %v893
  %v3772 = vunpack.c.h.b16 %v893
  %v3773 = vunpack.c.l.b16 %v894
  %v3774 = vunpack.c.h.b16 %v894
  %v3775 = vunpack.c.l.b16 %v895
  %v3776 = vunpack.c.h.b16 %v895
  %v3777 = vunpack.c.l.b16 %v896
  %v3778 = vunpack.c.h.b16 %v896
  %v3779 = vunpack.c.l.b16 %v897
  %v3780 = vunpack.c.h.b16 %v897
  %v3781 = vunpack.c.l.b16 %v898
  %v3782 = vunpack.c.h.b16 %v898
  %v3783 = vunpack.c.l.b16 %v899
  %v3784 = vunpack.c.h.b16 %v899
  %v3785 = vunpack.c.l.b16 %v900
  %v3786 = vunpack.c.h.b16 %v900
  %v3787 = vunpack.c.l.b16 %v901
  %v3788 = vunpack.c.h.b16 %v901
  %v3789 = vunpack.c.l.b16 %v902
  %v3790 = vunpack.c.h.b16 %v902
  %v3791 = vunpack.c.l.b16 %v903
  %v3792 = vunpack.c.h.b16 %v903
  %v3793 = vunpack.c.l.b16 %v904
  %v3794 = vunpack.c.h.b16 %v904
  %v3795 = vunpack.c.l.b16 %v905
  %v3796 = vunpack.c.h.b16 %v905
  %v3797 = vunpack.c.l.b16 %v906
  %v3798 = vunpack.c.h.b16 %v906
  %v3799 = vunpack.c.l.b16 %v907
  %v3800 = vunpack.c.h.b16 %v907
  %v3801 = vunpack.c.l.b16 %v908
  %v3802 = vunpack.c.h.b16 %v908
  %v3803 = vunpack.c.l.b16 %v909
  %v3804 = vunpack.c.h.b16 %v909
  %v3805 = vunpack.c.l.b16 %v910
  %v3806 = vunpack.c.h.b16 %v910
  %v3807 = vunpack.c.l.b16 %v911
  %v3808 = vunpack.c.h.b16 %v911
  %v3809 = vunpack.c.l.b16 %v912
  %v3810 = vunpack.c.h.b16 %v912
  %v3811 = vunpack.c.l.b16 %v913
  %v3812 = vunpack.c.h.b16 %v913
  %v3813 = vunpack.c.l.b16 %v914
  %v3814 = vunpack.c.h.b16 %v914
  %v3815 = vunpack.c.l.b16 %v915
  %v3816 = vunpack.c.h.b16 %v915
  %v3817 = vunpack.c.l.b16 %v916
  %v3818 = vunpack.c.h.b16 %v916
  %v3819 = vunpack.c.l.b16 %v917
  %v3820 = vunpack.c.h.b16 %v917
  %v3821 = vunpack.c.l.b16 %v918
  %v3822 = vunpack.c.h.b16 %v918
  %v3823 = vunpack.c.l.b16 %v919
  %v3824 = vunpack.c.h.b16 %v919
  %v3825 = vunpack.c.l.b16 %v920
  %v3826 = vunpack.c.h.b16 %v920
  %v3827 = vunpack.c.l.b16 %v921
  %v3828 = vunpack.c.h.b16 %v921
  %v3829 = vunpack.c.l.b16 %v922
  %v3830 = vunpack.c.h.b16 %v922
  %v3831 = vunpack.c.l.b16 %v923
  %v3832 = vunpack.c.h.b16 %v923
  %v3833 = vunpack.c.l.b16 %v924
  %v3834 = vunpack.c.h.b16 %v924
  %v3835 = vunpack.c.l.b16 %v925
  %v3836 = vunpack.c.h.b16 %v925
  %v3837 = vunpack.c.l.b16 %v926
  %v3838 = vunpack.c.h.b16 %v926
  %v3839 = vunpack.c.l.b16 %v927
  %v3840 = vunpack.c.h.b16 %v927
  %v3841 = vunpack.c.l.b16 %v928
  %v3842 = vunpack.c.h.b16 %v928
  %v3843 = vunpack.c.l.b16 %v929
  %v3844 = vunpack.c.h.b16 %v929
  %v3845 = vunpack.c.l.b16 %v930
  %v3846 = vunpack.c.h.b16 %v930
  %v3847 = vunpack.c.l.b16 %v931
  %v3848 = vunpack.c.h.b16 %v931
  %v3849 = vunpack.c.l.b16 %v932
  %v3850 = vunpack.c.h.b16 %v932
  %v3851 = vunpack.c.l.b16 %v933
  %v3852 = vunpack.c.h.b16 %v933
  %v3853 = vunpack.c.l.b16 %v934
  %v3854 = vunpack.c.h.b16 %v934
  %v3855 = vunpack.c.l.b16 %v935
  %v3856 = vunpack.c.h.b16 %v935
  %v3857 = vunpack.c.l.b16 %v936
  %v3858 = vunpack.c.h.b16 %v936
  %v3859 = vunpack.c.l.b16 %v937
  %v3860 = vunpack.c.h.b16 %v937
  %v3861 = vunpack.c.l.b16 %v938
  %v3862 = vunpack.c.h.b16 %v938
  %v3863 = vunpack.c.l.b16 %v939
  %v3864 = vunpack.c.h.b16 %v939
  %v3865 = vunpack.c.l.b16 %v940
  %v3866 = vunpack.c.h.b16 %v940
  %v3867 = vunpack.c.l.b16 %v941
  %v3868 = vunpack.c.h.b16 %v941
  %v3869 = vunpack.c.l.b16 %v942
  %v3870 = vunpack.c.h.b16 %v942
  %v3871 = vunpack.c.l.b16 %v943
  %v3872 = vunpack.c.h.b16 %v943
  %v3873 = vunpack.c.l.b16 %v944
  %v3874 = vunpack.c.h.b16 %v944
  %v3875 = vunpack.c.l.b16 %v945
  %v3876 = vunpack.c.h.b16 %v945
  %v3877 = vunpack.c.l.b16 %v946
  %v3878 = vunpack.c.h.b16 %v946
  %v3879 = vunpack.c.l.b16 %v947
  %v3880 = vunpack.c.h.b16 %v947
  %v3881 = vunpack.c.l.b16 %v948
  %v3882 = vunpack.c.h.b16 %v948
  %v3883 = vunpack.c.l.b16 %v949
  %v3884 = vunpack.c.h.b16 %v949
  %v3885 = vunpack.c.l.b16 %v950
  %v3886 = vunpack.c.h.b16 %v950
  %v3887 = vunpack.c.l.b16 %v951
  %v3888 = vunpack.c.h.b16 %v951
  %v3889 = vunpack.c.l.b16 %v952
  %v3890 = vunpack.c.h.b16 %v952
  %v3891 = vunpack.c.l.b16 %v953
  %v3892 = vunpack.c.h.b16 %v953
  %v3893 = vunpack.c.l.b16 %v954
  %v3894 = vunpack.c.h.b16 %v954
  %v3895 = vunpack.c.l.b16 %v955
  %v3896 = vunpack.c.h.b16 %v955
  %v3897 = vunpack.c.l.b16 %v956
  %v3898 = vunpack.c.h.b16 %v956
  %v3899 = vunpack.c.l.b16 %v957
  %v3900 = vunpack.c.h.b16 %v957
  %v3901 = vunpack.c.l.b16 %v958
  %v3902 = vunpack.c.h.b16 %v958
  %v3903 = vunpack.c.l.b16 %v959
  %v3904 = vunpack.c.h.b16 %v959
  %v3905 = vunpack.c.l.b16 %v960
  %v3906 = vunpack.c.h.b16 %v960
  %v3907 = vunpack.c.l.b16 %v961
  %v3908 = vunpack.c.h.b16 %v961
  %v3909 = vunpack.c.l.b16 %v962
  %v3910 = vunpack.c.h.b16 %v962
  %v3911 = vunpack.c.l.b16 %v963
  %v3912 = vunpack.c.h.b16 %v963
  %v3913 = vunpack.c.l.b16 %v964
  %v3914 = vunpack.c.h.b16 %v964
  %v3915 = vunpack.c.l.b16 %v965
  %v3916 = vunpack.c.h.b16 %v965
  %v3917 = vunpack.c.l.b16 %v966
  %v3918 = vunpack.c.h.b16 %v966
  %v3919 = vunpack.c.l.b16 %v967
  %v3920 = vunpack.c.h.b16 %v967
  %v3921 = vunpack.c.l.b16 %v968
  %v3922 = vunpack.c.h.b16 %v968
  %v3923 = vunpack.c.l.b16 %v969
  %v3924 = vunpack.c.h.b16 %v969
  %v3925 = vunpack.c.l.b16 %v970
  %v3926 = vunpack.c.h.b16 %v970
  %v3927 = vunpack.c.l.b16 %v971
  %v3928 = vunpack.c.h.b16 %v971
  %v3929 = vunpack.c.l.b16 %v972
  %v3930 = vunpack.c.h.b16 %v972
  %v3931 = vunpack.c.l.b16 %v973
  %v3932 = vunpack.c.h.b16 %v973
  %v3933 = vunpack.c.l.b16 %v974
  %v3934 = vunpack.c.h.b16 %v974
  %v3935 = vunpack.c.l.b16 %v975
  %v3936 = vunpack.c.h.b16 %v975
  %v3937 = vunpack.c.l.b16 %v976
  %v3938 = vunpack.c.h.b16 %v976
  %v3939 = vunpack.c.l.b16 %v977
  %v3940 = vunpack.c.h.b16 %v977
  %v3941 = vunpack.c.l.b16 %v978
  %v3942 = vunpack.c.h.b16 %v978
  %v3943 = vunpack.c.l.b16 %v979
  %v3944 = vunpack.c.h.b16 %v979
  %v3945 = vunpack.c.l.b16 %v980
  %v3946 = vunpack.c.h.b16 %v980
  %v3947 = vunpack.c.l.b16 %v981
  %v3948 = vunpack.c.h.b16 %v981
  %v3949 = vunpack.c.l.b16 %v982
  %v3950 = vunpack.c.h.b16 %v982
  %v3951 = vunpack.c.l.b16 %v983
  %v3952 = vunpack.c.h.b16 %v983
  %v3953 = vunpack.c.l.b16 %v984
  %v3954 = vunpack.c.h.b16 %v984
  %v3955 = vunpack.c.l.b16 %v985
  %v3956 = vunpack.c.h.b16 %v985
  %v3957 = vunpack.c.l.b16 %v986
  %v3958 = vunpack.c.h.b16 %v986
  %v3959 = vunpack.c.l.b16 %v987
  %v3960 = vunpack.c.h.b16 %v987
  %v3961 = vunpack.c.l.b16 %v988
  %v3962 = vunpack.c.h.b16 %v988
  %v3963 = vunpack.c.l.b16 %v989
  %v3964 = vunpack.c.h.b16 %v989
  %v3965 = vunpack.c.l.b16 %v990
  %v3966 = vunpack.c.h.b16 %v990
  %v3967 = vunpack.c.l.b16 %v991
  %v3968 = vunpack.c.h.b16 %v991
  %v3969 = vunpack.c.l.b16 %v992
  %v3970 = vunpack.c.h.b16 %v992
  %v3971 = vunpack.c.l.b16 %v993
  %v3972 = vunpack.c.h.b16 %v993
  %v3973 = vunpack.c.l.b16 %v994
  %v3974 = vunpack.c.h.b16 %v994
  %v3975 = vunpack.c.l.b16 %v995
  %v3976 = vunpack.c.h.b16 %v995
  %v3977 = vunpack.c.l.b16 %v996
  %v3978 = vunpack.c.h.b16 %v996
  %v3979 = vunpack.c.l.b16 %v997
  %v3980 = vunpack.c.h.b16 %v997
  %v3981 = vunpack.c.l.b16 %v998
  %v3982 = vunpack.c.h.b16 %v998
  %v3983 = vunpack.c.l.b16 %v999
  %v3984 = vunpack.c.h.b16 %v999
  %v3985 = vunpack.c.l.b16 %v1000
  %v3986 = vunpack.c.h.b16 %v1000
  %v3987 = vunpack.c.l.b16 %v1001
  %v3988 = vunpack.c.h.b16 %v1001
  %v3989 = vunpack.c.l.b16 %v1002
  %v3990 = vunpack.c.h.b16 %v1002
  %v3991 = vunpack.c.l.b16 %v1003
  %v3992 = vunpack.c.h.b16 %v1003
  %v3993 = vunpack.c.l.b16 %v1004
  %v3994 = vunpack.c.h.b16 %v1004
  %v3995 = vunpack.c.l.b16 %v1005
  %v3996 = vunpack.c.h.b16 %v1005
  %v3997 = vunpack.c.l.b16 %v1006
  %v3998 = vunpack.c.h.b16 %v1006
  %v3999 = vunpack.c.l.b16 %v1007
  %v4000 = vunpack.c.h.b16 %v1007
  %v4001 = vunpack.c.l.b16 %v1008
  %v4002 = vunpack.c.h.b16 %v1008
  %v4003 = vunpack.c.l.b16 %v1009
  %v4004 = vunpack.c.h.b16 %v1009
  %v4005 = vunpack.c.l.b16 %v1010
  %v4006 = vunpack.c.h.b16 %v1010
  %v4007 = vunpack.c.l.b16 %v1011
  %v4008 = vunpack.c.h.b16 %v1011
  %v4009 = vunpack.c.l.b16 %v1012
  %v4010 = vunpack.c.h.b16 %v1012
  %v4011 = vunpack.c.l.b16 %v1013
  %v4012 = vunpack.c.h.b16 %v1013
  %v4013 = vunpack.c.l.b16 %v1014
  %v4014 = vunpack.c.h.b16 %v1014
  %v4015 = vunpack.c.l.b16 %v1015
  %v4016 = vunpack.c.h.b16 %v1015
  %v4017 = vunpack.c.l.b16 %v1016
  %v4018 = vunpack.c.h.b16 %v1016
  %v4019 = vunpack.c.l.b16 %v1017
  %v4020 = vunpack.c.h.b16 %v1017
  %v4021 = vunpack.c.l.b16 %v1018
  %v4022 = vunpack.c.h.b16 %v1018
  %v4023 = vunpack.c.l.b16 %v1019
  %v4024 = vunpack.c.h.b16 %v1019
  %v4025 = vunpack.c.l.b16 %v1020
  %v4026 = vunpack.c.h.b16 %v1020
  %v4027 = vunpack.c.l.b16 %v1021
  %v4028 = vunpack.c.h.b16 %v1021
  %v4029 = vunpack.c.l.b16 %v1022
  %v4030 = vunpack.c.h.b16 %v1022
  %v4031 = vunpack.c.l.b16 %v1023
  %v4032 = vunpack.c.h.b16 %v1023
  %v4033 = vunpack.c.l.b16 %v1024
  %v4034 = vunpack.c.h.b16 %v1024
  %v4035 = vunpack.c.l.b16 %v1025
  %v4036 = vunpack.c.h.b16 %v1025
  %v4037 = vunpack.c.l.b16 %v1026
  %v4038 = vunpack.c.h.b16 %v1026
  %v4039 = vunpack.c.l.b16 %v1027
  %v4040 = vunpack.c.h.b16 %v1027
  %v4041 = vunpack.c.l.b16 %v1028
  %v4042 = vunpack.c.h.b16 %v1028
  %v4043 = vunpack.c.l.b16 %v1029
  %v4044 = vunpack.c.h.b16 %v1029
  %v4045 = vunpack.c.l.b16 %v1030
  %v4046 = vunpack.c.h.b16 %v1030
  %v4047 = vunpack.c.l.b16 %v1031
  %v4048 = vunpack.c.h.b16 %v1031
  %v4049 = vunpack.c.l.b16 %v1032
  %v4050 = vunpack.c.h.b16 %v1032
  %v4051 = vunpack.c.l.b16 %v1033
  %v4052 = vunpack.c.h.b16 %v1033
  %v4053 = vunpack.c.l.b16 %v1034
  %v4054 = vunpack.c.h.b16 %v1034
  %v4055 = vunpack.c.l.b16 %v1035
  %v4056 = vunpack.c.h.b16 %v1035
  %v4057 = vunpack.c.l.b16 %v1036
  %v4058 = vunpack.c.h.b16 %v1036
  %v4059 = vunpack.c.l.b16 %v1037
  %v4060 = vunpack.c.h.b16 %v1037
  %v4061 = vunpack.c.l.b16 %v1038
  %v4062 = vunpack.c.h.b16 %v1038
  %v4063 = vunpack.c.l.b16 %v1039
  %v4064 = vunpack.c.h.b16 %v1039
  %v4065 = vunpack.c.l.b16 %v1040
  %v4066 = vunpack.c.h.b16 %v1040
  %v4067 = vunpack.c.l.b16 %v1041
  %v4068 = vunpack.c.h.b16 %v1041
  %v4069 = vunpack.c.l.b16 %v1042
  %v4070 = vunpack.c.h.b16 %v1042
  %v4071 = vunpack.c.l.b16 %v1043
  %v4072 = vunpack.c.h.b16 %v1043
  %v4073 = vunpack.c.l.b16 %v1044
  %v4074 = vunpack.c.h.b16 %v1044
  %v4075 = vunpack.c.l.b16 %v1045
  %v4076 = vunpack.c.h.b16 %v1045
  %v4077 = vunpack.c.l.b16 %v1046
  %v4078 = vunpack.c.h.b16 %v1046
  %v4079 = vunpack.c.l.b16 %v1047
  %v4080 = vunpack.c.h.b16 %v1047
  %v4081 = vunpack.c.l.b16 %v1048
  %v4082 = vunpack.c.h.b16 %v1048
  %v4083 = vunpack.c.l.b16 %v1049
  %v4084 = vunpack.c.h.b16 %v1049
  %v4085 = vunpack.c.l.b16 %v1050
  %v4086 = vunpack.c.h.b16 %v1050
  %v4087 = vunpack.c.l.b16 %v1051
  %v4088 = vunpack.c.h.b16 %v1051
  %v4089 = vunpack.c.l.b16 %v1052
  %v4090 = vunpack.c.h.b16 %v1052
  %v4091 = vunpack.c.l.b16 %v1053
  %v4092 = vunpack.c.h.b16 %v1053
  %v4093 = vunpack.c.l.b16 %v1054
  %v4094 = vunpack.c.h.b16 %v1054
  %v4095 = vunpack.c.l.b16 %v1055
  %v4096 = vunpack.c.h.b16 %v1055
  %v4097 = vunpack.c.l.b16 %v1056
  %v4098 = vunpack.c.h.b16 %v1056
  %v4099 = vunpack.c.l.b16 %v1057
  %v4100 = vunpack.c.h.b16 %v1057
  %v4101 = vunpack.c.l.b16 %v1058
  %v4102 = vunpack.c.h.b16 %v1058
  %v4103 = vunpack.c.l.b16 %v1059
  %v4104 = vunpack.c.h.b16 %v1059
  %v4105 = vunpack.c.l.b16 %v1060
  %v4106 = vunpack.c.h.b16 %v1060
  %v4107 = vunpack.c.l.b16 %v1061
  %v4108 = vunpack.c.h.b16 %v1061
  %v4109 = vunpack.c.l.b16 %v1062
  %v4110 = vunpack.c.h.b16 %v1062
  %v4111 = vunpack.c.l.b16 %v1063
  %v4112 = vunpack.c.h.b16 %v1063
  %v4113 = vunpack.c.l.b16 %v1064
  %v4114 = vunpack.c.h.b16 %v1064
  %v4115 = vunpack.c.l.b16 %v1065
  %v4116 = vunpack.c.h.b16 %v1065
  %v4117 = vunpack.c.l.b16 %v1066
  %v4118 = vunpack.c.h.b16 %v1066
  %v4119 = vunpack.c.l.b16 %v1067
  %v4120 = vunpack.c.h.b16 %v1067
  %v4121 = vunpack.c.l.b16 %v1068
  %v4122 = vunpack.c.h.b16 %v1068
  %v4123 = vunpack.c.l.b16 %v1069
  %v4124 = vunpack.c.h.b16 %v1069
  %v4125 = vunpack.c.l.b16 %v1070
  %v4126 = vunpack.c.h.b16 %v1070
  %v4127 = vunpack.c.l.b16 %v1071
  %v4128 = vunpack.c.h.b16 %v1071
  %v4129 = vunpack.c.l.b16 %v1072
  %v4130 = vunpack.c.h.b16 %v1072
  %v4131 = vunpack.c.l.b16 %v1073
  %v4132 = vunpack.c.h.b16 %v1073
  %v4133 = vunpack.c.l.b16 %v1074
  %v4134 = vunpack.c.h.b16 %v1074
  %v4135 = vunpack.c.l.b16 %v1075
  %v4136 = vunpack.c.h.b16 %v1075
  %v4137 = vunpack.c.l.b16 %v1076
  %v4138 = vunpack.c.h.b16 %v1076
  %v4139 = vunpack.c.l.b16 %v1077
  %v4140 = vunpack.c.h.b16 %v1077
  %v4141 = vunpack.c.l.b16 %v1078
  %v4142 = vunpack.c.h.b16 %v1078
  %v4143 = vunpack.c.l.b16 %v1079
  %v4144 = vunpack.c.h.b16 %v1079
  %v4145 = vunpack.c.l.b16 %v1080
  %v4146 = vunpack.c.h.b16 %v1080
  %v4147 = vunpack.c.l.b16 %v1081
  %v4148 = vunpack.c.h.b16 %v1081
  %v4149 = vunpack.c.l.b16 %v1082
  %v4150 = vunpack.c.h.b16 %v1082
  %v4151 = vunpack.c.l.b16 %v1083
  %v4152 = vunpack.c.h.b16 %v1083
  %v4153 = vunpack.c.l.b16 %v1084
  %v4154 = vunpack.c.h.b16 %v1084
  %v4155 = vunpack.c.l.b16 %v1085
  %v4156 = vunpack.c.h.b16 %v1085
  %v4157 = vunpack.c.l.b16 %v1086
  %v4158 = vunpack.c.h.b16 %v1086
  %v4159 = vunpack.c.l.b16 %v1087
  %v4160 = vunpack.c.h.b16 %v1087
  %v4161 = vunpack.c.l.b16 %v1088
  %v4162 = vunpack.c.h.b16 %v1088
  %v4163 = vunpack.c.l.b16 %v1089
  %v4164 = vunpack.c.h.b16 %v1089
  %v4165 = vunpack.c.l.b16 %v1090
  %v4166 = vunpack.c.h.b16 %v1090
  %v4167 = vunpack.c.l.b16 %v1091
  %v4168 = vunpack.c.h.b16 %v1091
  %v4169 = vunpack.c.l.b16 %v1092
  %v4170 = vunpack.c.h.b16 %v1092
  %v4171 = vunpack.c.l.b16 %v1093
  %v4172 = vunpack.c.h.b16 %v1093
  %v4173 = vunpack.c.l.b16 %v1094
  %v4174 = vunpack.c.h.b16 %v1094
  %v4175 = vunpack.c.l.b16 %v1095
  %v4176 = vunpack.c.h.b16 %v1095
  %v4177 = vunpack.c.l.b16 %v1096
  %v4178 = vunpack.c.h.b16 %v1096
  %v4179 = vunpack.c.l.b16 %v1097
  %v4180 = vunpack.c.h.b16 %v1097
  %v4181 = vunpack.c.l.b16 %v1098
  %v4182 = vunpack.c.h.b16 %v1098
  %v4183 = vunpack.c.l.b16 %v1099
  %v4184 = vunpack.c.h.b16 %v1099
  %v4185 = vunpack.c.l.b16 %v1100
  %v4186 = vunpack.c.h.b16 %v1100
  %v4187 = vunpack.c.l.b16 %v1101
  %v4188 = vunpack.c.h.b16 %v1101
  %v4189 = vunpack.c.l.b16 %v1102
  %v4190 = vunpack.c.h.b16 %v1102
  %v4191 = vunpack.c.l.b16 %v1103
  %v4192 = vunpack.c.h.b16 %v1103
  %v4193 = vunpack.c.l.b16 %v1104
  %v4194 = vunpack.c.h.b16 %v1104
  %v4195 = vpack.c.b16 %v2155, %v2147
  %v4196 = vpack.c.b16 %v2156, %v2148
  %v4197 = vpack.c.b16 %v2157, %v2149
  %v4198 = vpack.c.b16 %v2158, %v2150
  %v4199 = vpack.c.b16 %v2159, %v2151
  %v4200 = vpack.c.b16 %v2160, %v2152
  %v4201 = vpack.c.b16 %v2161, %v2153
  %v4202 = vpack.c.b16 %v2162, %v2154
  %v4203 = vpack.c.b16 %v2171, %v2163
  %v4204 = vpack.c.b16 %v2172, %v2164
  %v4205 = vpack.c.b16 %v2173, %v2165
  %v4206 = vpack.c.b16 %v2174, %v2166
  %v4207 = vpack.c.b16 %v2175, %v2167
  %v4208 = vpack.c.b16 %v2176, %v2168
  %v4209 = vpack.c.b16 %v2177, %v2169
  %v4210 = vpack.c.b16 %v2178, %v2170
  %v4211 = vpack.c.b16 %v2187, %v2179
  %v4212 = vpack.c.b16 %v2188, %v2180
  %v4213 = vpack.c.b16 %v2189, %v2181
  %v4214 = vpack.c.b16 %v2190, %v2182
  %v4215 = vpack.c.b16 %v2191, %v2183
  %v4216 = vpack.c.b16 %v2192, %v2184
  %v4217 = vpack.c.b16 %v2193, %v2185
  %v4218 = vpack.c.b16 %v2194, %v2186
  %v4219 = vpack.c.b16 %v2203, %v2195
  %v4220 = vpack.c.b16 %v2204, %v2196
  %v4221 = vpack.c.b16 %v2205, %v2197
  %v4222 = vpack.c.b16 %v2206, %v2198
  %v4223 = vpack.c.b16 %v2207, %v2199
  %v4224 = vpack.c.b16 %v2208, %v2200
  %v4225 = vpack.c.b16 %v2209, %v2201
  %v4226 = vpack.c.b16 %v2210, %v2202
  %v4227 = vpack.c.b16 %v2219, %v2211
  %v4228 = vpack.c.b16 %v2220, %v2212
  %v4229 = vpack.c.b16 %v2221, %v2213
  %v4230 = vpack.c.b16 %v2222, %v2214
  %v4231 = vpack.c.b16 %v2223, %v2215
  %v4232 = vpack.c.b16 %v2224, %v2216
  %v4233 = vpack.c.b16 %v2225, %v2217
  %v4234 = vpack.c.b16 %v2226, %v2218
  %v4235 = vpack.c.b16 %v2235, %v2227
  %v4236 = vpack.c.b16 %v2236, %v2228
  %v4237 = vpack.c.b16 %v2237, %v2229
  %v4238 = vpack.c.b16 %v2238, %v2230
  %v4239 = vpack.c.b16 %v2239, %v2231
  %v4240 = vpack.c.b16 %v2240, %v2232
  %v4241 = vpack.c.b16 %v2241, %v2233
  %v4242 = vpack.c.b16 %v2242, %v2234
  %v4243 = vpack.c.b16 %v2251, %v2243
  %v4244 = vpack.c.b16 %v2252, %v2244
  %v4245 = vpack.c.b16 %v2253, %v2245
  %v4246 = vpack.c.b16 %v2254, %v2246
  %v4247 = vpack.c.b16 %v2255, %v2247
  %v4248 = vpack.c.b16 %v2256, %v2248
  %v4249 = vpack.c.b16 %v2257, %v2249
  %v4250 = vpack.c.b16 %v2258, %v2250
  %v4251 = vpack.c.b16 %v2267, %v2259
  %v4252 = vpack.c.b16 %v2268, %v2260
  %v4253 = vpack.c.b16 %v2269, %v2261
  %v4254 = vpack.c.b16 %v2270, %v2262
  %v4255 = vpack.c.b16 %v2271, %v2263
  %v4256 = vpack.c.b16 %v2272, %v2264
  %v4257 = vpack.c.b16 %v2273, %v2265
  %v4258 = vpack.c.b16 %v2274, %v2266
  %v4259 = vpack.c.b16 %v2283, %v2275
  %v4260 = vpack.c.b16 %v2284, %v2276
  %v4261 = vpack.c.b16 %v2285, %v2277
  %v4262 = vpack.c.b16 %v2286, %v2278
  %v4263 = vpack.c.b16 %v2287, %v2279
  %v4264 = vpack.c.b16 %v2288, %v2280
  %v4265 = vpack.c.b16 %v2289, %v2281
  %v4266 = vpack.c.b16 %v2290, %v2282
  %v4267 = vpack.c.b16 %v2299, %v2291
  %v4268 = vpack.c.b16 %v2300, %v2292
  %v4269 = vpack.c.b16 %v2301, %v2293
  %v4270 = vpack.c.b16 %v2302, %v2294
  %v4271 = vpack.c.b16 %v2303, %v2295
  %v4272 = vpack.c.b16 %v2304, %v2296
  %v4273 = vpack.c.b16 %v2305, %v2297
  %v4274 = vpack.c.b16 %v2306, %v2298
  %v4275 = vpack.c.b16 %v2315, %v2307
  %v4276 = vpack.c.b16 %v2316, %v2308
  %v4277 = vpack.c.b16 %v2317, %v2309
  %v4278 = vpack.c.b16 %v2318, %v2310
  %v4279 = vpack.c.b16 %v2319, %v2311
  %v4280 = vpack.c.b16 %v2320, %v2312
  %v4281 = vpack.c.b16 %v2321, %v2313
  %v4282 = vpack.c.b16 %v2322, %v2314
  %v4283 = vpack.c.b16 %v2331, %v2323
  %v4284 = vpack.c.b16 %v2332, %v2324
  %v4285 = vpack.c.b16 %v2333, %v2325
  %v4286 = vpack.c.b16 %v2334, %v2326
  %v4287 = vpack.c.b16 %v2335, %v2327
  %v4288 = vpack.c.b16 %v2336, %v2328
  %v4289 = vpack.c.b16 %v2337, %v2329
  %v4290 = vpack.c.b16 %v2338, %v2330
  %v4291 = vpack.c.b16 %v2347, %v2339
  %v4292 = vpack.c.b16 %v2348, %v2340
  %v4293 = vpack.c.b16 %v2349, %v2341
  %v4294 = vpack.c.b16 %v2350, %v2342
  %v4295 = vpack.c.b16 %v2351, %v2343
  %v4296 = vpack.c.b16 %v2352, %v2344
  %v4297 = vpack.c.b16 %v2353, %v2345
  %v4298 = vpack.c.b16 %v2354, %v2346
  %v4299 = vpack.c.b16 %v2363, %v2355
  %v4300 = vpack.c.b16 %v2364, %v2356
  %v4301 = vpack.c.b16 %v2365, %v2357
  %v4302 = vpack.c.b16 %v2366, %v2358
  %v4303 = vpack.c.b16 %v2367, %v2359
  %v4304 = vpack.c.b16 %v2368, %v2360
  %v4305 = vpack.c.b16 %v2369, %v2361
  %v4306 = vpack.c.b16 %v2370, %v2362
  %v4307 = vpack.c.b16 %v2379, %v2371
  %v4308 = vpack.c.b16 %v2380, %v2372
  %v4309 = vpack.c.b16 %v2381, %v2373
  %v4310 = vpack.c.b16 %v2382, %v2374
  %v4311 = vpack.c.b16 %v2383, %v2375
  %v4312 = vpack.c.b16 %v2384, %v2376
  %v4313 = vpack.c.b16 %v2385, %v2377
  %v4314 = vpack.c.b16 %v2386, %v2378
  %v4315 = vpack.c.b16 %v2395, %v2387
  %v4316 = vpack.c.b16 %v2396, %v2388
  %v4317 = vpack.c.b16 %v2397, %v2389
  %v4318 = vpack.c.b16 %v2398, %v2390
  %v4319 = vpack.c.b16 %v2399, %v2391
  %v4320 = vpack.c.b16 %v2400, %v2392
  %v4321 = vpack.c.b16 %v2401, %v2393
  %v4322 = vpack.c.b16 %v2402, %v2394
  %v4323 = vpack.c.b16 %v2411, %v2403
  %v4324 = vpack.c.b16 %v2412, %v2404
  %v4325 = vpack.c.b16 %v2413, %v2405
  %v4326 = vpack.c.b16 %v2414, %v2406
  %v4327 = vpack.c.b16 %v2415, %v2407
  %v4328 = vpack.c.b16 %v2416, %v2408
  %v4329 = vpack.c.b16 %v2417, %v2409
  %v4330 = vpack.c.b16 %v2418, %v2410
  %v4331 = vpack.c.b16 %v2427, %v2419
  %v4332 = vpack.c.b16 %v2428, %v2420
  %v4333 = vpack.c.b16 %v2429, %v2421
  %v4334 = vpack.c.b16 %v2430, %v2422
  %v4335 = vpack.c.b16 %v2431, %v2423
  %v4336 = vpack.c.b16 %v2432, %v2424
  %v4337 = vpack.c.b16 %v2433, %v2425
  %v4338 = vpack.c.b16 %v2434, %v2426
  %v4339 = vpack.c.b16 %v2443, %v2435
  %v4340 = vpack.c.b16 %v2444, %v2436
  %v4341 = vpack.c.b16 %v2445, %v2437
  %v4342 = vpack.c.b16 %v2446, %v2438
  %v4343 = vpack.c.b16 %v2447, %v2439
  %v4344 = vpack.c.b16 %v2448, %v2440
  %v4345 = vpack.c.b16 %v2449, %v2441
  %v4346 = vpack.c.b16 %v2450, %v2442
  %v4347 = vpack.c.b16 %v2459, %v2451
  %v4348 = vpack.c.b16 %v2460, %v2452
  %v4349 = vpack.c.b16 %v2461, %v2453
  %v4350 = vpack.c.b16 %v2462, %v2454
  %v4351 = vpack.c.b16 %v2463, %v2455
  %v4352 = vpack.c.b16 %v2464, %v2456
  %v4353 = vpack.c.b16 %v2465, %v2457
  %v4354 = vpack.c.b16 %v2466, %v2458
  %v4355 = vpack.c.b16 %v2475, %v2467
  %v4356 = vpack.c.b16 %v2476, %v2468
  %v4357 = vpack.c.b16 %v2477, %v2469
  %v4358 = vpack.c.b16 %v2478, %v2470
  %v4359 = vpack.c.b16 %v2479, %v2471
  %v4360 = vpack.c.b16 %v2480, %v2472
  %v4361 = vpack.c.b16 %v2481, %v2473
  %v4362 = vpack.c.b16 %v2482, %v2474
  %v4363 = vpack.c.b16 %v2491, %v2483
  %v4364 = vpack.c.b16 %v2492, %v2484
  %v4365 = vpack.c.b16 %v2493, %v2485
  %v4366 = vpack.c.b16 %v2494, %v2486
  %v4367 = vpack.c.b16 %v2495, %v2487
  %v4368 = vpack.c.b16 %v2496, %v2488
  %v4369 = vpack.c.b16 %v2497, %v2489
  %v4370 = vpack.c.b16 %v2498, %v2490
  %v4371 = vpack.c.b16 %v2507, %v2499
  %v4372 = vpack.c.b16 %v2508, %v2500
  %v4373 = vpack.c.b16 %v2509, %v2501
  %v4374 = vpack.c.b16 %v2510, %v2502
  %v4375 = vpack.c.b16 %v2511, %v2503
  %v4376 = vpack.c.b16 %v2512, %v2504
  %v4377 = vpack.c.b16 %v2513, %v2505
  %v4378 = vpack.c.b16 %v2514, %v2506
  %v4379 = vpack.c.b16 %v2523, %v2515
  %v4380 = vpack.c.b16 %v2524, %v2516
  %v4381 = vpack.c.b16 %v2525, %v2517
  %v4382 = vpack.c.b16 %v2526, %v2518
  %v4383 = vpack.c.b16 %v2527, %v2519
  %v4384 = vpack.c.b16 %v2528, %v2520
  %v4385 = vpack.c.b16 %v2529, %v2521
  %v4386 = vpack.c.b16 %v2530, %v2522
  %v4387 = vpack.c.b16 %v2539, %v2531
  %v4388 = vpack.c.b16 %v2540, %v2532
  %v4389 = vpack.c.b16 %v2541, %v2533
  %v4390 = vpack.c.b16 %v2542, %v2534
  %v4391 = vpack.c.b16 %v2543, %v2535
  %v4392 = vpack.c.b16 %v2544, %v2536
  %v4393 = vpack.c.b16 %v2545, %v2537
  %v4394 = vpack.c.b16 %v2546, %v2538
  %v4395 = vpack.c.b16 %v2555, %v2547
  %v4396 = vpack.c.b16 %v2556, %v2548
  %v4397 = vpack.c.b16 %v2557, %v2549
  %v4398 = vpack.c.b16 %v2558, %v2550
  %v4399 = vpack.c.b16 %v2559, %v2551
  %v4400 = vpack.c.b16 %v2560, %v2552
  %v4401 = vpack.c.b16 %v2561, %v2553
  %v4402 = vpack.c.b16 %v2562, %v2554
  %v4403 = vpack.c.b16 %v2571, %v2563
  %v4404 = vpack.c.b16 %v2572, %v2564
  %v4405 = vpack.c.b16 %v2573, %v2565
  %v4406 = vpack.c.b16 %v2574, %v2566
  %v4407 = vpack.c.b16 %v2575, %v2567
  %v4408 = vpack.c.b16 %v2576, %v2568
  %v4409 = vpack.c.b16 %v2577, %v2569
  %v4410 = vpack.c.b16 %v2578, %v2570
  %v4411 = vpack.c.b16 %v2587, %v2579
  %v4412 = vpack.c.b16 %v2588, %v2580
  %v4413 = vpack.c.b16 %v2589, %v2581
  %v4414 = vpack.c.b16 %v2590, %v2582
  %v4415 = vpack.c.b16 %v2591, %v2583
  %v4416 = vpack.c.b16 %v2592, %v2584
  %v4417 = vpack.c.b16 %v2593, %v2585
  %v4418 = vpack.c.b16 %v2594, %v2586
  %v4419 = vpack.c.b16 %v2603, %v2595
  %v4420 = vpack.c.b16 %v2604, %v2596
  %v4421 = vpack.c.b16 %v2605, %v2597
  %v4422 = vpack.c.b16 %v2606, %v2598
  %v4423 = vpack.c.b16 %v2607, %v2599
  %v4424 = vpack.c.b16 %v2608, %v2600
  %v4425 = vpack.c.b16 %v2609, %v2601
  %v4426 = vpack.c.b16 %v2610, %v2602
  %v4427 = vpack.c.b16 %v2619, %v2611
  %v4428 = vpack.c.b16 %v2620, %v2612
  %v4429 = vpack.c.b16 %v2621, %v2613
  %v4430 = vpack.c.b16 %v2622, %v2614
  %v4431 = vpack.c.b16 %v2623, %v2615
  %v4432 = vpack.c.b16 %v2624, %v2616
  %v4433 = vpack.c.b16 %v2625, %v2617
  %v4434 = vpack.c.b16 %v2626, %v2618
  %v4435 = vpack.c.b16 %v2635, %v2627
  %v4436 = vpack.c.b16 %v2636, %v2628
  %v4437 = vpack.c.b16 %v2637, %v2629
  %v4438 = vpack.c.b16 %v2638, %v2630
  %v4439 = vpack.c.b16 %v2639, %v2631
  %v4440 = vpack.c.b16 %v2640, %v2632
  %v4441 = vpack.c.b16 %v2641, %v2633
  %v4442 = vpack.c.b16 %v2642, %v2634
  %v4443 = vpack.c.b16 %v2651, %v2643
  %v4444 = vpack.c.b16 %v2652, %v2644
  %v4445 = vpack.c.b16 %v2653, %v2645
  %v4446 = vpack.c.b16 %v2654, %v2646
  %v4447 = vpack.c.b16 %v2655, %v2647
  %v4448 = vpack.c.b16 %v2656, %v2648
  %v4449 = vpack.c.b16 %v2657, %v2649
  %v4450 = vpack.c.b16 %v2658, %v2650
  %v4451 = vpack.c.b16 %v2667, %v2659
  %v4452 = vpack.c.b16 %v2668, %v2660
  %v4453 = vpack.c.b16 %v2669, %v2661
  %v4454 = vpack.c.b16 %v2670, %v2662
  %v4455 = vpack.c.b16 %v2671, %v2663
  %v4456 = vpack.c.b16 %v2672, %v2664
  %v4457 = vpack.c.b16 %v2673, %v2665
  %v4458 = vpack.c.b16 %v2674, %v2666
  %v4459 = vpack.c.b16 %v2683, %v2675
  %v4460 = vpack.c.b16 %v2684, %v2676
  %v4461 = vpack.c.b16 %v2685, %v2677
  %v4462 = vpack.c.b16 %v2686, %v2678
  %v4463 = vpack.c.b16 %v2687, %v2679
  %v4464 = vpack.c.b16 %v2688, %v2680
  %v4465 = vpack.c.b16 %v2689, %v2681
  %v4466 = vpack.c.b16 %v2690, %v2682
  %v4467 = vpack.c.b16 %v2699, %v2691
  %v4468 = vpack.c.b16 %v2700, %v2692
  %v4469 = vpack.c.b16 %v2701, %v2693
  %v4470 = vpack.c.b16 %v2702, %v2694
  %v4471 = vpack.c.b16 %v2703, %v2695
  %v4472 = vpack.c.b16 %v2704, %v2696
  %v4473 = vpack.c.b16 %v2705, %v2697
  %v4474 = vpack.c.b16 %v2706, %v2698
  %v4475 = vpack.c.b16 %v2715, %v2707
  %v4476 = vpack.c.b16 %v2716, %v2708
  %v4477 = vpack.c.b16 %v2717, %v2709
  %v4478 = vpack.c.b16 %v2718, %v2710
  %v4479 = vpack.c.b16 %v2719, %v2711
  %v4480 = vpack.c.b16 %v2720, %v2712
  %v4481 = vpack.c.b16 %v2721, %v2713
  %v4482 = vpack.c.b16 %v2722, %v2714
  %v4483 = vpack.c.b16 %v2731, %v2723
  %v4484 = vpack.c.b16 %v2732, %v2724
  %v4485 = vpack.c.b16 %v2733, %v2725
  %v4486 = vpack.c.b16 %v2734, %v2726
  %v4487 = vpack.c.b16 %v2735, %v2727
  %v4488 = vpack.c.b16 %v2736, %v2728
  %v4489 = vpack.c.b16 %v2737, %v2729
  %v4490 = vpack.c.b16 %v2738, %v2730
  %v4491 = vpack.c.b16 %v2747, %v2739
  %v4492 = vpack.c.b16 %v2748, %v2740
  %v4493 = vpack.c.b16 %v2749, %v2741
  %v4494 = vpack.c.b16 %v2750, %v2742
  %v4495 = vpack.c.b16 %v2751, %v2743
  %v4496 = vpack.c.b16 %v2752, %v2744
  %v4497 = vpack.c.b16 %v2753, %v2745
  %v4498 = vpack.c.b16 %v2754, %v2746
  %v4499 = vpack.c.b16 %v2763, %v2755
  %v4500 = vpack.c.b16 %v2764, %v2756
  %v4501 = vpack.c.b16 %v2765, %v2757
  %v4502 = vpack.c.b16 %v2766, %v2758
  %v4503 = vpack.c.b16 %v2767, %v2759
  %v4504 = vpack.c.b16 %v2768, %v2760
  %v4505 = vpack.c.b16 %v2769, %v2761
  %v4506 = vpack.c.b16 %v2770, %v2762
  %v4507 = vpack.c.b16 %v2779, %v2771
  %v4508 = vpack.c.b16 %v2780, %v2772
  %v4509 = vpack.c.b16 %v2781, %v2773
  %v4510 = vpack.c.b16 %v2782, %v2774
  %v4511 = vpack.c.b16 %v2783, %v2775
  %v4512 = vpack.c.b16 %v2784, %v2776
  %v4513 = vpack.c.b16 %v2785, %v2777
  %v4514 = vpack.c.b16 %v2786, %v2778
  %v4515 = vpack.c.b16 %v2795, %v2787
  %v4516 = vpack.c.b16 %v2796, %v2788
  %v4517 = vpack.c.b16 %v2797, %v2789
  %v4518 = vpack.c.b16 %v2798, %v2790
  %v4519 = vpack.c.b16 %v2799, %v2791
  %v4520 = vpack.c.b16 %v2800, %v2792
  %v4521 = vpack.c.b16 %v2801, %v2793
  %v4522 = vpack.c.b16 %v2802, %v2794
  %v4523 = vpack.c.b16 %v2811, %v2803
  %v4524 = vpack.c.b16 %v2812, %v2804
  %v4525 = vpack.c.b16 %v2813, %v2805
  %v4526 = vpack.c.b16 %v2814, %v2806
  %v4527 = vpack.c.b16 %v2815, %v2807
  %v4528 = vpack.c.b16 %v2816, %v2808
  %v4529 = vpack.c.b16 %v2817, %v2809
  %v4530 = vpack.c.b16 %v2818, %v2810
  %v4531 = vpack.c.b16 %v2827, %v2819
  %v4532 = vpack.c.b16 %v2828, %v2820
  %v4533 = vpack.c.b16 %v2829, %v2821
  %v4534 = vpack.c.b16 %v2830, %v2822
  %v4535 = vpack.c.b16 %v2831, %v2823
  %v4536 = vpack.c.b16 %v2832, %v2824
  %v4537 = vpack.c.b16 %v2833, %v2825
  %v4538 = vpack.c.b16 %v2834, %v2826
  %v4539 = vpack.c.b16 %v2843, %v2835
  %v4540 = vpack.c.b16 %v2844, %v2836
  %v4541 = vpack.c.b16 %v2845, %v2837
  %v4542 = vpack.c.b16 %v2846, %v2838
  %v4543 = vpack.c.b16 %v2847, %v2839
  %v4544 = vpack.c.b16 %v2848, %v2840
  %v4545 = vpack.c.b16 %v2849, %v2841
  %v4546 = vpack.c.b16 %v2850, %v2842
  %v4547 = vpack.c.b16 %v2859, %v2851
  %v4548 = vpack.c.b16 %v2860, %v2852
  %v4549 = vpack.c.b16 %v2861, %v2853
  %v4550 = vpack.c.b16 %v2862, %v2854
  %v4551 = vpack.c.b16 %v2863, %v2855
  %v4552 = vpack.c.b16 %v2864, %v2856
  %v4553 = vpack.c.b16 %v2865, %v2857
  %v4554 = vpack.c.b16 %v2866, %v2858
  %v4555 = vpack.c.b16 %v2875, %v2867
  %v4556 = vpack.c.b16 %v2876, %v2868
  %v4557 = vpack.c.b16 %v2877, %v2869
  %v4558 = vpack.c.b16 %v2878, %v2870
  %v4559 = vpack.c.b16 %v2879, %v2871
  %v4560 = vpack.c.b16 %v2880, %v2872
  %v4561 = vpack.c.b16 %v2881, %v2873
  %v4562 = vpack.c.b16 %v2882, %v2874
  %v4563 = vpack.c.b16 %v2891, %v2883
  %v4564 = vpack.c.b16 %v2892, %v2884
  %v4565 = vpack.c.b16 %v2893, %v2885
  %v4566 = vpack.c.b16 %v2894, %v2886
  %v4567 = vpack.c.b16 %v2895, %v2887
  %v4568 = vpack.c.b16 %v2896, %v2888
  %v4569 = vpack.c.b16 %v2897, %v2889
  %v4570 = vpack.c.b16 %v2898, %v2890
  %v4571 = vpack.c.b16 %v2907, %v2899
  %v4572 = vpack.c.b16 %v2908, %v2900
  %v4573 = vpack.c.b16 %v2909, %v2901
  %v4574 = vpack.c.b16 %v2910, %v2902
  %v4575 = vpack.c.b16 %v2911, %v2903
  %v4576 = vpack.c.b16 %v2912, %v2904
  %v4577 = vpack.c.b16 %v2913, %v2905
  %v4578 = vpack.c.b16 %v2914, %v2906
  %v4579 = vpack.c.b16 %v2923, %v2915
  %v4580 = vpack.c.b16 %v2924, %v2916
  %v4581 = vpack.c.b16 %v2925, %v2917
  %v4582 = vpack.c.b16 %v2926, %v2918
  %v4583 = vpack.c.b16 %v2927, %v2919
  %v4584 = vpack.c.b16 %v2928, %v2920
  %v4585 = vpack.c.b16 %v2929, %v2921
  %v4586 = vpack.c.b16 %v2930, %v2922
  %v4587 = vpack.c.b16 %v2939, %v2931
  %v4588 = vpack.c.b16 %v2940, %v2932
  %v4589 = vpack.c.b16 %v2941, %v2933
  %v4590 = vpack.c.b16 %v2942, %v2934
  %v4591 = vpack.c.b16 %v2943, %v2935
  %v4592 = vpack.c.b16 %v2944, %v2936
  %v4593 = vpack.c.b16 %v2945, %v2937
  %v4594 = vpack.c.b16 %v2946, %v2938
  %v4595 = vpack.c.b16 %v2955, %v2947
  %v4596 = vpack.c.b16 %v2956, %v2948
  %v4597 = vpack.c.b16 %v2957, %v2949
  %v4598 = vpack.c.b16 %v2958, %v2950
  %v4599 = vpack.c.b16 %v2959, %v2951
  %v4600 = vpack.c.b16 %v2960, %v2952
  %v4601 = vpack.c.b16 %v2961, %v2953
  %v4602 = vpack.c.b16 %v2962, %v2954
  %v4603 = vpack.c.b16 %v2971, %v2963
  %v4604 = vpack.c.b16 %v2972, %v2964
  %v4605 = vpack.c.b16 %v2973, %v2965
  %v4606 = vpack.c.b16 %v2974, %v2966
  %v4607 = vpack.c.b16 %v2975, %v2967
  %v4608 = vpack.c.b16 %v2976, %v2968
  %v4609 = vpack.c.b16 %v2977, %v2969
  %v4610 = vpack.c.b16 %v2978, %v2970
  %v4611 = vpack.c.b16 %v2987, %v2979
  %v4612 = vpack.c.b16 %v2988, %v2980
  %v4613 = vpack.c.b16 %v2989, %v2981
  %v4614 = vpack.c.b16 %v2990, %v2982
  %v4615 = vpack.c.b16 %v2991, %v2983
  %v4616 = vpack.c.b16 %v2992, %v2984
  %v4617 = vpack.c.b16 %v2993, %v2985
  %v4618 = vpack.c.b16 %v2994, %v2986
  %v4619 = vpack.c.b16 %v3003, %v2995
  %v4620 = vpack.c.b16 %v3004, %v2996
  %v4621 = vpack.c.b16 %v3005, %v2997
  %v4622 = vpack.c.b16 %v3006, %v2998
  %v4623 = vpack.c.b16 %v3007, %v2999
  %v4624 = vpack.c.b16 %v3008, %v3000
  %v4625 = vpack.c.b16 %v3009, %v3001
  %v4626 = vpack.c.b16 %v3010, %v3002
  %v4627 = vpack.c.b16 %v3019, %v3011
  %v4628 = vpack.c.b16 %v3020, %v3012
  %v4629 = vpack.c.b16 %v3021, %v3013
  %v4630 = vpack.c.b16 %v3022, %v3014
  %v4631 = vpack.c.b16 %v3023, %v3015
  %v4632 = vpack.c.b16 %v3024, %v3016
  %v4633 = vpack.c.b16 %v3025, %v3017
  %v4634 = vpack.c.b16 %v3026, %v3018
  %v4635 = vpack.c.b16 %v3035, %v3027
  %v4636 = vpack.c.b16 %v3036, %v3028
  %v4637 = vpack.c.b16 %v3037, %v3029
  %v4638 = vpack.c.b16 %v3038, %v3030
  %v4639 = vpack.c.b16 %v3039, %v3031
  %v4640 = vpack.c.b16 %v3040, %v3032
  %v4641 = vpack.c.b16 %v3041, %v3033
  %v4642 = vpack.c.b16 %v3042, %v3034
  %v4643 = vpack.c.b16 %v3051, %v3043
  %v4644 = vpack.c.b16 %v3052, %v3044
  %v4645 = vpack.c.b16 %v3053, %v3045
  %v4646 = vpack.c.b16 %v3054, %v3046
  %v4647 = vpack.c.b16 %v3055, %v3047
  %v4648 = vpack.c.b16 %v3056, %v3048
  %v4649 = vpack.c.b16 %v3057, %v3049
  %v4650 = vpack.c.b16 %v3058, %v3050
  %v4651 = vpack.c.b16 %v3067, %v3059
  %v4652 = vpack.c.b16 %v3068, %v3060
  %v4653 = vpack.c.b16 %v3069, %v3061
  %v4654 = vpack.c.b16 %v3070, %v3062
  %v4655 = vpack.c.b16 %v3071, %v3063
  %v4656 = vpack.c.b16 %v3072, %v3064
  %v4657 = vpack.c.b16 %v3073, %v3065
  %v4658 = vpack.c.b16 %v3074, %v3066
  %v4659 = vpack.c.b16 %v3083, %v3075
  %v4660 = vpack.c.b16 %v3084, %v3076
  %v4661 = vpack.c.b16 %v3085, %v3077
  %v4662 = vpack.c.b16 %v3086, %v3078
  %v4663 = vpack.c.b16 %v3087, %v3079
  %v4664 = vpack.c.b16 %v3088, %v3080
  %v4665 = vpack.c.b16 %v3089, %v3081
  %v4666 = vpack.c.b16 %v3090, %v3082
  %v4667 = vpack.c.b16 %v3099, %v3091
  %v4668 = vpack.c.b16 %v3100, %v3092
  %v4669 = vpack.c.b16 %v3101, %v3093
  %v4670 = vpack.c.b16 %v3102, %v3094
  %v4671 = vpack.c.b16 %v3103, %v3095
  %v4672 = vpack.c.b16 %v3104, %v3096
  %v4673 = vpack.c.b16 %v3105, %v3097
  %v4674 = vpack.c.b16 %v3106, %v3098
  %v4675 = vpack.c.b16 %v3115, %v3107
  %v4676 = vpack.c.b16 %v3116, %v3108
  %v4677 = vpack.c.b16 %v3117, %v3109
  %v4678 = vpack.c.b16 %v3118, %v3110
  %v4679 = vpack.c.b16 %v3119, %v3111
  %v4680 = vpack.c.b16 %v3120, %v3112
  %v4681 = vpack.c.b16 %v3121, %v3113
  %v4682 = vpack.c.b16 %v3122, %v3114
  %v4683 = vpack.c.b16 %v3131, %v3123
  %v4684 = vpack.c.b16 %v3132, %v3124
  %v4685 = vpack.c.b16 %v3133, %v3125
  %v4686 = vpack.c.b16 %v3134, %v3126
  %v4687 = vpack.c.b16 %v3135, %v3127
  %v4688 = vpack.c.b16 %v3136, %v3128
  %v4689 = vpack.c.b16 %v3137, %v3129
  %v4690 = vpack.c.b16 %v3138, %v3130
  %v4691 = vpack.c.b16 %v3147, %v3139
  %v4692 = vpack.c.b16 %v3148, %v3140
  %v4693 = vpack.c.b16 %v3149, %v3141
  %v4694 = vpack.c.b16 %v3150, %v3142
  %v4695 = vpack.c.b16 %v3151, %v3143
  %v4696 = vpack.c.b16 %v3152, %v3144
  %v4697 = vpack.c.b16 %v3153, %v3145
  %v4698 = vpack.c.b16 %v3154, %v3146
  %v4699 = vpack.c.b16 %v3163, %v3155
  %v4700 = vpack.c.b16 %v3164, %v3156
  %v4701 = vpack.c.b16 %v3165, %v3157
  %v4702 = vpack.c.b16 %v3166, %v3158
  %v4703 = vpack.c.b16 %v3167, %v3159
  %v4704 = vpack.c.b16 %v3168, %v3160
  %v4705 = vpack.c.b16 %v3169, %v3161
  %v4706 = vpack.c.b16 %v3170, %v3162
  %v4707 = vpack.c.b16 %v3179, %v3171
  %v4708 = vpack.c.b16 %v3180, %v3172
  %v4709 = vpack.c.b16 %v3181, %v3173
  %v4710 = vpack.c.b16 %v3182, %v3174
  %v4711 = vpack.c.b16 %v3183, %v3175
  %v4712 = vpack.c.b16 %v3184, %v3176
  %v4713 = vpack.c.b16 %v3185, %v3177
  %v4714 = vpack.c.b16 %v3186, %v3178
  %v4715 = vpack.c.b16 %v3195, %v3187
  %v4716 = vpack.c.b16 %v3196, %v3188
  %v4717 = vpack.c.b16 %v3197, %v3189
  %v4718 = vpack.c.b16 %v3198, %v3190
  %v4719 = vpack.c.b16 %v3199, %v3191
  %v4720 = vpack.c.b16 %v3200, %v3192
  %v4721 = vpack.c.b16 %v3201, %v3193
  %v4722 = vpack.c.b16 %v3202, %v3194
  %v4723 = vpack.c.b16 %v3211, %v3203
  %v4724 = vpack.c.b16 %v3212, %v3204
  %v4725 = vpack.c.b16 %v3213, %v3205
  %v4726 = vpack.c.b16 %v3214, %v3206
  %v4727 = vpack.c.b16 %v3215, %v3207
  %v4728 = vpack.c.b16 %v3216, %v3208
  %v4729 = vpack.c.b16 %v3217, %v3209
  %v4730 = vpack.c.b16 %v3218, %v3210
  %v4731 = vpack.c.b16 %v3227, %v3219
  %v4732 = vpack.c.b16 %v3228, %v3220
  %v4733 = vpack.c.b16 %v3229, %v3221
  %v4734 = vpack.c.b16 %v3230, %v3222
  %v4735 = vpack.c.b16 %v3231, %v3223
  %v4736 = vpack.c.b16 %v3232, %v3224
  %v4737 = vpack.c.b16 %v3233, %v3225
  %v4738 = vpack.c.b16 %v3234, %v3226
  %v4739 = vpack.c.b16 %v3243, %v3235
  %v4740 = vpack.c.b16 %v3244, %v3236
  %v4741 = vpack.c.b16 %v3245, %v3237
  %v4742 = vpack.c.b16 %v3246, %v3238
  %v4743 = vpack.c.b16 %v3247, %v3239
  %v4744 = vpack.c.b16 %v3248, %v3240
  %v4745 = vpack.c.b16 %v3249, %v3241
  %v4746 = vpack.c.b16 %v3250, %v3242
  %v4747 = vpack.c.b16 %v3259, %v3251
  %v4748 = vpack.c.b16 %v3260, %v3252
  %v4749 = vpack.c.b16 %v3261, %v3253
  %v4750 = vpack.c.b16 %v3262, %v3254
  %v4751 = vpack.c.b16 %v3263, %v3255
  %v4752 = vpack.c.b16 %v3264, %v3256
  %v4753 = vpack.c.b16 %v3265, %v3257
  %v4754 = vpack.c.b16 %v3266, %v3258
  %v4755 = vpack.c.b16 %v3275, %v3267
  %v4756 = vpack.c.b16 %v3276, %v3268
  %v4757 = vpack.c.b16 %v3277, %v3269
  %v4758 = vpack.c.b16 %v3278, %v3270
  %v4759 = vpack.c.b16 %v3279, %v3271
  %v4760 = vpack.c.b16 %v3280, %v3272
  %v4761 = vpack.c.b16 %v3281, %v3273
  %v4762 = vpack.c.b16 %v3282, %v3274
  %v4763 = vpack.c.b16 %v3291, %v3283
  %v4764 = vpack.c.b16 %v3292, %v3284
  %v4765 = vpack.c.b16 %v3293, %v3285
  %v4766 = vpack.c.b16 %v3294, %v3286
  %v4767 = vpack.c.b16 %v3295, %v3287
  %v4768 = vpack.c.b16 %v3296, %v3288
  %v4769 = vpack.c.b16 %v3297, %v3289
  %v4770 = vpack.c.b16 %v3298, %v3290
  %v4771 = vpack.c.b16 %v3307, %v3299
  %v4772 = vpack.c.b16 %v3308, %v3300
  %v4773 = vpack.c.b16 %v3309, %v3301
  %v4774 = vpack.c.b16 %v3310, %v3302
  %v4775 = vpack.c.b16 %v3311, %v3303
  %v4776 = vpack.c.b16 %v3312, %v3304
  %v4777 = vpack.c.b16 %v3313, %v3305
  %v4778 = vpack.c.b16 %v3314, %v3306
  %v4779 = vpack.c.b16 %v3323, %v3315
  %v4780 = vpack.c.b16 %v3324, %v3316
  %v4781 = vpack.c.b16 %v3325, %v3317
  %v4782 = vpack.c.b16 %v3326, %v3318
  %v4783 = vpack.c.b16 %v3327, %v3319
  %v4784 = vpack.c.b16 %v3328, %v3320
  %v4785 = vpack.c.b16 %v3329, %v3321
  %v4786 = vpack.c.b16 %v3330, %v3322
  %v4787 = vpack.c.b16 %v3339, %v3331
  %v4788 = vpack.c.b16 %v3340, %v3332
  %v4789 = vpack.c.b16 %v3341, %v3333
  %v4790 = vpack.c.b16 %v3342, %v3334
  %v4791 = vpack.c.b16 %v3343, %v3335
  %v4792 = vpack.c.b16 %v3344, %v3336
  %v4793 = vpack.c.b16 %v3345, %v3337
  %v4794 = vpack.c.b16 %v3346, %v3338
  %v4795 = vpack.c.b16 %v3355, %v3347
  %v4796 = vpack.c.b16 %v3356, %v3348
  %v4797 = vpack.c.b16 %v3357, %v3349
  %v4798 = vpack.c.b16 %v3358, %v3350
  %v4799 = vpack.c.b16 %v3359, %v3351
  %v4800 = vpack.c.b16 %v3360, %v3352
  %v4801 = vpack.c.b16 %v3361, %v3353
  %v4802 = vpack.c.b16 %v3362, %v3354
  %v4803 = vpack.c.b16 %v3371, %v3363
  %v4804 = vpack.c.b16 %v3372, %v3364
  %v4805 = vpack.c.b16 %v3373, %v3365
  %v4806 = vpack.c.b16 %v3374, %v3366
  %v4807 = vpack.c.b16 %v3375, %v3367
  %v4808 = vpack.c.b16 %v3376, %v3368
  %v4809 = vpack.c.b16 %v3377, %v3369
  %v4810 = vpack.c.b16 %v3378, %v3370
  %v4811 = vpack.c.b16 %v3387, %v3379
  %v4812 = vpack.c.b16 %v3388, %v3380
  %v4813 = vpack.c.b16 %v3389, %v3381
  %v4814 = vpack.c.b16 %v3390, %v3382
  %v4815 = vpack.c.b16 %v3391, %v3383
  %v4816 = vpack.c.b16 %v3392, %v3384
  %v4817 = vpack.c.b16 %v3393, %v3385
  %v4818 = vpack.c.b16 %v3394, %v3386
  %v4819 = vpack.c.b16 %v3403, %v3395
  %v4820 = vpack.c.b16 %v3404, %v3396
  %v4821 = vpack.c.b16 %v3405, %v3397
  %v4822 = vpack.c.b16 %v3406, %v3398
  %v4823 = vpack.c.b16 %v3407, %v3399
  %v4824 = vpack.c.b16 %v3408, %v3400
  %v4825 = vpack.c.b16 %v3409, %v3401
  %v4826 = vpack.c.b16 %v3410, %v3402
  %v4827 = vpack.c.b16 %v3419, %v3411
  %v4828 = vpack.c.b16 %v3420, %v3412
  %v4829 = vpack.c.b16 %v3421, %v3413
  %v4830 = vpack.c.b16 %v3422, %v3414
  %v4831 = vpack.c.b16 %v3423, %v3415
  %v4832 = vpack.c.b16 %v3424, %v3416
  %v4833 = vpack.c.b16 %v3425, %v3417
  %v4834 = vpack.c.b16 %v3426, %v3418
  %v4835 = vpack.c.b16 %v3435, %v3427
  %v4836 = vpack.c.b16 %v3436, %v3428
  %v4837 = vpack.c.b16 %v3437, %v3429
  %v4838 = vpack.c.b16 %v3438, %v3430
  %v4839 = vpack.c.b16 %v3439, %v3431
  %v4840 = vpack.c.b16 %v3440, %v3432
  %v4841 = vpack.c.b16 %v3441, %v3433
  %v4842 = vpack.c.b16 %v3442, %v3434
  %v4843 = vpack.c.b16 %v3451, %v3443
  %v4844 = vpack.c.b16 %v3452, %v3444
  %v4845 = vpack.c.b16 %v3453, %v3445
  %v4846 = vpack.c.b16 %v3454, %v3446
  %v4847 = vpack.c.b16 %v3455, %v3447
  %v4848 = vpack.c.b16 %v3456, %v3448
  %v4849 = vpack.c.b16 %v3457, %v3449
  %v4850 = vpack.c.b16 %v3458, %v3450
  %v4851 = vpack.c.b16 %v3467, %v3459
  %v4852 = vpack.c.b16 %v3468, %v3460
  %v4853 = vpack.c.b16 %v3469, %v3461
  %v4854 = vpack.c.b16 %v3470, %v3462
  %v4855 = vpack.c.b16 %v3471, %v3463
  %v4856 = vpack.c.b16 %v3472, %v3464
  %v4857 = vpack.c.b16 %v3473, %v3465
  %v4858 = vpack.c.b16 %v3474, %v3466
  %v4859 = vpack.c.b16 %v3483, %v3475
  %v4860 = vpack.c.b16 %v3484, %v3476
  %v4861 = vpack.c.b16 %v3485, %v3477
  %v4862 = vpack.c.b16 %v3486, %v3478
  %v4863 = vpack.c.b16 %v3487, %v3479
  %v4864 = vpack.c.b16 %v3488, %v3480
  %v4865 = vpack.c.b16 %v3489, %v3481
  %v4866 = vpack.c.b16 %v3490, %v3482
  %v4867 = vpack.c.b16 %v3499, %v3491
  %v4868 = vpack.c.b16 %v3500, %v3492
  %v4869 = vpack.c.b16 %v3501, %v3493
  %v4870 = vpack.c.b16 %v3502, %v3494
  %v4871 = vpack.c.b16 %v3503, %v3495
  %v4872 = vpack.c.b16 %v3504, %v3496
  %v4873 = vpack.c.b16 %v3505, %v3497
  %v4874 = vpack.c.b16 %v3506, %v3498
  %v4875 = vpack.c.b16 %v3515, %v3507
  %v4876 = vpack.c.b16 %v3516, %v3508
  %v4877 = vpack.c.b16 %v3517, %v3509
  %v4878 = vpack.c.b16 %v3518, %v3510
  %v4879 = vpack.c.b16 %v3519, %v3511
  %v4880 = vpack.c.b16 %v3520, %v3512
  %v4881 = vpack.c.b16 %v3521, %v3513
  %v4882 = vpack.c.b16 %v3522, %v3514
  %v4883 = vpack.c.b16 %v3531, %v3523
  %v4884 = vpack.c.b16 %v3532, %v3524
  %v4885 = vpack.c.b16 %v3533, %v3525
  %v4886 = vpack.c.b16 %v3534, %v3526
  %v4887 = vpack.c.b16 %v3535, %v3527
  %v4888 = vpack.c.b16 %v3536, %v3528
  %v4889 = vpack.c.b16 %v3537, %v3529
  %v4890 = vpack.c.b16 %v3538, %v3530
  %v4891 = vpack.c.b16 %v3547, %v3539
  %v4892 = vpack.c.b16 %v3548, %v3540
  %v4893 = vpack.c.b16 %v3549, %v3541
  %v4894 = vpack.c.b16 %v3550, %v3542
  %v4895 = vpack.c.b16 %v3551, %v3543
  %v4896 = vpack.c.b16 %v3552, %v3544
  %v4897 = vpack.c.b16 %v3553, %v3545
  %v4898 = vpack.c.b16 %v3554, %v3546
  %v4899 = vpack.c.b16 %v3563, %v3555
  %v4900 = vpack.c.b16 %v3564, %v3556
  %v4901 = vpack.c.b16 %v3565, %v3557
  %v4902 = vpack.c.b16 %v3566, %v3558
  %v4903 = vpack.c.b16 %v3567, %v3559
  %v4904 = vpack.c.b16 %v3568, %v3560
  %v4905 = vpack.c.b16 %v3569, %v3561
  %v4906 = vpack.c.b16 %v3570, %v3562
  %v4907 = vpack.c.b16 %v3579, %v3571
  %v4908 = vpack.c.b16 %v3580, %v3572
  %v4909 = vpack.c.b16 %v3581, %v3573
  %v4910 = vpack.c.b16 %v3582, %v3574
  %v4911 = vpack.c.b16 %v3583, %v3575
  %v4912 = vpack.c.b16 %v3584, %v3576
  %v4913 = vpack.c.b16 %v3585, %v3577
  %v4914 = vpack.c.b16 %v3586, %v3578
  %v4915 = vpack.c.b16 %v3595, %v3587
  %v4916 = vpack.c.b16 %v3596, %v3588
  %v4917 = vpack.c.b16 %v3597, %v3589
  %v4918 = vpack.c.b16 %v3598, %v3590
  %v4919 = vpack.c.b16 %v3599, %v3591
  %v4920 = vpack.c.b16 %v3600, %v3592
  %v4921 = vpack.c.b16 %v3601, %v3593
  %v4922 = vpack.c.b16 %v3602, %v3594
  %v4923 = vpack.c.b16 %v3611, %v3603
  %v4924 = vpack.c.b16 %v3612, %v3604
  %v4925 = vpack.c.b16 %v3613, %v3605
  %v4926 = vpack.c.b16 %v3614, %v3606
  %v4927 = vpack.c.b16 %v3615, %v3607
  %v4928 = vpack.c.b16 %v3616, %v3608
  %v4929 = vpack.c.b16 %v3617, %v3609
  %v4930 = vpack.c.b16 %v3618, %v3610
  %v4931 = vpack.c.b16 %v3627, %v3619
  %v4932 = vpack.c.b16 %v3628, %v3620
  %v4933 = vpack.c.b16 %v3629, %v3621
  %v4934 = vpack.c.b16 %v3630, %v3622
  %v4935 = vpack.c.b16 %v3631, %v3623
  %v4936 = vpack.c.b16 %v3632, %v3624
  %v4937 = vpack.c.b16 %v3633, %v3625
  %v4938 = vpack.c.b16 %v3634, %v3626
  %v4939 = vpack.c.b16 %v3643, %v3635
  %v4940 = vpack.c.b16 %v3644, %v3636
  %v4941 = vpack.c.b16 %v3645, %v3637
  %v4942 = vpack.c.b16 %v3646, %v3638
  %v4943 = vpack.c.b16 %v3647, %v3639
  %v4944 = vpack.c.b16 %v3648, %v3640
  %v4945 = vpack.c.b16 %v3649, %v3641
  %v4946 = vpack.c.b16 %v3650, %v3642
  %v4947 = vpack.c.b16 %v3659, %v3651
  %v4948 = vpack.c.b16 %v3660, %v3652
  %v4949 = vpack.c.b16 %v3661, %v3653
  %v4950 = vpack.c.b16 %v3662, %v3654
  %v4951 = vpack.c.b16 %v3663, %v3655
  %v4952 = vpack.c.b16 %v3664, %v3656
  %v4953 = vpack.c.b16 %v3665, %v3657
  %v4954 = vpack.c.b16 %v3666, %v3658
  %v4955 = vpack.c.b16 %v3675, %v3667
  %v4956 = vpack.c.b16 %v3676, %v3668
  %v4957 = vpack.c.b16 %v3677, %v3669
  %v4958 = vpack.c.b16 %v3678, %v3670
  %v4959 = vpack.c.b16 %v3679, %v3671
  %v4960 = vpack.c.b16 %v3680, %v3672
  %v4961 = vpack.c.b16 %v3681, %v3673
  %v4962 = vpack.c.b16 %v3682, %v3674
  %v4963 = vpack.c.b16 %v3691, %v3683
  %v4964 = vpack.c.b16 %v3692, %v3684
  %v4965 = vpack.c.b16 %v3693, %v3685
  %v4966 = vpack.c.b16 %v3694, %v3686
  %v4967 = vpack.c.b16 %v3695, %v3687
  %v4968 = vpack.c.b16 %v3696, %v3688
  %v4969 = vpack.c.b16 %v3697, %v3689
  %v4970 = vpack.c.b16 %v3698, %v3690
  %v4971 = vpack.c.b16 %v3707, %v3699
  %v4972 = vpack.c.b16 %v3708, %v3700
  %v4973 = vpack.c.b16 %v3709, %v3701
  %v4974 = vpack.c.b16 %v3710, %v3702
  %v4975 = vpack.c.b16 %v3711, %v3703
  %v4976 = vpack.c.b16 %v3712, %v3704
  %v4977 = vpack.c.b16 %v3713, %v3705
  %v4978 = vpack.c.b16 %v3714, %v3706
  %v4979 = vpack.c.b16 %v3723, %v3715
  %v4980 = vpack.c.b16 %v3724, %v3716
  %v4981 = vpack.c.b16 %v3725, %v3717
  %v4982 = vpack.c.b16 %v3726, %v3718
  %v4983 = vpack.c.b16 %v3727, %v3719
  %v4984 = vpack.c.b16 %v3728, %v3720
  %v4985 = vpack.c.b16 %v3729, %v3721
  %v4986 = vpack.c.b16 %v3730, %v3722
  %v4987 = vpack.c.b16 %v3739, %v3731
  %v4988 = vpack.c.b16 %v3740, %v3732
  %v4989 = vpack.c.b16 %v3741, %v3733
  %v4990 = vpack.c.b16 %v3742, %v3734
  %v4991 = vpack.c.b16 %v3743, %v3735
  %v4992 = vpack.c.b16 %v3744, %v3736
  %v4993 = vpack.c.b16 %v3745, %v3737
  %v4994 = vpack.c.b16 %v3746, %v3738
  %v4995 = vpack.c.b16 %v3755, %v3747
  %v4996 = vpack.c.b16 %v3756, %v3748
  %v4997 = vpack.c.b16 %v3757, %v3749
  %v4998 = vpack.c.b16 %v3758, %v3750
  %v4999 = vpack.c.b16 %v3759, %v3751
  %v5000 = vpack.c.b16 %v3760, %v3752
  %v5001 = vpack.c.b16 %v3761, %v3753
  %v5002 = vpack.c.b16 %v3762, %v3754
  %v5003 = vpack.c.b16 %v3771, %v3763
  %v5004 = vpack.c.b16 %v3772, %v3764
  %v5005 = vpack.c.b16 %v3773, %v3765
  %v5006 = vpack.c.b16 %v3774, %v3766
  %v5007 = vpack.c.b16 %v3775, %v3767
  %v5008 = vpack.c.b16 %v3776, %v3768
  %v5009 = vpack.c.b16 %v3777, %v3769
  %v5010 = vpack.c.b16 %v3778, %v3770
  %v5011 = vpack.c.b16 %v3787, %v3779
  %v5012 = vpack.c.b16 %v3788, %v3780
  %v5013 = vpack.c.b16 %v3789, %v3781
  %v5014 = vpack.c.b16 %v3790, %v3782
  %v5015 = vpack.c.b16 %v3791, %v3783
  %v5016 = vpack.c.b16 %v3792, %v3784
  %v5017 = vpack.c.b16 %v3793, %v3785
  %v5018 = vpack.c.b16 %v3794, %v3786
  %v5019 = vpack.c.b16 %v3803, %v3795
  %v5020 = vpack.c.b16 %v3804, %v3796
  %v5021 = vpack.c.b16 %v3805, %v3797
  %v5022 = vpack.c.b16 %v3806, %v3798
  %v5023 = vpack.c.b16 %v3807, %v3799
  %v5024 = vpack.c.b16 %v3808, %v3800
  %v5025 = vpack.c.b16 %v3809, %v3801
  %v5026 = vpack.c.b16 %v3810, %v3802
  %v5027 = vpack.c.b16 %v3819, %v3811
  %v5028 = vpack.c.b16 %v3820, %v3812
  %v5029 = vpack.c.b16 %v3821, %v3813
  %v5030 = vpack.c.b16 %v3822, %v3814
  %v5031 = vpack.c.b16 %v3823, %v3815
  %v5032 = vpack.c.b16 %v3824, %v3816
  %v5033 = vpack.c.b16 %v3825, %v3817
  %v5034 = vpack.c.b16 %v3826, %v3818
  %v5035 = vpack.c.b16 %v3835, %v3827
  %v5036 = vpack.c.b16 %v3836, %v3828
  %v5037 = vpack.c.b16 %v3837, %v3829
  %v5038 = vpack.c.b16 %v3838, %v3830
  %v5039 = vpack.c.b16 %v3839, %v3831
  %v5040 = vpack.c.b16 %v3840, %v3832
  %v5041 = vpack.c.b16 %v3841, %v3833
  %v5042 = vpack.c.b16 %v3842, %v3834
  %v5043 = vpack.c.b16 %v3851, %v3843
  %v5044 = vpack.c.b16 %v3852, %v3844
  %v5045 = vpack.c.b16 %v3853, %v3845
  %v5046 = vpack.c.b16 %v3854, %v3846
  %v5047 = vpack.c.b16 %v3855, %v3847
  %v5048 = vpack.c.b16 %v3856, %v3848
  %v5049 = vpack.c.b16 %v3857, %v3849
  %v5050 = vpack.c.b16 %v3858, %v3850
  %v5051 = vpack.c.b16 %v3867, %v3859
  %v5052 = vpack.c.b16 %v3868, %v3860
  %v5053 = vpack.c.b16 %v3869, %v3861
  %v5054 = vpack.c.b16 %v3870, %v3862
  %v5055 = vpack.c.b16 %v3871, %v3863
  %v5056 = vpack.c.b16 %v3872, %v3864
  %v5057 = vpack.c.b16 %v3873, %v3865
  %v5058 = vpack.c.b16 %v3874, %v3866
  %v5059 = vpack.c.b16 %v3883, %v3875
  %v5060 = vpack.c.b16 %v3884, %v3876
  %v5061 = vpack.c.b16 %v3885, %v3877
  %v5062 = vpack.c.b16 %v3886, %v3878
  %v5063 = vpack.c.b16 %v3887, %v3879
  %v5064 = vpack.c.b16 %v3888, %v3880
  %v5065 = vpack.c.b16 %v3889, %v3881
  %v5066 = vpack.c.b16 %v3890, %v3882
  %v5067 = vpack.c.b16 %v3899, %v3891
  %v5068 = vpack.c.b16 %v3900, %v3892
  %v5069 = vpack.c.b16 %v3901, %v3893
  %v5070 = vpack.c.b16 %v3902, %v3894
  %v5071 = vpack.c.b16 %v3903, %v3895
  %v5072 = vpack.c.b16 %v3904, %v3896
  %v5073 = vpack.c.b16 %v3905, %v3897
  %v5074 = vpack.c.b16 %v3906, %v3898
  %v5075 = vpack.c.b16 %v3915, %v3907
  %v5076 = vpack.c.b16 %v3916, %v3908
  %v5077 = vpack.c.b16 %v3917, %v3909
  %v5078 = vpack.c.b16 %v3918, %v3910
  %v5079 = vpack.c.b16 %v3919, %v3911
  %v5080 = vpack.c.b16 %v3920, %v3912
  %v5081 = vpack.c.b16 %v3921, %v3913
  %v5082 = vpack.c.b16 %v3922, %v3914
  %v5083 = vpack.c.b16 %v3931, %v3923
  %v5084 = vpack.c.b16 %v3932, %v3924
  %v5085 = vpack.c.b16 %v3933, %v3925
  %v5086 = vpack.c.b16 %v3934, %v3926
  %v5087 = vpack.c.b16 %v3935, %v3927
  %v5088 = vpack.c.b16 %v3936, %v3928
  %v5089 = vpack.c.b16 %v3937, %v3929
  %v5090 = vpack.c.b16 %v3938, %v3930
  %v5091 = vpack.c.b16 %v3947, %v3939
  %v5092 = vpack.c.b16 %v3948, %v3940
  %v5093 = vpack.c.b16 %v3949, %v3941
  %v5094 = vpack.c.b16 %v3950, %v3942
  %v5095 = vpack.c.b16 %v3951, %v3943
  %v5096 = vpack.c.b16 %v3952, %v3944
  %v5097 = vpack.c.b16 %v3953, %v3945
  %v5098 = vpack.c.b16 %v3954, %v3946
  %v5099 = vpack.c.b16 %v3963, %v3955
  %v5100 = vpack.c.b16 %v3964, %v3956
  %v5101 = vpack.c.b16 %v3965, %v3957
  %v5102 = vpack.c.b16 %v3966, %v3958
  %v5103 = vpack.c.b16 %v3967, %v3959
  %v5104 = vpack.c.b16 %v3968, %v3960
  %v5105 = vpack.c.b16 %v3969, %v3961
  %v5106 = vpack.c.b16 %v3970, %v3962
  %v5107 = vpack.c.b16 %v3979, %v3971
  %v5108 = vpack.c.b16 %v3980, %v3972
  %v5109 = vpack.c.b16 %v3981, %v3973
  %v5110 = vpack.c.b16 %v3982, %v3974
  %v5111 = vpack.c.b16 %v3983, %v3975
  %v5112 = vpack.c.b16 %v3984, %v3976
  %v5113 = vpack.c.b16 %v3985, %v3977
  %v5114 = vpack.c.b16 %v3986, %v3978
  %v5115 = vpack.c.b16 %v3995, %v3987
  %v5116 = vpack.c.b16 %v3996, %v3988
  %v5117 = vpack.c.b16 %v3997, %v3989
  %v5118 = vpack.c.b16 %v3998, %v3990
  %v5119 = vpack.c.b16 %v3999, %v3991
  %v5120 = vpack.c.b16 %v4000, %v3992
  %v5121 = vpack.c.b16 %v4001, %v3993
  %v5122 = vpack.c.b16 %v4002, %v3994
  %v5123 = vpack.c.b16 %v4011, %v4003
  %v5124 = vpack.c.b16 %v4012, %v4004
  %v5125 = vpack.c.b16 %v4013, %v4005
  %v5126 = vpack.c.b16 %v4014, %v4006
  %v5127 = vpack.c.b16 %v4015, %v4007
  %v5128 = vpack.c.b16 %v4016, %v4008
  %v5129 = vpack.c.b16 %v4017, %v4009
  %v5130 = vpack.c.b16 %v4018, %v4010
  %v5131 = vpack.c.b16 %v4027, %v4019
  %v5132 = vpack.c.b16 %v4028, %v4020
  %v5133 = vpack.c.b16 %v4029, %v4021
  %v5134 = vpack.c.b16 %v4030, %v4022
  %v5135 = vpack.c.b16 %v4031, %v4023
  %v5136 = vpack.c.b16 %v4032, %v4024
  %v5137 = vpack.c.b16 %v4033, %v4025
  %v5138 = vpack.c.b16 %v4034, %v4026
  %v5139 = vpack.c.b16 %v4043, %v4035
  %v5140 = vpack.c.b16 %v4044, %v4036
  %v5141 = vpack.c.b16 %v4045, %v4037
  %v5142 = vpack.c.b16 %v4046, %v4038
  %v5143 = vpack.c.b16 %v4047, %v4039
  %v5144 = vpack.c.b16 %v4048, %v4040
  %v5145 = vpack.c.b16 %v4049, %v4041
  %v5146 = vpack.c.b16 %v4050, %v4042
  %v5147 = vpack.c.b16 %v4059, %v4051
  %v5148 = vpack.c.b16 %v4060, %v4052
  %v5149 = vpack.c.b16 %v4061, %v4053
  %v5150 = vpack.c.b16 %v4062, %v4054
  %v5151 = vpack.c.b16 %v4063, %v4055
  %v5152 = vpack.c.b16 %v4064, %v4056
  %v5153 = vpack.c.b16 %v4065, %v4057
  %v5154 = vpack.c.b16 %v4066, %v4058
  %v5155 = vpack.c.b16 %v4075, %v4067
  %v5156 = vpack.c.b16 %v4076, %v4068
  %v5157 = vpack.c.b16 %v4077, %v4069
  %v5158 = vpack.c.b16 %v4078, %v4070
  %v5159 = vpack.c.b16 %v4079, %v4071
  %v5160 = vpack.c.b16 %v4080, %v4072
  %v5161 = vpack.c.b16 %v4081, %v4073
  %v5162 = vpack.c.b16 %v4082, %v4074
  %v5163 = vpack.c.b16 %v4091, %v4083
  %v5164 = vpack.c.b16 %v4092, %v4084
  %v5165 = vpack.c.b16 %v4093, %v4085
  %v5166 = vpack.c.b16 %v4094, %v4086
  %v5167 = vpack.c.b16 %v4095, %v4087
  %v5168 = vpack.c.b16 %v4096, %v4088
  %v5169 = vpack.c.b16 %v4097, %v4089
  %v5170 = vpack.c.b16 %v4098, %v4090
  %v5171 = vpack.c.b16 %v4107, %v4099
  %v5172 = vpack.c.b16 %v4108, %v4100
  %v5173 = vpack.c.b16 %v4109, %v4101
  %v5174 = vpack.c.b16 %v4110, %v4102
  %v5175 = vpack.c.b16 %v4111, %v4103
  %v5176 = vpack.c.b16 %v4112, %v4104
  %v5177 = vpack.c.b16 %v4113, %v4105
  %v5178 = vpack.c.b16 %v4114, %v4106
  %v5179 = vpack.c.b16 %v4123, %v4115
  %v5180 = vpack.c.b16 %v4124, %v4116
  %v5181 = vpack.c.b16 %v4125, %v4117
  %v5182 = vpack.c.b16 %v4126, %v4118
  %v5183 = vpack.c.b16 %v4127, %v4119
  %v5184 = vpack.c.b16 %v4128, %v4120
  %v5185 = vpack.c.b16 %v4129, %v4121
  %v5186 = vpack.c.b16 %v4130, %v4122
  %v5187 = vpack.c.b16 %v4139, %v4131
  %v5188 = vpack.c.b16 %v4140, %v4132
  %v5189 = vpack.c.b16 %v4141, %v4133
  %v5190 = vpack.c.b16 %v4142, %v4134
  %v5191 = vpack.c.b16 %v4143, %v4135
  %v5192 = vpack.c.b16 %v4144, %v4136
  %v5193 = vpack.c.b16 %v4145, %v4137
  %v5194 = vpack.c.b16 %v4146, %v4138
  %v5195 = vpack.c.b16 %v4155, %v4147
  %v5196 = vpack.c.b16 %v4156, %v4148
  %v5197 = vpack.c.b16 %v4157, %v4149
  %v5198 = vpack.c.b16 %v4158, %v4150
  %v5199 = vpack.c.b16 %v4159, %v4151
  %v5200 = vpack.c.b16 %v4160, %v4152
  %v5201 = vpack.c.b16 %v4161, %v4153
  %v5202 = vpack.c.b16 %v4162, %v4154
  %v5203 = vpack.c.b16 %v4171, %v4163
  %v5204 = vpack.c.b16 %v4172, %v4164
  %v5205 = vpack.c.b16 %v4173, %v4165
  %v5206 = vpack.c.b16 %v4174, %v4166
  %v5207 = vpack.c.b16 %v4175, %v4167
  %v5208 = vpack.c.b16 %v4176, %v4168
  %v5209 = vpack.c.b16 %v4177, %v4169
  %v5210 = vpack.c.b16 %v4178, %v4170
  %v5211 = vpack.c.b16 %v4187, %v4179
  %v5212 = vpack.c.b16 %v4188, %v4180
  %v5213 = vpack.c.b16 %v4189, %v4181
  %v5214 = vpack.c.b16 %v4190, %v4182
  %v5215 = vpack.c.b16 %v4191, %v4183
  %v5216 = vpack.c.b16 %v4192, %v4184
  %v5217 = vpack.c.b16 %v4193, %v4185
  %v5218 = vpack.c.b16 %v4194, %v4186
  %6243 = vmatpush.bf16.msra.mxu0 %v4251
  %6244 = vmatpush.bf16.msra.mxu0 %v4243
  %6245 = vmatpush.bf16.msra.mxu0 %v4235
  %6246 = vmatpush.bf16.msra.mxu0 %v4227
  %6247 = vmatpush.bf16.msra.mxu0 %v4219
  %6248 = vmatpush.bf16.msra.mxu0 %v4211
  %6249 = vmatpush.bf16.msra.mxu0 %v4203
  %6250 = vmatpush.bf16.msra.mxu0 %v4195
  %6251 = vmatmul.bf16.gmra.mxu0 %v65
  %v6252 = vpop.f32.mrf.mxu0
  %v6253 = vadd.f32 %v1107, %v6252
  %v6254 = vpop.f32.mrf.mxu0
  %6255 = vdwg.mxu0
  %6256 = vmatpush.bf16.msra.mxu0 %v4315
  %6257 = vmatpush.bf16.msra.mxu0 %v4307
  %6258 = vmatpush.bf16.msra.mxu0 %v4299
  %6259 = vmatpush.bf16.msra.mxu0 %v4291
  %6260 = vmatpush.bf16.msra.mxu0 %v4283
  %6261 = vmatpush.bf16.msra.mxu0 %v4275
  %6262 = vmatpush.bf16.msra.mxu0 %v4267
  %6263 = vmatpush.bf16.msra.mxu0 %v4259
  %6264 = vmatmul.bf16.gmra.mxu0 %v66
  %v6265 = vpop.f32.mrf.mxu0
  %v6266 = vadd.f32 %v6253, %v6265
  %v6267 = vpop.f32.mrf.mxu0
  %6268 = vdwg.mxu0
  %6269 = vmatpush.bf16.msra.mxu0 %v4379
  %6270 = vmatpush.bf16.msra.mxu0 %v4371
  %6271 = vmatpush.bf16.msra.mxu0 %v4363
  %6272 = vmatpush.bf16.msra.mxu0 %v4355
  %6273 = vmatpush.bf16.msra.mxu0 %v4347
  %6274 = vmatpush.bf16.msra.mxu0 %v4339
  %6275 = vmatpush.bf16.msra.mxu0 %v4331
  %6276 = vmatpush.bf16.msra.mxu0 %v4323
  %6277 = vmatmul.bf16.gmra.mxu0 %v67
  %v6278 = vpop.f32.mrf.mxu0
  %v6279 = vadd.f32 %v6266, %v6278
  %v6280 = vpop.f32.mrf.mxu0
  %6281 = vdwg.mxu0
  %6282 = vmatpush.bf16.msra.mxu0 %v4443
  %6283 = vmatpush.bf16.msra.mxu0 %v4435
  %6284 = vmatpush.bf16.msra.mxu0 %v4427
  %6285 = vmatpush.bf16.msra.mxu0 %v4419
  %6286 = vmatpush.bf16.msra.mxu0 %v4411
  %6287 = vmatpush.bf16.msra.mxu0 %v4403
  %6288 = vmatpush.bf16.msra.mxu0 %v4395
  %6289 = vmatpush.bf16.msra.mxu0 %v4387
  %6290 = vmatmul.bf16.gmra.mxu0 %v68
  %v6291 = vpop.f32.mrf.mxu0
  %v6292 = vadd.f32 %v6279, %v6291
  %v6293 = vpop.f32.mrf.mxu0
  %6294 = vdwg.mxu0
  %6295 = vmatpush.bf16.msra.mxu0 %v4507
  %6296 = vmatpush.bf16.msra.mxu0 %v4499
  %6297 = vmatpush.bf16.msra.mxu0 %v4491
  %6298 = vmatpush.bf16.msra.mxu0 %v4483
  %6299 = vmatpush.bf16.msra.mxu0 %v4475
  %6300 = vmatpush.bf16.msra.mxu0 %v4467
  %6301 = vmatpush.bf16.msra.mxu0 %v4459
  %6302 = vmatpush.bf16.msra.mxu0 %v4451
  %6303 = vmatmul.bf16.gmra.mxu0 %v69
  %v6304 = vpop.f32.mrf.mxu0
  %v6305 = vadd.f32 %v6292, %v6304
  %v6306 = vpop.f32.mrf.mxu0
  %6307 = vdwg.mxu0
  %6308 = vmatpush.bf16.msra.mxu0 %v4571
  %6309 = vmatpush.bf16.msra.mxu0 %v4563
  %6310 = vmatpush.bf16.msra.mxu0 %v4555
  %6311 = vmatpush.bf16.msra.mxu0 %v4547
  %6312 = vmatpush.bf16.msra.mxu0 %v4539
  %6313 = vmatpush.bf16.msra.mxu0 %v4531
  %6314 = vmatpush.bf16.msra.mxu0 %v4523
  %6315 = vmatpush.bf16.msra.mxu0 %v4515
  %6316 = vmatmul.bf16.gmra.mxu0 %v70
  %v6317 = vpop.f32.mrf.mxu0
  %v6318 = vadd.f32 %v6305, %v6317
  %v6319 = vpop.f32.mrf.mxu0
  %6320 = vdwg.mxu0
  %6321 = vmatpush.bf16.msra.mxu0 %v4635
  %6322 = vmatpush.bf16.msra.mxu0 %v4627
  %6323 = vmatpush.bf16.msra.mxu0 %v4619
  %6324 = vmatpush.bf16.msra.mxu0 %v4611
  %6325 = vmatpush.bf16.msra.mxu0 %v4603
  %6326 = vmatpush.bf16.msra.mxu0 %v4595
  %6327 = vmatpush.bf16.msra.mxu0 %v4587
  %6328 = vmatpush.bf16.msra.mxu0 %v4579
  %6329 = vmatmul.bf16.gmra.mxu0 %v71
  %v6330 = vpop.f32.mrf.mxu0
  %v6331 = vadd.f32 %v6318, %v6330
  %v6332 = vpop.f32.mrf.mxu0
  %6333 = vdwg.mxu0
  %6334 = vmatpush.bf16.msra.mxu0 %v4699
  %6335 = vmatpush.bf16.msra.mxu0 %v4691
  %6336 = vmatpush.bf16.msra.mxu0 %v4683
  %6337 = vmatpush.bf16.msra.mxu0 %v4675
  %6338 = vmatpush.bf16.msra.mxu0 %v4667
  %6339 = vmatpush.bf16.msra.mxu0 %v4659
  %6340 = vmatpush.bf16.msra.mxu0 %v4651
  %6341 = vmatpush.bf16.msra.mxu0 %v4643
  %6342 = vmatmul.bf16.gmra.mxu0 %v72
  %v6343 = vpop.f32.mrf.mxu0
  %v6344 = vadd.f32 %v6331, %v6343
  %v6345 = vpop.f32.mrf.mxu0
  %6346 = vdwg.mxu0
  %6347 = vmatpush.bf16.msra.mxu0 %v4763
  %6348 = vmatpush.bf16.msra.mxu0 %v4755
  %6349 = vmatpush.bf16.msra.mxu0 %v4747
  %6350 = vmatpush.bf16.msra.mxu0 %v4739
  %6351 = vmatpush.bf16.msra.mxu0 %v4731
  %6352 = vmatpush.bf16.msra.mxu0 %v4723
  %6353 = vmatpush.bf16.msra.mxu0 %v4715
  %6354 = vmatpush.bf16.msra.mxu0 %v4707
  %6355 = vmatmul.bf16.gmra.mxu0 %v73
  %v6356 = vpop.f32.mrf.mxu0
  %v6357 = vadd.f32 %v6344, %v6356
  %v6358 = vpop.f32.mrf.mxu0
  %6359 = vdwg.mxu0
  %6360 = vmatpush.bf16.msra.mxu0 %v4827
  %6361 = vmatpush.bf16.msra.mxu0 %v4819
  %6362 = vmatpush.bf16.msra.mxu0 %v4811
  %6363 = vmatpush.bf16.msra.mxu0 %v4803
  %6364 = vmatpush.bf16.msra.mxu0 %v4795
  %6365 = vmatpush.bf16.msra.mxu0 %v4787
  %6366 = vmatpush.bf16.msra.mxu0 %v4779
  %6367 = vmatpush.bf16.msra.mxu0 %v4771
  %6368 = vmatmul.bf16.gmra.mxu0 %v74
  %v6369 = vpop.f32.mrf.mxu0
  %v6370 = vadd.f32 %v6357, %v6369
  %v6371 = vpop.f32.mrf.mxu0
  %6372 = vdwg.mxu0
  %6373 = vmatpush.bf16.msra.mxu0 %v4891
  %6374 = vmatpush.bf16.msra.mxu0 %v4883
  %6375 = vmatpush.bf16.msra.mxu0 %v4875
  %6376 = vmatpush.bf16.msra.mxu0 %v4867
  %6377 = vmatpush.bf16.msra.mxu0 %v4859
  %6378 = vmatpush.bf16.msra.mxu0 %v4851
  %6379 = vmatpush.bf16.msra.mxu0 %v4843
  %6380 = vmatpush.bf16.msra.mxu0 %v4835
  %6381 = vmatmul.bf16.gmra.mxu0 %v75
  %v6382 = vpop.f32.mrf.mxu0
  %v6383 = vadd.f32 %v6370, %v6382
  %v6384 = vpop.f32.mrf.mxu0
  %6385 = vdwg.mxu0
  %6386 = vmatpush.bf16.msra.mxu0 %v4955
  %6387 = vmatpush.bf16.msra.mxu0 %v4947
  %6388 = vmatpush.bf16.msra.mxu0 %v4939
  %6389 = vmatpush.bf16.msra.mxu0 %v4931
  %6390 = vmatpush.bf16.msra.mxu0 %v4923
  %6391 = vmatpush.bf16.msra.mxu0 %v4915
  %6392 = vmatpush.bf16.msra.mxu0 %v4907
  %6393 = vmatpush.bf16.msra.mxu0 %v4899
  %6394 = vmatmul.bf16.gmra.mxu0 %v76
  %v6395 = vpop.f32.mrf.mxu0
  %v6396 = vadd.f32 %v6383, %v6395
  %v6397 = vpop.f32.mrf.mxu0
  %6398 = vdwg.mxu0
  %6399 = vmatpush.bf16.msra.mxu0 %v5019
  %6400 = vmatpush.bf16.msra.mxu0 %v5011
  %6401 = vmatpush.bf16.msra.mxu0 %v5003
  %6402 = vmatpush.bf16.msra.mxu0 %v4995
  %6403 = vmatpush.bf16.msra.mxu0 %v4987
  %6404 = vmatpush.bf16.msra.mxu0 %v4979
  %6405 = vmatpush.bf16.msra.mxu0 %v4971
  %6406 = vmatpush.bf16.msra.mxu0 %v4963
  %6407 = vmatmul.bf16.gmra.mxu0 %v77
  %v6408 = vpop.f32.mrf.mxu0
  %v6409 = vadd.f32 %v6396, %v6408
  %v6410 = vpop.f32.mrf.mxu0
  %6411 = vdwg.mxu0
  %6412 = vmatpush.bf16.msra.mxu0 %v5083
  %6413 = vmatpush.bf16.msra.mxu0 %v5075
  %6414 = vmatpush.bf16.msra.mxu0 %v5067
  %6415 = vmatpush.bf16.msra.mxu0 %v5059
  %6416 = vmatpush.bf16.msra.mxu0 %v5051
  %6417 = vmatpush.bf16.msra.mxu0 %v5043
  %6418 = vmatpush.bf16.msra.mxu0 %v5035
  %6419 = vmatpush.bf16.msra.mxu0 %v5027
  %6420 = vmatmul.bf16.gmra.mxu0 %v78
  %v6421 = vpop.f32.mrf.mxu0
  %v6422 = vadd.f32 %v6409, %v6421
  %v6423 = vpop.f32.mrf.mxu0
  %6424 = vdwg.mxu0
  %6425 = vmatpush.bf16.msra.mxu0 %v5147
  %6426 = vmatpush.bf16.msra.mxu0 %v5139
  %6427 = vmatpush.bf16.msra.mxu0 %v5131
  %6428 = vmatpush.bf16.msra.mxu0 %v5123
  %6429 = vmatpush.bf16.msra.mxu0 %v5115
  %6430 = vmatpush.bf16.msra.mxu0 %v5107
  %6431 = vmatpush.bf16.msra.mxu0 %v5099
  %6432 = vmatpush.bf16.msra.mxu0 %v5091
  %6433 = vmatmul.bf16.gmra.mxu0 %v79
  %v6434 = vpop.f32.mrf.mxu0
  %v6435 = vadd.f32 %v6422, %v6434
  %v6436 = vpop.f32.mrf.mxu0
  %6437 = vdwg.mxu0
  %6438 = vmatpush.bf16.msra.mxu0 %v5211
  %6439 = vmatpush.bf16.msra.mxu0 %v5203
  %6440 = vmatpush.bf16.msra.mxu0 %v5195
  %6441 = vmatpush.bf16.msra.mxu0 %v5187
  %6442 = vmatpush.bf16.msra.mxu0 %v5179
  %6443 = vmatpush.bf16.msra.mxu0 %v5171
  %6444 = vmatpush.bf16.msra.mxu0 %v5163
  %6445 = vmatpush.bf16.msra.mxu0 %v5155
  %6446 = vmatmul.bf16.gmra.mxu0 %v80
  %v6447 = vpop.f32.mrf.mxu0
  %v6448 = vadd.f32 %v6435, %v6447
  %v6449 = vpop.f32.mrf.mxu0
  %6450 = vdwg.mxu0
  %6451 = vmatpush.bf16.msra.mxu0 %v4252
  %6452 = vmatpush.bf16.msra.mxu0 %v4244
  %6453 = vmatpush.bf16.msra.mxu0 %v4236
  %6454 = vmatpush.bf16.msra.mxu0 %v4228
  %6455 = vmatpush.bf16.msra.mxu0 %v4220
  %6456 = vmatpush.bf16.msra.mxu0 %v4212
  %6457 = vmatpush.bf16.msra.mxu0 %v4204
  %6458 = vmatpush.bf16.msra.mxu0 %v4196
  %6459 = vmatmul.bf16.gmra.mxu0 %v65
  %v6460 = vpop.f32.mrf.mxu0
  %v6461 = vadd.f32 %v1108, %v6460
  %v6462 = vpop.f32.mrf.mxu0
  %6463 = vdwg.mxu0
  %6464 = vmatpush.bf16.msra.mxu0 %v4316
  %6465 = vmatpush.bf16.msra.mxu0 %v4308
  %6466 = vmatpush.bf16.msra.mxu0 %v4300
  %6467 = vmatpush.bf16.msra.mxu0 %v4292
  %6468 = vmatpush.bf16.msra.mxu0 %v4284
  %6469 = vmatpush.bf16.msra.mxu0 %v4276
  %6470 = vmatpush.bf16.msra.mxu0 %v4268
  %6471 = vmatpush.bf16.msra.mxu0 %v4260
  %6472 = vmatmul.bf16.gmra.mxu0 %v66
  %v6473 = vpop.f32.mrf.mxu0
  %v6474 = vadd.f32 %v6461, %v6473
  %v6475 = vpop.f32.mrf.mxu0
  %6476 = vdwg.mxu0
  %6477 = vmatpush.bf16.msra.mxu0 %v4380
  %6478 = vmatpush.bf16.msra.mxu0 %v4372
  %6479 = vmatpush.bf16.msra.mxu0 %v4364
  %6480 = vmatpush.bf16.msra.mxu0 %v4356
  %6481 = vmatpush.bf16.msra.mxu0 %v4348
  %6482 = vmatpush.bf16.msra.mxu0 %v4340
  %6483 = vmatpush.bf16.msra.mxu0 %v4332
  %6484 = vmatpush.bf16.msra.mxu0 %v4324
  %6485 = vmatmul.bf16.gmra.mxu0 %v67
  %v6486 = vpop.f32.mrf.mxu0
  %v6487 = vadd.f32 %v6474, %v6486
  %v6488 = vpop.f32.mrf.mxu0
  %6489 = vdwg.mxu0
  %6490 = vmatpush.bf16.msra.mxu0 %v4444
  %6491 = vmatpush.bf16.msra.mxu0 %v4436
  %6492 = vmatpush.bf16.msra.mxu0 %v4428
  %6493 = vmatpush.bf16.msra.mxu0 %v4420
  %6494 = vmatpush.bf16.msra.mxu0 %v4412
  %6495 = vmatpush.bf16.msra.mxu0 %v4404
  %6496 = vmatpush.bf16.msra.mxu0 %v4396
  %6497 = vmatpush.bf16.msra.mxu0 %v4388
  %6498 = vmatmul.bf16.gmra.mxu0 %v68
  %v6499 = vpop.f32.mrf.mxu0
  %v6500 = vadd.f32 %v6487, %v6499
  %v6501 = vpop.f32.mrf.mxu0
  %6502 = vdwg.mxu0
  %6503 = vmatpush.bf16.msra.mxu0 %v4508
  %6504 = vmatpush.bf16.msra.mxu0 %v4500
  %6505 = vmatpush.bf16.msra.mxu0 %v4492
  %6506 = vmatpush.bf16.msra.mxu0 %v4484
  %6507 = vmatpush.bf16.msra.mxu0 %v4476
  %6508 = vmatpush.bf16.msra.mxu0 %v4468
  %6509 = vmatpush.bf16.msra.mxu0 %v4460
  %6510 = vmatpush.bf16.msra.mxu0 %v4452
  %6511 = vmatmul.bf16.gmra.mxu0 %v69
  %v6512 = vpop.f32.mrf.mxu0
  %v6513 = vadd.f32 %v6500, %v6512
  %v6514 = vpop.f32.mrf.mxu0
  %6515 = vdwg.mxu0
  %6516 = vmatpush.bf16.msra.mxu0 %v4572
  %6517 = vmatpush.bf16.msra.mxu0 %v4564
  %6518 = vmatpush.bf16.msra.mxu0 %v4556
  %6519 = vmatpush.bf16.msra.mxu0 %v4548
  %6520 = vmatpush.bf16.msra.mxu0 %v4540
  %6521 = vmatpush.bf16.msra.mxu0 %v4532
  %6522 = vmatpush.bf16.msra.mxu0 %v4524
  %6523 = vmatpush.bf16.msra.mxu0 %v4516
  %6524 = vmatmul.bf16.gmra.mxu0 %v70
  %v6525 = vpop.f32.mrf.mxu0
  %v6526 = vadd.f32 %v6513, %v6525
  %v6527 = vpop.f32.mrf.mxu0
  %6528 = vdwg.mxu0
  %6529 = vmatpush.bf16.msra.mxu0 %v4636
  %6530 = vmatpush.bf16.msra.mxu0 %v4628
  %6531 = vmatpush.bf16.msra.mxu0 %v4620
  %6532 = vmatpush.bf16.msra.mxu0 %v4612
  %6533 = vmatpush.bf16.msra.mxu0 %v4604
  %6534 = vmatpush.bf16.msra.mxu0 %v4596
  %6535 = vmatpush.bf16.msra.mxu0 %v4588
  %6536 = vmatpush.bf16.msra.mxu0 %v4580
  %6537 = vmatmul.bf16.gmra.mxu0 %v71
  %v6538 = vpop.f32.mrf.mxu0
  %v6539 = vadd.f32 %v6526, %v6538
  %v6540 = vpop.f32.mrf.mxu0
  %6541 = vdwg.mxu0
  %6542 = vmatpush.bf16.msra.mxu0 %v4700
  %6543 = vmatpush.bf16.msra.mxu0 %v4692
  %6544 = vmatpush.bf16.msra.mxu0 %v4684
  %6545 = vmatpush.bf16.msra.mxu0 %v4676
  %6546 = vmatpush.bf16.msra.mxu0 %v4668
  %6547 = vmatpush.bf16.msra.mxu0 %v4660
  %6548 = vmatpush.bf16.msra.mxu0 %v4652
  %6549 = vmatpush.bf16.msra.mxu0 %v4644
  %6550 = vmatmul.bf16.gmra.mxu0 %v72
  %v6551 = vpop.f32.mrf.mxu0
  %v6552 = vadd.f32 %v6539, %v6551
  %v6553 = vpop.f32.mrf.mxu0
  %6554 = vdwg.mxu0
  %6555 = vmatpush.bf16.msra.mxu0 %v4764
  %6556 = vmatpush.bf16.msra.mxu0 %v4756
  %6557 = vmatpush.bf16.msra.mxu0 %v4748
  %6558 = vmatpush.bf16.msra.mxu0 %v4740
  %6559 = vmatpush.bf16.msra.mxu0 %v4732
  %6560 = vmatpush.bf16.msra.mxu0 %v4724
  %6561 = vmatpush.bf16.msra.mxu0 %v4716
  %6562 = vmatpush.bf16.msra.mxu0 %v4708
  %6563 = vmatmul.bf16.gmra.mxu0 %v73
  %v6564 = vpop.f32.mrf.mxu0
  %v6565 = vadd.f32 %v6552, %v6564
  %v6566 = vpop.f32.mrf.mxu0
  %6567 = vdwg.mxu0
  %6568 = vmatpush.bf16.msra.mxu0 %v4828
  %6569 = vmatpush.bf16.msra.mxu0 %v4820
  %6570 = vmatpush.bf16.msra.mxu0 %v4812
  %6571 = vmatpush.bf16.msra.mxu0 %v4804
  %6572 = vmatpush.bf16.msra.mxu0 %v4796
  %6573 = vmatpush.bf16.msra.mxu0 %v4788
  %6574 = vmatpush.bf16.msra.mxu0 %v4780
  %6575 = vmatpush.bf16.msra.mxu0 %v4772
  %6576 = vmatmul.bf16.gmra.mxu0 %v74
  %v6577 = vpop.f32.mrf.mxu0
  %v6578 = vadd.f32 %v6565, %v6577
  %v6579 = vpop.f32.mrf.mxu0
  %6580 = vdwg.mxu0
  %6581 = vmatpush.bf16.msra.mxu0 %v4892
  %6582 = vmatpush.bf16.msra.mxu0 %v4884
  %6583 = vmatpush.bf16.msra.mxu0 %v4876
  %6584 = vmatpush.bf16.msra.mxu0 %v4868
  %6585 = vmatpush.bf16.msra.mxu0 %v4860
  %6586 = vmatpush.bf16.msra.mxu0 %v4852
  %6587 = vmatpush.bf16.msra.mxu0 %v4844
  %6588 = vmatpush.bf16.msra.mxu0 %v4836
  %6589 = vmatmul.bf16.gmra.mxu0 %v75
  %v6590 = vpop.f32.mrf.mxu0
  %v6591 = vadd.f32 %v6578, %v6590
  %v6592 = vpop.f32.mrf.mxu0
  %6593 = vdwg.mxu0
  %6594 = vmatpush.bf16.msra.mxu0 %v4956
  %6595 = vmatpush.bf16.msra.mxu0 %v4948
  %6596 = vmatpush.bf16.msra.mxu0 %v4940
  %6597 = vmatpush.bf16.msra.mxu0 %v4932
  %6598 = vmatpush.bf16.msra.mxu0 %v4924
  %6599 = vmatpush.bf16.msra.mxu0 %v4916
  %6600 = vmatpush.bf16.msra.mxu0 %v4908
  %6601 = vmatpush.bf16.msra.mxu0 %v4900
  %6602 = vmatmul.bf16.gmra.mxu0 %v76
  %v6603 = vpop.f32.mrf.mxu0
  %v6604 = vadd.f32 %v6591, %v6603
  %v6605 = vpop.f32.mrf.mxu0
  %6606 = vdwg.mxu0
  %6607 = vmatpush.bf16.msra.mxu0 %v5020
  %6608 = vmatpush.bf16.msra.mxu0 %v5012
  %6609 = vmatpush.bf16.msra.mxu0 %v5004
  %6610 = vmatpush.bf16.msra.mxu0 %v4996
  %6611 = vmatpush.bf16.msra.mxu0 %v4988
  %6612 = vmatpush.bf16.msra.mxu0 %v4980
  %6613 = vmatpush.bf16.msra.mxu0 %v4972
  %6614 = vmatpush.bf16.msra.mxu0 %v4964
  %6615 = vmatmul.bf16.gmra.mxu0 %v77
  %v6616 = vpop.f32.mrf.mxu0
  %v6617 = vadd.f32 %v6604, %v6616
  %v6618 = vpop.f32.mrf.mxu0
  %6619 = vdwg.mxu0
  %6620 = vmatpush.bf16.msra.mxu0 %v5084
  %6621 = vmatpush.bf16.msra.mxu0 %v5076
  %6622 = vmatpush.bf16.msra.mxu0 %v5068
  %6623 = vmatpush.bf16.msra.mxu0 %v5060
  %6624 = vmatpush.bf16.msra.mxu0 %v5052
  %6625 = vmatpush.bf16.msra.mxu0 %v5044
  %6626 = vmatpush.bf16.msra.mxu0 %v5036
  %6627 = vmatpush.bf16.msra.mxu0 %v5028
  %6628 = vmatmul.bf16.gmra.mxu0 %v78
  %v6629 = vpop.f32.mrf.mxu0
  %v6630 = vadd.f32 %v6617, %v6629
  %v6631 = vpop.f32.mrf.mxu0
  %6632 = vdwg.mxu0
  %6633 = vmatpush.bf16.msra.mxu0 %v5148
  %6634 = vmatpush.bf16.msra.mxu0 %v5140
  %6635 = vmatpush.bf16.msra.mxu0 %v5132
  %6636 = vmatpush.bf16.msra.mxu0 %v5124
  %6637 = vmatpush.bf16.msra.mxu0 %v5116
  %6638 = vmatpush.bf16.msra.mxu0 %v5108
  %6639 = vmatpush.bf16.msra.mxu0 %v5100
  %6640 = vmatpush.bf16.msra.mxu0 %v5092
  %6641 = vmatmul.bf16.gmra.mxu0 %v79
  %v6642 = vpop.f32.mrf.mxu0
  %v6643 = vadd.f32 %v6630, %v6642
  %v6644 = vpop.f32.mrf.mxu0
  %6645 = vdwg.mxu0
  %6646 = vmatpush.bf16.msra.mxu0 %v5212
  %6647 = vmatpush.bf16.msra.mxu0 %v5204
  %6648 = vmatpush.bf16.msra.mxu0 %v5196
  %6649 = vmatpush.bf16.msra.mxu0 %v5188
  %6650 = vmatpush.bf16.msra.mxu0 %v5180
  %6651 = vmatpush.bf16.msra.mxu0 %v5172
  %6652 = vmatpush.bf16.msra.mxu0 %v5164
  %6653 = vmatpush.bf16.msra.mxu0 %v5156
  %6654 = vmatmul.bf16.gmra.mxu0 %v80
  %v6655 = vpop.f32.mrf.mxu0
  %v6656 = vadd.f32 %v6643, %v6655
  %v6657 = vpop.f32.mrf.mxu0
  %6658 = vdwg.mxu0
  %6659 = vmatpush.bf16.msra.mxu0 %v4253
  %6660 = vmatpush.bf16.msra.mxu0 %v4245
  %6661 = vmatpush.bf16.msra.mxu0 %v4237
  %6662 = vmatpush.bf16.msra.mxu0 %v4229
  %6663 = vmatpush.bf16.msra.mxu0 %v4221
  %6664 = vmatpush.bf16.msra.mxu0 %v4213
  %6665 = vmatpush.bf16.msra.mxu0 %v4205
  %6666 = vmatpush.bf16.msra.mxu0 %v4197
  %6667 = vmatmul.bf16.gmra.mxu0 %v65
  %v6668 = vpop.f32.mrf.mxu0
  %v6669 = vadd.f32 %v1109, %v6668
  %v6670 = vpop.f32.mrf.mxu0
  %6671 = vdwg.mxu0
  %6672 = vmatpush.bf16.msra.mxu0 %v4317
  %6673 = vmatpush.bf16.msra.mxu0 %v4309
  %6674 = vmatpush.bf16.msra.mxu0 %v4301
  %6675 = vmatpush.bf16.msra.mxu0 %v4293
  %6676 = vmatpush.bf16.msra.mxu0 %v4285
  %6677 = vmatpush.bf16.msra.mxu0 %v4277
  %6678 = vmatpush.bf16.msra.mxu0 %v4269
  %6679 = vmatpush.bf16.msra.mxu0 %v4261
  %6680 = vmatmul.bf16.gmra.mxu0 %v66
  %v6681 = vpop.f32.mrf.mxu0
  %v6682 = vadd.f32 %v6669, %v6681
  %v6683 = vpop.f32.mrf.mxu0
  %6684 = vdwg.mxu0
  %6685 = vmatpush.bf16.msra.mxu0 %v4381
  %6686 = vmatpush.bf16.msra.mxu0 %v4373
  %6687 = vmatpush.bf16.msra.mxu0 %v4365
  %6688 = vmatpush.bf16.msra.mxu0 %v4357
  %6689 = vmatpush.bf16.msra.mxu0 %v4349
  %6690 = vmatpush.bf16.msra.mxu0 %v4341
  %6691 = vmatpush.bf16.msra.mxu0 %v4333
  %6692 = vmatpush.bf16.msra.mxu0 %v4325
  %6693 = vmatmul.bf16.gmra.mxu0 %v67
  %v6694 = vpop.f32.mrf.mxu0
  %v6695 = vadd.f32 %v6682, %v6694
  %v6696 = vpop.f32.mrf.mxu0
  %6697 = vdwg.mxu0
  %6698 = vmatpush.bf16.msra.mxu0 %v4445
  %6699 = vmatpush.bf16.msra.mxu0 %v4437
  %6700 = vmatpush.bf16.msra.mxu0 %v4429
  %6701 = vmatpush.bf16.msra.mxu0 %v4421
  %6702 = vmatpush.bf16.msra.mxu0 %v4413
  %6703 = vmatpush.bf16.msra.mxu0 %v4405
  %6704 = vmatpush.bf16.msra.mxu0 %v4397
  %6705 = vmatpush.bf16.msra.mxu0 %v4389
  %6706 = vmatmul.bf16.gmra.mxu0 %v68
  %v6707 = vpop.f32.mrf.mxu0
  %v6708 = vadd.f32 %v6695, %v6707
  %v6709 = vpop.f32.mrf.mxu0
  %6710 = vdwg.mxu0
  %6711 = vmatpush.bf16.msra.mxu0 %v4509
  %6712 = vmatpush.bf16.msra.mxu0 %v4501
  %6713 = vmatpush.bf16.msra.mxu0 %v4493
  %6714 = vmatpush.bf16.msra.mxu0 %v4485
  %6715 = vmatpush.bf16.msra.mxu0 %v4477
  %6716 = vmatpush.bf16.msra.mxu0 %v4469
  %6717 = vmatpush.bf16.msra.mxu0 %v4461
  %6718 = vmatpush.bf16.msra.mxu0 %v4453
  %6719 = vmatmul.bf16.gmra.mxu0 %v69
  %v6720 = vpop.f32.mrf.mxu0
  %v6721 = vadd.f32 %v6708, %v6720
  %v6722 = vpop.f32.mrf.mxu0
  %6723 = vdwg.mxu0
  %6724 = vmatpush.bf16.msra.mxu0 %v4573
  %6725 = vmatpush.bf16.msra.mxu0 %v4565
  %6726 = vmatpush.bf16.msra.mxu0 %v4557
  %6727 = vmatpush.bf16.msra.mxu0 %v4549
  %6728 = vmatpush.bf16.msra.mxu0 %v4541
  %6729 = vmatpush.bf16.msra.mxu0 %v4533
  %6730 = vmatpush.bf16.msra.mxu0 %v4525
  %6731 = vmatpush.bf16.msra.mxu0 %v4517
  %6732 = vmatmul.bf16.gmra.mxu0 %v70
  %v6733 = vpop.f32.mrf.mxu0
  %v6734 = vadd.f32 %v6721, %v6733
  %v6735 = vpop.f32.mrf.mxu0
  %6736 = vdwg.mxu0
  %6737 = vmatpush.bf16.msra.mxu0 %v4637
  %6738 = vmatpush.bf16.msra.mxu0 %v4629
  %6739 = vmatpush.bf16.msra.mxu0 %v4621
  %6740 = vmatpush.bf16.msra.mxu0 %v4613
  %6741 = vmatpush.bf16.msra.mxu0 %v4605
  %6742 = vmatpush.bf16.msra.mxu0 %v4597
  %6743 = vmatpush.bf16.msra.mxu0 %v4589
  %6744 = vmatpush.bf16.msra.mxu0 %v4581
  %6745 = vmatmul.bf16.gmra.mxu0 %v71
  %v6746 = vpop.f32.mrf.mxu0
  %v6747 = vadd.f32 %v6734, %v6746
  %v6748 = vpop.f32.mrf.mxu0
  %6749 = vdwg.mxu0
  %6750 = vmatpush.bf16.msra.mxu0 %v4701
  %6751 = vmatpush.bf16.msra.mxu0 %v4693
  %6752 = vmatpush.bf16.msra.mxu0 %v4685
  %6753 = vmatpush.bf16.msra.mxu0 %v4677
  %6754 = vmatpush.bf16.msra.mxu0 %v4669
  %6755 = vmatpush.bf16.msra.mxu0 %v4661
  %6756 = vmatpush.bf16.msra.mxu0 %v4653
  %6757 = vmatpush.bf16.msra.mxu0 %v4645
  %6758 = vmatmul.bf16.gmra.mxu0 %v72
  %v6759 = vpop.f32.mrf.mxu0
  %v6760 = vadd.f32 %v6747, %v6759
  %v6761 = vpop.f32.mrf.mxu0
  %6762 = vdwg.mxu0
  %6763 = vmatpush.bf16.msra.mxu0 %v4765
  %6764 = vmatpush.bf16.msra.mxu0 %v4757
  %6765 = vmatpush.bf16.msra.mxu0 %v4749
  %6766 = vmatpush.bf16.msra.mxu0 %v4741
  %6767 = vmatpush.bf16.msra.mxu0 %v4733
  %6768 = vmatpush.bf16.msra.mxu0 %v4725
  %6769 = vmatpush.bf16.msra.mxu0 %v4717
  %6770 = vmatpush.bf16.msra.mxu0 %v4709
  %6771 = vmatmul.bf16.gmra.mxu0 %v73
  %v6772 = vpop.f32.mrf.mxu0
  %v6773 = vadd.f32 %v6760, %v6772
  %v6774 = vpop.f32.mrf.mxu0
  %6775 = vdwg.mxu0
  %6776 = vmatpush.bf16.msra.mxu0 %v4829
  %6777 = vmatpush.bf16.msra.mxu0 %v4821
  %6778 = vmatpush.bf16.msra.mxu0 %v4813
  %6779 = vmatpush.bf16.msra.mxu0 %v4805
  %6780 = vmatpush.bf16.msra.mxu0 %v4797
  %6781 = vmatpush.bf16.msra.mxu0 %v4789
  %6782 = vmatpush.bf16.msra.mxu0 %v4781
  %6783 = vmatpush.bf16.msra.mxu0 %v4773
  %6784 = vmatmul.bf16.gmra.mxu0 %v74
  %v6785 = vpop.f32.mrf.mxu0
  %v6786 = vadd.f32 %v6773, %v6785
  %v6787 = vpop.f32.mrf.mxu0
  %6788 = vdwg.mxu0
  %6789 = vmatpush.bf16.msra.mxu0 %v4893
  %6790 = vmatpush.bf16.msra.mxu0 %v4885
  %6791 = vmatpush.bf16.msra.mxu0 %v4877
  %6792 = vmatpush.bf16.msra.mxu0 %v4869
  %6793 = vmatpush.bf16.msra.mxu0 %v4861
  %6794 = vmatpush.bf16.msra.mxu0 %v4853
  %6795 = vmatpush.bf16.msra.mxu0 %v4845
  %6796 = vmatpush.bf16.msra.mxu0 %v4837
  %6797 = vmatmul.bf16.gmra.mxu0 %v75
  %v6798 = vpop.f32.mrf.mxu0
  %v6799 = vadd.f32 %v6786, %v6798
  %v6800 = vpop.f32.mrf.mxu0
  %6801 = vdwg.mxu0
  %6802 = vmatpush.bf16.msra.mxu0 %v4957
  %6803 = vmatpush.bf16.msra.mxu0 %v4949
  %6804 = vmatpush.bf16.msra.mxu0 %v4941
  %6805 = vmatpush.bf16.msra.mxu0 %v4933
  %6806 = vmatpush.bf16.msra.mxu0 %v4925
  %6807 = vmatpush.bf16.msra.mxu0 %v4917
  %6808 = vmatpush.bf16.msra.mxu0 %v4909
  %6809 = vmatpush.bf16.msra.mxu0 %v4901
  %6810 = vmatmul.bf16.gmra.mxu0 %v76
  %v6811 = vpop.f32.mrf.mxu0
  %v6812 = vadd.f32 %v6799, %v6811
  %v6813 = vpop.f32.mrf.mxu0
  %6814 = vdwg.mxu0
  %6815 = vmatpush.bf16.msra.mxu0 %v5021
  %6816 = vmatpush.bf16.msra.mxu0 %v5013
  %6817 = vmatpush.bf16.msra.mxu0 %v5005
  %6818 = vmatpush.bf16.msra.mxu0 %v4997
  %6819 = vmatpush.bf16.msra.mxu0 %v4989
  %6820 = vmatpush.bf16.msra.mxu0 %v4981
  %6821 = vmatpush.bf16.msra.mxu0 %v4973
  %6822 = vmatpush.bf16.msra.mxu0 %v4965
  %6823 = vmatmul.bf16.gmra.mxu0 %v77
  %v6824 = vpop.f32.mrf.mxu0
  %v6825 = vadd.f32 %v6812, %v6824
  %v6826 = vpop.f32.mrf.mxu0
  %6827 = vdwg.mxu0
  %6828 = vmatpush.bf16.msra.mxu0 %v5085
  %6829 = vmatpush.bf16.msra.mxu0 %v5077
  %6830 = vmatpush.bf16.msra.mxu0 %v5069
  %6831 = vmatpush.bf16.msra.mxu0 %v5061
  %6832 = vmatpush.bf16.msra.mxu0 %v5053
  %6833 = vmatpush.bf16.msra.mxu0 %v5045
  %6834 = vmatpush.bf16.msra.mxu0 %v5037
  %6835 = vmatpush.bf16.msra.mxu0 %v5029
  %6836 = vmatmul.bf16.gmra.mxu0 %v78
  %v6837 = vpop.f32.mrf.mxu0
  %v6838 = vadd.f32 %v6825, %v6837
  %v6839 = vpop.f32.mrf.mxu0
  %6840 = vdwg.mxu0
  %6841 = vmatpush.bf16.msra.mxu0 %v5149
  %6842 = vmatpush.bf16.msra.mxu0 %v5141
  %6843 = vmatpush.bf16.msra.mxu0 %v5133
  %6844 = vmatpush.bf16.msra.mxu0 %v5125
  %6845 = vmatpush.bf16.msra.mxu0 %v5117
  %6846 = vmatpush.bf16.msra.mxu0 %v5109
  %6847 = vmatpush.bf16.msra.mxu0 %v5101
  %6848 = vmatpush.bf16.msra.mxu0 %v5093
  %6849 = vmatmul.bf16.gmra.mxu0 %v79
  %v6850 = vpop.f32.mrf.mxu0
  %v6851 = vadd.f32 %v6838, %v6850
  %v6852 = vpop.f32.mrf.mxu0
  %6853 = vdwg.mxu0
  %6854 = vmatpush.bf16.msra.mxu0 %v5213
  %6855 = vmatpush.bf16.msra.mxu0 %v5205
  %6856 = vmatpush.bf16.msra.mxu0 %v5197
  %6857 = vmatpush.bf16.msra.mxu0 %v5189
  %6858 = vmatpush.bf16.msra.mxu0 %v5181
  %6859 = vmatpush.bf16.msra.mxu0 %v5173
  %6860 = vmatpush.bf16.msra.mxu0 %v5165
  %6861 = vmatpush.bf16.msra.mxu0 %v5157
  %6862 = vmatmul.bf16.gmra.mxu0 %v80
  %v6863 = vpop.f32.mrf.mxu0
  %v6864 = vadd.f32 %v6851, %v6863
  %v6865 = vpop.f32.mrf.mxu0
  %6866 = vdwg.mxu0
  %6867 = vmatpush.bf16.msra.mxu0 %v4254
  %6868 = vmatpush.bf16.msra.mxu0 %v4246
  %6869 = vmatpush.bf16.msra.mxu0 %v4238
  %6870 = vmatpush.bf16.msra.mxu0 %v4230
  %6871 = vmatpush.bf16.msra.mxu0 %v4222
  %6872 = vmatpush.bf16.msra.mxu0 %v4214
  %6873 = vmatpush.bf16.msra.mxu0 %v4206
  %6874 = vmatpush.bf16.msra.mxu0 %v4198
  %6875 = vmatmul.bf16.gmra.mxu0 %v65
  %v6876 = vpop.f32.mrf.mxu0
  %v6877 = vadd.f32 %v1110, %v6876
  %v6878 = vpop.f32.mrf.mxu0
  %6879 = vdwg.mxu0
  %6880 = vmatpush.bf16.msra.mxu0 %v4318
  %6881 = vmatpush.bf16.msra.mxu0 %v4310
  %6882 = vmatpush.bf16.msra.mxu0 %v4302
  %6883 = vmatpush.bf16.msra.mxu0 %v4294
  %6884 = vmatpush.bf16.msra.mxu0 %v4286
  %6885 = vmatpush.bf16.msra.mxu0 %v4278
  %6886 = vmatpush.bf16.msra.mxu0 %v4270
  %6887 = vmatpush.bf16.msra.mxu0 %v4262
  %6888 = vmatmul.bf16.gmra.mxu0 %v66
  %v6889 = vpop.f32.mrf.mxu0
  %v6890 = vadd.f32 %v6877, %v6889
  %v6891 = vpop.f32.mrf.mxu0
  %6892 = vdwg.mxu0
  %6893 = vmatpush.bf16.msra.mxu0 %v4382
  %6894 = vmatpush.bf16.msra.mxu0 %v4374
  %6895 = vmatpush.bf16.msra.mxu0 %v4366
  %6896 = vmatpush.bf16.msra.mxu0 %v4358
  %6897 = vmatpush.bf16.msra.mxu0 %v4350
  %6898 = vmatpush.bf16.msra.mxu0 %v4342
  %6899 = vmatpush.bf16.msra.mxu0 %v4334
  %6900 = vmatpush.bf16.msra.mxu0 %v4326
  %6901 = vmatmul.bf16.gmra.mxu0 %v67
  %v6902 = vpop.f32.mrf.mxu0
  %v6903 = vadd.f32 %v6890, %v6902
  %v6904 = vpop.f32.mrf.mxu0
  %6905 = vdwg.mxu0
  %6906 = vmatpush.bf16.msra.mxu0 %v4446
  %6907 = vmatpush.bf16.msra.mxu0 %v4438
  %6908 = vmatpush.bf16.msra.mxu0 %v4430
  %6909 = vmatpush.bf16.msra.mxu0 %v4422
  %6910 = vmatpush.bf16.msra.mxu0 %v4414
  %6911 = vmatpush.bf16.msra.mxu0 %v4406
  %6912 = vmatpush.bf16.msra.mxu0 %v4398
  %6913 = vmatpush.bf16.msra.mxu0 %v4390
  %6914 = vmatmul.bf16.gmra.mxu0 %v68
  %v6915 = vpop.f32.mrf.mxu0
  %v6916 = vadd.f32 %v6903, %v6915
  %v6917 = vpop.f32.mrf.mxu0
  %6918 = vdwg.mxu0
  %6919 = vmatpush.bf16.msra.mxu0 %v4510
  %6920 = vmatpush.bf16.msra.mxu0 %v4502
  %6921 = vmatpush.bf16.msra.mxu0 %v4494
  %6922 = vmatpush.bf16.msra.mxu0 %v4486
  %6923 = vmatpush.bf16.msra.mxu0 %v4478
  %6924 = vmatpush.bf16.msra.mxu0 %v4470
  %6925 = vmatpush.bf16.msra.mxu0 %v4462
  %6926 = vmatpush.bf16.msra.mxu0 %v4454
  %6927 = vmatmul.bf16.gmra.mxu0 %v69
  %v6928 = vpop.f32.mrf.mxu0
  %v6929 = vadd.f32 %v6916, %v6928
  %v6930 = vpop.f32.mrf.mxu0
  %6931 = vdwg.mxu0
  %6932 = vmatpush.bf16.msra.mxu0 %v4574
  %6933 = vmatpush.bf16.msra.mxu0 %v4566
  %6934 = vmatpush.bf16.msra.mxu0 %v4558
  %6935 = vmatpush.bf16.msra.mxu0 %v4550
  %6936 = vmatpush.bf16.msra.mxu0 %v4542
  %6937 = vmatpush.bf16.msra.mxu0 %v4534
  %6938 = vmatpush.bf16.msra.mxu0 %v4526
  %6939 = vmatpush.bf16.msra.mxu0 %v4518
  %6940 = vmatmul.bf16.gmra.mxu0 %v70
  %v6941 = vpop.f32.mrf.mxu0
  %v6942 = vadd.f32 %v6929, %v6941
  %v6943 = vpop.f32.mrf.mxu0
  %6944 = vdwg.mxu0
  %6945 = vmatpush.bf16.msra.mxu0 %v4638
  %6946 = vmatpush.bf16.msra.mxu0 %v4630
  %6947 = vmatpush.bf16.msra.mxu0 %v4622
  %6948 = vmatpush.bf16.msra.mxu0 %v4614
  %6949 = vmatpush.bf16.msra.mxu0 %v4606
  %6950 = vmatpush.bf16.msra.mxu0 %v4598
  %6951 = vmatpush.bf16.msra.mxu0 %v4590
  %6952 = vmatpush.bf16.msra.mxu0 %v4582
  %6953 = vmatmul.bf16.gmra.mxu0 %v71
  %v6954 = vpop.f32.mrf.mxu0
  %v6955 = vadd.f32 %v6942, %v6954
  %v6956 = vpop.f32.mrf.mxu0
  %6957 = vdwg.mxu0
  %6958 = vmatpush.bf16.msra.mxu0 %v4702
  %6959 = vmatpush.bf16.msra.mxu0 %v4694
  %6960 = vmatpush.bf16.msra.mxu0 %v4686
  %6961 = vmatpush.bf16.msra.mxu0 %v4678
  %6962 = vmatpush.bf16.msra.mxu0 %v4670
  %6963 = vmatpush.bf16.msra.mxu0 %v4662
  %6964 = vmatpush.bf16.msra.mxu0 %v4654
  %6965 = vmatpush.bf16.msra.mxu0 %v4646
  %6966 = vmatmul.bf16.gmra.mxu0 %v72
  %v6967 = vpop.f32.mrf.mxu0
  %v6968 = vadd.f32 %v6955, %v6967
  %v6969 = vpop.f32.mrf.mxu0
  %6970 = vdwg.mxu0
  %6971 = vmatpush.bf16.msra.mxu0 %v4766
  %6972 = vmatpush.bf16.msra.mxu0 %v4758
  %6973 = vmatpush.bf16.msra.mxu0 %v4750
  %6974 = vmatpush.bf16.msra.mxu0 %v4742
  %6975 = vmatpush.bf16.msra.mxu0 %v4734
  %6976 = vmatpush.bf16.msra.mxu0 %v4726
  %6977 = vmatpush.bf16.msra.mxu0 %v4718
  %6978 = vmatpush.bf16.msra.mxu0 %v4710
  %6979 = vmatmul.bf16.gmra.mxu0 %v73
  %v6980 = vpop.f32.mrf.mxu0
  %v6981 = vadd.f32 %v6968, %v6980
  %v6982 = vpop.f32.mrf.mxu0
  %6983 = vdwg.mxu0
  %6984 = vmatpush.bf16.msra.mxu0 %v4830
  %6985 = vmatpush.bf16.msra.mxu0 %v4822
  %6986 = vmatpush.bf16.msra.mxu0 %v4814
  %6987 = vmatpush.bf16.msra.mxu0 %v4806
  %6988 = vmatpush.bf16.msra.mxu0 %v4798
  %6989 = vmatpush.bf16.msra.mxu0 %v4790
  %6990 = vmatpush.bf16.msra.mxu0 %v4782
  %6991 = vmatpush.bf16.msra.mxu0 %v4774
  %6992 = vmatmul.bf16.gmra.mxu0 %v74
  %v6993 = vpop.f32.mrf.mxu0
  %v6994 = vadd.f32 %v6981, %v6993
  %v6995 = vpop.f32.mrf.mxu0
  %6996 = vdwg.mxu0
  %6997 = vmatpush.bf16.msra.mxu0 %v4894
  %6998 = vmatpush.bf16.msra.mxu0 %v4886
  %6999 = vmatpush.bf16.msra.mxu0 %v4878
  %7000 = vmatpush.bf16.msra.mxu0 %v4870
  %7001 = vmatpush.bf16.msra.mxu0 %v4862
  %7002 = vmatpush.bf16.msra.mxu0 %v4854
  %7003 = vmatpush.bf16.msra.mxu0 %v4846
  %7004 = vmatpush.bf16.msra.mxu0 %v4838
  %7005 = vmatmul.bf16.gmra.mxu0 %v75
  %v7006 = vpop.f32.mrf.mxu0
  %v7007 = vadd.f32 %v6994, %v7006
  %v7008 = vpop.f32.mrf.mxu0
  %7009 = vdwg.mxu0
  %7010 = vmatpush.bf16.msra.mxu0 %v4958
  %7011 = vmatpush.bf16.msra.mxu0 %v4950
  %7012 = vmatpush.bf16.msra.mxu0 %v4942
  %7013 = vmatpush.bf16.msra.mxu0 %v4934
  %7014 = vmatpush.bf16.msra.mxu0 %v4926
  %7015 = vmatpush.bf16.msra.mxu0 %v4918
  %7016 = vmatpush.bf16.msra.mxu0 %v4910
  %7017 = vmatpush.bf16.msra.mxu0 %v4902
  %7018 = vmatmul.bf16.gmra.mxu0 %v76
  %v7019 = vpop.f32.mrf.mxu0
  %v7020 = vadd.f32 %v7007, %v7019
  %v7021 = vpop.f32.mrf.mxu0
  %7022 = vdwg.mxu0
  %7023 = vmatpush.bf16.msra.mxu0 %v5022
  %7024 = vmatpush.bf16.msra.mxu0 %v5014
  %7025 = vmatpush.bf16.msra.mxu0 %v5006
  %7026 = vmatpush.bf16.msra.mxu0 %v4998
  %7027 = vmatpush.bf16.msra.mxu0 %v4990
  %7028 = vmatpush.bf16.msra.mxu0 %v4982
  %7029 = vmatpush.bf16.msra.mxu0 %v4974
  %7030 = vmatpush.bf16.msra.mxu0 %v4966
  %7031 = vmatmul.bf16.gmra.mxu0 %v77
  %v7032 = vpop.f32.mrf.mxu0
  %v7033 = vadd.f32 %v7020, %v7032
  %v7034 = vpop.f32.mrf.mxu0
  %7035 = vdwg.mxu0
  %7036 = vmatpush.bf16.msra.mxu0 %v5086
  %7037 = vmatpush.bf16.msra.mxu0 %v5078
  %7038 = vmatpush.bf16.msra.mxu0 %v5070
  %7039 = vmatpush.bf16.msra.mxu0 %v5062
  %7040 = vmatpush.bf16.msra.mxu0 %v5054
  %7041 = vmatpush.bf16.msra.mxu0 %v5046
  %7042 = vmatpush.bf16.msra.mxu0 %v5038
  %7043 = vmatpush.bf16.msra.mxu0 %v5030
  %7044 = vmatmul.bf16.gmra.mxu0 %v78
  %v7045 = vpop.f32.mrf.mxu0
  %v7046 = vadd.f32 %v7033, %v7045
  %v7047 = vpop.f32.mrf.mxu0
  %7048 = vdwg.mxu0
  %7049 = vmatpush.bf16.msra.mxu0 %v5150
  %7050 = vmatpush.bf16.msra.mxu0 %v5142
  %7051 = vmatpush.bf16.msra.mxu0 %v5134
  %7052 = vmatpush.bf16.msra.mxu0 %v5126
  %7053 = vmatpush.bf16.msra.mxu0 %v5118
  %7054 = vmatpush.bf16.msra.mxu0 %v5110
  %7055 = vmatpush.bf16.msra.mxu0 %v5102
  %7056 = vmatpush.bf16.msra.mxu0 %v5094
  %7057 = vmatmul.bf16.gmra.mxu0 %v79
  %v7058 = vpop.f32.mrf.mxu0
  %v7059 = vadd.f32 %v7046, %v7058
  %v7060 = vpop.f32.mrf.mxu0
  %7061 = vdwg.mxu0
  %7062 = vmatpush.bf16.msra.mxu0 %v5214
  %7063 = vmatpush.bf16.msra.mxu0 %v5206
  %7064 = vmatpush.bf16.msra.mxu0 %v5198
  %7065 = vmatpush.bf16.msra.mxu0 %v5190
  %7066 = vmatpush.bf16.msra.mxu0 %v5182
  %7067 = vmatpush.bf16.msra.mxu0 %v5174
  %7068 = vmatpush.bf16.msra.mxu0 %v5166
  %7069 = vmatpush.bf16.msra.mxu0 %v5158
  %7070 = vmatmul.bf16.gmra.mxu0 %v80
  %v7071 = vpop.f32.mrf.mxu0
  %v7072 = vadd.f32 %v7059, %v7071
  %v7073 = vpop.f32.mrf.mxu0
  %7074 = vdwg.mxu0
  %7075 = vmatpush.bf16.msra.mxu0 %v4255
  %7076 = vmatpush.bf16.msra.mxu0 %v4247
  %7077 = vmatpush.bf16.msra.mxu0 %v4239
  %7078 = vmatpush.bf16.msra.mxu0 %v4231
  %7079 = vmatpush.bf16.msra.mxu0 %v4223
  %7080 = vmatpush.bf16.msra.mxu0 %v4215
  %7081 = vmatpush.bf16.msra.mxu0 %v4207
  %7082 = vmatpush.bf16.msra.mxu0 %v4199
  %7083 = vmatmul.bf16.gmra.mxu0 %v65
  %v7084 = vpop.f32.mrf.mxu0
  %v7085 = vadd.f32 %v1111, %v7084
  %v7086 = vpop.f32.mrf.mxu0
  %7087 = vdwg.mxu0
  %7088 = vmatpush.bf16.msra.mxu0 %v4319
  %7089 = vmatpush.bf16.msra.mxu0 %v4311
  %7090 = vmatpush.bf16.msra.mxu0 %v4303
  %7091 = vmatpush.bf16.msra.mxu0 %v4295
  %7092 = vmatpush.bf16.msra.mxu0 %v4287
  %7093 = vmatpush.bf16.msra.mxu0 %v4279
  %7094 = vmatpush.bf16.msra.mxu0 %v4271
  %7095 = vmatpush.bf16.msra.mxu0 %v4263
  %7096 = vmatmul.bf16.gmra.mxu0 %v66
  %v7097 = vpop.f32.mrf.mxu0
  %v7098 = vadd.f32 %v7085, %v7097
  %v7099 = vpop.f32.mrf.mxu0
  %7100 = vdwg.mxu0
  %7101 = vmatpush.bf16.msra.mxu0 %v4383
  %7102 = vmatpush.bf16.msra.mxu0 %v4375
  %7103 = vmatpush.bf16.msra.mxu0 %v4367
  %7104 = vmatpush.bf16.msra.mxu0 %v4359
  %7105 = vmatpush.bf16.msra.mxu0 %v4351
  %7106 = vmatpush.bf16.msra.mxu0 %v4343
  %7107 = vmatpush.bf16.msra.mxu0 %v4335
  %7108 = vmatpush.bf16.msra.mxu0 %v4327
  %7109 = vmatmul.bf16.gmra.mxu0 %v67
  %v7110 = vpop.f32.mrf.mxu0
  %v7111 = vadd.f32 %v7098, %v7110
  %v7112 = vpop.f32.mrf.mxu0
  %7113 = vdwg.mxu0
  %7114 = vmatpush.bf16.msra.mxu0 %v4447
  %7115 = vmatpush.bf16.msra.mxu0 %v4439
  %7116 = vmatpush.bf16.msra.mxu0 %v4431
  %7117 = vmatpush.bf16.msra.mxu0 %v4423
  %7118 = vmatpush.bf16.msra.mxu0 %v4415
  %7119 = vmatpush.bf16.msra.mxu0 %v4407
  %7120 = vmatpush.bf16.msra.mxu0 %v4399
  %7121 = vmatpush.bf16.msra.mxu0 %v4391
  %7122 = vmatmul.bf16.gmra.mxu0 %v68
  %v7123 = vpop.f32.mrf.mxu0
  %v7124 = vadd.f32 %v7111, %v7123
  %v7125 = vpop.f32.mrf.mxu0
  %7126 = vdwg.mxu0
  %7127 = vmatpush.bf16.msra.mxu0 %v4511
  %7128 = vmatpush.bf16.msra.mxu0 %v4503
  %7129 = vmatpush.bf16.msra.mxu0 %v4495
  %7130 = vmatpush.bf16.msra.mxu0 %v4487
  %7131 = vmatpush.bf16.msra.mxu0 %v4479
  %7132 = vmatpush.bf16.msra.mxu0 %v4471
  %7133 = vmatpush.bf16.msra.mxu0 %v4463
  %7134 = vmatpush.bf16.msra.mxu0 %v4455
  %7135 = vmatmul.bf16.gmra.mxu0 %v69
  %v7136 = vpop.f32.mrf.mxu0
  %v7137 = vadd.f32 %v7124, %v7136
  %v7138 = vpop.f32.mrf.mxu0
  %7139 = vdwg.mxu0
  %7140 = vmatpush.bf16.msra.mxu0 %v4575
  %7141 = vmatpush.bf16.msra.mxu0 %v4567
  %7142 = vmatpush.bf16.msra.mxu0 %v4559
  %7143 = vmatpush.bf16.msra.mxu0 %v4551
  %7144 = vmatpush.bf16.msra.mxu0 %v4543
  %7145 = vmatpush.bf16.msra.mxu0 %v4535
  %7146 = vmatpush.bf16.msra.mxu0 %v4527
  %7147 = vmatpush.bf16.msra.mxu0 %v4519
  %7148 = vmatmul.bf16.gmra.mxu0 %v70
  %v7149 = vpop.f32.mrf.mxu0
  %v7150 = vadd.f32 %v7137, %v7149
  %v7151 = vpop.f32.mrf.mxu0
  %7152 = vdwg.mxu0
  %7153 = vmatpush.bf16.msra.mxu0 %v4639
  %7154 = vmatpush.bf16.msra.mxu0 %v4631
  %7155 = vmatpush.bf16.msra.mxu0 %v4623
  %7156 = vmatpush.bf16.msra.mxu0 %v4615
  %7157 = vmatpush.bf16.msra.mxu0 %v4607
  %7158 = vmatpush.bf16.msra.mxu0 %v4599
  %7159 = vmatpush.bf16.msra.mxu0 %v4591
  %7160 = vmatpush.bf16.msra.mxu0 %v4583
  %7161 = vmatmul.bf16.gmra.mxu0 %v71
  %v7162 = vpop.f32.mrf.mxu0
  %v7163 = vadd.f32 %v7150, %v7162
  %v7164 = vpop.f32.mrf.mxu0
  %7165 = vdwg.mxu0
  %7166 = vmatpush.bf16.msra.mxu0 %v4703
  %7167 = vmatpush.bf16.msra.mxu0 %v4695
  %7168 = vmatpush.bf16.msra.mxu0 %v4687
  %7169 = vmatpush.bf16.msra.mxu0 %v4679
  %7170 = vmatpush.bf16.msra.mxu0 %v4671
  %7171 = vmatpush.bf16.msra.mxu0 %v4663
  %7172 = vmatpush.bf16.msra.mxu0 %v4655
  %7173 = vmatpush.bf16.msra.mxu0 %v4647
  %7174 = vmatmul.bf16.gmra.mxu0 %v72
  %v7175 = vpop.f32.mrf.mxu0
  %v7176 = vadd.f32 %v7163, %v7175
  %v7177 = vpop.f32.mrf.mxu0
  %7178 = vdwg.mxu0
  %7179 = vmatpush.bf16.msra.mxu0 %v4767
  %7180 = vmatpush.bf16.msra.mxu0 %v4759
  %7181 = vmatpush.bf16.msra.mxu0 %v4751
  %7182 = vmatpush.bf16.msra.mxu0 %v4743
  %7183 = vmatpush.bf16.msra.mxu0 %v4735
  %7184 = vmatpush.bf16.msra.mxu0 %v4727
  %7185 = vmatpush.bf16.msra.mxu0 %v4719
  %7186 = vmatpush.bf16.msra.mxu0 %v4711
  %7187 = vmatmul.bf16.gmra.mxu0 %v73
  %v7188 = vpop.f32.mrf.mxu0
  %v7189 = vadd.f32 %v7176, %v7188
  %v7190 = vpop.f32.mrf.mxu0
  %7191 = vdwg.mxu0
  %7192 = vmatpush.bf16.msra.mxu0 %v4831
  %7193 = vmatpush.bf16.msra.mxu0 %v4823
  %7194 = vmatpush.bf16.msra.mxu0 %v4815
  %7195 = vmatpush.bf16.msra.mxu0 %v4807
  %7196 = vmatpush.bf16.msra.mxu0 %v4799
  %7197 = vmatpush.bf16.msra.mxu0 %v4791
  %7198 = vmatpush.bf16.msra.mxu0 %v4783
  %7199 = vmatpush.bf16.msra.mxu0 %v4775
  %7200 = vmatmul.bf16.gmra.mxu0 %v74
  %v7201 = vpop.f32.mrf.mxu0
  %v7202 = vadd.f32 %v7189, %v7201
  %v7203 = vpop.f32.mrf.mxu0
  %7204 = vdwg.mxu0
  %7205 = vmatpush.bf16.msra.mxu0 %v4895
  %7206 = vmatpush.bf16.msra.mxu0 %v4887
  %7207 = vmatpush.bf16.msra.mxu0 %v4879
  %7208 = vmatpush.bf16.msra.mxu0 %v4871
  %7209 = vmatpush.bf16.msra.mxu0 %v4863
  %7210 = vmatpush.bf16.msra.mxu0 %v4855
  %7211 = vmatpush.bf16.msra.mxu0 %v4847
  %7212 = vmatpush.bf16.msra.mxu0 %v4839
  %7213 = vmatmul.bf16.gmra.mxu0 %v75
  %v7214 = vpop.f32.mrf.mxu0
  %v7215 = vadd.f32 %v7202, %v7214
  %v7216 = vpop.f32.mrf.mxu0
  %7217 = vdwg.mxu0
  %7218 = vmatpush.bf16.msra.mxu0 %v4959
  %7219 = vmatpush.bf16.msra.mxu0 %v4951
  %7220 = vmatpush.bf16.msra.mxu0 %v4943
  %7221 = vmatpush.bf16.msra.mxu0 %v4935
  %7222 = vmatpush.bf16.msra.mxu0 %v4927
  %7223 = vmatpush.bf16.msra.mxu0 %v4919
  %7224 = vmatpush.bf16.msra.mxu0 %v4911
  %7225 = vmatpush.bf16.msra.mxu0 %v4903
  %7226 = vmatmul.bf16.gmra.mxu0 %v76
  %v7227 = vpop.f32.mrf.mxu0
  %v7228 = vadd.f32 %v7215, %v7227
  %v7229 = vpop.f32.mrf.mxu0
  %7230 = vdwg.mxu0
  %7231 = vmatpush.bf16.msra.mxu0 %v5023
  %7232 = vmatpush.bf16.msra.mxu0 %v5015
  %7233 = vmatpush.bf16.msra.mxu0 %v5007
  %7234 = vmatpush.bf16.msra.mxu0 %v4999
  %7235 = vmatpush.bf16.msra.mxu0 %v4991
  %7236 = vmatpush.bf16.msra.mxu0 %v4983
  %7237 = vmatpush.bf16.msra.mxu0 %v4975
  %7238 = vmatpush.bf16.msra.mxu0 %v4967
  %7239 = vmatmul.bf16.gmra.mxu0 %v77
  %v7240 = vpop.f32.mrf.mxu0
  %v7241 = vadd.f32 %v7228, %v7240
  %v7242 = vpop.f32.mrf.mxu0
  %7243 = vdwg.mxu0
  %7244 = vmatpush.bf16.msra.mxu0 %v5087
  %7245 = vmatpush.bf16.msra.mxu0 %v5079
  %7246 = vmatpush.bf16.msra.mxu0 %v5071
  %7247 = vmatpush.bf16.msra.mxu0 %v5063
  %7248 = vmatpush.bf16.msra.mxu0 %v5055
  %7249 = vmatpush.bf16.msra.mxu0 %v5047
  %7250 = vmatpush.bf16.msra.mxu0 %v5039
  %7251 = vmatpush.bf16.msra.mxu0 %v5031
  %7252 = vmatmul.bf16.gmra.mxu0 %v78
  %v7253 = vpop.f32.mrf.mxu0
  %v7254 = vadd.f32 %v7241, %v7253
  %v7255 = vpop.f32.mrf.mxu0
  %7256 = vdwg.mxu0
  %7257 = vmatpush.bf16.msra.mxu0 %v5151
  %7258 = vmatpush.bf16.msra.mxu0 %v5143
  %7259 = vmatpush.bf16.msra.mxu0 %v5135
  %7260 = vmatpush.bf16.msra.mxu0 %v5127
  %7261 = vmatpush.bf16.msra.mxu0 %v5119
  %7262 = vmatpush.bf16.msra.mxu0 %v5111
  %7263 = vmatpush.bf16.msra.mxu0 %v5103
  %7264 = vmatpush.bf16.msra.mxu0 %v5095
  %7265 = vmatmul.bf16.gmra.mxu0 %v79
  %v7266 = vpop.f32.mrf.mxu0
  %v7267 = vadd.f32 %v7254, %v7266
  %v7268 = vpop.f32.mrf.mxu0
  %7269 = vdwg.mxu0
  %7270 = vmatpush.bf16.msra.mxu0 %v5215
  %7271 = vmatpush.bf16.msra.mxu0 %v5207
  %7272 = vmatpush.bf16.msra.mxu0 %v5199
  %7273 = vmatpush.bf16.msra.mxu0 %v5191
  %7274 = vmatpush.bf16.msra.mxu0 %v5183
  %7275 = vmatpush.bf16.msra.mxu0 %v5175
  %7276 = vmatpush.bf16.msra.mxu0 %v5167
  %7277 = vmatpush.bf16.msra.mxu0 %v5159
  %7278 = vmatmul.bf16.gmra.mxu0 %v80
  %v7279 = vpop.f32.mrf.mxu0
  %v7280 = vadd.f32 %v7267, %v7279
  %v7281 = vpop.f32.mrf.mxu0
  %7282 = vdwg.mxu0
  %7283 = vmatpush.bf16.msra.mxu0 %v4256
  %7284 = vmatpush.bf16.msra.mxu0 %v4248
  %7285 = vmatpush.bf16.msra.mxu0 %v4240
  %7286 = vmatpush.bf16.msra.mxu0 %v4232
  %7287 = vmatpush.bf16.msra.mxu0 %v4224
  %7288 = vmatpush.bf16.msra.mxu0 %v4216
  %7289 = vmatpush.bf16.msra.mxu0 %v4208
  %7290 = vmatpush.bf16.msra.mxu0 %v4200
  %7291 = vmatmul.bf16.gmra.mxu0 %v65
  %v7292 = vpop.f32.mrf.mxu0
  %v7293 = vadd.f32 %v1112, %v7292
  %v7294 = vpop.f32.mrf.mxu0
  %7295 = vdwg.mxu0
  %7296 = vmatpush.bf16.msra.mxu0 %v4320
  %7297 = vmatpush.bf16.msra.mxu0 %v4312
  %7298 = vmatpush.bf16.msra.mxu0 %v4304
  %7299 = vmatpush.bf16.msra.mxu0 %v4296
  %7300 = vmatpush.bf16.msra.mxu0 %v4288
  %7301 = vmatpush.bf16.msra.mxu0 %v4280
  %7302 = vmatpush.bf16.msra.mxu0 %v4272
  %7303 = vmatpush.bf16.msra.mxu0 %v4264
  %7304 = vmatmul.bf16.gmra.mxu0 %v66
  %v7305 = vpop.f32.mrf.mxu0
  %v7306 = vadd.f32 %v7293, %v7305
  %v7307 = vpop.f32.mrf.mxu0
  %7308 = vdwg.mxu0
  %7309 = vmatpush.bf16.msra.mxu0 %v4384
  %7310 = vmatpush.bf16.msra.mxu0 %v4376
  %7311 = vmatpush.bf16.msra.mxu0 %v4368
  %7312 = vmatpush.bf16.msra.mxu0 %v4360
  %7313 = vmatpush.bf16.msra.mxu0 %v4352
  %7314 = vmatpush.bf16.msra.mxu0 %v4344
  %7315 = vmatpush.bf16.msra.mxu0 %v4336
  %7316 = vmatpush.bf16.msra.mxu0 %v4328
  %7317 = vmatmul.bf16.gmra.mxu0 %v67
  %v7318 = vpop.f32.mrf.mxu0
  %v7319 = vadd.f32 %v7306, %v7318
  %v7320 = vpop.f32.mrf.mxu0
  %7321 = vdwg.mxu0
  %7322 = vmatpush.bf16.msra.mxu0 %v4448
  %7323 = vmatpush.bf16.msra.mxu0 %v4440
  %7324 = vmatpush.bf16.msra.mxu0 %v4432
  %7325 = vmatpush.bf16.msra.mxu0 %v4424
  %7326 = vmatpush.bf16.msra.mxu0 %v4416
  %7327 = vmatpush.bf16.msra.mxu0 %v4408
  %7328 = vmatpush.bf16.msra.mxu0 %v4400
  %7329 = vmatpush.bf16.msra.mxu0 %v4392
  %7330 = vmatmul.bf16.gmra.mxu0 %v68
  %v7331 = vpop.f32.mrf.mxu0
  %v7332 = vadd.f32 %v7319, %v7331
  %v7333 = vpop.f32.mrf.mxu0
  %7334 = vdwg.mxu0
  %7335 = vmatpush.bf16.msra.mxu0 %v4512
  %7336 = vmatpush.bf16.msra.mxu0 %v4504
  %7337 = vmatpush.bf16.msra.mxu0 %v4496
  %7338 = vmatpush.bf16.msra.mxu0 %v4488
  %7339 = vmatpush.bf16.msra.mxu0 %v4480
  %7340 = vmatpush.bf16.msra.mxu0 %v4472
  %7341 = vmatpush.bf16.msra.mxu0 %v4464
  %7342 = vmatpush.bf16.msra.mxu0 %v4456
  %7343 = vmatmul.bf16.gmra.mxu0 %v69
  %v7344 = vpop.f32.mrf.mxu0
  %v7345 = vadd.f32 %v7332, %v7344
  %v7346 = vpop.f32.mrf.mxu0
  %7347 = vdwg.mxu0
  %7348 = vmatpush.bf16.msra.mxu0 %v4576
  %7349 = vmatpush.bf16.msra.mxu0 %v4568
  %7350 = vmatpush.bf16.msra.mxu0 %v4560
  %7351 = vmatpush.bf16.msra.mxu0 %v4552
  %7352 = vmatpush.bf16.msra.mxu0 %v4544
  %7353 = vmatpush.bf16.msra.mxu0 %v4536
  %7354 = vmatpush.bf16.msra.mxu0 %v4528
  %7355 = vmatpush.bf16.msra.mxu0 %v4520
  %7356 = vmatmul.bf16.gmra.mxu0 %v70
  %v7357 = vpop.f32.mrf.mxu0
  %v7358 = vadd.f32 %v7345, %v7357
  %v7359 = vpop.f32.mrf.mxu0
  %7360 = vdwg.mxu0
  %7361 = vmatpush.bf16.msra.mxu0 %v4640
  %7362 = vmatpush.bf16.msra.mxu0 %v4632
  %7363 = vmatpush.bf16.msra.mxu0 %v4624
  %7364 = vmatpush.bf16.msra.mxu0 %v4616
  %7365 = vmatpush.bf16.msra.mxu0 %v4608
  %7366 = vmatpush.bf16.msra.mxu0 %v4600
  %7367 = vmatpush.bf16.msra.mxu0 %v4592
  %7368 = vmatpush.bf16.msra.mxu0 %v4584
  %7369 = vmatmul.bf16.gmra.mxu0 %v71
  %v7370 = vpop.f32.mrf.mxu0
  %v7371 = vadd.f32 %v7358, %v7370
  %v7372 = vpop.f32.mrf.mxu0
  %7373 = vdwg.mxu0
  %7374 = vmatpush.bf16.msra.mxu0 %v4704
  %7375 = vmatpush.bf16.msra.mxu0 %v4696
  %7376 = vmatpush.bf16.msra.mxu0 %v4688
  %7377 = vmatpush.bf16.msra.mxu0 %v4680
  %7378 = vmatpush.bf16.msra.mxu0 %v4672
  %7379 = vmatpush.bf16.msra.mxu0 %v4664
  %7380 = vmatpush.bf16.msra.mxu0 %v4656
  %7381 = vmatpush.bf16.msra.mxu0 %v4648
  %7382 = vmatmul.bf16.gmra.mxu0 %v72
  %v7383 = vpop.f32.mrf.mxu0
  %v7384 = vadd.f32 %v7371, %v7383
  %v7385 = vpop.f32.mrf.mxu0
  %7386 = vdwg.mxu0
  %7387 = vmatpush.bf16.msra.mxu0 %v4768
  %7388 = vmatpush.bf16.msra.mxu0 %v4760
  %7389 = vmatpush.bf16.msra.mxu0 %v4752
  %7390 = vmatpush.bf16.msra.mxu0 %v4744
  %7391 = vmatpush.bf16.msra.mxu0 %v4736
  %7392 = vmatpush.bf16.msra.mxu0 %v4728
  %7393 = vmatpush.bf16.msra.mxu0 %v4720
  %7394 = vmatpush.bf16.msra.mxu0 %v4712
  %7395 = vmatmul.bf16.gmra.mxu0 %v73
  %v7396 = vpop.f32.mrf.mxu0
  %v7397 = vadd.f32 %v7384, %v7396
  %v7398 = vpop.f32.mrf.mxu0
  %7399 = vdwg.mxu0
  %7400 = vmatpush.bf16.msra.mxu0 %v4832
  %7401 = vmatpush.bf16.msra.mxu0 %v4824
  %7402 = vmatpush.bf16.msra.mxu0 %v4816
  %7403 = vmatpush.bf16.msra.mxu0 %v4808
  %7404 = vmatpush.bf16.msra.mxu0 %v4800
  %7405 = vmatpush.bf16.msra.mxu0 %v4792
  %7406 = vmatpush.bf16.msra.mxu0 %v4784
  %7407 = vmatpush.bf16.msra.mxu0 %v4776
  %7408 = vmatmul.bf16.gmra.mxu0 %v74
  %v7409 = vpop.f32.mrf.mxu0
  %v7410 = vadd.f32 %v7397, %v7409
  %v7411 = vpop.f32.mrf.mxu0
  %7412 = vdwg.mxu0
  %7413 = vmatpush.bf16.msra.mxu0 %v4896
  %7414 = vmatpush.bf16.msra.mxu0 %v4888
  %7415 = vmatpush.bf16.msra.mxu0 %v4880
  %7416 = vmatpush.bf16.msra.mxu0 %v4872
  %7417 = vmatpush.bf16.msra.mxu0 %v4864
  %7418 = vmatpush.bf16.msra.mxu0 %v4856
  %7419 = vmatpush.bf16.msra.mxu0 %v4848
  %7420 = vmatpush.bf16.msra.mxu0 %v4840
  %7421 = vmatmul.bf16.gmra.mxu0 %v75
  %v7422 = vpop.f32.mrf.mxu0
  %v7423 = vadd.f32 %v7410, %v7422
  %v7424 = vpop.f32.mrf.mxu0
  %7425 = vdwg.mxu0
  %7426 = vmatpush.bf16.msra.mxu0 %v4960
  %7427 = vmatpush.bf16.msra.mxu0 %v4952
  %7428 = vmatpush.bf16.msra.mxu0 %v4944
  %7429 = vmatpush.bf16.msra.mxu0 %v4936
  %7430 = vmatpush.bf16.msra.mxu0 %v4928
  %7431 = vmatpush.bf16.msra.mxu0 %v4920
  %7432 = vmatpush.bf16.msra.mxu0 %v4912
  %7433 = vmatpush.bf16.msra.mxu0 %v4904
  %7434 = vmatmul.bf16.gmra.mxu0 %v76
  %v7435 = vpop.f32.mrf.mxu0
  %v7436 = vadd.f32 %v7423, %v7435
  %v7437 = vpop.f32.mrf.mxu0
  %7438 = vdwg.mxu0
  %7439 = vmatpush.bf16.msra.mxu0 %v5024
  %7440 = vmatpush.bf16.msra.mxu0 %v5016
  %7441 = vmatpush.bf16.msra.mxu0 %v5008
  %7442 = vmatpush.bf16.msra.mxu0 %v5000
  %7443 = vmatpush.bf16.msra.mxu0 %v4992
  %7444 = vmatpush.bf16.msra.mxu0 %v4984
  %7445 = vmatpush.bf16.msra.mxu0 %v4976
  %7446 = vmatpush.bf16.msra.mxu0 %v4968
  %7447 = vmatmul.bf16.gmra.mxu0 %v77
  %v7448 = vpop.f32.mrf.mxu0
  %v7449 = vadd.f32 %v7436, %v7448
  %v7450 = vpop.f32.mrf.mxu0
  %7451 = vdwg.mxu0
  %7452 = vmatpush.bf16.msra.mxu0 %v5088
  %7453 = vmatpush.bf16.msra.mxu0 %v5080
  %7454 = vmatpush.bf16.msra.mxu0 %v5072
  %7455 = vmatpush.bf16.msra.mxu0 %v5064
  %7456 = vmatpush.bf16.msra.mxu0 %v5056
  %7457 = vmatpush.bf16.msra.mxu0 %v5048
  %7458 = vmatpush.bf16.msra.mxu0 %v5040
  %7459 = vmatpush.bf16.msra.mxu0 %v5032
  %7460 = vmatmul.bf16.gmra.mxu0 %v78
  %v7461 = vpop.f32.mrf.mxu0
  %v7462 = vadd.f32 %v7449, %v7461
  %v7463 = vpop.f32.mrf.mxu0
  %7464 = vdwg.mxu0
  %7465 = vmatpush.bf16.msra.mxu0 %v5152
  %7466 = vmatpush.bf16.msra.mxu0 %v5144
  %7467 = vmatpush.bf16.msra.mxu0 %v5136
  %7468 = vmatpush.bf16.msra.mxu0 %v5128
  %7469 = vmatpush.bf16.msra.mxu0 %v5120
  %7470 = vmatpush.bf16.msra.mxu0 %v5112
  %7471 = vmatpush.bf16.msra.mxu0 %v5104
  %7472 = vmatpush.bf16.msra.mxu0 %v5096
  %7473 = vmatmul.bf16.gmra.mxu0 %v79
  %v7474 = vpop.f32.mrf.mxu0
  %v7475 = vadd.f32 %v7462, %v7474
  %v7476 = vpop.f32.mrf.mxu0
  %7477 = vdwg.mxu0
  %7478 = vmatpush.bf16.msra.mxu0 %v5216
  %7479 = vmatpush.bf16.msra.mxu0 %v5208
  %7480 = vmatpush.bf16.msra.mxu0 %v5200
  %7481 = vmatpush.bf16.msra.mxu0 %v5192
  %7482 = vmatpush.bf16.msra.mxu0 %v5184
  %7483 = vmatpush.bf16.msra.mxu0 %v5176
  %7484 = vmatpush.bf16.msra.mxu0 %v5168
  %7485 = vmatpush.bf16.msra.mxu0 %v5160
  %7486 = vmatmul.bf16.gmra.mxu0 %v80
  %v7487 = vpop.f32.mrf.mxu0
  %v7488 = vadd.f32 %v7475, %v7487
  %v7489 = vpop.f32.mrf.mxu0
  %7490 = vdwg.mxu0
  %7491 = vmatpush.bf16.msra.mxu0 %v4257
  %7492 = vmatpush.bf16.msra.mxu0 %v4249
  %7493 = vmatpush.bf16.msra.mxu0 %v4241
  %7494 = vmatpush.bf16.msra.mxu0 %v4233
  %7495 = vmatpush.bf16.msra.mxu0 %v4225
  %7496 = vmatpush.bf16.msra.mxu0 %v4217
  %7497 = vmatpush.bf16.msra.mxu0 %v4209
  %7498 = vmatpush.bf16.msra.mxu0 %v4201
  %7499 = vmatmul.bf16.gmra.mxu0 %v65
  %v7500 = vpop.f32.mrf.mxu0
  %v7501 = vadd.f32 %v1113, %v7500
  %v7502 = vpop.f32.mrf.mxu0
  %7503 = vdwg.mxu0
  %7504 = vmatpush.bf16.msra.mxu0 %v4321
  %7505 = vmatpush.bf16.msra.mxu0 %v4313
  %7506 = vmatpush.bf16.msra.mxu0 %v4305
  %7507 = vmatpush.bf16.msra.mxu0 %v4297
  %7508 = vmatpush.bf16.msra.mxu0 %v4289
  %7509 = vmatpush.bf16.msra.mxu0 %v4281
  %7510 = vmatpush.bf16.msra.mxu0 %v4273
  %7511 = vmatpush.bf16.msra.mxu0 %v4265
  %7512 = vmatmul.bf16.gmra.mxu0 %v66
  %v7513 = vpop.f32.mrf.mxu0
  %v7514 = vadd.f32 %v7501, %v7513
  %v7515 = vpop.f32.mrf.mxu0
  %7516 = vdwg.mxu0
  %7517 = vmatpush.bf16.msra.mxu0 %v4385
  %7518 = vmatpush.bf16.msra.mxu0 %v4377
  %7519 = vmatpush.bf16.msra.mxu0 %v4369
  %7520 = vmatpush.bf16.msra.mxu0 %v4361
  %7521 = vmatpush.bf16.msra.mxu0 %v4353
  %7522 = vmatpush.bf16.msra.mxu0 %v4345
  %7523 = vmatpush.bf16.msra.mxu0 %v4337
  %7524 = vmatpush.bf16.msra.mxu0 %v4329
  %7525 = vmatmul.bf16.gmra.mxu0 %v67
  %v7526 = vpop.f32.mrf.mxu0
  %v7527 = vadd.f32 %v7514, %v7526
  %v7528 = vpop.f32.mrf.mxu0
  %7529 = vdwg.mxu0
  %7530 = vmatpush.bf16.msra.mxu0 %v4449
  %7531 = vmatpush.bf16.msra.mxu0 %v4441
  %7532 = vmatpush.bf16.msra.mxu0 %v4433
  %7533 = vmatpush.bf16.msra.mxu0 %v4425
  %7534 = vmatpush.bf16.msra.mxu0 %v4417
  %7535 = vmatpush.bf16.msra.mxu0 %v4409
  %7536 = vmatpush.bf16.msra.mxu0 %v4401
  %7537 = vmatpush.bf16.msra.mxu0 %v4393
  %7538 = vmatmul.bf16.gmra.mxu0 %v68
  %v7539 = vpop.f32.mrf.mxu0
  %v7540 = vadd.f32 %v7527, %v7539
  %v7541 = vpop.f32.mrf.mxu0
  %7542 = vdwg.mxu0
  %7543 = vmatpush.bf16.msra.mxu0 %v4513
  %7544 = vmatpush.bf16.msra.mxu0 %v4505
  %7545 = vmatpush.bf16.msra.mxu0 %v4497
  %7546 = vmatpush.bf16.msra.mxu0 %v4489
  %7547 = vmatpush.bf16.msra.mxu0 %v4481
  %7548 = vmatpush.bf16.msra.mxu0 %v4473
  %7549 = vmatpush.bf16.msra.mxu0 %v4465
  %7550 = vmatpush.bf16.msra.mxu0 %v4457
  %7551 = vmatmul.bf16.gmra.mxu0 %v69
  %v7552 = vpop.f32.mrf.mxu0
  %v7553 = vadd.f32 %v7540, %v7552
  %v7554 = vpop.f32.mrf.mxu0
  %7555 = vdwg.mxu0
  %7556 = vmatpush.bf16.msra.mxu0 %v4577
  %7557 = vmatpush.bf16.msra.mxu0 %v4569
  %7558 = vmatpush.bf16.msra.mxu0 %v4561
  %7559 = vmatpush.bf16.msra.mxu0 %v4553
  %7560 = vmatpush.bf16.msra.mxu0 %v4545
  %7561 = vmatpush.bf16.msra.mxu0 %v4537
  %7562 = vmatpush.bf16.msra.mxu0 %v4529
  %7563 = vmatpush.bf16.msra.mxu0 %v4521
  %7564 = vmatmul.bf16.gmra.mxu0 %v70
  %v7565 = vpop.f32.mrf.mxu0
  %v7566 = vadd.f32 %v7553, %v7565
  %v7567 = vpop.f32.mrf.mxu0
  %7568 = vdwg.mxu0
  %7569 = vmatpush.bf16.msra.mxu0 %v4641
  %7570 = vmatpush.bf16.msra.mxu0 %v4633
  %7571 = vmatpush.bf16.msra.mxu0 %v4625
  %7572 = vmatpush.bf16.msra.mxu0 %v4617
  %7573 = vmatpush.bf16.msra.mxu0 %v4609
  %7574 = vmatpush.bf16.msra.mxu0 %v4601
  %7575 = vmatpush.bf16.msra.mxu0 %v4593
  %7576 = vmatpush.bf16.msra.mxu0 %v4585
  %7577 = vmatmul.bf16.gmra.mxu0 %v71
  %v7578 = vpop.f32.mrf.mxu0
  %v7579 = vadd.f32 %v7566, %v7578
  %v7580 = vpop.f32.mrf.mxu0
  %7581 = vdwg.mxu0
  %7582 = vmatpush.bf16.msra.mxu0 %v4705
  %7583 = vmatpush.bf16.msra.mxu0 %v4697
  %7584 = vmatpush.bf16.msra.mxu0 %v4689
  %7585 = vmatpush.bf16.msra.mxu0 %v4681
  %7586 = vmatpush.bf16.msra.mxu0 %v4673
  %7587 = vmatpush.bf16.msra.mxu0 %v4665
  %7588 = vmatpush.bf16.msra.mxu0 %v4657
  %7589 = vmatpush.bf16.msra.mxu0 %v4649
  %7590 = vmatmul.bf16.gmra.mxu0 %v72
  %v7591 = vpop.f32.mrf.mxu0
  %v7592 = vadd.f32 %v7579, %v7591
  %v7593 = vpop.f32.mrf.mxu0
  %7594 = vdwg.mxu0
  %7595 = vmatpush.bf16.msra.mxu0 %v4769
  %7596 = vmatpush.bf16.msra.mxu0 %v4761
  %7597 = vmatpush.bf16.msra.mxu0 %v4753
  %7598 = vmatpush.bf16.msra.mxu0 %v4745
  %7599 = vmatpush.bf16.msra.mxu0 %v4737
  %7600 = vmatpush.bf16.msra.mxu0 %v4729
  %7601 = vmatpush.bf16.msra.mxu0 %v4721
  %7602 = vmatpush.bf16.msra.mxu0 %v4713
  %7603 = vmatmul.bf16.gmra.mxu0 %v73
  %v7604 = vpop.f32.mrf.mxu0
  %v7605 = vadd.f32 %v7592, %v7604
  %v7606 = vpop.f32.mrf.mxu0
  %7607 = vdwg.mxu0
  %7608 = vmatpush.bf16.msra.mxu0 %v4833
  %7609 = vmatpush.bf16.msra.mxu0 %v4825
  %7610 = vmatpush.bf16.msra.mxu0 %v4817
  %7611 = vmatpush.bf16.msra.mxu0 %v4809
  %7612 = vmatpush.bf16.msra.mxu0 %v4801
  %7613 = vmatpush.bf16.msra.mxu0 %v4793
  %7614 = vmatpush.bf16.msra.mxu0 %v4785
  %7615 = vmatpush.bf16.msra.mxu0 %v4777
  %7616 = vmatmul.bf16.gmra.mxu0 %v74
  %v7617 = vpop.f32.mrf.mxu0
  %v7618 = vadd.f32 %v7605, %v7617
  %v7619 = vpop.f32.mrf.mxu0
  %7620 = vdwg.mxu0
  %7621 = vmatpush.bf16.msra.mxu0 %v4897
  %7622 = vmatpush.bf16.msra.mxu0 %v4889
  %7623 = vmatpush.bf16.msra.mxu0 %v4881
  %7624 = vmatpush.bf16.msra.mxu0 %v4873
  %7625 = vmatpush.bf16.msra.mxu0 %v4865
  %7626 = vmatpush.bf16.msra.mxu0 %v4857
  %7627 = vmatpush.bf16.msra.mxu0 %v4849
  %7628 = vmatpush.bf16.msra.mxu0 %v4841
  %7629 = vmatmul.bf16.gmra.mxu0 %v75
  %v7630 = vpop.f32.mrf.mxu0
  %v7631 = vadd.f32 %v7618, %v7630
  %v7632 = vpop.f32.mrf.mxu0
  %7633 = vdwg.mxu0
  %7634 = vmatpush.bf16.msra.mxu0 %v4961
  %7635 = vmatpush.bf16.msra.mxu0 %v4953
  %7636 = vmatpush.bf16.msra.mxu0 %v4945
  %7637 = vmatpush.bf16.msra.mxu0 %v4937
  %7638 = vmatpush.bf16.msra.mxu0 %v4929
  %7639 = vmatpush.bf16.msra.mxu0 %v4921
  %7640 = vmatpush.bf16.msra.mxu0 %v4913
  %7641 = vmatpush.bf16.msra.mxu0 %v4905
  %7642 = vmatmul.bf16.gmra.mxu0 %v76
  %v7643 = vpop.f32.mrf.mxu0
  %v7644 = vadd.f32 %v7631, %v7643
  %v7645 = vpop.f32.mrf.mxu0
  %7646 = vdwg.mxu0
  %7647 = vmatpush.bf16.msra.mxu0 %v5025
  %7648 = vmatpush.bf16.msra.mxu0 %v5017
  %7649 = vmatpush.bf16.msra.mxu0 %v5009
  %7650 = vmatpush.bf16.msra.mxu0 %v5001
  %7651 = vmatpush.bf16.msra.mxu0 %v4993
  %7652 = vmatpush.bf16.msra.mxu0 %v4985
  %7653 = vmatpush.bf16.msra.mxu0 %v4977
  %7654 = vmatpush.bf16.msra.mxu0 %v4969
  %7655 = vmatmul.bf16.gmra.mxu0 %v77
  %v7656 = vpop.f32.mrf.mxu0
  %v7657 = vadd.f32 %v7644, %v7656
  %v7658 = vpop.f32.mrf.mxu0
  %7659 = vdwg.mxu0
  %7660 = vmatpush.bf16.msra.mxu0 %v5089
  %7661 = vmatpush.bf16.msra.mxu0 %v5081
  %7662 = vmatpush.bf16.msra.mxu0 %v5073
  %7663 = vmatpush.bf16.msra.mxu0 %v5065
  %7664 = vmatpush.bf16.msra.mxu0 %v5057
  %7665 = vmatpush.bf16.msra.mxu0 %v5049
  %7666 = vmatpush.bf16.msra.mxu0 %v5041
  %7667 = vmatpush.bf16.msra.mxu0 %v5033
  %7668 = vmatmul.bf16.gmra.mxu0 %v78
  %v7669 = vpop.f32.mrf.mxu0
  %v7670 = vadd.f32 %v7657, %v7669
  %v7671 = vpop.f32.mrf.mxu0
  %7672 = vdwg.mxu0
  %7673 = vmatpush.bf16.msra.mxu0 %v5153
  %7674 = vmatpush.bf16.msra.mxu0 %v5145
  %7675 = vmatpush.bf16.msra.mxu0 %v5137
  %7676 = vmatpush.bf16.msra.mxu0 %v5129
  %7677 = vmatpush.bf16.msra.mxu0 %v5121
  %7678 = vmatpush.bf16.msra.mxu0 %v5113
  %7679 = vmatpush.bf16.msra.mxu0 %v5105
  %7680 = vmatpush.bf16.msra.mxu0 %v5097
  %7681 = vmatmul.bf16.gmra.mxu0 %v79
  %v7682 = vpop.f32.mrf.mxu0
  %v7683 = vadd.f32 %v7670, %v7682
  %v7684 = vpop.f32.mrf.mxu0
  %7685 = vdwg.mxu0
  %7686 = vmatpush.bf16.msra.mxu0 %v5217
  %7687 = vmatpush.bf16.msra.mxu0 %v5209
  %7688 = vmatpush.bf16.msra.mxu0 %v5201
  %7689 = vmatpush.bf16.msra.mxu0 %v5193
  %7690 = vmatpush.bf16.msra.mxu0 %v5185
  %7691 = vmatpush.bf16.msra.mxu0 %v5177
  %7692 = vmatpush.bf16.msra.mxu0 %v5169
  %7693 = vmatpush.bf16.msra.mxu0 %v5161
  %7694 = vmatmul.bf16.gmra.mxu0 %v80
  %v7695 = vpop.f32.mrf.mxu0
  %v7696 = vadd.f32 %v7683, %v7695
  %v7697 = vpop.f32.mrf.mxu0
  %7698 = vdwg.mxu0
  %7699 = vmatpush.bf16.msra.mxu0 %v4258
  %7700 = vmatpush.bf16.msra.mxu0 %v4250
  %7701 = vmatpush.bf16.msra.mxu0 %v4242
  %7702 = vmatpush.bf16.msra.mxu0 %v4234
  %7703 = vmatpush.bf16.msra.mxu0 %v4226
  %7704 = vmatpush.bf16.msra.mxu0 %v4218
  %7705 = vmatpush.bf16.msra.mxu0 %v4210
  %7706 = vmatpush.bf16.msra.mxu0 %v4202
  %7707 = vmatmul.bf16.gmra.mxu0 %v65
  %v7708 = vpop.f32.mrf.mxu0
  %v7709 = vadd.f32 %v1114, %v7708
  %v7710 = vpop.f32.mrf.mxu0
  %7711 = vdwg.mxu0
  %7712 = vmatpush.bf16.msra.mxu0 %v4322
  %7713 = vmatpush.bf16.msra.mxu0 %v4314
  %7714 = vmatpush.bf16.msra.mxu0 %v4306
  %7715 = vmatpush.bf16.msra.mxu0 %v4298
  %7716 = vmatpush.bf16.msra.mxu0 %v4290
  %7717 = vmatpush.bf16.msra.mxu0 %v4282
  %7718 = vmatpush.bf16.msra.mxu0 %v4274
  %7719 = vmatpush.bf16.msra.mxu0 %v4266
  %7720 = vmatmul.bf16.gmra.mxu0 %v66
  %v7721 = vpop.f32.mrf.mxu0
  %v7722 = vadd.f32 %v7709, %v7721
  %v7723 = vpop.f32.mrf.mxu0
  %7724 = vdwg.mxu0
  %7725 = vmatpush.bf16.msra.mxu0 %v4386
  %7726 = vmatpush.bf16.msra.mxu0 %v4378
  %7727 = vmatpush.bf16.msra.mxu0 %v4370
  %7728 = vmatpush.bf16.msra.mxu0 %v4362
  %7729 = vmatpush.bf16.msra.mxu0 %v4354
  %7730 = vmatpush.bf16.msra.mxu0 %v4346
  %7731 = vmatpush.bf16.msra.mxu0 %v4338
  %7732 = vmatpush.bf16.msra.mxu0 %v4330
  %7733 = vmatmul.bf16.gmra.mxu0 %v67
  %v7734 = vpop.f32.mrf.mxu0
  %v7735 = vadd.f32 %v7722, %v7734
  %v7736 = vpop.f32.mrf.mxu0
  %7737 = vdwg.mxu0
  %7738 = vmatpush.bf16.msra.mxu0 %v4450
  %7739 = vmatpush.bf16.msra.mxu0 %v4442
  %7740 = vmatpush.bf16.msra.mxu0 %v4434
  %7741 = vmatpush.bf16.msra.mxu0 %v4426
  %7742 = vmatpush.bf16.msra.mxu0 %v4418
  %7743 = vmatpush.bf16.msra.mxu0 %v4410
  %7744 = vmatpush.bf16.msra.mxu0 %v4402
  %7745 = vmatpush.bf16.msra.mxu0 %v4394
  %7746 = vmatmul.bf16.gmra.mxu0 %v68
  %v7747 = vpop.f32.mrf.mxu0
  %v7748 = vadd.f32 %v7735, %v7747
  %v7749 = vpop.f32.mrf.mxu0
  %7750 = vdwg.mxu0
  %7751 = vmatpush.bf16.msra.mxu0 %v4514
  %7752 = vmatpush.bf16.msra.mxu0 %v4506
  %7753 = vmatpush.bf16.msra.mxu0 %v4498
  %7754 = vmatpush.bf16.msra.mxu0 %v4490
  %7755 = vmatpush.bf16.msra.mxu0 %v4482
  %7756 = vmatpush.bf16.msra.mxu0 %v4474
  %7757 = vmatpush.bf16.msra.mxu0 %v4466
  %7758 = vmatpush.bf16.msra.mxu0 %v4458
  %7759 = vmatmul.bf16.gmra.mxu0 %v69
  %v7760 = vpop.f32.mrf.mxu0
  %v7761 = vadd.f32 %v7748, %v7760
  %v7762 = vpop.f32.mrf.mxu0
  %7763 = vdwg.mxu0
  %7764 = vmatpush.bf16.msra.mxu0 %v4578
  %7765 = vmatpush.bf16.msra.mxu0 %v4570
  %7766 = vmatpush.bf16.msra.mxu0 %v4562
  %7767 = vmatpush.bf16.msra.mxu0 %v4554
  %7768 = vmatpush.bf16.msra.mxu0 %v4546
  %7769 = vmatpush.bf16.msra.mxu0 %v4538
  %7770 = vmatpush.bf16.msra.mxu0 %v4530
  %7771 = vmatpush.bf16.msra.mxu0 %v4522
  %7772 = vmatmul.bf16.gmra.mxu0 %v70
  %v7773 = vpop.f32.mrf.mxu0
  %v7774 = vadd.f32 %v7761, %v7773
  %v7775 = vpop.f32.mrf.mxu0
  %7776 = vdwg.mxu0
  %7777 = vmatpush.bf16.msra.mxu0 %v4642
  %7778 = vmatpush.bf16.msra.mxu0 %v4634
  %7779 = vmatpush.bf16.msra.mxu0 %v4626
  %7780 = vmatpush.bf16.msra.mxu0 %v4618
  %7781 = vmatpush.bf16.msra.mxu0 %v4610
  %7782 = vmatpush.bf16.msra.mxu0 %v4602
  %7783 = vmatpush.bf16.msra.mxu0 %v4594
  %7784 = vmatpush.bf16.msra.mxu0 %v4586
  %7785 = vmatmul.bf16.gmra.mxu0 %v71
  %v7786 = vpop.f32.mrf.mxu0
  %v7787 = vadd.f32 %v7774, %v7786
  %v7788 = vpop.f32.mrf.mxu0
  %7789 = vdwg.mxu0
  %7790 = vmatpush.bf16.msra.mxu0 %v4706
  %7791 = vmatpush.bf16.msra.mxu0 %v4698
  %7792 = vmatpush.bf16.msra.mxu0 %v4690
  %7793 = vmatpush.bf16.msra.mxu0 %v4682
  %7794 = vmatpush.bf16.msra.mxu0 %v4674
  %7795 = vmatpush.bf16.msra.mxu0 %v4666
  %7796 = vmatpush.bf16.msra.mxu0 %v4658
  %7797 = vmatpush.bf16.msra.mxu0 %v4650
  %7798 = vmatmul.bf16.gmra.mxu0 %v72
  %v7799 = vpop.f32.mrf.mxu0
  %v7800 = vadd.f32 %v7787, %v7799
  %v7801 = vpop.f32.mrf.mxu0
  %7802 = vdwg.mxu0
  %7803 = vmatpush.bf16.msra.mxu0 %v4770
  %7804 = vmatpush.bf16.msra.mxu0 %v4762
  %7805 = vmatpush.bf16.msra.mxu0 %v4754
  %7806 = vmatpush.bf16.msra.mxu0 %v4746
  %7807 = vmatpush.bf16.msra.mxu0 %v4738
  %7808 = vmatpush.bf16.msra.mxu0 %v4730
  %7809 = vmatpush.bf16.msra.mxu0 %v4722
  %7810 = vmatpush.bf16.msra.mxu0 %v4714
  %7811 = vmatmul.bf16.gmra.mxu0 %v73
  %v7812 = vpop.f32.mrf.mxu0
  %v7813 = vadd.f32 %v7800, %v7812
  %v7814 = vpop.f32.mrf.mxu0
  %7815 = vdwg.mxu0
  %7816 = vmatpush.bf16.msra.mxu0 %v4834
  %7817 = vmatpush.bf16.msra.mxu0 %v4826
  %7818 = vmatpush.bf16.msra.mxu0 %v4818
  %7819 = vmatpush.bf16.msra.mxu0 %v4810
  %7820 = vmatpush.bf16.msra.mxu0 %v4802
  %7821 = vmatpush.bf16.msra.mxu0 %v4794
  %7822 = vmatpush.bf16.msra.mxu0 %v4786
  %7823 = vmatpush.bf16.msra.mxu0 %v4778
  %7824 = vmatmul.bf16.gmra.mxu0 %v74
  %v7825 = vpop.f32.mrf.mxu0
  %v7826 = vadd.f32 %v7813, %v7825
  %v7827 = vpop.f32.mrf.mxu0
  %7828 = vdwg.mxu0
  %7829 = vmatpush.bf16.msra.mxu0 %v4898
  %7830 = vmatpush.bf16.msra.mxu0 %v4890
  %7831 = vmatpush.bf16.msra.mxu0 %v4882
  %7832 = vmatpush.bf16.msra.mxu0 %v4874
  %7833 = vmatpush.bf16.msra.mxu0 %v4866
  %7834 = vmatpush.bf16.msra.mxu0 %v4858
  %7835 = vmatpush.bf16.msra.mxu0 %v4850
  %7836 = vmatpush.bf16.msra.mxu0 %v4842
  %7837 = vmatmul.bf16.gmra.mxu0 %v75
  %v7838 = vpop.f32.mrf.mxu0
  %v7839 = vadd.f32 %v7826, %v7838
  %v7840 = vpop.f32.mrf.mxu0
  %7841 = vdwg.mxu0
  %7842 = vmatpush.bf16.msra.mxu0 %v4962
  %7843 = vmatpush.bf16.msra.mxu0 %v4954
  %7844 = vmatpush.bf16.msra.mxu0 %v4946
  %7845 = vmatpush.bf16.msra.mxu0 %v4938
  %7846 = vmatpush.bf16.msra.mxu0 %v4930
  %7847 = vmatpush.bf16.msra.mxu0 %v4922
  %7848 = vmatpush.bf16.msra.mxu0 %v4914
  %7849 = vmatpush.bf16.msra.mxu0 %v4906
  %7850 = vmatmul.bf16.gmra.mxu0 %v76
  %v7851 = vpop.f32.mrf.mxu0
  %v7852 = vadd.f32 %v7839, %v7851
  %v7853 = vpop.f32.mrf.mxu0
  %7854 = vdwg.mxu0
  %7855 = vmatpush.bf16.msra.mxu0 %v5026
  %7856 = vmatpush.bf16.msra.mxu0 %v5018
  %7857 = vmatpush.bf16.msra.mxu0 %v5010
  %7858 = vmatpush.bf16.msra.mxu0 %v5002
  %7859 = vmatpush.bf16.msra.mxu0 %v4994
  %7860 = vmatpush.bf16.msra.mxu0 %v4986
  %7861 = vmatpush.bf16.msra.mxu0 %v4978
  %7862 = vmatpush.bf16.msra.mxu0 %v4970
  %7863 = vmatmul.bf16.gmra.mxu0 %v77
  %v7864 = vpop.f32.mrf.mxu0
  %v7865 = vadd.f32 %v7852, %v7864
  %v7866 = vpop.f32.mrf.mxu0
  %7867 = vdwg.mxu0
  %7868 = vmatpush.bf16.msra.mxu0 %v5090
  %7869 = vmatpush.bf16.msra.mxu0 %v5082
  %7870 = vmatpush.bf16.msra.mxu0 %v5074
  %7871 = vmatpush.bf16.msra.mxu0 %v5066
  %7872 = vmatpush.bf16.msra.mxu0 %v5058
  %7873 = vmatpush.bf16.msra.mxu0 %v5050
  %7874 = vmatpush.bf16.msra.mxu0 %v5042
  %7875 = vmatpush.bf16.msra.mxu0 %v5034
  %7876 = vmatmul.bf16.gmra.mxu0 %v78
  %v7877 = vpop.f32.mrf.mxu0
  %v7878 = vadd.f32 %v7865, %v7877
  %v7879 = vpop.f32.mrf.mxu0
  %7880 = vdwg.mxu0
  %7881 = vmatpush.bf16.msra.mxu0 %v5154
  %7882 = vmatpush.bf16.msra.mxu0 %v5146
  %7883 = vmatpush.bf16.msra.mxu0 %v5138
  %7884 = vmatpush.bf16.msra.mxu0 %v5130
  %7885 = vmatpush.bf16.msra.mxu0 %v5122
  %7886 = vmatpush.bf16.msra.mxu0 %v5114
  %7887 = vmatpush.bf16.msra.mxu0 %v5106
  %7888 = vmatpush.bf16.msra.mxu0 %v5098
  %7889 = vmatmul.bf16.gmra.mxu0 %v79
  %v7890 = vpop.f32.mrf.mxu0
  %v7891 = vadd.f32 %v7878, %v7890
  %v7892 = vpop.f32.mrf.mxu0
  %7893 = vdwg.mxu0
  %7894 = vmatpush.bf16.msra.mxu0 %v5218
  %7895 = vmatpush.bf16.msra.mxu0 %v5210
  %7896 = vmatpush.bf16.msra.mxu0 %v5202
  %7897 = vmatpush.bf16.msra.mxu0 %v5194
  %7898 = vmatpush.bf16.msra.mxu0 %v5186
  %7899 = vmatpush.bf16.msra.mxu0 %v5178
  %7900 = vmatpush.bf16.msra.mxu0 %v5170
  %7901 = vmatpush.bf16.msra.mxu0 %v5162
  %7902 = vmatmul.bf16.gmra.mxu0 %v80
  %v7903 = vpop.f32.mrf.mxu0
  %v7904 = vadd.f32 %v7891, %v7903
  %v7905 = vpop.f32.mrf.mxu0
  %7906 = vdwg.mxu0
  %v7907 = vmax.f32 %v6448, 0.0
  %v7908 = vmax.f32 %v6656, 0.0
  %v7909 = vmax.f32 %v6864, 0.0
  %v7910 = vmax.f32 %v7072, 0.0
  %v7911 = vmax.f32 %v7280, 0.0
  %v7912 = vmax.f32 %v7488, 0.0
  %v7913 = vmax.f32 %v7696, 0.0
  %v7914 = vmax.f32 %v7904, 0.0
  %v7915 = vpack.c.bf16 %v7907, %v7907
  %v7916 = vpack.c.bf16 %v7908, %v7908
  %v7917 = vpack.c.bf16 %v7909, %v7909
  %v7918 = vpack.c.bf16 %v7910, %v7910
  %v7919 = vpack.c.bf16 %v7911, %v7911
  %v7920 = vpack.c.bf16 %v7912, %v7912
  %v7921 = vpack.c.bf16 %v7913, %v7913
  %v7922 = vpack.c.bf16 %v7914, %v7914
  %v7923 = vld [vmem:[%s3] sm:$0xf]
  %v7924 = vld [vmem:[%s3 + $0x4] sm:$0xf]
  %v7925 = vld [vmem:[%s3 + $0x8] sm:$0xf]
  %v7926 = vld [vmem:[%s3 + $0xc] sm:$0xf]
  %v7927 = vld [vmem:[%s3 + $0x10] sm:$0xf]
  %v7928 = vld [vmem:[%s3 + $0x14] sm:$0xf]
  %v7929 = vld [vmem:[%s3 + $0x18] sm:$0xf]
  %v7930 = vld [vmem:[%s3 + $0x1c] sm:$0xf]
  %v7931 = vld [vmem:[%s3 + $0x20] sm:$0xf]
  %v7932 = vld [vmem:[%s3 + $0x24] sm:$0xf]
  %v7933 = vld [vmem:[%s3 + $0x28] sm:$0xf]
  %v7934 = vld [vmem:[%s3 + $0x2c] sm:$0xf]
  %v7935 = vld [vmem:[%s3 + $0x30] sm:$0xf]
  %v7936 = vld [vmem:[%s3 + $0x34] sm:$0xf]
  %v7937 = vld [vmem:[%s3 + $0x38] sm:$0xf]
  %v7938 = vld [vmem:[%s3 + $0x3c] sm:$0xf]
  %v7939 = vld [vmem:[%s3 + $0x40] sm:$0xf]
  %v7940 = vld [vmem:[%s3 + $0x44] sm:$0xf]
  %v7941 = vld [vmem:[%s3 + $0x48] sm:$0xf]
  %v7942 = vld [vmem:[%s3 + $0x4c] sm:$0xf]
  %v7943 = vld [vmem:[%s3 + $0x50] sm:$0xf]
  %v7944 = vld [vmem:[%s3 + $0x54] sm:$0xf]
  %v7945 = vld [vmem:[%s3 + $0x58] sm:$0xf]
  %v7946 = vld [vmem:[%s3 + $0x5c] sm:$0xf]
  %v7947 = vld [vmem:[%s3 + $0x60] sm:$0xf]
  %v7948 = vld [vmem:[%s3 + $0x64] sm:$0xf]
  %v7949 = vld [vmem:[%s3 + $0x68] sm:$0xf]
  %v7950 = vld [vmem:[%s3 + $0x6c] sm:$0xf]
  %v7951 = vld [vmem:[%s3 + $0x70] sm:$0xf]
  %v7952 = vld [vmem:[%s3 + $0x74] sm:$0xf]
  %v7953 = vld [vmem:[%s3 + $0x78] sm:$0xf]
  %v7954 = vld [vmem:[%s3 + $0x7c] sm:$0xf]
  %v7955 = vld [vmem:[%s3 + $0x80] sm:$0xf]
  %v7956 = vld [vmem:[%s3 + $0x84] sm:$0xf]
  %v7957 = vld [vmem:[%s3 + $0x88] sm:$0xf]
  %v7958 = vld [vmem:[%s3 + $0x8c] sm:$0xf]
  %v7959 = vld [vmem:[%s3 + $0x90] sm:$0xf]
  %v7960 = vld [vmem:[%s3 + $0x94] sm:$0xf]
  %v7961 = vld [vmem:[%s3 + $0x98] sm:$0xf]
  %v7962 = vld [vmem:[%s3 + $0x9c] sm:$0xf]
  %v7963 = vld [vmem:[%s3 + $0xa0] sm:$0xf]
  %v7964 = vld [vmem:[%s3 + $0xa4] sm:$0xf]
  %v7965 = vld [vmem:[%s3 + $0xa8] sm:$0xf]
  %v7966 = vld [vmem:[%s3 + $0xac] sm:$0xf]
  %v7967 = vld [vmem:[%s3 + $0xb0] sm:$0xf]
  %v7968 = vld [vmem:[%s3 + $0xb4] sm:$0xf]
  %v7969 = vld [vmem:[%s3 + $0xb8] sm:$0xf]
  %v7970 = vld [vmem:[%s3 + $0xbc] sm:$0xf]
  %v7971 = vld [vmem:[%s3 + $0xc0] sm:$0xf]
  %v7972 = vld [vmem:[%s3 + $0xc4] sm:$0xf]
  %v7973 = vld [vmem:[%s3 + $0xc8] sm:$0xf]
  %v7974 = vld [vmem:[%s3 + $0xcc] sm:$0xf]
  %v7975 = vld [vmem:[%s3 + $0xd0] sm:$0xf]
  %v7976 = vld [vmem:[%s3 + $0xd4] sm:$0xf]
  %v7977 = vld [vmem:[%s3 + $0xd8] sm:$0xf]
  %v7978 = vld [vmem:[%s3 + $0xdc] sm:$0xf]
  %v7979 = vld [vmem:[%s3 + $0xe0] sm:$0xf]
  %v7980 = vld [vmem:[%s3 + $0xe4] sm:$0xf]
  %v7981 = vld [vmem:[%s3 + $0xe8] sm:$0xf]
  %v7982 = vld [vmem:[%s3 + $0xec] sm:$0xf]
  %v7983 = vld [vmem:[%s3 + $0xf0] sm:$0xf]
  %v7984 = vld [vmem:[%s3 + $0xf4] sm:$0xf]
  %v7985 = vld [vmem:[%s3 + $0xf8] sm:$0xf]
  %v7986 = vld [vmem:[%s3 + $0xfc] sm:$0xf]
  %v7987 = vld [vmem:[%s3 + $0x100] sm:$0xf]
  %v7988 = vld [vmem:[%s3 + $0x104] sm:$0xf]
  %v7989 = vld [vmem:[%s3 + $0x108] sm:$0xf]
  %v7990 = vld [vmem:[%s3 + $0x10c] sm:$0xf]
  %v7991 = vld [vmem:[%s3 + $0x110] sm:$0xf]
  %v7992 = vld [vmem:[%s3 + $0x114] sm:$0xf]
  %v7993 = vld [vmem:[%s3 + $0x118] sm:$0xf]
  %v7994 = vld [vmem:[%s3 + $0x11c] sm:$0xf]
  %v7995 = vld [vmem:[%s3 + $0x120] sm:$0xf]
  %v7996 = vld [vmem:[%s3 + $0x124] sm:$0xf]
  %v7997 = vld [vmem:[%s3 + $0x128] sm:$0xf]
  %v7998 = vld [vmem:[%s3 + $0x12c] sm:$0xf]
  %v7999 = vld [vmem:[%s3 + $0x130] sm:$0xf]
  %v8000 = vld [vmem:[%s3 + $0x134] sm:$0xf]
  %v8001 = vld [vmem:[%s3 + $0x138] sm:$0xf]
  %v8002 = vld [vmem:[%s3 + $0x13c] sm:$0xf]
  %v8003 = vld [vmem:[%s3 + $0x140] sm:$0xf]
  %v8004 = vld [vmem:[%s3 + $0x144] sm:$0xf]
  %v8005 = vld [vmem:[%s3 + $0x148] sm:$0xf]
  %v8006 = vld [vmem:[%s3 + $0x14c] sm:$0xf]
  %v8007 = vld [vmem:[%s3 + $0x150] sm:$0xf]
  %v8008 = vld [vmem:[%s3 + $0x154] sm:$0xf]
  %v8009 = vld [vmem:[%s3 + $0x158] sm:$0xf]
  %v8010 = vld [vmem:[%s3 + $0x15c] sm:$0xf]
  %v8011 = vld [vmem:[%s3 + $0x160] sm:$0xf]
  %v8012 = vld [vmem:[%s3 + $0x164] sm:$0xf]
  %v8013 = vld [vmem:[%s3 + $0x168] sm:$0xf]
  %v8014 = vld [vmem:[%s3 + $0x16c] sm:$0xf]
  %v8015 = vld [vmem:[%s3 + $0x170] sm:$0xf]
  %v8016 = vld [vmem:[%s3 + $0x174] sm:$0xf]
  %v8017 = vld [vmem:[%s3 + $0x178] sm:$0xf]
  %v8018 = vld [vmem:[%s3 + $0x17c] sm:$0xf]
  %v8019 = vld [vmem:[%s3 + $0x180] sm:$0xf]
  %v8020 = vld [vmem:[%s3 + $0x184] sm:$0xf]
  %v8021 = vld [vmem:[%s3 + $0x188] sm:$0xf]
  %v8022 = vld [vmem:[%s3 + $0x18c] sm:$0xf]
  %v8023 = vld [vmem:[%s3 + $0x190] sm:$0xf]
  %v8024 = vld [vmem:[%s3 + $0x194] sm:$0xf]
  %v8025 = vld [vmem:[%s3 + $0x198] sm:$0xf]
  %v8026 = vld [vmem:[%s3 + $0x19c] sm:$0xf]
  %v8027 = vld [vmem:[%s3 + $0x1a0] sm:$0xf]
  %v8028 = vld [vmem:[%s3 + $0x1a4] sm:$0xf]
  %v8029 = vld [vmem:[%s3 + $0x1a8] sm:$0xf]
  %v8030 = vld [vmem:[%s3 + $0x1ac] sm:$0xf]
  %v8031 = vld [vmem:[%s3 + $0x1b0] sm:$0xf]
  %v8032 = vld [vmem:[%s3 + $0x1b4] sm:$0xf]
  %v8033 = vld [vmem:[%s3 + $0x1b8] sm:$0xf]
  %v8034 = vld [vmem:[%s3 + $0x1bc] sm:$0xf]
  %v8035 = vld [vmem:[%s3 + $0x1c0] sm:$0xf]
  %v8036 = vld [vmem:[%s3 + $0x1c4] sm:$0xf]
  %v8037 = vld [vmem:[%s3 + $0x1c8] sm:$0xf]
  %v8038 = vld [vmem:[%s3 + $0x1cc] sm:$0xf]
  %v8039 = vld [vmem:[%s3 + $0x1d0] sm:$0xf]
  %v8040 = vld [vmem:[%s3 + $0x1d4] sm:$0xf]
  %v8041 = vld [vmem:[%s3 + $0x1d8] sm:$0xf]
  %v8042 = vld [vmem:[%s3 + $0x1dc] sm:$0xf]
  %v8043 = vld [vmem:[%s3 + $0x1e0] sm:$0xf]
  %v8044 = vld [vmem:[%s3 + $0x1e4] sm:$0xf]
  %v8045 = vld [vmem:[%s3 + $0x1e8] sm:$0xf]
  %v8046 = vld [vmem:[%s3 + $0x1ec] sm:$0xf]
  %v8047 = vld [vmem:[%s3 + $0x1f0] sm:$0xf]
  %v8048 = vld [vmem:[%s3 + $0x1f4] sm:$0xf]
  %v8049 = vld [vmem:[%s3 + $0x1f8] sm:$0xf]
  %v8050 = vld [vmem:[%s3 + $0x1fc] sm:$0xf]
  %v8051 = vld [vmem:[%s4] sm:$0x1]
  %v8053 = vperm.slane %v8051, 0
  %v8183 = vunpack.c.l.b16 %v7923
  %v8184 = vunpack.c.l.b16 %v7924
  %v8185 = vunpack.c.l.b16 %v7925
  %v8186 = vunpack.c.l.b16 %v7926
  %v8187 = vunpack.c.l.b16 %v7927
  %v8188 = vunpack.c.l.b16 %v7928
  %v8189 = vunpack.c.l.b16 %v7929
  %v8190 = vunpack.c.l.b16 %v7930
  %v8191 = vunpack.c.l.b16 %v7931
  %v8192 = vunpack.c.l.b16 %v7932
  %v8193 = vunpack.c.l.b16 %v7933
  %v8194 = vunpack.c.l.b16 %v7934
  %v8195 = vunpack.c.l.b16 %v7935
  %v8196 = vunpack.c.l.b16 %v7936
  %v8197 = vunpack.c.l.b16 %v7937
  %v8198 = vunpack.c.l.b16 %v7938
  %v8199 = vunpack.c.l.b16 %v7939
  %v8200 = vunpack.c.l.b16 %v7940
  %v8201 = vunpack.c.l.b16 %v7941
  %v8202 = vunpack.c.l.b16 %v7942
  %v8203 = vunpack.c.l.b16 %v7943
  %v8204 = vunpack.c.l.b16 %v7944
  %v8205 = vunpack.c.l.b16 %v7945
  %v8206 = vunpack.c.l.b16 %v7946
  %v8207 = vunpack.c.l.b16 %v7947
  %v8208 = vunpack.c.l.b16 %v7948
  %v8209 = vunpack.c.l.b16 %v7949
  %v8210 = vunpack.c.l.b16 %v7950
  %v8211 = vunpack.c.l.b16 %v7951
  %v8212 = vunpack.c.l.b16 %v7952
  %v8213 = vunpack.c.l.b16 %v7953
  %v8214 = vunpack.c.l.b16 %v7954
  %v8215 = vunpack.c.l.b16 %v7955
  %v8216 = vunpack.c.l.b16 %v7956
  %v8217 = vunpack.c.l.b16 %v7957
  %v8218 = vunpack.c.l.b16 %v7958
  %v8219 = vunpack.c.l.b16 %v7959
  %v8220 = vunpack.c.l.b16 %v7960
  %v8221 = vunpack.c.l.b16 %v7961
  %v8222 = vunpack.c.l.b16 %v7962
  %v8223 = vunpack.c.l.b16 %v7963
  %v8224 = vunpack.c.l.b16 %v7964
  %v8225 = vunpack.c.l.b16 %v7965
  %v8226 = vunpack.c.l.b16 %v7966
  %v8227 = vunpack.c.l.b16 %v7967
  %v8228 = vunpack.c.l.b16 %v7968
  %v8229 = vunpack.c.l.b16 %v7969
  %v8230 = vunpack.c.l.b16 %v7970
  %v8231 = vunpack.c.l.b16 %v7971
  %v8232 = vunpack.c.l.b16 %v7972
  %v8233 = vunpack.c.l.b16 %v7973
  %v8234 = vunpack.c.l.b16 %v7974
  %v8235 = vunpack.c.l.b16 %v7975
  %v8236 = vunpack.c.l.b16 %v7976
  %v8237 = vunpack.c.l.b16 %v7977
  %v8238 = vunpack.c.l.b16 %v7978
  %v8239 = vunpack.c.l.b16 %v7979
  %v8240 = vunpack.c.l.b16 %v7980
  %v8241 = vunpack.c.l.b16 %v7981
  %v8242 = vunpack.c.l.b16 %v7982
  %v8243 = vunpack.c.l.b16 %v7983
  %v8244 = vunpack.c.l.b16 %v7984
  %v8245 = vunpack.c.l.b16 %v7985
  %v8246 = vunpack.c.l.b16 %v7986
  %v8247 = vunpack.c.l.b16 %v7987
  %v8248 = vunpack.c.l.b16 %v7988
  %v8249 = vunpack.c.l.b16 %v7989
  %v8250 = vunpack.c.l.b16 %v7990
  %v8251 = vunpack.c.l.b16 %v7991
  %v8252 = vunpack.c.l.b16 %v7992
  %v8253 = vunpack.c.l.b16 %v7993
  %v8254 = vunpack.c.l.b16 %v7994
  %v8255 = vunpack.c.l.b16 %v7995
  %v8256 = vunpack.c.l.b16 %v7996
  %v8257 = vunpack.c.l.b16 %v7997
  %v8258 = vunpack.c.l.b16 %v7998
  %v8259 = vunpack.c.l.b16 %v7999
  %v8260 = vunpack.c.l.b16 %v8000
  %v8261 = vunpack.c.l.b16 %v8001
  %v8262 = vunpack.c.l.b16 %v8002
  %v8263 = vunpack.c.l.b16 %v8003
  %v8264 = vunpack.c.l.b16 %v8004
  %v8265 = vunpack.c.l.b16 %v8005
  %v8266 = vunpack.c.l.b16 %v8006
  %v8267 = vunpack.c.l.b16 %v8007
  %v8268 = vunpack.c.l.b16 %v8008
  %v8269 = vunpack.c.l.b16 %v8009
  %v8270 = vunpack.c.l.b16 %v8010
  %v8271 = vunpack.c.l.b16 %v8011
  %v8272 = vunpack.c.l.b16 %v8012
  %v8273 = vunpack.c.l.b16 %v8013
  %v8274 = vunpack.c.l.b16 %v8014
  %v8275 = vunpack.c.l.b16 %v8015
  %v8276 = vunpack.c.l.b16 %v8016
  %v8277 = vunpack.c.l.b16 %v8017
  %v8278 = vunpack.c.l.b16 %v8018
  %v8279 = vunpack.c.l.b16 %v8019
  %v8280 = vunpack.c.l.b16 %v8020
  %v8281 = vunpack.c.l.b16 %v8021
  %v8282 = vunpack.c.l.b16 %v8022
  %v8283 = vunpack.c.l.b16 %v8023
  %v8284 = vunpack.c.l.b16 %v8024
  %v8285 = vunpack.c.l.b16 %v8025
  %v8286 = vunpack.c.l.b16 %v8026
  %v8287 = vunpack.c.l.b16 %v8027
  %v8288 = vunpack.c.l.b16 %v8028
  %v8289 = vunpack.c.l.b16 %v8029
  %v8290 = vunpack.c.l.b16 %v8030
  %v8291 = vunpack.c.l.b16 %v8031
  %v8292 = vunpack.c.l.b16 %v8032
  %v8293 = vunpack.c.l.b16 %v8033
  %v8294 = vunpack.c.l.b16 %v8034
  %v8295 = vunpack.c.l.b16 %v8035
  %v8296 = vunpack.c.l.b16 %v8036
  %v8297 = vunpack.c.l.b16 %v8037
  %v8298 = vunpack.c.l.b16 %v8038
  %v8299 = vunpack.c.l.b16 %v8039
  %v8300 = vunpack.c.l.b16 %v8040
  %v8301 = vunpack.c.l.b16 %v8041
  %v8302 = vunpack.c.l.b16 %v8042
  %v8303 = vunpack.c.l.b16 %v8043
  %v8304 = vunpack.c.l.b16 %v8044
  %v8305 = vunpack.c.l.b16 %v8045
  %v8306 = vunpack.c.l.b16 %v8046
  %v8307 = vunpack.c.l.b16 %v8047
  %v8308 = vunpack.c.l.b16 %v8048
  %v8309 = vunpack.c.l.b16 %v8049
  %v8310 = vunpack.c.l.b16 %v8050
  %v8311 = vpack.c.b16 %v8184, %v8183
  %v8312 = vpack.c.b16 %v8186, %v8185
  %v8313 = vpack.c.b16 %v8188, %v8187
  %v8314 = vpack.c.b16 %v8190, %v8189
  %v8315 = vpack.c.b16 %v8192, %v8191
  %v8316 = vpack.c.b16 %v8194, %v8193
  %v8317 = vpack.c.b16 %v8196, %v8195
  %v8318 = vpack.c.b16 %v8198, %v8197
  %v8319 = vpack.c.b16 %v8200, %v8199
  %v8320 = vpack.c.b16 %v8202, %v8201
  %v8321 = vpack.c.b16 %v8204, %v8203
  %v8322 = vpack.c.b16 %v8206, %v8205
  %v8323 = vpack.c.b16 %v8208, %v8207
  %v8324 = vpack.c.b16 %v8210, %v8209
  %v8325 = vpack.c.b16 %v8212, %v8211
  %v8326 = vpack.c.b16 %v8214, %v8213
  %v8327 = vpack.c.b16 %v8216, %v8215
  %v8328 = vpack.c.b16 %v8218, %v8217
  %v8329 = vpack.c.b16 %v8220, %v8219
  %v8330 = vpack.c.b16 %v8222, %v8221
  %v8331 = vpack.c.b16 %v8224, %v8223
  %v8332 = vpack.c.b16 %v8226, %v8225
  %v8333 = vpack.c.b16 %v8228, %v8227
  %v8334 = vpack.c.b16 %v8230, %v8229
  %v8335 = vpack.c.b16 %v8232, %v8231
  %v8336 = vpack.c.b16 %v8234, %v8233
  %v8337 = vpack.c.b16 %v8236, %v8235
  %v8338 = vpack.c.b16 %v8238, %v8237
  %v8339 = vpack.c.b16 %v8240, %v8239
  %v8340 = vpack.c.b16 %v8242, %v8241
  %v8341 = vpack.c.b16 %v8244, %v8243
  %v8342 = vpack.c.b16 %v8246, %v8245
  %v8343 = vpack.c.b16 %v8248, %v8247
  %v8344 = vpack.c.b16 %v8250, %v8249
  %v8345 = vpack.c.b16 %v8252, %v8251
  %v8346 = vpack.c.b16 %v8254, %v8253
  %v8347 = vpack.c.b16 %v8256, %v8255
  %v8348 = vpack.c.b16 %v8258, %v8257
  %v8349 = vpack.c.b16 %v8260, %v8259
  %v8350 = vpack.c.b16 %v8262, %v8261
  %v8351 = vpack.c.b16 %v8264, %v8263
  %v8352 = vpack.c.b16 %v8266, %v8265
  %v8353 = vpack.c.b16 %v8268, %v8267
  %v8354 = vpack.c.b16 %v8270, %v8269
  %v8355 = vpack.c.b16 %v8272, %v8271
  %v8356 = vpack.c.b16 %v8274, %v8273
  %v8357 = vpack.c.b16 %v8276, %v8275
  %v8358 = vpack.c.b16 %v8278, %v8277
  %v8359 = vpack.c.b16 %v8280, %v8279
  %v8360 = vpack.c.b16 %v8282, %v8281
  %v8361 = vpack.c.b16 %v8284, %v8283
  %v8362 = vpack.c.b16 %v8286, %v8285
  %v8363 = vpack.c.b16 %v8288, %v8287
  %v8364 = vpack.c.b16 %v8290, %v8289
  %v8365 = vpack.c.b16 %v8292, %v8291
  %v8366 = vpack.c.b16 %v8294, %v8293
  %v8367 = vpack.c.b16 %v8296, %v8295
  %v8368 = vpack.c.b16 %v8298, %v8297
  %v8369 = vpack.c.b16 %v8300, %v8299
  %v8370 = vpack.c.b16 %v8302, %v8301
  %v8371 = vpack.c.b16 %v8304, %v8303
  %v8372 = vpack.c.b16 %v8306, %v8305
  %v8373 = vpack.c.b16 %v8308, %v8307
  %v8374 = vpack.c.b16 %v8310, %v8309
  %8439 = vmatpush.bf16.msra.mxu0 %v8318
  %8440 = vmatpush.bf16.msra.mxu0 %v8317
  %8441 = vmatpush.bf16.msra.mxu0 %v8316
  %8442 = vmatpush.bf16.msra.mxu0 %v8315
  %8443 = vmatpush.bf16.msra.mxu0 %v8314
  %8444 = vmatpush.bf16.msra.mxu0 %v8313
  %8445 = vmatpush.bf16.msra.mxu0 %v8312
  %8446 = vmatpush.bf16.msra.mxu0 %v8311
  %8447 = vmatmul.bf16.gmra.mxu0 %v7915
  %v8448 = vpop.f32.mrf.mxu0
  %v8449 = vadd.f32 %v8053, %v8448
  %v8450 = vpop.f32.mrf.mxu0
  %8451 = vdwg.mxu0
  %8452 = vmatpush.bf16.msra.mxu0 %v8326
  %8453 = vmatpush.bf16.msra.mxu0 %v8325
  %8454 = vmatpush.bf16.msra.mxu0 %v8324
  %8455 = vmatpush.bf16.msra.mxu0 %v8323
  %8456 = vmatpush.bf16.msra.mxu0 %v8322
  %8457 = vmatpush.bf16.msra.mxu0 %v8321
  %8458 = vmatpush.bf16.msra.mxu0 %v8320
  %8459 = vmatpush.bf16.msra.mxu0 %v8319
  %8460 = vmatmul.bf16.gmra.mxu0 %v7916
  %v8461 = vpop.f32.mrf.mxu0
  %v8462 = vadd.f32 %v8449, %v8461
  %v8463 = vpop.f32.mrf.mxu0
  %8464 = vdwg.mxu0
  %8465 = vmatpush.bf16.msra.mxu0 %v8334
  %8466 = vmatpush.bf16.msra.mxu0 %v8333
  %8467 = vmatpush.bf16.msra.mxu0 %v8332
  %8468 = vmatpush.bf16.msra.mxu0 %v8331
  %8469 = vmatpush.bf16.msra.mxu0 %v8330
  %8470 = vmatpush.bf16.msra.mxu0 %v8329
  %8471 = vmatpush.bf16.msra.mxu0 %v8328
  %8472 = vmatpush.bf16.msra.mxu0 %v8327
  %8473 = vmatmul.bf16.gmra.mxu0 %v7917
  %v8474 = vpop.f32.mrf.mxu0
  %v8475 = vadd.f32 %v8462, %v8474
  %v8476 = vpop.f32.mrf.mxu0
  %8477 = vdwg.mxu0
  %8478 = vmatpush.bf16.msra.mxu0 %v8342
  %8479 = vmatpush.bf16.msra.mxu0 %v8341
  %8480 = vmatpush.bf16.msra.mxu0 %v8340
  %8481 = vmatpush.bf16.msra.mxu0 %v8339
  %8482 = vmatpush.bf16.msra.mxu0 %v8338
  %8483 = vmatpush.bf16.msra.mxu0 %v8337
  %8484 = vmatpush.bf16.msra.mxu0 %v8336
  %8485 = vmatpush.bf16.msra.mxu0 %v8335
  %8486 = vmatmul.bf16.gmra.mxu0 %v7918
  %v8487 = vpop.f32.mrf.mxu0
  %v8488 = vadd.f32 %v8475, %v8487
  %v8489 = vpop.f32.mrf.mxu0
  %8490 = vdwg.mxu0
  %8491 = vmatpush.bf16.msra.mxu0 %v8350
  %8492 = vmatpush.bf16.msra.mxu0 %v8349
  %8493 = vmatpush.bf16.msra.mxu0 %v8348
  %8494 = vmatpush.bf16.msra.mxu0 %v8347
  %8495 = vmatpush.bf16.msra.mxu0 %v8346
  %8496 = vmatpush.bf16.msra.mxu0 %v8345
  %8497 = vmatpush.bf16.msra.mxu0 %v8344
  %8498 = vmatpush.bf16.msra.mxu0 %v8343
  %8499 = vmatmul.bf16.gmra.mxu0 %v7919
  %v8500 = vpop.f32.mrf.mxu0
  %v8501 = vadd.f32 %v8488, %v8500
  %v8502 = vpop.f32.mrf.mxu0
  %8503 = vdwg.mxu0
  %8504 = vmatpush.bf16.msra.mxu0 %v8358
  %8505 = vmatpush.bf16.msra.mxu0 %v8357
  %8506 = vmatpush.bf16.msra.mxu0 %v8356
  %8507 = vmatpush.bf16.msra.mxu0 %v8355
  %8508 = vmatpush.bf16.msra.mxu0 %v8354
  %8509 = vmatpush.bf16.msra.mxu0 %v8353
  %8510 = vmatpush.bf16.msra.mxu0 %v8352
  %8511 = vmatpush.bf16.msra.mxu0 %v8351
  %8512 = vmatmul.bf16.gmra.mxu0 %v7920
  %v8513 = vpop.f32.mrf.mxu0
  %v8514 = vadd.f32 %v8501, %v8513
  %v8515 = vpop.f32.mrf.mxu0
  %8516 = vdwg.mxu0
  %8517 = vmatpush.bf16.msra.mxu0 %v8366
  %8518 = vmatpush.bf16.msra.mxu0 %v8365
  %8519 = vmatpush.bf16.msra.mxu0 %v8364
  %8520 = vmatpush.bf16.msra.mxu0 %v8363
  %8521 = vmatpush.bf16.msra.mxu0 %v8362
  %8522 = vmatpush.bf16.msra.mxu0 %v8361
  %8523 = vmatpush.bf16.msra.mxu0 %v8360
  %8524 = vmatpush.bf16.msra.mxu0 %v8359
  %8525 = vmatmul.bf16.gmra.mxu0 %v7921
  %v8526 = vpop.f32.mrf.mxu0
  %v8527 = vadd.f32 %v8514, %v8526
  %v8528 = vpop.f32.mrf.mxu0
  %8529 = vdwg.mxu0
  %8530 = vmatpush.bf16.msra.mxu0 %v8374
  %8531 = vmatpush.bf16.msra.mxu0 %v8373
  %8532 = vmatpush.bf16.msra.mxu0 %v8372
  %8533 = vmatpush.bf16.msra.mxu0 %v8371
  %8534 = vmatpush.bf16.msra.mxu0 %v8370
  %8535 = vmatpush.bf16.msra.mxu0 %v8369
  %8536 = vmatpush.bf16.msra.mxu0 %v8368
  %8537 = vmatpush.bf16.msra.mxu0 %v8367
  %8538 = vmatmul.bf16.gmra.mxu0 %v7922
  %v8539 = vpop.f32.mrf.mxu0
  %v8540 = vadd.f32 %v8527, %v8539
  %v8541 = vpop.f32.mrf.mxu0
  %8542 = vdwg.mxu0
  %8543 = vst [vmem:[%s5] sm:$0x3] %v8540
  // Predicated region
  $region22: #{forward.1} parent=0 // pred_check
    _
  $region23: #{forward.1} parent=0 // pred_check_branch
    %8545 = sbr.rel (0) target = $region25
  $region24: #{forward.1} parent=0 // pred_region
    _
  $region25: #{forward.1} parent=0 // pred_fallthru
    _
  // Predicated region
  $region26: #{forward.1} parent=0 // pred_check
    _
  $region27: #{forward.1} parent=0 // pred_check_branch
    %8547 = sbr.rel (0) target = $region29
  $region28: #{forward.1} parent=0 // pred_region
    _
  $region29: #{forward.1} parent=0 // pred_fallthru
    _

</llo_original>
